<compile_context>
chip_gen: v7x
topology: tpu7x:2x2x1
jax: 0.10.0
libtpu: 0.0.40
codegen_flags: <defaults>
</compile_context>

<pallas_src>
import jax
import jax.numpy as jnp
from jax import lax
from jax.experimental import pallas as pl
from jax.experimental.pallas import tpu as pltpu

PAD = 8  # halo width on each side of the padded scratch (max tap offset is 5)


def _dw_offsets(kh, kw, ph, pw, dh=1, dw=1):
    # PyTorch Conv2d (cross-correlation) tap offsets, tap order t = i*kw + j.
    return tuple((i * dh - ph, j * dw - pw) for i in range(kh) for j in range(kw))


# Depthwise conv ladder (order defines packed-weight row bases / bias rows).
_CONVS = (
    ("conv",    _dw_offsets(3, 3, 1, 1)),
    ("conv0",   _dw_offsets(3, 3, 3, 3, 3, 3)),   # 3x3, dilation 3, padding 3
    ("conv0_1", _dw_offsets(1, 5, 0, 2)),
    ("conv0_2", _dw_offsets(5, 1, 2, 0)),
    ("conv1_1", _dw_offsets(1, 7, 0, 3)),
    ("conv1_2", _dw_offsets(7, 1, 3, 0)),
    ("conv2_1", _dw_offsets(1, 11, 0, 5)),
    ("conv2_2", _dw_offsets(11, 1, 5, 0)),
)
_OFFSETS = {name: offs for name, offs in _CONVS}
_W_BASE = {}
_B_ROW = {}
_base = 0
for _i, (_name, _offs) in enumerate(_CONVS):
    _W_BASE[_name] = _base
    _B_ROW[_name] = _i
    _base += len(_offs)
_N_TAPS = _base  # 64


def _make_cca_kernel(H, W, GC):
    def kernel(x_ref, dw_w_ref, dw_b_ref, w3_ref, b3_ref, o_ref, pad_ref):
        # Zero only the halo (nothing ever writes it; the center is fully
        # overwritten before every conv).  Done every step so correctness does
        # not depend on how the "parallel" grid axis is sharded across cores.
        z_row = jnp.zeros((PAD, W + 2 * PAD, GC), jnp.float32)
        pad_ref[0:PAD, :, :] = z_row
        pad_ref[PAD + H:2 * PAD + H, :, :] = z_row
        z_col = jnp.zeros((H, PAD, GC), jnp.float32)
        pad_ref[PAD:PAD + H, 0:PAD, :] = z_col
        pad_ref[PAD:PAD + H, PAD + W:2 * PAD + W, :] = z_col

        def pad_center(v):
            pad_ref[PAD:PAD + H, PAD:PAD + W, :] = v

        def conv_from_pad(name):
            offs = _OFFSETS[name]
            w_base = _W_BASE[name]
            acc = None
            for t, (dy, dx) in enumerate(offs):
                tap = pad_ref[PAD + dy:PAD + dy + H,
                              PAD + dx:PAD + dx + W, :]
                term = tap * dw_w_ref[w_base + t, :]
                acc = term if acc is None else acc + term
            return acc + dw_b_ref[_B_ROW[name], :]

        xv = x_ref[0].astype(jnp.float32)                  # (H, W, GC)

        pad_center(xv)
        attn = conv_from_pad("conv")                       # 3x3
        pad_center(attn)
        attna = conv_from_pad("conv0")                     # 3x3 dil 3
        acc = attn + attna
        # The three 1xk branches share one padded copy of attna.
        pad_center(attna)
        b0 = conv_from_pad("conv0_1")                      # 1x5
        b1 = conv_from_pad("conv1_1")                      # 1x7
        b2 = conv_from_pad("conv2_1")                      # 1x11
        pad_center(b0)
        acc = acc + conv_from_pad("conv0_2")               # 5x1
        pad_center(b1)
        acc = acc + conv_from_pad("conv1_2")               # 7x1
        pad_center(b2)
        acc = acc + conv_from_pad("conv2_2")               # 11x1
        acc = acc * jnp.float32(0.2)                       # == /5

        # Final 1x1 conv over concat([attn, u], channel): single packed
        # block-diagonal weight, two MXU dots (attn rows / u rows).
        a_flat = acc.reshape(H * W, GC)
        u_flat = xv.reshape(H * W, GC)
        out = (jnp.dot(a_flat, w3_ref[0:GC, :],
                       preferred_element_type=jnp.float32)
               + jnp.dot(u_flat, w3_ref[GC:2 * GC, :],
                         preferred_element_type=jnp.float32)
               + b3_ref[0, :])
        o_ref[0] = out.reshape(H, W, GC)

    return kernel


def _pick_group(B, C, lanes=128):
    # Largest divisor of B with G*C <= 128 lanes.
    target = max(1, lanes // C) if C <= lanes else 1
    for g in range(min(B, target), 0, -1):
        if B % g == 0:
            return g
    return 1


def cca_forward(x_nchw, params):
    B, C, H, W = x_nchw.shape
    G = _pick_group(B, C)
    GC = G * C
    NG = B // G

    # NCHW -> (NG, H, W, G*C); lane index = g*C + c.
    x = x_nchw.astype(jnp.float32).reshape(NG, G, C, H, W)
    x = jnp.transpose(x, (0, 3, 4, 1, 2)).reshape(NG, H, W, GC)

    # ---- packed depthwise tap weights / biases (tiled G times along lanes) --
    def dw_rows(w):  # (C, 1, kh, kw) -> (kh*kw, G*C)
        taps = jnp.transpose(w.reshape(C, -1), (1, 0)).astype(jnp.float32)
        return jnp.tile(taps, (1, G))

    def bias_row(b):  # (C,) -> (1, G*C)
        return jnp.tile(b.reshape(1, C).astype(jnp.float32), (1, G))

    dw_w = jnp.concatenate(
        [dw_rows(params[name + "_w"]) for name, _ in _CONVS], axis=0)   # (64, GC)
    dw_b = jnp.concatenate(
        [bias_row(params[name + "_b"]) for name, _ in _CONVS], axis=0)  # (8, GC)

    # ---- 1x1 conv weight packed as block-diagonal (2*GC, GC) ----------------
    w3 = params["conv3_w"].reshape(C, 2 * C).astype(jnp.float32)  # (Cout, 2C)
    w3a = jnp.transpose(w3[:, :C], (1, 0))                        # (Cin, Cout)
    w3u = jnp.transpose(w3[:, C:], (1, 0))
    eye = jnp.eye(G, dtype=jnp.float32)
    w3_full = jnp.concatenate([jnp.kron(eye, w3a), jnp.kron(eye, w3u)], axis=0)
    b3 = bias_row(params["conv3_b"])                              # (1, GC)

    kernel = _make_cca_kernel(H, W, GC)

    def full_spec(a):
        nd = a.ndim
        return pl.BlockSpec(a.shape, lambda g, _nd=nd: (0,) * _nd)

    out = pl.pallas_call(
        kernel,
        out_shape=jax.ShapeDtypeStruct((NG, H, W, GC), jnp.float32),
        grid_spec=pltpu.PrefetchScalarGridSpec(
            num_scalar_prefetch=0,
            grid=(NG,),
            in_specs=[pl.BlockSpec((1, H, W, GC), lambda g: (g, 0, 0, 0)),
                      full_spec(dw_w), full_spec(dw_b),
                      full_spec(w3_full), full_spec(b3)],
            out_specs=pl.BlockSpec((1, H, W, GC), lambda g: (g, 0, 0, 0)),
            scratch_shapes=[pltpu.VMEM(
                (H + 2 * PAD, W + 2 * PAD, GC), jnp.float32)],
        ),
        compiler_params=pltpu.CompilerParams(
            dimension_semantics=("parallel",),   # image groups are independent
            vmem_limit_bytes=32 * 1024 * 1024,
        ),
    )(x, dw_w, dw_b, w3_full, b3)

    out = out.reshape(NG, H, W, G, C)
    return jnp.transpose(out, (0, 3, 4, 1, 2)).reshape(B, C, H, W)


# ------------------------- pure-JAX reference --------------------------------
def cca_ref(x, p):
    C = x.shape[1]

    def dw(x, w, b, pad, dil=(1, 1)):
        y = lax.conv_general_dilated(
            x, w, window_strides=(1, 1),
            padding=[(pad[0], pad[0]), (pad[1], pad[1])],
            rhs_dilation=dil, feature_group_count=C,
            dimension_numbers=('NCHW', 'OIHW', 'NCHW'))
        return y + b.reshape(1, C, 1, 1)

    attn = dw(x, p['conv_w'], p['conv_b'], (1, 1))
    attna = dw(attn, p['conv0_w'], p['conv0_b'], (3, 3), (3, 3))
    a0 = dw(dw(attna, p['conv0_1_w'], p['conv0_1_b'], (0, 2)),
            p['conv0_2_w'], p['conv0_2_b'], (2, 0))
    a1 = dw(dw(attna, p['conv1_1_w'], p['conv1_1_b'], (0, 3)),
            p['conv1_2_w'], p['conv1_2_b'], (3, 0))
    a2 = dw(dw(attna, p['conv2_1_w'], p['conv2_1_b'], (0, 5)),
            p['conv2_2_w'], p['conv2_2_b'], (5, 0))
    attn = (attn + attna + a0 + a1 + a2) / 5
    cat = jnp.concatenate([attn, x], axis=1)
    out = lax.conv_general_dilated(
        cat, p['conv3_w'], (1, 1), [(0, 0), (0, 0)],
        dimension_numbers=('NCHW', 'OIHW', 'NCHW'))
    return out + p['conv3_b'].reshape(1, C, 1, 1)


def init_params(key, C):
    ks = jax.random.split(key, 18)

    def w(k, shape, scale=0.1):
        return (scale * jax.random.normal(k, shape)).astype(jnp.float32)

    p = {}
    p['conv_w'] = w(ks[0], (C, 1, 3, 3));      p['conv_b'] = w(ks[1], (C,))
    p['conv0_w'] = w(ks[2], (C, 1, 3, 3));     p['conv0_b'] = w(ks[3], (C,))
    p['conv0_1_w'] = w(ks[4], (C, 1, 1, 5));   p['conv0_1_b'] = w(ks[5], (C,))
    p['conv0_2_w'] = w(ks[6], (C, 1, 5, 1));   p['conv0_2_b'] = w(ks[7], (C,))
    p['conv1_1_w'] = w(ks[8], (C, 1, 1, 7));   p['conv1_1_b'] = w(ks[9], (C,))
    p['conv1_2_w'] = w(ks[10], (C, 1, 7, 1));  p['conv1_2_b'] = w(ks[11], (C,))
    p['conv2_1_w'] = w(ks[12], (C, 1, 1, 11)); p['conv2_1_b'] = w(ks[13], (C,))
    p['conv2_2_w'] = w(ks[14], (C, 1, 11, 1)); p['conv2_2_b'] = w(ks[15], (C,))
    p['conv3_w'] = w(ks[16], (C, 2 * C, 1, 1)); p['conv3_b'] = w(ks[17], (C,))
    return p


if __name__ == "__main__":
    key = jax.random.PRNGKey(0)
    B, C, H, W = 2, 32, 16, 16
    kx, kp = jax.random.split(key)
    x = jax.random.normal(kx, (B, C, H, W), jnp.float32)
    params = init_params(kp, C)

    out = cca_forward(x, params)
    out = jax.block_until_ready(out)

    ref = cca_ref(x, params)
    assert out.shape == ref.shape == (B, C, H, W)
    err = float(jnp.max(jnp.abs(out - ref)))
    assert err < 1e-3, f"max abs error {err}"
    print("KERNEL_OK")
</pallas_src>

<mosaic_0001>
module attributes {stable_mosaic.version = 11 : i64} {
  func.func @kernel(%arg0: i32, %arg1: memref<1x16x16x64xf32, #tpu.memory_space<vmem>>, %arg2: memref<64x64xf32, #tpu.memory_space<vmem>>, %arg3: memref<8x64xf32, #tpu.memory_space<vmem>>, %arg4: memref<128x64xf32, #tpu.memory_space<vmem>>, %arg5: memref<1x64xf32, #tpu.memory_space<vmem>>, %arg6: memref<1x16x16x64xf32, #tpu.memory_space<vmem>>, %arg7: memref<32x32x64xf32, #tpu.memory_space<vmem>>) attributes {dimension_semantics = [#tpu.dimension_semantics<parallel>], iteration_bounds = array<i64: 1>, scalar_prefetch = 0 : i64, scratch_operands = 1 : i64, tpu.core_type = #tpu.core_type<tc>, window_params = [{transform_indices = @transform_0, window_bounds = array<i64: 1, 16, 16, 64>}, {pipeline_mode = #tpu.pipeline_mode<synchronous>, transform_indices = @transform_1, window_bounds = array<i64: 64, 64>}, {pipeline_mode = #tpu.pipeline_mode<synchronous>, transform_indices = @transform_2, window_bounds = array<i64: 8, 64>}, {pipeline_mode = #tpu.pipeline_mode<synchronous>, transform_indices = @transform_3, window_bounds = array<i64: 128, 64>}, {pipeline_mode = #tpu.pipeline_mode<synchronous>, transform_indices = @transform_4, window_bounds = array<i64: 1, 64>}, {transform_indices = @transform_5, window_bounds = array<i64: 1, 16, 16, 64>}]} {
    %cst = arith.constant 0.000000e+00 : f32
    %0 = vector.broadcast %cst : f32 to vector<8x32x64xf32>
    %c0 = arith.constant 0 : index
    %c0_0 = arith.constant 0 : index
    %c0_1 = arith.constant 0 : index
    %1 = vector.load %arg7[%c0, %c0_0, %c0_1] : memref<32x32x64xf32, #tpu.memory_space<vmem>>, vector<8x32x64xf32>
    tpu.vector_store %arg7[%c0, %c0_0, %c0_1], %0 {strides = array<i32>} : memref<32x32x64xf32, #tpu.memory_space<vmem>>, vector<8x32x64xf32>,
    %c24 = arith.constant 24 : index
    %c0_2 = arith.constant 0 : index
    %c0_3 = arith.constant 0 : index
    %2 = vector.load %arg7[%c24, %c0_2, %c0_3] : memref<32x32x64xf32, #tpu.memory_space<vmem>>, vector<8x32x64xf32>
    tpu.vector_store %arg7[%c24, %c0_2, %c0_3], %0 {strides = array<i32>} : memref<32x32x64xf32, #tpu.memory_space<vmem>>, vector<8x32x64xf32>,
    %cst_4 = arith.constant 0.000000e+00 : f32
    %3 = vector.broadcast %cst_4 : f32 to vector<16x8x64xf32>
    %c8 = arith.constant 8 : index
    %c0_5 = arith.constant 0 : index
    %c0_6 = arith.constant 0 : index
    %4 = vector.load %arg7[%c8, %c0_5, %c0_6] : memref<32x32x64xf32, #tpu.memory_space<vmem>>, vector<16x8x64xf32>
    tpu.vector_store %arg7[%c8, %c0_5, %c0_6], %3 {strides = array<i32>} : memref<32x32x64xf32, #tpu.memory_space<vmem>>, vector<16x8x64xf32>,
    %c8_7 = arith.constant 8 : index
    %c24_8 = arith.constant 24 : index
    %c0_9 = arith.constant 0 : index
    %5 = vector.load %arg7[%c8_7, %c24_8, %c0_9] : memref<32x32x64xf32, #tpu.memory_space<vmem>>, vector<16x8x64xf32>
    tpu.vector_store %arg7[%c8_7, %c24_8, %c0_9], %3 {strides = array<i32>} : memref<32x32x64xf32, #tpu.memory_space<vmem>>, vector<16x8x64xf32>,
    %c0_10 = arith.constant 0 : index
    %c0_11 = arith.constant 0 : index
    %c0_12 = arith.constant 0 : index
    %c0_13 = arith.constant 0 : index
    %6 = vector.load %arg1[%c0_10, %c0_11, %c0_12, %c0_13] : memref<1x16x16x64xf32, #tpu.memory_space<vmem>>, vector<1x16x16x64xf32>
    %7 = vector.shape_cast %6 : vector<1x16x16x64xf32> to vector<16x16x64xf32>
    %c8_14 = arith.constant 8 : index
    %c8_15 = arith.constant 8 : index
    %c0_16 = arith.constant 0 : index
    %8 = vector.load %arg7[%c8_14, %c8_15, %c0_16] : memref<32x32x64xf32, #tpu.memory_space<vmem>>, vector<16x16x64xf32>
    tpu.vector_store %arg7[%c8_14, %c8_15, %c0_16], %7 {strides = array<i32>} : memref<32x32x64xf32, #tpu.memory_space<vmem>>, vector<16x16x64xf32>,
    %c7 = arith.constant 7 : index
    %c7_17 = arith.constant 7 : index
    %c0_18 = arith.constant 0 : index
    %9 = vector.load %arg7[%c7, %c7_17, %c0_18] : memref<32x32x64xf32, #tpu.memory_space<vmem>>, vector<16x16x64xf32>
    %c0_19 = arith.constant 0 : index
    %c0_20 = arith.constant 0 : index
    %10 = vector.load %arg2[%c0_19, %c0_20] : memref<64x64xf32, #tpu.memory_space<vmem>>, vector<1x64xf32>
    %11 = vector.shape_cast %10 : vector<1x64xf32> to vector<64xf32>
    %12 = vector.shape_cast %11 : vector<64xf32> to vector<1x1x64xf32>
    %13 = vector.broadcast %12 : vector<1x1x64xf32> to vector<16x16x64xf32>
    %14 = arith.mulf %9, %13 : vector<16x16x64xf32>
    %c7_21 = arith.constant 7 : index
    %c8_22 = arith.constant 8 : index
    %c0_23 = arith.constant 0 : index
    %15 = vector.load %arg7[%c7_21, %c8_22, %c0_23] : memref<32x32x64xf32, #tpu.memory_space<vmem>>, vector<16x16x64xf32>
    %c1 = arith.constant 1 : index
    %c0_24 = arith.constant 0 : index
    %16 = vector.load %arg2[%c1, %c0_24] : memref<64x64xf32, #tpu.memory_space<vmem>>, vector<1x64xf32>
    %17 = vector.shape_cast %16 : vector<1x64xf32> to vector<64xf32>
    %18 = vector.shape_cast %17 : vector<64xf32> to vector<1x1x64xf32>
    %19 = vector.broadcast %18 : vector<1x1x64xf32> to vector<16x16x64xf32>
    %20 = arith.mulf %15, %19 : vector<16x16x64xf32>
    %21 = arith.addf %14, %20 : vector<16x16x64xf32>
    %c7_25 = arith.constant 7 : index
    %c9 = arith.constant 9 : index
    %c0_26 = arith.constant 0 : index
    %22 = vector.load %arg7[%c7_25, %c9, %c0_26] : memref<32x32x64xf32, #tpu.memory_space<vmem>>, vector<16x16x64xf32>
    %c2 = arith.constant 2 : index
    %c0_27 = arith.constant 0 : index
    %23 = vector.load %arg2[%c2, %c0_27] : memref<64x64xf32, #tpu.memory_space<vmem>>, vector<1x64xf32>
    %24 = vector.shape_cast %23 : vector<1x64xf32> to vector<64xf32>
    %25 = vector.shape_cast %24 : vector<64xf32> to vector<1x1x64xf32>
    %26 = vector.broadcast %25 : vector<1x1x64xf32> to vector<16x16x64xf32>
    %27 = arith.mulf %22, %26 : vector<16x16x64xf32>
    %28 = arith.addf %21, %27 : vector<16x16x64xf32>
    %c8_28 = arith.constant 8 : index
    %c7_29 = arith.constant 7 : index
    %c0_30 = arith.constant 0 : index
    %29 = vector.load %arg7[%c8_28, %c7_29, %c0_30] : memref<32x32x64xf32, #tpu.memory_space<vmem>>, vector<16x16x64xf32>
    %c3 = arith.constant 3 : index
    %c0_31 = arith.constant 0 : index
    %30 = vector.load %arg2[%c3, %c0_31] : memref<64x64xf32, #tpu.memory_space<vmem>>, vector<1x64xf32>
    %31 = vector.shape_cast %30 : vector<1x64xf32> to vector<64xf32>
    %32 = vector.shape_cast %31 : vector<64xf32> to vector<1x1x64xf32>
    %33 = vector.broadcast %32 : vector<1x1x64xf32> to vector<16x16x64xf32>
    %34 = arith.mulf %29, %33 : vector<16x16x64xf32>
    %35 = arith.addf %28, %34 : vector<16x16x64xf32>
    %c8_32 = arith.constant 8 : index
    %c8_33 = arith.constant 8 : index
    %c0_34 = arith.constant 0 : index
    %36 = vector.load %arg7[%c8_32, %c8_33, %c0_34] : memref<32x32x64xf32, #tpu.memory_space<vmem>>, vector<16x16x64xf32>
    %c4 = arith.constant 4 : index
    %c0_35 = arith.constant 0 : index
    %37 = vector.load %arg2[%c4, %c0_35] : memref<64x64xf32, #tpu.memory_space<vmem>>, vector<1x64xf32>
    %38 = vector.shape_cast %37 : vector<1x64xf32> to vector<64xf32>
    %39 = vector.shape_cast %38 : vector<64xf32> to vector<1x1x64xf32>
    %40 = vector.broadcast %39 : vector<1x1x64xf32> to vector<16x16x64xf32>
    %41 = arith.mulf %36, %40 : vector<16x16x64xf32>
    %42 = arith.addf %35, %41 : vector<16x16x64xf32>
    %c8_36 = arith.constant 8 : index
    %c9_37 = arith.constant 9 : index
    %c0_38 = arith.constant 0 : index
    %43 = vector.load %arg7[%c8_36, %c9_37, %c0_38] : memref<32x32x64xf32, #tpu.memory_space<vmem>>, vector<16x16x64xf32>
    %c5 = arith.constant 5 : index
    %c0_39 = arith.constant 0 : index
    %44 = vector.load %arg2[%c5, %c0_39] : memref<64x64xf32, #tpu.memory_space<vmem>>, vector<1x64xf32>
    %45 = vector.shape_cast %44 : vector<1x64xf32> to vector<64xf32>
    %46 = vector.shape_cast %45 : vector<64xf32> to vector<1x1x64xf32>
    %47 = vector.broadcast %46 : vector<1x1x64xf32> to vector<16x16x64xf32>
    %48 = arith.mulf %43, %47 : vector<16x16x64xf32>
    %49 = arith.addf %42, %48 : vector<16x16x64xf32>
    %c9_40 = arith.constant 9 : index
    %c7_41 = arith.constant 7 : index
    %c0_42 = arith.constant 0 : index
    %50 = vector.load %arg7[%c9_40, %c7_41, %c0_42] : memref<32x32x64xf32, #tpu.memory_space<vmem>>, vector<16x16x64xf32>
    %c6 = arith.constant 6 : index
    %c0_43 = arith.constant 0 : index
    %51 = vector.load %arg2[%c6, %c0_43] : memref<64x64xf32, #tpu.memory_space<vmem>>, vector<1x64xf32>
    %52 = vector.shape_cast %51 : vector<1x64xf32> to vector<64xf32>
    %53 = vector.shape_cast %52 : vector<64xf32> to vector<1x1x64xf32>
    %54 = vector.broadcast %53 : vector<1x1x64xf32> to vector<16x16x64xf32>
    %55 = arith.mulf %50, %54 : vector<16x16x64xf32>
    %56 = arith.addf %49, %55 : vector<16x16x64xf32>
    %c9_44 = arith.constant 9 : index
    %c8_45 = arith.constant 8 : index
    %c0_46 = arith.constant 0 : index
    %57 = vector.load %arg7[%c9_44, %c8_45, %c0_46] : memref<32x32x64xf32, #tpu.memory_space<vmem>>, vector<16x16x64xf32>
    %c7_47 = arith.constant 7 : index
    %c0_48 = arith.constant 0 : index
    %58 = vector.load %arg2[%c7_47, %c0_48] : memref<64x64xf32, #tpu.memory_space<vmem>>, vector<1x64xf32>
    %59 = vector.shape_cast %58 : vector<1x64xf32> to vector<64xf32>
    %60 = vector.shape_cast %59 : vector<64xf32> to vector<1x1x64xf32>
    %61 = vector.broadcast %60 : vector<1x1x64xf32> to vector<16x16x64xf32>
    %62 = arith.mulf %57, %61 : vector<16x16x64xf32>
    %63 = arith.addf %56, %62 : vector<16x16x64xf32>
    %c9_49 = arith.constant 9 : index
    %c9_50 = arith.constant 9 : index
    %c0_51 = arith.constant 0 : index
    %64 = vector.load %arg7[%c9_49, %c9_50, %c0_51] : memref<32x32x64xf32, #tpu.memory_space<vmem>>, vector<16x16x64xf32>
    %c8_52 = arith.constant 8 : index
    %c0_53 = arith.constant 0 : index
    %65 = vector.load %arg2[%c8_52, %c0_53] : memref<64x64xf32, #tpu.memory_space<vmem>>, vector<1x64xf32>
    %66 = vector.shape_cast %65 : vector<1x64xf32> to vector<64xf32>
    %67 = vector.shape_cast %66 : vector<64xf32> to vector<1x1x64xf32>
    %68 = vector.broadcast %67 : vector<1x1x64xf32> to vector<16x16x64xf32>
    %69 = arith.mulf %64, %68 : vector<16x16x64xf32>
    %70 = arith.addf %63, %69 : vector<16x16x64xf32>
    %c0_54 = arith.constant 0 : index
    %c0_55 = arith.constant 0 : index
    %71 = vector.load %arg3[%c0_54, %c0_55] : memref<8x64xf32, #tpu.memory_space<vmem>>, vector<1x64xf32>
    %72 = vector.shape_cast %71 : vector<1x64xf32> to vector<64xf32>
    %73 = vector.shape_cast %72 : vector<64xf32> to vector<1x1x64xf32>
    %74 = vector.broadcast %73 : vector<1x1x64xf32> to vector<16x16x64xf32>
    %75 = arith.addf %70, %74 : vector<16x16x64xf32>
    %c8_56 = arith.constant 8 : index
    %c8_57 = arith.constant 8 : index
    %c0_58 = arith.constant 0 : index
    %76 = vector.load %arg7[%c8_56, %c8_57, %c0_58] : memref<32x32x64xf32, #tpu.memory_space<vmem>>, vector<16x16x64xf32>
    tpu.vector_store %arg7[%c8_56, %c8_57, %c0_58], %75 {strides = array<i32>} : memref<32x32x64xf32, #tpu.memory_space<vmem>>, vector<16x16x64xf32>,
    %c5_59 = arith.constant 5 : index
    %c5_60 = arith.constant 5 : index
    %c0_61 = arith.constant 0 : index
    %77 = vector.load %arg7[%c5_59, %c5_60, %c0_61] : memref<32x32x64xf32, #tpu.memory_space<vmem>>, vector<16x16x64xf32>
    %c9_62 = arith.constant 9 : index
    %c0_63 = arith.constant 0 : index
    %78 = vector.load %arg2[%c9_62, %c0_63] : memref<64x64xf32, #tpu.memory_space<vmem>>, vector<1x64xf32>
    %79 = vector.shape_cast %78 : vector<1x64xf32> to vector<64xf32>
    %80 = vector.shape_cast %79 : vector<64xf32> to vector<1x1x64xf32>
    %81 = vector.broadcast %80 : vector<1x1x64xf32> to vector<16x16x64xf32>
    %82 = arith.mulf %77, %81 : vector<16x16x64xf32>
    %c5_64 = arith.constant 5 : index
    %c8_65 = arith.constant 8 : index
    %c0_66 = arith.constant 0 : index
    %83 = vector.load %arg7[%c5_64, %c8_65, %c0_66] : memref<32x32x64xf32, #tpu.memory_space<vmem>>, vector<16x16x64xf32>
    %c10 = arith.constant 10 : index
    %c0_67 = arith.constant 0 : index
    %84 = vector.load %arg2[%c10, %c0_67] : memref<64x64xf32, #tpu.memory_space<vmem>>, vector<1x64xf32>
    %85 = vector.shape_cast %84 : vector<1x64xf32> to vector<64xf32>
    %86 = vector.shape_cast %85 : vector<64xf32> to vector<1x1x64xf32>
    %87 = vector.broadcast %86 : vector<1x1x64xf32> to vector<16x16x64xf32>
    %88 = arith.mulf %83, %87 : vector<16x16x64xf32>
    %89 = arith.addf %82, %88 : vector<16x16x64xf32>
    %c5_68 = arith.constant 5 : index
    %c11 = arith.constant 11 : index
    %c0_69 = arith.constant 0 : index
    %90 = vector.load %arg7[%c5_68, %c11, %c0_69] : memref<32x32x64xf32, #tpu.memory_space<vmem>>, vector<16x16x64xf32>
    %c11_70 = arith.constant 11 : index
    %c0_71 = arith.constant 0 : index
    %91 = vector.load %arg2[%c11_70, %c0_71] : memref<64x64xf32, #tpu.memory_space<vmem>>, vector<1x64xf32>
    %92 = vector.shape_cast %91 : vector<1x64xf32> to vector<64xf32>
    %93 = vector.shape_cast %92 : vector<64xf32> to vector<1x1x64xf32>
    %94 = vector.broadcast %93 : vector<1x1x64xf32> to vector<16x16x64xf32>
    %95 = arith.mulf %90, %94 : vector<16x16x64xf32>
    %96 = arith.addf %89, %95 : vector<16x16x64xf32>
    %c8_72 = arith.constant 8 : index
    %c5_73 = arith.constant 5 : index
    %c0_74 = arith.constant 0 : index
    %97 = vector.load %arg7[%c8_72, %c5_73, %c0_74] : memref<32x32x64xf32, #tpu.memory_space<vmem>>, vector<16x16x64xf32>
    %c12 = arith.constant 12 : index
    %c0_75 = arith.constant 0 : index
    %98 = vector.load %arg2[%c12, %c0_75] : memref<64x64xf32, #tpu.memory_space<vmem>>, vector<1x64xf32>
    %99 = vector.shape_cast %98 : vector<1x64xf32> to vector<64xf32>
    %100 = vector.shape_cast %99 : vector<64xf32> to vector<1x1x64xf32>
    %101 = vector.broadcast %100 : vector<1x1x64xf32> to vector<16x16x64xf32>
    %102 = arith.mulf %97, %101 : vector<16x16x64xf32>
    %103 = arith.addf %96, %102 : vector<16x16x64xf32>
    %c8_76 = arith.constant 8 : index
    %c8_77 = arith.constant 8 : index
    %c0_78 = arith.constant 0 : index
    %104 = vector.load %arg7[%c8_76, %c8_77, %c0_78] : memref<32x32x64xf32, #tpu.memory_space<vmem>>, vector<16x16x64xf32>
    %c13 = arith.constant 13 : index
    %c0_79 = arith.constant 0 : index
    %105 = vector.load %arg2[%c13, %c0_79] : memref<64x64xf32, #tpu.memory_space<vmem>>, vector<1x64xf32>
    %106 = vector.shape_cast %105 : vector<1x64xf32> to vector<64xf32>
    %107 = vector.shape_cast %106 : vector<64xf32> to vector<1x1x64xf32>
    %108 = vector.broadcast %107 : vector<1x1x64xf32> to vector<16x16x64xf32>
    %109 = arith.mulf %104, %108 : vector<16x16x64xf32>
    %110 = arith.addf %103, %109 : vector<16x16x64xf32>
    %c8_80 = arith.constant 8 : index
    %c11_81 = arith.constant 11 : index
    %c0_82 = arith.constant 0 : index
    %111 = vector.load %arg7[%c8_80, %c11_81, %c0_82] : memref<32x32x64xf32, #tpu.memory_space<vmem>>, vector<16x16x64xf32>
    %c14 = arith.constant 14 : index
    %c0_83 = arith.constant 0 : index
    %112 = vector.load %arg2[%c14, %c0_83] : memref<64x64xf32, #tpu.memory_space<vmem>>, vector<1x64xf32>
    %113 = vector.shape_cast %112 : vector<1x64xf32> to vector<64xf32>
    %114 = vector.shape_cast %113 : vector<64xf32> to vector<1x1x64xf32>
    %115 = vector.broadcast %114 : vector<1x1x64xf32> to vector<16x16x64xf32>
    %116 = arith.mulf %111, %115 : vector<16x16x64xf32>
    %117 = arith.addf %110, %116 : vector<16x16x64xf32>
    %c11_84 = arith.constant 11 : index
    %c5_85 = arith.constant 5 : index
    %c0_86 = arith.constant 0 : index
    %118 = vector.load %arg7[%c11_84, %c5_85, %c0_86] : memref<32x32x64xf32, #tpu.memory_space<vmem>>, vector<16x16x64xf32>
    %c15 = arith.constant 15 : index
    %c0_87 = arith.constant 0 : index
    %119 = vector.load %arg2[%c15, %c0_87] : memref<64x64xf32, #tpu.memory_space<vmem>>, vector<1x64xf32>
    %120 = vector.shape_cast %119 : vector<1x64xf32> to vector<64xf32>
    %121 = vector.shape_cast %120 : vector<64xf32> to vector<1x1x64xf32>
    %122 = vector.broadcast %121 : vector<1x1x64xf32> to vector<16x16x64xf32>
    %123 = arith.mulf %118, %122 : vector<16x16x64xf32>
    %124 = arith.addf %117, %123 : vector<16x16x64xf32>
    %c11_88 = arith.constant 11 : index
    %c8_89 = arith.constant 8 : index
    %c0_90 = arith.constant 0 : index
    %125 = vector.load %arg7[%c11_88, %c8_89, %c0_90] : memref<32x32x64xf32, #tpu.memory_space<vmem>>, vector<16x16x64xf32>
    %c16 = arith.constant 16 : index
    %c0_91 = arith.constant 0 : index
    %126 = vector.load %arg2[%c16, %c0_91] : memref<64x64xf32, #tpu.memory_space<vmem>>, vector<1x64xf32>
    %127 = vector.shape_cast %126 : vector<1x64xf32> to vector<64xf32>
    %128 = vector.shape_cast %127 : vector<64xf32> to vector<1x1x64xf32>
    %129 = vector.broadcast %128 : vector<1x1x64xf32> to vector<16x16x64xf32>
    %130 = arith.mulf %125, %129 : vector<16x16x64xf32>
    %131 = arith.addf %124, %130 : vector<16x16x64xf32>
    %c11_92 = arith.constant 11 : index
    %c11_93 = arith.constant 11 : index
    %c0_94 = arith.constant 0 : index
    %132 = vector.load %arg7[%c11_92, %c11_93, %c0_94] : memref<32x32x64xf32, #tpu.memory_space<vmem>>, vector<16x16x64xf32>
    %c17 = arith.constant 17 : index
    %c0_95 = arith.constant 0 : index
    %133 = vector.load %arg2[%c17, %c0_95] : memref<64x64xf32, #tpu.memory_space<vmem>>, vector<1x64xf32>
    %134 = vector.shape_cast %133 : vector<1x64xf32> to vector<64xf32>
    %135 = vector.shape_cast %134 : vector<64xf32> to vector<1x1x64xf32>
    %136 = vector.broadcast %135 : vector<1x1x64xf32> to vector<16x16x64xf32>
    %137 = arith.mulf %132, %136 : vector<16x16x64xf32>
    %138 = arith.addf %131, %137 : vector<16x16x64xf32>
    %c1_96 = arith.constant 1 : index
    %c0_97 = arith.constant 0 : index
    %139 = vector.load %arg3[%c1_96, %c0_97] : memref<8x64xf32, #tpu.memory_space<vmem>>, vector<1x64xf32>
    %140 = vector.shape_cast %139 : vector<1x64xf32> to vector<64xf32>
    %141 = vector.shape_cast %140 : vector<64xf32> to vector<1x1x64xf32>
    %142 = vector.broadcast %141 : vector<1x1x64xf32> to vector<16x16x64xf32>
    %143 = arith.addf %138, %142 : vector<16x16x64xf32>
    %144 = arith.addf %75, %143 : vector<16x16x64xf32>
    %c8_98 = arith.constant 8 : index
    %c8_99 = arith.constant 8 : index
    %c0_100 = arith.constant 0 : index
    %145 = vector.load %arg7[%c8_98, %c8_99, %c0_100] : memref<32x32x64xf32, #tpu.memory_space<vmem>>, vector<16x16x64xf32>
    tpu.vector_store %arg7[%c8_98, %c8_99, %c0_100], %143 {strides = array<i32>} : memref<32x32x64xf32, #tpu.memory_space<vmem>>, vector<16x16x64xf32>,
    %c8_101 = arith.constant 8 : index
    %c6_102 = arith.constant 6 : index
    %c0_103 = arith.constant 0 : index
    %146 = vector.load %arg7[%c8_101, %c6_102, %c0_103] : memref<32x32x64xf32, #tpu.memory_space<vmem>>, vector<16x16x64xf32>
    %c18 = arith.constant 18 : index
    %c0_104 = arith.constant 0 : index
    %147 = vector.load %arg2[%c18, %c0_104] : memref<64x64xf32, #tpu.memory_space<vmem>>, vector<1x64xf32>
    %148 = vector.shape_cast %147 : vector<1x64xf32> to vector<64xf32>
    %149 = vector.shape_cast %148 : vector<64xf32> to vector<1x1x64xf32>
    %150 = vector.broadcast %149 : vector<1x1x64xf32> to vector<16x16x64xf32>
    %151 = arith.mulf %146, %150 : vector<16x16x64xf32>
    %c8_105 = arith.constant 8 : index
    %c7_106 = arith.constant 7 : index
    %c0_107 = arith.constant 0 : index
    %152 = vector.load %arg7[%c8_105, %c7_106, %c0_107] : memref<32x32x64xf32, #tpu.memory_space<vmem>>, vector<16x16x64xf32>
    %c19 = arith.constant 19 : index
    %c0_108 = arith.constant 0 : index
    %153 = vector.load %arg2[%c19, %c0_108] : memref<64x64xf32, #tpu.memory_space<vmem>>, vector<1x64xf32>
    %154 = vector.shape_cast %153 : vector<1x64xf32> to vector<64xf32>
    %155 = vector.shape_cast %154 : vector<64xf32> to vector<1x1x64xf32>
    %156 = vector.broadcast %155 : vector<1x1x64xf32> to vector<16x16x64xf32>
    %157 = arith.mulf %152, %156 : vector<16x16x64xf32>
    %158 = arith.addf %151, %157 : vector<16x16x64xf32>
    %c8_109 = arith.constant 8 : index
    %c8_110 = arith.constant 8 : index
    %c0_111 = arith.constant 0 : index
    %159 = vector.load %arg7[%c8_109, %c8_110, %c0_111] : memref<32x32x64xf32, #tpu.memory_space<vmem>>, vector<16x16x64xf32>
    %c20 = arith.constant 20 : index
    %c0_112 = arith.constant 0 : index
    %160 = vector.load %arg2[%c20, %c0_112] : memref<64x64xf32, #tpu.memory_space<vmem>>, vector<1x64xf32>
    %161 = vector.shape_cast %160 : vector<1x64xf32> to vector<64xf32>
    %162 = vector.shape_cast %161 : vector<64xf32> to vector<1x1x64xf32>
    %163 = vector.broadcast %162 : vector<1x1x64xf32> to vector<16x16x64xf32>
    %164 = arith.mulf %159, %163 : vector<16x16x64xf32>
    %165 = arith.addf %158, %164 : vector<16x16x64xf32>
    %c8_113 = arith.constant 8 : index
    %c9_114 = arith.constant 9 : index
    %c0_115 = arith.constant 0 : index
    %166 = vector.load %arg7[%c8_113, %c9_114, %c0_115] : memref<32x32x64xf32, #tpu.memory_space<vmem>>, vector<16x16x64xf32>
    %c21 = arith.constant 21 : index
    %c0_116 = arith.constant 0 : index
    %167 = vector.load %arg2[%c21, %c0_116] : memref<64x64xf32, #tpu.memory_space<vmem>>, vector<1x64xf32>
    %168 = vector.shape_cast %167 : vector<1x64xf32> to vector<64xf32>
    %169 = vector.shape_cast %168 : vector<64xf32> to vector<1x1x64xf32>
    %170 = vector.broadcast %169 : vector<1x1x64xf32> to vector<16x16x64xf32>
    %171 = arith.mulf %166, %170 : vector<16x16x64xf32>
    %172 = arith.addf %165, %171 : vector<16x16x64xf32>
    %c8_117 = arith.constant 8 : index
    %c10_118 = arith.constant 10 : index
    %c0_119 = arith.constant 0 : index
    %173 = vector.load %arg7[%c8_117, %c10_118, %c0_119] : memref<32x32x64xf32, #tpu.memory_space<vmem>>, vector<16x16x64xf32>
    %c22 = arith.constant 22 : index
    %c0_120 = arith.constant 0 : index
    %174 = vector.load %arg2[%c22, %c0_120] : memref<64x64xf32, #tpu.memory_space<vmem>>, vector<1x64xf32>
    %175 = vector.shape_cast %174 : vector<1x64xf32> to vector<64xf32>
    %176 = vector.shape_cast %175 : vector<64xf32> to vector<1x1x64xf32>
    %177 = vector.broadcast %176 : vector<1x1x64xf32> to vector<16x16x64xf32>
    %178 = arith.mulf %173, %177 : vector<16x16x64xf32>
    %179 = arith.addf %172, %178 : vector<16x16x64xf32>
    %c2_121 = arith.constant 2 : index
    %c0_122 = arith.constant 0 : index
    %180 = vector.load %arg3[%c2_121, %c0_122] : memref<8x64xf32, #tpu.memory_space<vmem>>, vector<1x64xf32>
    %181 = vector.shape_cast %180 : vector<1x64xf32> to vector<64xf32>
    %182 = vector.shape_cast %181 : vector<64xf32> to vector<1x1x64xf32>
    %183 = vector.broadcast %182 : vector<1x1x64xf32> to vector<16x16x64xf32>
    %184 = arith.addf %179, %183 : vector<16x16x64xf32>
    %c8_123 = arith.constant 8 : index
    %c5_124 = arith.constant 5 : index
    %c0_125 = arith.constant 0 : index
    %185 = vector.load %arg7[%c8_123, %c5_124, %c0_125] : memref<32x32x64xf32, #tpu.memory_space<vmem>>, vector<16x16x64xf32>
    %c28 = arith.constant 28 : index
    %c0_126 = arith.constant 0 : index
    %186 = vector.load %arg2[%c28, %c0_126] : memref<64x64xf32, #tpu.memory_space<vmem>>, vector<1x64xf32>
    %187 = vector.shape_cast %186 : vector<1x64xf32> to vector<64xf32>
    %188 = vector.shape_cast %187 : vector<64xf32> to vector<1x1x64xf32>
    %189 = vector.broadcast %188 : vector<1x1x64xf32> to vector<16x16x64xf32>
    %190 = arith.mulf %185, %189 : vector<16x16x64xf32>
    %c8_127 = arith.constant 8 : index
    %c6_128 = arith.constant 6 : index
    %c0_129 = arith.constant 0 : index
    %191 = vector.load %arg7[%c8_127, %c6_128, %c0_129] : memref<32x32x64xf32, #tpu.memory_space<vmem>>, vector<16x16x64xf32>
    %c29 = arith.constant 29 : index
    %c0_130 = arith.constant 0 : index
    %192 = vector.load %arg2[%c29, %c0_130] : memref<64x64xf32, #tpu.memory_space<vmem>>, vector<1x64xf32>
    %193 = vector.shape_cast %192 : vector<1x64xf32> to vector<64xf32>
    %194 = vector.shape_cast %193 : vector<64xf32> to vector<1x1x64xf32>
    %195 = vector.broadcast %194 : vector<1x1x64xf32> to vector<16x16x64xf32>
    %196 = arith.mulf %191, %195 : vector<16x16x64xf32>
    %197 = arith.addf %190, %196 : vector<16x16x64xf32>
    %c8_131 = arith.constant 8 : index
    %c7_132 = arith.constant 7 : index
    %c0_133 = arith.constant 0 : index
    %198 = vector.load %arg7[%c8_131, %c7_132, %c0_133] : memref<32x32x64xf32, #tpu.memory_space<vmem>>, vector<16x16x64xf32>
    %c30 = arith.constant 30 : index
    %c0_134 = arith.constant 0 : index
    %199 = vector.load %arg2[%c30, %c0_134] : memref<64x64xf32, #tpu.memory_space<vmem>>, vector<1x64xf32>
    %200 = vector.shape_cast %199 : vector<1x64xf32> to vector<64xf32>
    %201 = vector.shape_cast %200 : vector<64xf32> to vector<1x1x64xf32>
    %202 = vector.broadcast %201 : vector<1x1x64xf32> to vector<16x16x64xf32>
    %203 = arith.mulf %198, %202 : vector<16x16x64xf32>
    %204 = arith.addf %197, %203 : vector<16x16x64xf32>
    %c8_135 = arith.constant 8 : index
    %c8_136 = arith.constant 8 : index
    %c0_137 = arith.constant 0 : index
    %205 = vector.load %arg7[%c8_135, %c8_136, %c0_137] : memref<32x32x64xf32, #tpu.memory_space<vmem>>, vector<16x16x64xf32>
    %c31 = arith.constant 31 : index
    %c0_138 = arith.constant 0 : index
    %206 = vector.load %arg2[%c31, %c0_138] : memref<64x64xf32, #tpu.memory_space<vmem>>, vector<1x64xf32>
    %207 = vector.shape_cast %206 : vector<1x64xf32> to vector<64xf32>
    %208 = vector.shape_cast %207 : vector<64xf32> to vector<1x1x64xf32>
    %209 = vector.broadcast %208 : vector<1x1x64xf32> to vector<16x16x64xf32>
    %210 = arith.mulf %205, %209 : vector<16x16x64xf32>
    %211 = arith.addf %204, %210 : vector<16x16x64xf32>
    %c8_139 = arith.constant 8 : index
    %c9_140 = arith.constant 9 : index
    %c0_141 = arith.constant 0 : index
    %212 = vector.load %arg7[%c8_139, %c9_140, %c0_141] : memref<32x32x64xf32, #tpu.memory_space<vmem>>, vector<16x16x64xf32>
    %c32 = arith.constant 32 : index
    %c0_142 = arith.constant 0 : index
    %213 = vector.load %arg2[%c32, %c0_142] : memref<64x64xf32, #tpu.memory_space<vmem>>, vector<1x64xf32>
    %214 = vector.shape_cast %213 : vector<1x64xf32> to vector<64xf32>
    %215 = vector.shape_cast %214 : vector<64xf32> to vector<1x1x64xf32>
    %216 = vector.broadcast %215 : vector<1x1x64xf32> to vector<16x16x64xf32>
    %217 = arith.mulf %212, %216 : vector<16x16x64xf32>
    %218 = arith.addf %211, %217 : vector<16x16x64xf32>
    %c8_143 = arith.constant 8 : index
    %c10_144 = arith.constant 10 : index
    %c0_145 = arith.constant 0 : index
    %219 = vector.load %arg7[%c8_143, %c10_144, %c0_145] : memref<32x32x64xf32, #tpu.memory_space<vmem>>, vector<16x16x64xf32>
    %c33 = arith.constant 33 : index
    %c0_146 = arith.constant 0 : index
    %220 = vector.load %arg2[%c33, %c0_146] : memref<64x64xf32, #tpu.memory_space<vmem>>, vector<1x64xf32>
    %221 = vector.shape_cast %220 : vector<1x64xf32> to vector<64xf32>
    %222 = vector.shape_cast %221 : vector<64xf32> to vector<1x1x64xf32>
    %223 = vector.broadcast %222 : vector<1x1x64xf32> to vector<16x16x64xf32>
    %224 = arith.mulf %219, %223 : vector<16x16x64xf32>
    %225 = arith.addf %218, %224 : vector<16x16x64xf32>
    %c8_147 = arith.constant 8 : index
    %c11_148 = arith.constant 11 : index
    %c0_149 = arith.constant 0 : index
    %226 = vector.load %arg7[%c8_147, %c11_148, %c0_149] : memref<32x32x64xf32, #tpu.memory_space<vmem>>, vector<16x16x64xf32>
    %c34 = arith.constant 34 : index
    %c0_150 = arith.constant 0 : index
    %227 = vector.load %arg2[%c34, %c0_150] : memref<64x64xf32, #tpu.memory_space<vmem>>, vector<1x64xf32>
    %228 = vector.shape_cast %227 : vector<1x64xf32> to vector<64xf32>
    %229 = vector.shape_cast %228 : vector<64xf32> to vector<1x1x64xf32>
    %230 = vector.broadcast %229 : vector<1x1x64xf32> to vector<16x16x64xf32>
    %231 = arith.mulf %226, %230 : vector<16x16x64xf32>
    %232 = arith.addf %225, %231 : vector<16x16x64xf32>
    %c4_151 = arith.constant 4 : index
    %c0_152 = arith.constant 0 : index
    %233 = vector.load %arg3[%c4_151, %c0_152] : memref<8x64xf32, #tpu.memory_space<vmem>>, vector<1x64xf32>
    %234 = vector.shape_cast %233 : vector<1x64xf32> to vector<64xf32>
    %235 = vector.shape_cast %234 : vector<64xf32> to vector<1x1x64xf32>
    %236 = vector.broadcast %235 : vector<1x1x64xf32> to vector<16x16x64xf32>
    %237 = arith.addf %232, %236 : vector<16x16x64xf32>
    %c8_153 = arith.constant 8 : index
    %c3_154 = arith.constant 3 : index
    %c0_155 = arith.constant 0 : index
    %238 = vector.load %arg7[%c8_153, %c3_154, %c0_155] : memref<32x32x64xf32, #tpu.memory_space<vmem>>, vector<16x16x64xf32>
    %c42 = arith.constant 42 : index
    %c0_156 = arith.constant 0 : index
    %239 = vector.load %arg2[%c42, %c0_156] : memref<64x64xf32, #tpu.memory_space<vmem>>, vector<1x64xf32>
    %240 = vector.shape_cast %239 : vector<1x64xf32> to vector<64xf32>
    %241 = vector.shape_cast %240 : vector<64xf32> to vector<1x1x64xf32>
    %242 = vector.broadcast %241 : vector<1x1x64xf32> to vector<16x16x64xf32>
    %243 = arith.mulf %238, %242 : vector<16x16x64xf32>
    %c8_157 = arith.constant 8 : index
    %c4_158 = arith.constant 4 : index
    %c0_159 = arith.constant 0 : index
    %244 = vector.load %arg7[%c8_157, %c4_158, %c0_159] : memref<32x32x64xf32, #tpu.memory_space<vmem>>, vector<16x16x64xf32>
    %c43 = arith.constant 43 : index
    %c0_160 = arith.constant 0 : index
    %245 = vector.load %arg2[%c43, %c0_160] : memref<64x64xf32, #tpu.memory_space<vmem>>, vector<1x64xf32>
    %246 = vector.shape_cast %245 : vector<1x64xf32> to vector<64xf32>
    %247 = vector.shape_cast %246 : vector<64xf32> to vector<1x1x64xf32>
    %248 = vector.broadcast %247 : vector<1x1x64xf32> to vector<16x16x64xf32>
    %249 = arith.mulf %244, %248 : vector<16x16x64xf32>
    %250 = arith.addf %243, %249 : vector<16x16x64xf32>
    %c8_161 = arith.constant 8 : index
    %c5_162 = arith.constant 5 : index
    %c0_163 = arith.constant 0 : index
    %251 = vector.load %arg7[%c8_161, %c5_162, %c0_163] : memref<32x32x64xf32, #tpu.memory_space<vmem>>, vector<16x16x64xf32>
    %c44 = arith.constant 44 : index
    %c0_164 = arith.constant 0 : index
    %252 = vector.load %arg2[%c44, %c0_164] : memref<64x64xf32, #tpu.memory_space<vmem>>, vector<1x64xf32>
    %253 = vector.shape_cast %252 : vector<1x64xf32> to vector<64xf32>
    %254 = vector.shape_cast %253 : vector<64xf32> to vector<1x1x64xf32>
    %255 = vector.broadcast %254 : vector<1x1x64xf32> to vector<16x16x64xf32>
    %256 = arith.mulf %251, %255 : vector<16x16x64xf32>
    %257 = arith.addf %250, %256 : vector<16x16x64xf32>
    %c8_165 = arith.constant 8 : index
    %c6_166 = arith.constant 6 : index
    %c0_167 = arith.constant 0 : index
    %258 = vector.load %arg7[%c8_165, %c6_166, %c0_167] : memref<32x32x64xf32, #tpu.memory_space<vmem>>, vector<16x16x64xf32>
    %c45 = arith.constant 45 : index
    %c0_168 = arith.constant 0 : index
    %259 = vector.load %arg2[%c45, %c0_168] : memref<64x64xf32, #tpu.memory_space<vmem>>, vector<1x64xf32>
    %260 = vector.shape_cast %259 : vector<1x64xf32> to vector<64xf32>
    %261 = vector.shape_cast %260 : vector<64xf32> to vector<1x1x64xf32>
    %262 = vector.broadcast %261 : vector<1x1x64xf32> to vector<16x16x64xf32>
    %263 = arith.mulf %258, %262 : vector<16x16x64xf32>
    %264 = arith.addf %257, %263 : vector<16x16x64xf32>
    %c8_169 = arith.constant 8 : index
    %c7_170 = arith.constant 7 : index
    %c0_171 = arith.constant 0 : index
    %265 = vector.load %arg7[%c8_169, %c7_170, %c0_171] : memref<32x32x64xf32, #tpu.memory_space<vmem>>, vector<16x16x64xf32>
    %c46 = arith.constant 46 : index
    %c0_172 = arith.constant 0 : index
    %266 = vector.load %arg2[%c46, %c0_172] : memref<64x64xf32, #tpu.memory_space<vmem>>, vector<1x64xf32>
    %267 = vector.shape_cast %266 : vector<1x64xf32> to vector<64xf32>
    %268 = vector.shape_cast %267 : vector<64xf32> to vector<1x1x64xf32>
    %269 = vector.broadcast %268 : vector<1x1x64xf32> to vector<16x16x64xf32>
    %270 = arith.mulf %265, %269 : vector<16x16x64xf32>
    %271 = arith.addf %264, %270 : vector<16x16x64xf32>
    %c8_173 = arith.constant 8 : index
    %c8_174 = arith.constant 8 : index
    %c0_175 = arith.constant 0 : index
    %272 = vector.load %arg7[%c8_173, %c8_174, %c0_175] : memref<32x32x64xf32, #tpu.memory_space<vmem>>, vector<16x16x64xf32>
    %c47 = arith.constant 47 : index
    %c0_176 = arith.constant 0 : index
    %273 = vector.load %arg2[%c47, %c0_176] : memref<64x64xf32, #tpu.memory_space<vmem>>, vector<1x64xf32>
    %274 = vector.shape_cast %273 : vector<1x64xf32> to vector<64xf32>
    %275 = vector.shape_cast %274 : vector<64xf32> to vector<1x1x64xf32>
    %276 = vector.broadcast %275 : vector<1x1x64xf32> to vector<16x16x64xf32>
    %277 = arith.mulf %272, %276 : vector<16x16x64xf32>
    %278 = arith.addf %271, %277 : vector<16x16x64xf32>
    %c8_177 = arith.constant 8 : index
    %c9_178 = arith.constant 9 : index
    %c0_179 = arith.constant 0 : index
    %279 = vector.load %arg7[%c8_177, %c9_178, %c0_179] : memref<32x32x64xf32, #tpu.memory_space<vmem>>, vector<16x16x64xf32>
    %c48 = arith.constant 48 : index
    %c0_180 = arith.constant 0 : index
    %280 = vector.load %arg2[%c48, %c0_180] : memref<64x64xf32, #tpu.memory_space<vmem>>, vector<1x64xf32>
    %281 = vector.shape_cast %280 : vector<1x64xf32> to vector<64xf32>
    %282 = vector.shape_cast %281 : vector<64xf32> to vector<1x1x64xf32>
    %283 = vector.broadcast %282 : vector<1x1x64xf32> to vector<16x16x64xf32>
    %284 = arith.mulf %279, %283 : vector<16x16x64xf32>
    %285 = arith.addf %278, %284 : vector<16x16x64xf32>
    %c8_181 = arith.constant 8 : index
    %c10_182 = arith.constant 10 : index
    %c0_183 = arith.constant 0 : index
    %286 = vector.load %arg7[%c8_181, %c10_182, %c0_183] : memref<32x32x64xf32, #tpu.memory_space<vmem>>, vector<16x16x64xf32>
    %c49 = arith.constant 49 : index
    %c0_184 = arith.constant 0 : index
    %287 = vector.load %arg2[%c49, %c0_184] : memref<64x64xf32, #tpu.memory_space<vmem>>, vector<1x64xf32>
    %288 = vector.shape_cast %287 : vector<1x64xf32> to vector<64xf32>
    %289 = vector.shape_cast %288 : vector<64xf32> to vector<1x1x64xf32>
    %290 = vector.broadcast %289 : vector<1x1x64xf32> to vector<16x16x64xf32>
    %291 = arith.mulf %286, %290 : vector<16x16x64xf32>
    %292 = arith.addf %285, %291 : vector<16x16x64xf32>
    %c8_185 = arith.constant 8 : index
    %c11_186 = arith.constant 11 : index
    %c0_187 = arith.constant 0 : index
    %293 = vector.load %arg7[%c8_185, %c11_186, %c0_187] : memref<32x32x64xf32, #tpu.memory_space<vmem>>, vector<16x16x64xf32>
    %c50 = arith.constant 50 : index
    %c0_188 = arith.constant 0 : index
    %294 = vector.load %arg2[%c50, %c0_188] : memref<64x64xf32, #tpu.memory_space<vmem>>, vector<1x64xf32>
    %295 = vector.shape_cast %294 : vector<1x64xf32> to vector<64xf32>
    %296 = vector.shape_cast %295 : vector<64xf32> to vector<1x1x64xf32>
    %297 = vector.broadcast %296 : vector<1x1x64xf32> to vector<16x16x64xf32>
    %298 = arith.mulf %293, %297 : vector<16x16x64xf32>
    %299 = arith.addf %292, %298 : vector<16x16x64xf32>
    %c8_189 = arith.constant 8 : index
    %c12_190 = arith.constant 12 : index
    %c0_191 = arith.constant 0 : index
    %300 = vector.load %arg7[%c8_189, %c12_190, %c0_191] : memref<32x32x64xf32, #tpu.memory_space<vmem>>, vector<16x16x64xf32>
    %c51 = arith.constant 51 : index
    %c0_192 = arith.constant 0 : index
    %301 = vector.load %arg2[%c51, %c0_192] : memref<64x64xf32, #tpu.memory_space<vmem>>, vector<1x64xf32>
    %302 = vector.shape_cast %301 : vector<1x64xf32> to vector<64xf32>
    %303 = vector.shape_cast %302 : vector<64xf32> to vector<1x1x64xf32>
    %304 = vector.broadcast %303 : vector<1x1x64xf32> to vector<16x16x64xf32>
    %305 = arith.mulf %300, %304 : vector<16x16x64xf32>
    %306 = arith.addf %299, %305 : vector<16x16x64xf32>
    %c8_193 = arith.constant 8 : index
    %c13_194 = arith.constant 13 : index
    %c0_195 = arith.constant 0 : index
    %307 = vector.load %arg7[%c8_193, %c13_194, %c0_195] : memref<32x32x64xf32, #tpu.memory_space<vmem>>, vector<16x16x64xf32>
    %c52 = arith.constant 52 : index
    %c0_196 = arith.constant 0 : index
    %308 = vector.load %arg2[%c52, %c0_196] : memref<64x64xf32, #tpu.memory_space<vmem>>, vector<1x64xf32>
    %309 = vector.shape_cast %308 : vector<1x64xf32> to vector<64xf32>
    %310 = vector.shape_cast %309 : vector<64xf32> to vector<1x1x64xf32>
    %311 = vector.broadcast %310 : vector<1x1x64xf32> to vector<16x16x64xf32>
    %312 = arith.mulf %307, %311 : vector<16x16x64xf32>
    %313 = arith.addf %306, %312 : vector<16x16x64xf32>
    %c6_197 = arith.constant 6 : index
    %c0_198 = arith.constant 0 : index
    %314 = vector.load %arg3[%c6_197, %c0_198] : memref<8x64xf32, #tpu.memory_space<vmem>>, vector<1x64xf32>
    %315 = vector.shape_cast %314 : vector<1x64xf32> to vector<64xf32>
    %316 = vector.shape_cast %315 : vector<64xf32> to vector<1x1x64xf32>
    %317 = vector.broadcast %316 : vector<1x1x64xf32> to vector<16x16x64xf32>
    %318 = arith.addf %313, %317 : vector<16x16x64xf32>
    %c8_199 = arith.constant 8 : index
    %c8_200 = arith.constant 8 : index
    %c0_201 = arith.constant 0 : index
    %319 = vector.load %arg7[%c8_199, %c8_200, %c0_201] : memref<32x32x64xf32, #tpu.memory_space<vmem>>, vector<16x16x64xf32>
    tpu.vector_store %arg7[%c8_199, %c8_200, %c0_201], %184 {strides = array<i32>} : memref<32x32x64xf32, #tpu.memory_space<vmem>>, vector<16x16x64xf32>,
    %c6_202 = arith.constant 6 : index
    %c8_203 = arith.constant 8 : index
    %c0_204 = arith.constant 0 : index
    %320 = vector.load %arg7[%c6_202, %c8_203, %c0_204] : memref<32x32x64xf32, #tpu.memory_space<vmem>>, vector<16x16x64xf32>
    %c23 = arith.constant 23 : index
    %c0_205 = arith.constant 0 : index
    %321 = vector.load %arg2[%c23, %c0_205] : memref<64x64xf32, #tpu.memory_space<vmem>>, vector<1x64xf32>
    %322 = vector.shape_cast %321 : vector<1x64xf32> to vector<64xf32>
    %323 = vector.shape_cast %322 : vector<64xf32> to vector<1x1x64xf32>
    %324 = vector.broadcast %323 : vector<1x1x64xf32> to vector<16x16x64xf32>
    %325 = arith.mulf %320, %324 : vector<16x16x64xf32>
    %c7_206 = arith.constant 7 : index
    %c8_207 = arith.constant 8 : index
    %c0_208 = arith.constant 0 : index
    %326 = vector.load %arg7[%c7_206, %c8_207, %c0_208] : memref<32x32x64xf32, #tpu.memory_space<vmem>>, vector<16x16x64xf32>
    %c24_209 = arith.constant 24 : index
    %c0_210 = arith.constant 0 : index
    %327 = vector.load %arg2[%c24_209, %c0_210] : memref<64x64xf32, #tpu.memory_space<vmem>>, vector<1x64xf32>
    %328 = vector.shape_cast %327 : vector<1x64xf32> to vector<64xf32>
    %329 = vector.shape_cast %328 : vector<64xf32> to vector<1x1x64xf32>
    %330 = vector.broadcast %329 : vector<1x1x64xf32> to vector<16x16x64xf32>
    %331 = arith.mulf %326, %330 : vector<16x16x64xf32>
    %332 = arith.addf %325, %331 : vector<16x16x64xf32>
    %c8_211 = arith.constant 8 : index
    %c8_212 = arith.constant 8 : index
    %c0_213 = arith.constant 0 : index
    %333 = vector.load %arg7[%c8_211, %c8_212, %c0_213] : memref<32x32x64xf32, #tpu.memory_space<vmem>>, vector<16x16x64xf32>
    %c25 = arith.constant 25 : index
    %c0_214 = arith.constant 0 : index
    %334 = vector.load %arg2[%c25, %c0_214] : memref<64x64xf32, #tpu.memory_space<vmem>>, vector<1x64xf32>
    %335 = vector.shape_cast %334 : vector<1x64xf32> to vector<64xf32>
    %336 = vector.shape_cast %335 : vector<64xf32> to vector<1x1x64xf32>
    %337 = vector.broadcast %336 : vector<1x1x64xf32> to vector<16x16x64xf32>
    %338 = arith.mulf %333, %337 : vector<16x16x64xf32>
    %339 = arith.addf %332, %338 : vector<16x16x64xf32>
    %c9_215 = arith.constant 9 : index
    %c8_216 = arith.constant 8 : index
    %c0_217 = arith.constant 0 : index
    %340 = vector.load %arg7[%c9_215, %c8_216, %c0_217] : memref<32x32x64xf32, #tpu.memory_space<vmem>>, vector<16x16x64xf32>
    %c26 = arith.constant 26 : index
    %c0_218 = arith.constant 0 : index
    %341 = vector.load %arg2[%c26, %c0_218] : memref<64x64xf32, #tpu.memory_space<vmem>>, vector<1x64xf32>
    %342 = vector.shape_cast %341 : vector<1x64xf32> to vector<64xf32>
    %343 = vector.shape_cast %342 : vector<64xf32> to vector<1x1x64xf32>
    %344 = vector.broadcast %343 : vector<1x1x64xf32> to vector<16x16x64xf32>
    %345 = arith.mulf %340, %344 : vector<16x16x64xf32>
    %346 = arith.addf %339, %345 : vector<16x16x64xf32>
    %c10_219 = arith.constant 10 : index
    %c8_220 = arith.constant 8 : index
    %c0_221 = arith.constant 0 : index
    %347 = vector.load %arg7[%c10_219, %c8_220, %c0_221] : memref<32x32x64xf32, #tpu.memory_space<vmem>>, vector<16x16x64xf32>
    %c27 = arith.constant 27 : index
    %c0_222 = arith.constant 0 : index
    %348 = vector.load %arg2[%c27, %c0_222] : memref<64x64xf32, #tpu.memory_space<vmem>>, vector<1x64xf32>
    %349 = vector.shape_cast %348 : vector<1x64xf32> to vector<64xf32>
    %350 = vector.shape_cast %349 : vector<64xf32> to vector<1x1x64xf32>
    %351 = vector.broadcast %350 : vector<1x1x64xf32> to vector<16x16x64xf32>
    %352 = arith.mulf %347, %351 : vector<16x16x64xf32>
    %353 = arith.addf %346, %352 : vector<16x16x64xf32>
    %c3_223 = arith.constant 3 : index
    %c0_224 = arith.constant 0 : index
    %354 = vector.load %arg3[%c3_223, %c0_224] : memref<8x64xf32, #tpu.memory_space<vmem>>, vector<1x64xf32>
    %355 = vector.shape_cast %354 : vector<1x64xf32> to vector<64xf32>
    %356 = vector.shape_cast %355 : vector<64xf32> to vector<1x1x64xf32>
    %357 = vector.broadcast %356 : vector<1x1x64xf32> to vector<16x16x64xf32>
    %358 = arith.addf %353, %357 : vector<16x16x64xf32>
    %359 = arith.addf %144, %358 : vector<16x16x64xf32>
    %c8_225 = arith.constant 8 : index
    %c8_226 = arith.constant 8 : index
    %c0_227 = arith.constant 0 : index
    %360 = vector.load %arg7[%c8_225, %c8_226, %c0_227] : memref<32x32x64xf32, #tpu.memory_space<vmem>>, vector<16x16x64xf32>
    tpu.vector_store %arg7[%c8_225, %c8_226, %c0_227], %237 {strides = array<i32>} : memref<32x32x64xf32, #tpu.memory_space<vmem>>, vector<16x16x64xf32>,
    %c5_228 = arith.constant 5 : index
    %c8_229 = arith.constant 8 : index
    %c0_230 = arith.constant 0 : index
    %361 = vector.load %arg7[%c5_228, %c8_229, %c0_230] : memref<32x32x64xf32, #tpu.memory_space<vmem>>, vector<16x16x64xf32>
    %c35 = arith.constant 35 : index
    %c0_231 = arith.constant 0 : index
    %362 = vector.load %arg2[%c35, %c0_231] : memref<64x64xf32, #tpu.memory_space<vmem>>, vector<1x64xf32>
    %363 = vector.shape_cast %362 : vector<1x64xf32> to vector<64xf32>
    %364 = vector.shape_cast %363 : vector<64xf32> to vector<1x1x64xf32>
    %365 = vector.broadcast %364 : vector<1x1x64xf32> to vector<16x16x64xf32>
    %366 = arith.mulf %361, %365 : vector<16x16x64xf32>
    %c6_232 = arith.constant 6 : index
    %c8_233 = arith.constant 8 : index
    %c0_234 = arith.constant 0 : index
    %367 = vector.load %arg7[%c6_232, %c8_233, %c0_234] : memref<32x32x64xf32, #tpu.memory_space<vmem>>, vector<16x16x64xf32>
    %c36 = arith.constant 36 : index
    %c0_235 = arith.constant 0 : index
    %368 = vector.load %arg2[%c36, %c0_235] : memref<64x64xf32, #tpu.memory_space<vmem>>, vector<1x64xf32>
    %369 = vector.shape_cast %368 : vector<1x64xf32> to vector<64xf32>
    %370 = vector.shape_cast %369 : vector<64xf32> to vector<1x1x64xf32>
    %371 = vector.broadcast %370 : vector<1x1x64xf32> to vector<16x16x64xf32>
    %372 = arith.mulf %367, %371 : vector<16x16x64xf32>
    %373 = arith.addf %366, %372 : vector<16x16x64xf32>
    %c7_236 = arith.constant 7 : index
    %c8_237 = arith.constant 8 : index
    %c0_238 = arith.constant 0 : index
    %374 = vector.load %arg7[%c7_236, %c8_237, %c0_238] : memref<32x32x64xf32, #tpu.memory_space<vmem>>, vector<16x16x64xf32>
    %c37 = arith.constant 37 : index
    %c0_239 = arith.constant 0 : index
    %375 = vector.load %arg2[%c37, %c0_239] : memref<64x64xf32, #tpu.memory_space<vmem>>, vector<1x64xf32>
    %376 = vector.shape_cast %375 : vector<1x64xf32> to vector<64xf32>
    %377 = vector.shape_cast %376 : vector<64xf32> to vector<1x1x64xf32>
    %378 = vector.broadcast %377 : vector<1x1x64xf32> to vector<16x16x64xf32>
    %379 = arith.mulf %374, %378 : vector<16x16x64xf32>
    %380 = arith.addf %373, %379 : vector<16x16x64xf32>
    %c8_240 = arith.constant 8 : index
    %c8_241 = arith.constant 8 : index
    %c0_242 = arith.constant 0 : index
    %381 = vector.load %arg7[%c8_240, %c8_241, %c0_242] : memref<32x32x64xf32, #tpu.memory_space<vmem>>, vector<16x16x64xf32>
    %c38 = arith.constant 38 : index
    %c0_243 = arith.constant 0 : index
    %382 = vector.load %arg2[%c38, %c0_243] : memref<64x64xf32, #tpu.memory_space<vmem>>, vector<1x64xf32>
    %383 = vector.shape_cast %382 : vector<1x64xf32> to vector<64xf32>
    %384 = vector.shape_cast %383 : vector<64xf32> to vector<1x1x64xf32>
    %385 = vector.broadcast %384 : vector<1x1x64xf32> to vector<16x16x64xf32>
    %386 = arith.mulf %381, %385 : vector<16x16x64xf32>
    %387 = arith.addf %380, %386 : vector<16x16x64xf32>
    %c9_244 = arith.constant 9 : index
    %c8_245 = arith.constant 8 : index
    %c0_246 = arith.constant 0 : index
    %388 = vector.load %arg7[%c9_244, %c8_245, %c0_246] : memref<32x32x64xf32, #tpu.memory_space<vmem>>, vector<16x16x64xf32>
    %c39 = arith.constant 39 : index
    %c0_247 = arith.constant 0 : index
    %389 = vector.load %arg2[%c39, %c0_247] : memref<64x64xf32, #tpu.memory_space<vmem>>, vector<1x64xf32>
    %390 = vector.shape_cast %389 : vector<1x64xf32> to vector<64xf32>
    %391 = vector.shape_cast %390 : vector<64xf32> to vector<1x1x64xf32>
    %392 = vector.broadcast %391 : vector<1x1x64xf32> to vector<16x16x64xf32>
    %393 = arith.mulf %388, %392 : vector<16x16x64xf32>
    %394 = arith.addf %387, %393 : vector<16x16x64xf32>
    %c10_248 = arith.constant 10 : index
    %c8_249 = arith.constant 8 : index
    %c0_250 = arith.constant 0 : index
    %395 = vector.load %arg7[%c10_248, %c8_249, %c0_250] : memref<32x32x64xf32, #tpu.memory_space<vmem>>, vector<16x16x64xf32>
    %c40 = arith.constant 40 : index
    %c0_251 = arith.constant 0 : index
    %396 = vector.load %arg2[%c40, %c0_251] : memref<64x64xf32, #tpu.memory_space<vmem>>, vector<1x64xf32>
    %397 = vector.shape_cast %396 : vector<1x64xf32> to vector<64xf32>
    %398 = vector.shape_cast %397 : vector<64xf32> to vector<1x1x64xf32>
    %399 = vector.broadcast %398 : vector<1x1x64xf32> to vector<16x16x64xf32>
    %400 = arith.mulf %395, %399 : vector<16x16x64xf32>
    %401 = arith.addf %394, %400 : vector<16x16x64xf32>
    %c11_252 = arith.constant 11 : index
    %c8_253 = arith.constant 8 : index
    %c0_254 = arith.constant 0 : index
    %402 = vector.load %arg7[%c11_252, %c8_253, %c0_254] : memref<32x32x64xf32, #tpu.memory_space<vmem>>, vector<16x16x64xf32>
    %c41 = arith.constant 41 : index
    %c0_255 = arith.constant 0 : index
    %403 = vector.load %arg2[%c41, %c0_255] : memref<64x64xf32, #tpu.memory_space<vmem>>, vector<1x64xf32>
    %404 = vector.shape_cast %403 : vector<1x64xf32> to vector<64xf32>
    %405 = vector.shape_cast %404 : vector<64xf32> to vector<1x1x64xf32>
    %406 = vector.broadcast %405 : vector<1x1x64xf32> to vector<16x16x64xf32>
    %407 = arith.mulf %402, %406 : vector<16x16x64xf32>
    %408 = arith.addf %401, %407 : vector<16x16x64xf32>
    %c5_256 = arith.constant 5 : index
    %c0_257 = arith.constant 0 : index
    %409 = vector.load %arg3[%c5_256, %c0_257] : memref<8x64xf32, #tpu.memory_space<vmem>>, vector<1x64xf32>
    %410 = vector.shape_cast %409 : vector<1x64xf32> to vector<64xf32>
    %411 = vector.shape_cast %410 : vector<64xf32> to vector<1x1x64xf32>
    %412 = vector.broadcast %411 : vector<1x1x64xf32> to vector<16x16x64xf32>
    %413 = arith.addf %408, %412 : vector<16x16x64xf32>
    %414 = arith.addf %359, %413 : vector<16x16x64xf32>
    %c8_258 = arith.constant 8 : index
    %c8_259 = arith.constant 8 : index
    %c0_260 = arith.constant 0 : index
    %415 = vector.load %arg7[%c8_258, %c8_259, %c0_260] : memref<32x32x64xf32, #tpu.memory_space<vmem>>, vector<16x16x64xf32>
    tpu.vector_store %arg7[%c8_258, %c8_259, %c0_260], %318 {strides = array<i32>} : memref<32x32x64xf32, #tpu.memory_space<vmem>>, vector<16x16x64xf32>,
    %c3_261 = arith.constant 3 : index
    %c8_262 = arith.constant 8 : index
    %c0_263 = arith.constant 0 : index
    %416 = vector.load %arg7[%c3_261, %c8_262, %c0_263] : memref<32x32x64xf32, #tpu.memory_space<vmem>>, vector<16x16x64xf32>
    %c53 = arith.constant 53 : index
    %c0_264 = arith.constant 0 : index
    %417 = vector.load %arg2[%c53, %c0_264] : memref<64x64xf32, #tpu.memory_space<vmem>>, vector<1x64xf32>
    %418 = vector.shape_cast %417 : vector<1x64xf32> to vector<64xf32>
    %419 = vector.shape_cast %418 : vector<64xf32> to vector<1x1x64xf32>
    %420 = vector.broadcast %419 : vector<1x1x64xf32> to vector<16x16x64xf32>
    %421 = arith.mulf %416, %420 : vector<16x16x64xf32>
    %c4_265 = arith.constant 4 : index
    %c8_266 = arith.constant 8 : index
    %c0_267 = arith.constant 0 : index
    %422 = vector.load %arg7[%c4_265, %c8_266, %c0_267] : memref<32x32x64xf32, #tpu.memory_space<vmem>>, vector<16x16x64xf32>
    %c54 = arith.constant 54 : index
    %c0_268 = arith.constant 0 : index
    %423 = vector.load %arg2[%c54, %c0_268] : memref<64x64xf32, #tpu.memory_space<vmem>>, vector<1x64xf32>
    %424 = vector.shape_cast %423 : vector<1x64xf32> to vector<64xf32>
    %425 = vector.shape_cast %424 : vector<64xf32> to vector<1x1x64xf32>
    %426 = vector.broadcast %425 : vector<1x1x64xf32> to vector<16x16x64xf32>
    %427 = arith.mulf %422, %426 : vector<16x16x64xf32>
    %428 = arith.addf %421, %427 : vector<16x16x64xf32>
    %c5_269 = arith.constant 5 : index
    %c8_270 = arith.constant 8 : index
    %c0_271 = arith.constant 0 : index
    %429 = vector.load %arg7[%c5_269, %c8_270, %c0_271] : memref<32x32x64xf32, #tpu.memory_space<vmem>>, vector<16x16x64xf32>
    %c55 = arith.constant 55 : index
    %c0_272 = arith.constant 0 : index
    %430 = vector.load %arg2[%c55, %c0_272] : memref<64x64xf32, #tpu.memory_space<vmem>>, vector<1x64xf32>
    %431 = vector.shape_cast %430 : vector<1x64xf32> to vector<64xf32>
    %432 = vector.shape_cast %431 : vector<64xf32> to vector<1x1x64xf32>
    %433 = vector.broadcast %432 : vector<1x1x64xf32> to vector<16x16x64xf32>
    %434 = arith.mulf %429, %433 : vector<16x16x64xf32>
    %435 = arith.addf %428, %434 : vector<16x16x64xf32>
    %c6_273 = arith.constant 6 : index
    %c8_274 = arith.constant 8 : index
    %c0_275 = arith.constant 0 : index
    %436 = vector.load %arg7[%c6_273, %c8_274, %c0_275] : memref<32x32x64xf32, #tpu.memory_space<vmem>>, vector<16x16x64xf32>
    %c56 = arith.constant 56 : index
    %c0_276 = arith.constant 0 : index
    %437 = vector.load %arg2[%c56, %c0_276] : memref<64x64xf32, #tpu.memory_space<vmem>>, vector<1x64xf32>
    %438 = vector.shape_cast %437 : vector<1x64xf32> to vector<64xf32>
    %439 = vector.shape_cast %438 : vector<64xf32> to vector<1x1x64xf32>
    %440 = vector.broadcast %439 : vector<1x1x64xf32> to vector<16x16x64xf32>
    %441 = arith.mulf %436, %440 : vector<16x16x64xf32>
    %442 = arith.addf %435, %441 : vector<16x16x64xf32>
    %c7_277 = arith.constant 7 : index
    %c8_278 = arith.constant 8 : index
    %c0_279 = arith.constant 0 : index
    %443 = vector.load %arg7[%c7_277, %c8_278, %c0_279] : memref<32x32x64xf32, #tpu.memory_space<vmem>>, vector<16x16x64xf32>
    %c57 = arith.constant 57 : index
    %c0_280 = arith.constant 0 : index
    %444 = vector.load %arg2[%c57, %c0_280] : memref<64x64xf32, #tpu.memory_space<vmem>>, vector<1x64xf32>
    %445 = vector.shape_cast %444 : vector<1x64xf32> to vector<64xf32>
    %446 = vector.shape_cast %445 : vector<64xf32> to vector<1x1x64xf32>
    %447 = vector.broadcast %446 : vector<1x1x64xf32> to vector<16x16x64xf32>
    %448 = arith.mulf %443, %447 : vector<16x16x64xf32>
    %449 = arith.addf %442, %448 : vector<16x16x64xf32>
    %c8_281 = arith.constant 8 : index
    %c8_282 = arith.constant 8 : index
    %c0_283 = arith.constant 0 : index
    %450 = vector.load %arg7[%c8_281, %c8_282, %c0_283] : memref<32x32x64xf32, #tpu.memory_space<vmem>>, vector<16x16x64xf32>
    %c58 = arith.constant 58 : index
    %c0_284 = arith.constant 0 : index
    %451 = vector.load %arg2[%c58, %c0_284] : memref<64x64xf32, #tpu.memory_space<vmem>>, vector<1x64xf32>
    %452 = vector.shape_cast %451 : vector<1x64xf32> to vector<64xf32>
    %453 = vector.shape_cast %452 : vector<64xf32> to vector<1x1x64xf32>
    %454 = vector.broadcast %453 : vector<1x1x64xf32> to vector<16x16x64xf32>
    %455 = arith.mulf %450, %454 : vector<16x16x64xf32>
    %456 = arith.addf %449, %455 : vector<16x16x64xf32>
    %c9_285 = arith.constant 9 : index
    %c8_286 = arith.constant 8 : index
    %c0_287 = arith.constant 0 : index
    %457 = vector.load %arg7[%c9_285, %c8_286, %c0_287] : memref<32x32x64xf32, #tpu.memory_space<vmem>>, vector<16x16x64xf32>
    %c59 = arith.constant 59 : index
    %c0_288 = arith.constant 0 : index
    %458 = vector.load %arg2[%c59, %c0_288] : memref<64x64xf32, #tpu.memory_space<vmem>>, vector<1x64xf32>
    %459 = vector.shape_cast %458 : vector<1x64xf32> to vector<64xf32>
    %460 = vector.shape_cast %459 : vector<64xf32> to vector<1x1x64xf32>
    %461 = vector.broadcast %460 : vector<1x1x64xf32> to vector<16x16x64xf32>
    %462 = arith.mulf %457, %461 : vector<16x16x64xf32>
    %463 = arith.addf %456, %462 : vector<16x16x64xf32>
    %c10_289 = arith.constant 10 : index
    %c8_290 = arith.constant 8 : index
    %c0_291 = arith.constant 0 : index
    %464 = vector.load %arg7[%c10_289, %c8_290, %c0_291] : memref<32x32x64xf32, #tpu.memory_space<vmem>>, vector<16x16x64xf32>
    %c60 = arith.constant 60 : index
    %c0_292 = arith.constant 0 : index
    %465 = vector.load %arg2[%c60, %c0_292] : memref<64x64xf32, #tpu.memory_space<vmem>>, vector<1x64xf32>
    %466 = vector.shape_cast %465 : vector<1x64xf32> to vector<64xf32>
    %467 = vector.shape_cast %466 : vector<64xf32> to vector<1x1x64xf32>
    %468 = vector.broadcast %467 : vector<1x1x64xf32> to vector<16x16x64xf32>
    %469 = arith.mulf %464, %468 : vector<16x16x64xf32>
    %470 = arith.addf %463, %469 : vector<16x16x64xf32>
    %c11_293 = arith.constant 11 : index
    %c8_294 = arith.constant 8 : index
    %c0_295 = arith.constant 0 : index
    %471 = vector.load %arg7[%c11_293, %c8_294, %c0_295] : memref<32x32x64xf32, #tpu.memory_space<vmem>>, vector<16x16x64xf32>
    %c61 = arith.constant 61 : index
    %c0_296 = arith.constant 0 : index
    %472 = vector.load %arg2[%c61, %c0_296] : memref<64x64xf32, #tpu.memory_space<vmem>>, vector<1x64xf32>
    %473 = vector.shape_cast %472 : vector<1x64xf32> to vector<64xf32>
    %474 = vector.shape_cast %473 : vector<64xf32> to vector<1x1x64xf32>
    %475 = vector.broadcast %474 : vector<1x1x64xf32> to vector<16x16x64xf32>
    %476 = arith.mulf %471, %475 : vector<16x16x64xf32>
    %477 = arith.addf %470, %476 : vector<16x16x64xf32>
    %c12_297 = arith.constant 12 : index
    %c8_298 = arith.constant 8 : index
    %c0_299 = arith.constant 0 : index
    %478 = vector.load %arg7[%c12_297, %c8_298, %c0_299] : memref<32x32x64xf32, #tpu.memory_space<vmem>>, vector<16x16x64xf32>
    %c62 = arith.constant 62 : index
    %c0_300 = arith.constant 0 : index
    %479 = vector.load %arg2[%c62, %c0_300] : memref<64x64xf32, #tpu.memory_space<vmem>>, vector<1x64xf32>
    %480 = vector.shape_cast %479 : vector<1x64xf32> to vector<64xf32>
    %481 = vector.shape_cast %480 : vector<64xf32> to vector<1x1x64xf32>
    %482 = vector.broadcast %481 : vector<1x1x64xf32> to vector<16x16x64xf32>
    %483 = arith.mulf %478, %482 : vector<16x16x64xf32>
    %484 = arith.addf %477, %483 : vector<16x16x64xf32>
    %c13_301 = arith.constant 13 : index
    %c8_302 = arith.constant 8 : index
    %c0_303 = arith.constant 0 : index
    %485 = vector.load %arg7[%c13_301, %c8_302, %c0_303] : memref<32x32x64xf32, #tpu.memory_space<vmem>>, vector<16x16x64xf32>
    %c63 = arith.constant 63 : index
    %c0_304 = arith.constant 0 : index
    %486 = vector.load %arg2[%c63, %c0_304] : memref<64x64xf32, #tpu.memory_space<vmem>>, vector<1x64xf32>
    %487 = vector.shape_cast %486 : vector<1x64xf32> to vector<64xf32>
    %488 = vector.shape_cast %487 : vector<64xf32> to vector<1x1x64xf32>
    %489 = vector.broadcast %488 : vector<1x1x64xf32> to vector<16x16x64xf32>
    %490 = arith.mulf %485, %489 : vector<16x16x64xf32>
    %491 = arith.addf %484, %490 : vector<16x16x64xf32>
    %c7_305 = arith.constant 7 : index
    %c0_306 = arith.constant 0 : index
    %492 = vector.load %arg3[%c7_305, %c0_306] : memref<8x64xf32, #tpu.memory_space<vmem>>, vector<1x64xf32>
    %493 = vector.shape_cast %492 : vector<1x64xf32> to vector<64xf32>
    %494 = vector.shape_cast %493 : vector<64xf32> to vector<1x1x64xf32>
    %495 = vector.broadcast %494 : vector<1x1x64xf32> to vector<16x16x64xf32>
    %496 = arith.addf %491, %495 : vector<16x16x64xf32>
    %497 = arith.addf %414, %496 : vector<16x16x64xf32>
    %cst_307 = arith.constant 2.000000e-01 : f32
    %498 = vector.broadcast %cst_307 : f32 to vector<16x16x64xf32>
    %499 = arith.mulf %497, %498 : vector<16x16x64xf32>
    %500 = vector.shape_cast %499 : vector<16x16x64xf32> to vector<256x64xf32>
    %501 = vector.shape_cast %7 : vector<16x16x64xf32> to vector<256x64xf32>
    %c0_308 = arith.constant 0 : index
    %c0_309 = arith.constant 0 : index
    %502 = vector.load %arg4[%c0_308, %c0_309] : memref<128x64xf32, #tpu.memory_space<vmem>>, vector<64x64xf32>
    %cst_310 = arith.constant dense<0.000000e+00> : vector<256x64xf32>
    %503 = tpu.matmul %500, %502, %cst_310 {dimension_numbers = #tpu.dot_dimension_numbers<[1], [0], [0], [1], [0, 0, 1, 1], [], []>} : vector<256x64xf32>, vector<64x64xf32>, vector<256x64xf32> -> vector<256x64xf32>
    %c64 = arith.constant 64 : index
    %c0_311 = arith.constant 0 : index
    %504 = vector.load %arg4[%c64, %c0_311] : memref<128x64xf32, #tpu.memory_space<vmem>>, vector<64x64xf32>
    %cst_312 = arith.constant dense<0.000000e+00> : vector<256x64xf32>
    %505 = tpu.matmul %501, %504, %cst_312 {dimension_numbers = #tpu.dot_dimension_numbers<[1], [0], [0], [1], [0, 0, 1, 1], [], []>} : vector<256x64xf32>, vector<64x64xf32>, vector<256x64xf32> -> vector<256x64xf32>
    %506 = arith.addf %503, %505 : vector<256x64xf32>
    %c0_313 = arith.constant 0 : index
    %c0_314 = arith.constant 0 : index
    %507 = vector.load %arg5[%c0_313, %c0_314] : memref<1x64xf32, #tpu.memory_space<vmem>>, vector<1x64xf32>
    %508 = vector.shape_cast %507 : vector<1x64xf32> to vector<64xf32>
    %509 = vector.shape_cast %508 : vector<64xf32> to vector<1x64xf32>
    %510 = vector.broadcast %509 : vector<1x64xf32> to vector<256x64xf32>
    %511 = arith.addf %506, %510 : vector<256x64xf32>
    %512 = vector.shape_cast %511 : vector<256x64xf32> to vector<16x16x64xf32>
    %c0_315 = arith.constant 0 : index
    %c0_316 = arith.constant 0 : index
    %c0_317 = arith.constant 0 : index
    %c0_318 = arith.constant 0 : index
    %513 = vector.load %arg6[%c0_315, %c0_316, %c0_317, %c0_318] : memref<1x16x16x64xf32, #tpu.memory_space<vmem>>, vector<1x16x16x64xf32>
    %514 = vector.shape_cast %513 : vector<1x16x16x64xf32> to vector<16x16x64xf32>
    %515 = vector.shape_cast %512 : vector<16x16x64xf32> to vector<1x16x16x64xf32>
    tpu.vector_store %arg6[%c0_315, %c0_316, %c0_317, %c0_318], %515 {strides = array<i32>} : memref<1x16x16x64xf32, #tpu.memory_space<vmem>>, vector<1x16x16x64xf32>,
    return
  }
  func.func @transform_0(%arg0: i32) -> (i32, i32, i32, i32) {
    %c0_i32 = arith.constant 0 : i32
    %c0_i32_0 = arith.constant 0 : i32
    %c0_i32_1 = arith.constant 0 : i32
    %c0_i32_2 = arith.constant 0 : i32
    return %arg0, %c0_i32, %c0_i32_0, %c0_i32_1 : i32, i32, i32, i32
  }
  func.func @transform_1(%arg0: i32) -> (i32, i32) {
    %c0_i32 = arith.constant 0 : i32
    %c0_i32_0 = arith.constant 0 : i32
    %c0_i32_1 = arith.constant 0 : i32
    return %c0_i32, %c0_i32_0 : i32, i32
  }
  func.func @transform_2(%arg0: i32) -> (i32, i32) {
    %c0_i32 = arith.constant 0 : i32
    %c0_i32_0 = arith.constant 0 : i32
    %c0_i32_1 = arith.constant 0 : i32
    return %c0_i32, %c0_i32_0 : i32, i32
  }
  func.func @transform_3(%arg0: i32) -> (i32, i32) {
    %c0_i32 = arith.constant 0 : i32
    %c0_i32_0 = arith.constant 0 : i32
    %c0_i32_1 = arith.constant 0 : i32
    return %c0_i32, %c0_i32_0 : i32, i32
  }
  func.func @transform_4(%arg0: i32) -> (i32, i32) {
    %c0_i32 = arith.constant 0 : i32
    %c0_i32_0 = arith.constant 0 : i32
    %c0_i32_1 = arith.constant 0 : i32
    return %c0_i32, %c0_i32_0 : i32, i32
  }
  func.func @transform_5(%arg0: i32) -> (i32, i32, i32, i32) {
    %c0_i32 = arith.constant 0 : i32
    %c0_i32_0 = arith.constant 0 : i32
    %c0_i32_1 = arith.constant 0 : i32
    %c0_i32_2 = arith.constant 0 : i32
    return %arg0, %c0_i32, %c0_i32_0, %c0_i32_1 : i32, i32, i32, i32
  }
}

</mosaic_0001>

<llo_original>
// kernel: tpu_custom_call.1
$region0: #{tpu_custom_call.1}
  #allocation0 [shape = 'u32[]', space=smem, size = 0x4, offset = 0x4, fixed_abs, tag = 'smem constant byte address 0x4 - core index']
  #allocation1 [shape = 'u32[144,128]{1,0:T(1,128)}', space=vmem, size = 0x12000, scoped, tag = 'internal scratch']
  #allocation2 [shape = 'f32[32,32,64]{2,1,0:T(8,128)}', space=vmem, size = 0x80000, scoped, tag = 'scratch operand']
  %s0 = inlined_call_operand.hbm [shape: f32[1,16,16,64], index: 0, kind: input, shape index: {}]
  %s1 = inlined_call_operand.vmem [shape: f32[64,64], index: 1, kind: input, shape index: {}]
  %s2 = inlined_call_operand.vmem [shape: f32[8,64], index: 2, kind: input, shape index: {}]
  %s3 = inlined_call_operand.vmem [shape: f32[128,64], index: 3, kind: input, shape index: {}]
  %s4 = inlined_call_operand.vmem [shape: f32[1,64], index: 4, kind: input, shape index: {}]
  %s5 = inlined_call_operand.hbm [shape: f32[1,16,16,64], index: 5, kind: output, shape index: {}]
  %s6 = sld [smem:[#allocation0]]
  $region34: #{tpu_custom_call.1} parent=0
    _
  %s8 = ssub.s32 1, %s6
  %s9 = scalar_select 0, %s8, %s6
  $region1: #{tpu_custom_call.1} parent=0
    #allocation3 [shape = 'u8[131072]{0}', space=vmem, size = 0x20000, scoped, tag = 'input window, operand 0, single buffered']
    #allocation4 [shape = 's32[1]{0}', space=sflag, size = 0x4, scoped, tag = 'scoped memory for tpu_custom_call.1']
    #allocation5 [shape = 's32[1]{0}', space=sflag, size = 0x4, scoped, tag = 'scoped memory for tpu_custom_call.1']
    #allocation6 [shape = 'u8[131072]{0}', space=vmem, size = 0x20000, scoped, tag = 'output window, operand 0, single buffered']
    %10 = vsyncpa [#allocation4], 0
    %11 = vsyncpa [#allocation5], 0
    // Predicated region
    $region2: #{tpu_custom_call.1} parent=1 // pred_check
      _
    $region3: #{tpu_custom_call.1} parent=1 // pred_check_branch
      %13 = sbr.rel (0) target = $region5
    $region4: #{tpu_custom_call.1} parent=1 // pred_region
      %s15 = ssub.s32 4096, 4096
      %16 = vsyncadd [#allocation4], %s15
      %s17 = sshll.u32 [#allocation3], 4
      %s18 = int_to_ptr.vmem [resolvable:$true] %s17
      %23 = dma.hbm_to_vmem [thread:$0]  %s0, 4096, %s18, [#allocation4], 128, 128, 8
    $region5: #{tpu_custom_call.1} parent=1 // pred_fallthru
      _
    // Predicated region
    $region6: #{tpu_custom_call.1} parent=1 // pred_check
      _
    $region7: #{tpu_custom_call.1} parent=1 // pred_check_branch
      %25 = sbr.rel (0) target = $region9
    $region8: #{tpu_custom_call.1} parent=1 // pred_region
      _
    $region9: #{tpu_custom_call.1} parent=1 // pred_fallthru
      _
    // Predicated region
    $region10: #{tpu_custom_call.1} parent=1 // pred_check
      _
    $region11: #{tpu_custom_call.1} parent=1 // pred_check_branch
      %27 = sbr.rel (0) target = $region13
    $region12: #{tpu_custom_call.1} parent=1 // pred_region
      _
    $region13: #{tpu_custom_call.1} parent=1 // pred_fallthru
      _
    // Predicated region
    $region14: #{tpu_custom_call.1} parent=1 // pred_check
      _
    $region15: #{tpu_custom_call.1} parent=1 // pred_check_branch
      %29 = sbr.rel (0) target = $region17
    $region16: #{tpu_custom_call.1} parent=1 // pred_region
      _
    $region17: #{tpu_custom_call.1} parent=1 // pred_fallthru
      _
    // Predicated region
    $region18: #{tpu_custom_call.1} parent=1 // pred_check
      _
    $region19: #{tpu_custom_call.1} parent=1 // pred_check_branch
      %31 = sbr.rel (0) target = $region21
    $region20: #{tpu_custom_call.1} parent=1 // pred_region
      _
    $region21: #{tpu_custom_call.1} parent=1 // pred_fallthru
      _
    // Predicated region
    $region22: #{tpu_custom_call.1} parent=1 // pred_check
      _
    $region23: #{tpu_custom_call.1} parent=1 // pred_check_branch
      %33 = sbr.rel (0) target = $region25
    $region24: #{tpu_custom_call.1} parent=1 // pred_region
      %34 = dma.done [#allocation4], 4096
    $region25: #{tpu_custom_call.1} parent=1 // pred_fallthru
      _
    %vm35 = vcmask 523264
    %36 = vst.msk [vmem:[#allocation2] sm:$0xff] %vm35, 0.0
    %37 = vst.msk [vmem:[#allocation2 + $0x8] sm:$0xff] %vm35, 0.0
    %38 = vst.msk [vmem:[#allocation2 + $0x10] sm:$0xff] %vm35, 0.0
    %39 = vst.msk [vmem:[#allocation2 + $0x18] sm:$0xff] %vm35, 0.0
    %40 = vst.msk [vmem:[#allocation2 + $0x20] sm:$0xff] %vm35, 0.0
    %41 = vst.msk [vmem:[#allocation2 + $0x28] sm:$0xff] %vm35, 0.0
    %42 = vst.msk [vmem:[#allocation2 + $0x30] sm:$0xff] %vm35, 0.0
    %43 = vst.msk [vmem:[#allocation2 + $0x38] sm:$0xff] %vm35, 0.0
    %44 = vst.msk [vmem:[#allocation2 + $0x40] sm:$0xff] %vm35, 0.0
    %45 = vst.msk [vmem:[#allocation2 + $0x48] sm:$0xff] %vm35, 0.0
    %46 = vst.msk [vmem:[#allocation2 + $0x50] sm:$0xff] %vm35, 0.0
    %47 = vst.msk [vmem:[#allocation2 + $0x58] sm:$0xff] %vm35, 0.0
    %48 = vst.msk [vmem:[#allocation2 + $0x60] sm:$0xff] %vm35, 0.0
    %49 = vst.msk [vmem:[#allocation2 + $0x68] sm:$0xff] %vm35, 0.0
    %50 = vst.msk [vmem:[#allocation2 + $0x70] sm:$0xff] %vm35, 0.0
    %51 = vst.msk [vmem:[#allocation2 + $0x78] sm:$0xff] %vm35, 0.0
    %52 = vst.msk [vmem:[#allocation2 + $0x80] sm:$0xff] %vm35, 0.0
    %53 = vst.msk [vmem:[#allocation2 + $0x88] sm:$0xff] %vm35, 0.0
    %54 = vst.msk [vmem:[#allocation2 + $0x90] sm:$0xff] %vm35, 0.0
    %55 = vst.msk [vmem:[#allocation2 + $0x98] sm:$0xff] %vm35, 0.0
    %56 = vst.msk [vmem:[#allocation2 + $0xa0] sm:$0xff] %vm35, 0.0
    %57 = vst.msk [vmem:[#allocation2 + $0xa8] sm:$0xff] %vm35, 0.0
    %58 = vst.msk [vmem:[#allocation2 + $0xb0] sm:$0xff] %vm35, 0.0
    %59 = vst.msk [vmem:[#allocation2 + $0xb8] sm:$0xff] %vm35, 0.0
    %60 = vst.msk [vmem:[#allocation2 + $0xc0] sm:$0xff] %vm35, 0.0
    %61 = vst.msk [vmem:[#allocation2 + $0xc8] sm:$0xff] %vm35, 0.0
    %62 = vst.msk [vmem:[#allocation2 + $0xd0] sm:$0xff] %vm35, 0.0
    %63 = vst.msk [vmem:[#allocation2 + $0xd8] sm:$0xff] %vm35, 0.0
    %64 = vst.msk [vmem:[#allocation2 + $0xe0] sm:$0xff] %vm35, 0.0
    %65 = vst.msk [vmem:[#allocation2 + $0xe8] sm:$0xff] %vm35, 0.0
    %66 = vst.msk [vmem:[#allocation2 + $0xf0] sm:$0xff] %vm35, 0.0
    %67 = vst.msk [vmem:[#allocation2 + $0xf8] sm:$0xff] %vm35, 0.0
    %s68 = scalar_lea.vmem [#allocation2], 768
    %69 = vst.msk [vmem:[%s68] sm:$0xff] %vm35, 0.0
    %70 = vst.msk [vmem:[%s68 + $0x8] sm:$0xff] %vm35, 0.0
    %71 = vst.msk [vmem:[%s68 + $0x10] sm:$0xff] %vm35, 0.0
    %72 = vst.msk [vmem:[%s68 + $0x18] sm:$0xff] %vm35, 0.0
    %73 = vst.msk [vmem:[%s68 + $0x20] sm:$0xff] %vm35, 0.0
    %74 = vst.msk [vmem:[%s68 + $0x28] sm:$0xff] %vm35, 0.0
    %75 = vst.msk [vmem:[%s68 + $0x30] sm:$0xff] %vm35, 0.0
    %76 = vst.msk [vmem:[%s68 + $0x38] sm:$0xff] %vm35, 0.0
    %77 = vst.msk [vmem:[%s68 + $0x40] sm:$0xff] %vm35, 0.0
    %78 = vst.msk [vmem:[%s68 + $0x48] sm:$0xff] %vm35, 0.0
    %79 = vst.msk [vmem:[%s68 + $0x50] sm:$0xff] %vm35, 0.0
    %80 = vst.msk [vmem:[%s68 + $0x58] sm:$0xff] %vm35, 0.0
    %81 = vst.msk [vmem:[%s68 + $0x60] sm:$0xff] %vm35, 0.0
    %82 = vst.msk [vmem:[%s68 + $0x68] sm:$0xff] %vm35, 0.0
    %83 = vst.msk [vmem:[%s68 + $0x70] sm:$0xff] %vm35, 0.0
    %84 = vst.msk [vmem:[%s68 + $0x78] sm:$0xff] %vm35, 0.0
    %85 = vst.msk [vmem:[%s68 + $0x80] sm:$0xff] %vm35, 0.0
    %86 = vst.msk [vmem:[%s68 + $0x88] sm:$0xff] %vm35, 0.0
    %87 = vst.msk [vmem:[%s68 + $0x90] sm:$0xff] %vm35, 0.0
    %88 = vst.msk [vmem:[%s68 + $0x98] sm:$0xff] %vm35, 0.0
    %89 = vst.msk [vmem:[%s68 + $0xa0] sm:$0xff] %vm35, 0.0
    %90 = vst.msk [vmem:[%s68 + $0xa8] sm:$0xff] %vm35, 0.0
    %91 = vst.msk [vmem:[%s68 + $0xb0] sm:$0xff] %vm35, 0.0
    %92 = vst.msk [vmem:[%s68 + $0xb8] sm:$0xff] %vm35, 0.0
    %93 = vst.msk [vmem:[%s68 + $0xc0] sm:$0xff] %vm35, 0.0
    %94 = vst.msk [vmem:[%s68 + $0xc8] sm:$0xff] %vm35, 0.0
    %95 = vst.msk [vmem:[%s68 + $0xd0] sm:$0xff] %vm35, 0.0
    %96 = vst.msk [vmem:[%s68 + $0xd8] sm:$0xff] %vm35, 0.0
    %97 = vst.msk [vmem:[%s68 + $0xe0] sm:$0xff] %vm35, 0.0
    %98 = vst.msk [vmem:[%s68 + $0xe8] sm:$0xff] %vm35, 0.0
    %99 = vst.msk [vmem:[%s68 + $0xf0] sm:$0xff] %vm35, 0.0
    %100 = vst.msk [vmem:[%s68 + $0xf8] sm:$0xff] %vm35, 0.0
    %s101 = scalar_lea.vmem [#allocation2], 256
    %102 = vst.msk [vmem:[%s101] sm:$0xff] %vm35, 0.0
    %103 = vst.msk [vmem:[%s101 + $0x20] sm:$0xff] %vm35, 0.0
    %104 = vst.msk [vmem:[%s101 + $0x40] sm:$0xff] %vm35, 0.0
    %105 = vst.msk [vmem:[%s101 + $0x60] sm:$0xff] %vm35, 0.0
    %106 = vst.msk [vmem:[%s101 + $0x80] sm:$0xff] %vm35, 0.0
    %107 = vst.msk [vmem:[%s101 + $0xa0] sm:$0xff] %vm35, 0.0
    %108 = vst.msk [vmem:[%s101 + $0xc0] sm:$0xff] %vm35, 0.0
    %109 = vst.msk [vmem:[%s101 + $0xe0] sm:$0xff] %vm35, 0.0
    %110 = vst.msk [vmem:[%s101 + $0x100] sm:$0xff] %vm35, 0.0
    %111 = vst.msk [vmem:[%s101 + $0x120] sm:$0xff] %vm35, 0.0
    %112 = vst.msk [vmem:[%s101 + $0x140] sm:$0xff] %vm35, 0.0
    %113 = vst.msk [vmem:[%s101 + $0x160] sm:$0xff] %vm35, 0.0
    %114 = vst.msk [vmem:[%s101 + $0x180] sm:$0xff] %vm35, 0.0
    %115 = vst.msk [vmem:[%s101 + $0x1a0] sm:$0xff] %vm35, 0.0
    %116 = vst.msk [vmem:[%s101 + $0x1c0] sm:$0xff] %vm35, 0.0
    %117 = vst.msk [vmem:[%s101 + $0x1e0] sm:$0xff] %vm35, 0.0
    %118 = vst.msk [vmem:[%s101 + $0x18] sm:$0xff] %vm35, 0.0
    %119 = vst.msk [vmem:[%s101 + $0x38] sm:$0xff] %vm35, 0.0
    %120 = vst.msk [vmem:[%s101 + $0x58] sm:$0xff] %vm35, 0.0
    %121 = vst.msk [vmem:[%s101 + $0x78] sm:$0xff] %vm35, 0.0
    %122 = vst.msk [vmem:[%s101 + $0x98] sm:$0xff] %vm35, 0.0
    %123 = vst.msk [vmem:[%s101 + $0xb8] sm:$0xff] %vm35, 0.0
    %124 = vst.msk [vmem:[%s101 + $0xd8] sm:$0xff] %vm35, 0.0
    %125 = vst.msk [vmem:[%s101 + $0xf8] sm:$0xff] %vm35, 0.0
    %126 = vst.msk [vmem:[%s101 + $0x118] sm:$0xff] %vm35, 0.0
    %127 = vst.msk [vmem:[%s101 + $0x138] sm:$0xff] %vm35, 0.0
    %128 = vst.msk [vmem:[%s101 + $0x158] sm:$0xff] %vm35, 0.0
    %129 = vst.msk [vmem:[%s101 + $0x178] sm:$0xff] %vm35, 0.0
    %130 = vst.msk [vmem:[%s101 + $0x198] sm:$0xff] %vm35, 0.0
    %131 = vst.msk [vmem:[%s101 + $0x1b8] sm:$0xff] %vm35, 0.0
    %132 = vst.msk [vmem:[%s101 + $0x1d8] sm:$0xff] %vm35, 0.0
    %133 = vst.msk [vmem:[%s101 + $0x1f8] sm:$0xff] %vm35, 0.0
    %v134 = vld [vmem:[#allocation3] sm:$0xff]
    %v135 = vld [vmem:[#allocation3 + $0x8] sm:$0xff]
    %v136 = vld [vmem:[#allocation3 + $0x10] sm:$0xff]
    %v137 = vld [vmem:[#allocation3 + $0x18] sm:$0xff]
    %v138 = vld [vmem:[#allocation3 + $0x20] sm:$0xff]
    %v139 = vld [vmem:[#allocation3 + $0x28] sm:$0xff]
    %v140 = vld [vmem:[#allocation3 + $0x30] sm:$0xff]
    %v141 = vld [vmem:[#allocation3 + $0x38] sm:$0xff]
    %v142 = vld [vmem:[#allocation3 + $0x40] sm:$0xff]
    %v143 = vld [vmem:[#allocation3 + $0x48] sm:$0xff]
    %v144 = vld [vmem:[#allocation3 + $0x50] sm:$0xff]
    %v145 = vld [vmem:[#allocation3 + $0x58] sm:$0xff]
    %v146 = vld [vmem:[#allocation3 + $0x60] sm:$0xff]
    %v147 = vld [vmem:[#allocation3 + $0x68] sm:$0xff]
    %v148 = vld [vmem:[#allocation3 + $0x70] sm:$0xff]
    %v149 = vld [vmem:[#allocation3 + $0x78] sm:$0xff]
    %v150 = vld [vmem:[#allocation3 + $0x80] sm:$0xff]
    %v151 = vld [vmem:[#allocation3 + $0x88] sm:$0xff]
    %v152 = vld [vmem:[#allocation3 + $0x90] sm:$0xff]
    %v153 = vld [vmem:[#allocation3 + $0x98] sm:$0xff]
    %v154 = vld [vmem:[#allocation3 + $0xa0] sm:$0xff]
    %v155 = vld [vmem:[#allocation3 + $0xa8] sm:$0xff]
    %v156 = vld [vmem:[#allocation3 + $0xb0] sm:$0xff]
    %v157 = vld [vmem:[#allocation3 + $0xb8] sm:$0xff]
    %v158 = vld [vmem:[#allocation3 + $0xc0] sm:$0xff]
    %v159 = vld [vmem:[#allocation3 + $0xc8] sm:$0xff]
    %v160 = vld [vmem:[#allocation3 + $0xd0] sm:$0xff]
    %v161 = vld [vmem:[#allocation3 + $0xd8] sm:$0xff]
    %v162 = vld [vmem:[#allocation3 + $0xe0] sm:$0xff]
    %v163 = vld [vmem:[#allocation3 + $0xe8] sm:$0xff]
    %v164 = vld [vmem:[#allocation3 + $0xf0] sm:$0xff]
    %v165 = vld [vmem:[#allocation3 + $0xf8] sm:$0xff]
    %166 = vst.msk [vmem:[%s101 + $0x8] sm:$0xff] %vm35, %v134
    %167 = vst.msk [vmem:[%s101 + $0x10] sm:$0xff] %vm35, %v135
    %168 = vst.msk [vmem:[%s101 + $0x28] sm:$0xff] %vm35, %v136
    %169 = vst.msk [vmem:[%s101 + $0x30] sm:$0xff] %vm35, %v137
    %170 = vst.msk [vmem:[%s101 + $0x48] sm:$0xff] %vm35, %v138
    %171 = vst.msk [vmem:[%s101 + $0x50] sm:$0xff] %vm35, %v139
    %172 = vst.msk [vmem:[%s101 + $0x68] sm:$0xff] %vm35, %v140
    %173 = vst.msk [vmem:[%s101 + $0x70] sm:$0xff] %vm35, %v141
    %174 = vst.msk [vmem:[%s101 + $0x88] sm:$0xff] %vm35, %v142
    %175 = vst.msk [vmem:[%s101 + $0x90] sm:$0xff] %vm35, %v143
    %176 = vst.msk [vmem:[%s101 + $0xa8] sm:$0xff] %vm35, %v144
    %177 = vst.msk [vmem:[%s101 + $0xb0] sm:$0xff] %vm35, %v145
    %178 = vst.msk [vmem:[%s101 + $0xc8] sm:$0xff] %vm35, %v146
    %179 = vst.msk [vmem:[%s101 + $0xd0] sm:$0xff] %vm35, %v147
    %180 = vst.msk [vmem:[%s101 + $0xe8] sm:$0xff] %vm35, %v148
    %181 = vst.msk [vmem:[%s101 + $0xf0] sm:$0xff] %vm35, %v149
    %182 = vst.msk [vmem:[%s101 + $0x108] sm:$0xff] %vm35, %v150
    %183 = vst.msk [vmem:[%s101 + $0x110] sm:$0xff] %vm35, %v151
    %184 = vst.msk [vmem:[%s101 + $0x128] sm:$0xff] %vm35, %v152
    %185 = vst.msk [vmem:[%s101 + $0x130] sm:$0xff] %vm35, %v153
    %186 = vst.msk [vmem:[%s101 + $0x148] sm:$0xff] %vm35, %v154
    %187 = vst.msk [vmem:[%s101 + $0x150] sm:$0xff] %vm35, %v155
    %188 = vst.msk [vmem:[%s101 + $0x168] sm:$0xff] %vm35, %v156
    %189 = vst.msk [vmem:[%s101 + $0x170] sm:$0xff] %vm35, %v157
    %190 = vst.msk [vmem:[%s101 + $0x188] sm:$0xff] %vm35, %v158
    %191 = vst.msk [vmem:[%s101 + $0x190] sm:$0xff] %vm35, %v159
    %192 = vst.msk [vmem:[%s101 + $0x1a8] sm:$0xff] %vm35, %v160
    %193 = vst.msk [vmem:[%s101 + $0x1b0] sm:$0xff] %vm35, %v161
    %194 = vst.msk [vmem:[%s101 + $0x1c8] sm:$0xff] %vm35, %v162
    %195 = vst.msk [vmem:[%s101 + $0x1d0] sm:$0xff] %vm35, %v163
    %196 = vst.msk [vmem:[%s101 + $0x1e8] sm:$0xff] %vm35, %v164
    %197 = vst.msk [vmem:[%s101 + $0x1f0] sm:$0xff] %vm35, %v165
    %s198 = scalar_lea.vmem [#allocation2], 224
    %v199 = vld [vmem:[%s198 + $0x7] sm:$0xff]
    %v200 = vld [vmem:[%s198 + $0xf] sm:$0xff]
    %v201 = vld [vmem:[%s198 + $0x27] sm:$0xff]
    %v202 = vld [vmem:[%s198 + $0x2f] sm:$0xff]
    %v203 = vld [vmem:[%s198 + $0x47] sm:$0xff]
    %v204 = vld [vmem:[%s198 + $0x4f] sm:$0xff]
    %v205 = vld [vmem:[%s198 + $0x67] sm:$0xff]
    %v206 = vld [vmem:[%s198 + $0x6f] sm:$0xff]
    %v207 = vld [vmem:[%s198 + $0x87] sm:$0xff]
    %v208 = vld [vmem:[%s198 + $0x8f] sm:$0xff]
    %v209 = vld [vmem:[%s198 + $0xa7] sm:$0xff]
    %v210 = vld [vmem:[%s198 + $0xaf] sm:$0xff]
    %v211 = vld [vmem:[%s198 + $0xc7] sm:$0xff]
    %v212 = vld [vmem:[%s198 + $0xcf] sm:$0xff]
    %v213 = vld [vmem:[%s198 + $0xe7] sm:$0xff]
    %v214 = vld [vmem:[%s198 + $0xef] sm:$0xff]
    %v215 = vld [vmem:[%s198 + $0x107] sm:$0xff]
    %v216 = vld [vmem:[%s198 + $0x10f] sm:$0xff]
    %v217 = vld [vmem:[%s198 + $0x127] sm:$0xff]
    %v218 = vld [vmem:[%s198 + $0x12f] sm:$0xff]
    %v219 = vld [vmem:[%s198 + $0x147] sm:$0xff]
    %v220 = vld [vmem:[%s198 + $0x14f] sm:$0xff]
    %v221 = vld [vmem:[%s198 + $0x167] sm:$0xff]
    %v222 = vld [vmem:[%s198 + $0x16f] sm:$0xff]
    %v223 = vld [vmem:[%s198 + $0x187] sm:$0xff]
    %v224 = vld [vmem:[%s198 + $0x18f] sm:$0xff]
    %v225 = vld [vmem:[%s198 + $0x1a7] sm:$0xff]
    %v226 = vld [vmem:[%s198 + $0x1af] sm:$0xff]
    %v227 = vld [vmem:[%s198 + $0x1c7] sm:$0xff]
    %v228 = vld [vmem:[%s198 + $0x1cf] sm:$0xff]
    %v229 = vld [vmem:[%s198 + $0x1e7] sm:$0xff]
    %v230 = vld [vmem:[%s198 + $0x1ef] sm:$0xff]
    %v231 = vld [vmem:[%s1] sm:$0x1]
    %v232 = vlaneseq
    %v233 = vshrl.u32 %v232, 7
    %v234 = vsub.s32 0, %v233
    %v235 = vrot.slane %v231, %v234
    %v236 = vmul.f32 %v199, %v235
    %v237 = vmul.f32 %v200, %v235
    %v238 = vmul.f32 %v201, %v235
    %v239 = vmul.f32 %v202, %v235
    %v240 = vmul.f32 %v203, %v235
    %v241 = vmul.f32 %v204, %v235
    %v242 = vmul.f32 %v205, %v235
    %v243 = vmul.f32 %v206, %v235
    %v244 = vmul.f32 %v207, %v235
    %v245 = vmul.f32 %v208, %v235
    %v246 = vmul.f32 %v209, %v235
    %v247 = vmul.f32 %v210, %v235
    %v248 = vmul.f32 %v211, %v235
    %v249 = vmul.f32 %v212, %v235
    %v250 = vmul.f32 %v213, %v235
    %v251 = vmul.f32 %v214, %v235
    %v252 = vmul.f32 %v215, %v235
    %v253 = vmul.f32 %v216, %v235
    %v254 = vmul.f32 %v217, %v235
    %v255 = vmul.f32 %v218, %v235
    %v256 = vmul.f32 %v219, %v235
    %v257 = vmul.f32 %v220, %v235
    %v258 = vmul.f32 %v221, %v235
    %v259 = vmul.f32 %v222, %v235
    %v260 = vmul.f32 %v223, %v235
    %v261 = vmul.f32 %v224, %v235
    %v262 = vmul.f32 %v225, %v235
    %v263 = vmul.f32 %v226, %v235
    %v264 = vmul.f32 %v227, %v235
    %v265 = vmul.f32 %v228, %v235
    %v266 = vmul.f32 %v229, %v235
    %v267 = vmul.f32 %v230, %v235
    %v268 = vld [vmem:[%s198 + $0x8] sm:$0xff]
    %v269 = vld [vmem:[%s198 + $0x10] sm:$0xff]
    %v270 = vld [vmem:[%s198 + $0x28] sm:$0xff]
    %v271 = vld [vmem:[%s198 + $0x30] sm:$0xff]
    %v272 = vld [vmem:[%s198 + $0x48] sm:$0xff]
    %v273 = vld [vmem:[%s198 + $0x50] sm:$0xff]
    %v274 = vld [vmem:[%s198 + $0x68] sm:$0xff]
    %v275 = vld [vmem:[%s198 + $0x70] sm:$0xff]
    %v276 = vld [vmem:[%s198 + $0x88] sm:$0xff]
    %v277 = vld [vmem:[%s198 + $0x90] sm:$0xff]
    %v278 = vld [vmem:[%s198 + $0xa8] sm:$0xff]
    %v279 = vld [vmem:[%s198 + $0xb0] sm:$0xff]
    %v280 = vld [vmem:[%s198 + $0xc8] sm:$0xff]
    %v281 = vld [vmem:[%s198 + $0xd0] sm:$0xff]
    %v282 = vld [vmem:[%s198 + $0xe8] sm:$0xff]
    %v283 = vld [vmem:[%s198 + $0xf0] sm:$0xff]
    %v284 = vld [vmem:[%s198 + $0x108] sm:$0xff]
    %v285 = vld [vmem:[%s198 + $0x110] sm:$0xff]
    %v286 = vld [vmem:[%s198 + $0x128] sm:$0xff]
    %v287 = vld [vmem:[%s198 + $0x130] sm:$0xff]
    %v288 = vld [vmem:[%s198 + $0x148] sm:$0xff]
    %v289 = vld [vmem:[%s198 + $0x150] sm:$0xff]
    %v290 = vld [vmem:[%s198 + $0x168] sm:$0xff]
    %v291 = vld [vmem:[%s198 + $0x170] sm:$0xff]
    %v292 = vld [vmem:[%s198 + $0x188] sm:$0xff]
    %v293 = vld [vmem:[%s198 + $0x190] sm:$0xff]
    %v294 = vld [vmem:[%s198 + $0x1a8] sm:$0xff]
    %v295 = vld [vmem:[%s198 + $0x1b0] sm:$0xff]
    %v296 = vld [vmem:[%s198 + $0x1c8] sm:$0xff]
    %v297 = vld [vmem:[%s198 + $0x1d0] sm:$0xff]
    %v298 = vld [vmem:[%s198 + $0x1e8] sm:$0xff]
    %v299 = vld [vmem:[%s198 + $0x1f0] sm:$0xff]
    %v300 = vld [vmem:[%s1 + $0x1] sm:$0x1]
    %v301 = vlaneseq
    %v302 = vshrl.u32 %v301, 7
    %v303 = vsub.s32 0, %v302
    %v304 = vrot.slane %v300, %v303
    %v305 = vmul.f32 %v268, %v304
    %v306 = vmul.f32 %v269, %v304
    %v307 = vmul.f32 %v270, %v304
    %v308 = vmul.f32 %v271, %v304
    %v309 = vmul.f32 %v272, %v304
    %v310 = vmul.f32 %v273, %v304
    %v311 = vmul.f32 %v274, %v304
    %v312 = vmul.f32 %v275, %v304
    %v313 = vmul.f32 %v276, %v304
    %v314 = vmul.f32 %v277, %v304
    %v315 = vmul.f32 %v278, %v304
    %v316 = vmul.f32 %v279, %v304
    %v317 = vmul.f32 %v280, %v304
    %v318 = vmul.f32 %v281, %v304
    %v319 = vmul.f32 %v282, %v304
    %v320 = vmul.f32 %v283, %v304
    %v321 = vmul.f32 %v284, %v304
    %v322 = vmul.f32 %v285, %v304
    %v323 = vmul.f32 %v286, %v304
    %v324 = vmul.f32 %v287, %v304
    %v325 = vmul.f32 %v288, %v304
    %v326 = vmul.f32 %v289, %v304
    %v327 = vmul.f32 %v290, %v304
    %v328 = vmul.f32 %v291, %v304
    %v329 = vmul.f32 %v292, %v304
    %v330 = vmul.f32 %v293, %v304
    %v331 = vmul.f32 %v294, %v304
    %v332 = vmul.f32 %v295, %v304
    %v333 = vmul.f32 %v296, %v304
    %v334 = vmul.f32 %v297, %v304
    %v335 = vmul.f32 %v298, %v304
    %v336 = vmul.f32 %v299, %v304
    %v337 = vadd.f32 %v236, %v305
    %v338 = vadd.f32 %v237, %v306
    %v339 = vadd.f32 %v238, %v307
    %v340 = vadd.f32 %v239, %v308
    %v341 = vadd.f32 %v240, %v309
    %v342 = vadd.f32 %v241, %v310
    %v343 = vadd.f32 %v242, %v311
    %v344 = vadd.f32 %v243, %v312
    %v345 = vadd.f32 %v244, %v313
    %v346 = vadd.f32 %v245, %v314
    %v347 = vadd.f32 %v246, %v315
    %v348 = vadd.f32 %v247, %v316
    %v349 = vadd.f32 %v248, %v317
    %v350 = vadd.f32 %v249, %v318
    %v351 = vadd.f32 %v250, %v319
    %v352 = vadd.f32 %v251, %v320
    %v353 = vadd.f32 %v252, %v321
    %v354 = vadd.f32 %v253, %v322
    %v355 = vadd.f32 %v254, %v323
    %v356 = vadd.f32 %v255, %v324
    %v357 = vadd.f32 %v256, %v325
    %v358 = vadd.f32 %v257, %v326
    %v359 = vadd.f32 %v258, %v327
    %v360 = vadd.f32 %v259, %v328
    %v361 = vadd.f32 %v260, %v329
    %v362 = vadd.f32 %v261, %v330
    %v363 = vadd.f32 %v262, %v331
    %v364 = vadd.f32 %v263, %v332
    %v365 = vadd.f32 %v264, %v333
    %v366 = vadd.f32 %v265, %v334
    %v367 = vadd.f32 %v266, %v335
    %v368 = vadd.f32 %v267, %v336
    %v369 = vld [vmem:[%s198 + $0x9] sm:$0xff]
    %v370 = vld [vmem:[%s198 + $0x11] sm:$0xff]
    %v371 = vld [vmem:[%s198 + $0x29] sm:$0xff]
    %v372 = vld [vmem:[%s198 + $0x31] sm:$0xff]
    %v373 = vld [vmem:[%s198 + $0x49] sm:$0xff]
    %v374 = vld [vmem:[%s198 + $0x51] sm:$0xff]
    %v375 = vld [vmem:[%s198 + $0x69] sm:$0xff]
    %v376 = vld [vmem:[%s198 + $0x71] sm:$0xff]
    %v377 = vld [vmem:[%s198 + $0x89] sm:$0xff]
    %v378 = vld [vmem:[%s198 + $0x91] sm:$0xff]
    %v379 = vld [vmem:[%s198 + $0xa9] sm:$0xff]
    %v380 = vld [vmem:[%s198 + $0xb1] sm:$0xff]
    %v381 = vld [vmem:[%s198 + $0xc9] sm:$0xff]
    %v382 = vld [vmem:[%s198 + $0xd1] sm:$0xff]
    %v383 = vld [vmem:[%s198 + $0xe9] sm:$0xff]
    %v384 = vld [vmem:[%s198 + $0xf1] sm:$0xff]
    %v385 = vld [vmem:[%s198 + $0x109] sm:$0xff]
    %v386 = vld [vmem:[%s198 + $0x111] sm:$0xff]
    %v387 = vld [vmem:[%s198 + $0x129] sm:$0xff]
    %v388 = vld [vmem:[%s198 + $0x131] sm:$0xff]
    %v389 = vld [vmem:[%s198 + $0x149] sm:$0xff]
    %v390 = vld [vmem:[%s198 + $0x151] sm:$0xff]
    %v391 = vld [vmem:[%s198 + $0x169] sm:$0xff]
    %v392 = vld [vmem:[%s198 + $0x171] sm:$0xff]
    %v393 = vld [vmem:[%s198 + $0x189] sm:$0xff]
    %v394 = vld [vmem:[%s198 + $0x191] sm:$0xff]
    %v395 = vld [vmem:[%s198 + $0x1a9] sm:$0xff]
    %v396 = vld [vmem:[%s198 + $0x1b1] sm:$0xff]
    %v397 = vld [vmem:[%s198 + $0x1c9] sm:$0xff]
    %v398 = vld [vmem:[%s198 + $0x1d1] sm:$0xff]
    %v399 = vld [vmem:[%s198 + $0x1e9] sm:$0xff]
    %v400 = vld [vmem:[%s198 + $0x1f1] sm:$0xff]
    %v401 = vld [vmem:[%s1 + $0x2] sm:$0x1]
    %v402 = vlaneseq
    %v403 = vshrl.u32 %v402, 7
    %v404 = vsub.s32 0, %v403
    %v405 = vrot.slane %v401, %v404
    %v406 = vmul.f32 %v369, %v405
    %v407 = vmul.f32 %v370, %v405
    %v408 = vmul.f32 %v371, %v405
    %v409 = vmul.f32 %v372, %v405
    %v410 = vmul.f32 %v373, %v405
    %v411 = vmul.f32 %v374, %v405
    %v412 = vmul.f32 %v375, %v405
    %v413 = vmul.f32 %v376, %v405
    %v414 = vmul.f32 %v377, %v405
    %v415 = vmul.f32 %v378, %v405
    %v416 = vmul.f32 %v379, %v405
    %v417 = vmul.f32 %v380, %v405
    %v418 = vmul.f32 %v381, %v405
    %v419 = vmul.f32 %v382, %v405
    %v420 = vmul.f32 %v383, %v405
    %v421 = vmul.f32 %v384, %v405
    %v422 = vmul.f32 %v385, %v405
    %v423 = vmul.f32 %v386, %v405
    %v424 = vmul.f32 %v387, %v405
    %v425 = vmul.f32 %v388, %v405
    %v426 = vmul.f32 %v389, %v405
    %v427 = vmul.f32 %v390, %v405
    %v428 = vmul.f32 %v391, %v405
    %v429 = vmul.f32 %v392, %v405
    %v430 = vmul.f32 %v393, %v405
    %v431 = vmul.f32 %v394, %v405
    %v432 = vmul.f32 %v395, %v405
    %v433 = vmul.f32 %v396, %v405
    %v434 = vmul.f32 %v397, %v405
    %v435 = vmul.f32 %v398, %v405
    %v436 = vmul.f32 %v399, %v405
    %v437 = vmul.f32 %v400, %v405
    %v438 = vadd.f32 %v337, %v406
    %v439 = vadd.f32 %v338, %v407
    %v440 = vadd.f32 %v339, %v408
    %v441 = vadd.f32 %v340, %v409
    %v442 = vadd.f32 %v341, %v410
    %v443 = vadd.f32 %v342, %v411
    %v444 = vadd.f32 %v343, %v412
    %v445 = vadd.f32 %v344, %v413
    %v446 = vadd.f32 %v345, %v414
    %v447 = vadd.f32 %v346, %v415
    %v448 = vadd.f32 %v347, %v416
    %v449 = vadd.f32 %v348, %v417
    %v450 = vadd.f32 %v349, %v418
    %v451 = vadd.f32 %v350, %v419
    %v452 = vadd.f32 %v351, %v420
    %v453 = vadd.f32 %v352, %v421
    %v454 = vadd.f32 %v353, %v422
    %v455 = vadd.f32 %v354, %v423
    %v456 = vadd.f32 %v355, %v424
    %v457 = vadd.f32 %v356, %v425
    %v458 = vadd.f32 %v357, %v426
    %v459 = vadd.f32 %v358, %v427
    %v460 = vadd.f32 %v359, %v428
    %v461 = vadd.f32 %v360, %v429
    %v462 = vadd.f32 %v361, %v430
    %v463 = vadd.f32 %v362, %v431
    %v464 = vadd.f32 %v363, %v432
    %v465 = vadd.f32 %v364, %v433
    %v466 = vadd.f32 %v365, %v434
    %v467 = vadd.f32 %v366, %v435
    %v468 = vadd.f32 %v367, %v436
    %v469 = vadd.f32 %v368, %v437
    %v470 = vld [vmem:[%s101 + $0x7] sm:$0xff]
    %v471 = vld [vmem:[%s101 + $0xf] sm:$0xff]
    %v472 = vld [vmem:[%s101 + $0x27] sm:$0xff]
    %v473 = vld [vmem:[%s101 + $0x2f] sm:$0xff]
    %v474 = vld [vmem:[%s101 + $0x47] sm:$0xff]
    %v475 = vld [vmem:[%s101 + $0x4f] sm:$0xff]
    %v476 = vld [vmem:[%s101 + $0x67] sm:$0xff]
    %v477 = vld [vmem:[%s101 + $0x6f] sm:$0xff]
    %v478 = vld [vmem:[%s101 + $0x87] sm:$0xff]
    %v479 = vld [vmem:[%s101 + $0x8f] sm:$0xff]
    %v480 = vld [vmem:[%s101 + $0xa7] sm:$0xff]
    %v481 = vld [vmem:[%s101 + $0xaf] sm:$0xff]
    %v482 = vld [vmem:[%s101 + $0xc7] sm:$0xff]
    %v483 = vld [vmem:[%s101 + $0xcf] sm:$0xff]
    %v484 = vld [vmem:[%s101 + $0xe7] sm:$0xff]
    %v485 = vld [vmem:[%s101 + $0xef] sm:$0xff]
    %v486 = vld [vmem:[%s101 + $0x107] sm:$0xff]
    %v487 = vld [vmem:[%s101 + $0x10f] sm:$0xff]
    %v488 = vld [vmem:[%s101 + $0x127] sm:$0xff]
    %v489 = vld [vmem:[%s101 + $0x12f] sm:$0xff]
    %v490 = vld [vmem:[%s101 + $0x147] sm:$0xff]
    %v491 = vld [vmem:[%s101 + $0x14f] sm:$0xff]
    %v492 = vld [vmem:[%s101 + $0x167] sm:$0xff]
    %v493 = vld [vmem:[%s101 + $0x16f] sm:$0xff]
    %v494 = vld [vmem:[%s101 + $0x187] sm:$0xff]
    %v495 = vld [vmem:[%s101 + $0x18f] sm:$0xff]
    %v496 = vld [vmem:[%s101 + $0x1a7] sm:$0xff]
    %v497 = vld [vmem:[%s101 + $0x1af] sm:$0xff]
    %v498 = vld [vmem:[%s101 + $0x1c7] sm:$0xff]
    %v499 = vld [vmem:[%s101 + $0x1cf] sm:$0xff]
    %v500 = vld [vmem:[%s101 + $0x1e7] sm:$0xff]
    %v501 = vld [vmem:[%s101 + $0x1ef] sm:$0xff]
    %v502 = vld [vmem:[%s1 + $0x3] sm:$0x1]
    %v503 = vlaneseq
    %v504 = vshrl.u32 %v503, 7
    %v505 = vsub.s32 0, %v504
    %v506 = vrot.slane %v502, %v505
    %v507 = vmul.f32 %v470, %v506
    %v508 = vmul.f32 %v471, %v506
    %v509 = vmul.f32 %v472, %v506
    %v510 = vmul.f32 %v473, %v506
    %v511 = vmul.f32 %v474, %v506
    %v512 = vmul.f32 %v475, %v506
    %v513 = vmul.f32 %v476, %v506
    %v514 = vmul.f32 %v477, %v506
    %v515 = vmul.f32 %v478, %v506
    %v516 = vmul.f32 %v479, %v506
    %v517 = vmul.f32 %v480, %v506
    %v518 = vmul.f32 %v481, %v506
    %v519 = vmul.f32 %v482, %v506
    %v520 = vmul.f32 %v483, %v506
    %v521 = vmul.f32 %v484, %v506
    %v522 = vmul.f32 %v485, %v506
    %v523 = vmul.f32 %v486, %v506
    %v524 = vmul.f32 %v487, %v506
    %v525 = vmul.f32 %v488, %v506
    %v526 = vmul.f32 %v489, %v506
    %v527 = vmul.f32 %v490, %v506
    %v528 = vmul.f32 %v491, %v506
    %v529 = vmul.f32 %v492, %v506
    %v530 = vmul.f32 %v493, %v506
    %v531 = vmul.f32 %v494, %v506
    %v532 = vmul.f32 %v495, %v506
    %v533 = vmul.f32 %v496, %v506
    %v534 = vmul.f32 %v497, %v506
    %v535 = vmul.f32 %v498, %v506
    %v536 = vmul.f32 %v499, %v506
    %v537 = vmul.f32 %v500, %v506
    %v538 = vmul.f32 %v501, %v506
    %v539 = vadd.f32 %v438, %v507
    %v540 = vadd.f32 %v439, %v508
    %v541 = vadd.f32 %v440, %v509
    %v542 = vadd.f32 %v441, %v510
    %v543 = vadd.f32 %v442, %v511
    %v544 = vadd.f32 %v443, %v512
    %v545 = vadd.f32 %v444, %v513
    %v546 = vadd.f32 %v445, %v514
    %v547 = vadd.f32 %v446, %v515
    %v548 = vadd.f32 %v447, %v516
    %v549 = vadd.f32 %v448, %v517
    %v550 = vadd.f32 %v449, %v518
    %v551 = vadd.f32 %v450, %v519
    %v552 = vadd.f32 %v451, %v520
    %v553 = vadd.f32 %v452, %v521
    %v554 = vadd.f32 %v453, %v522
    %v555 = vadd.f32 %v454, %v523
    %v556 = vadd.f32 %v455, %v524
    %v557 = vadd.f32 %v456, %v525
    %v558 = vadd.f32 %v457, %v526
    %v559 = vadd.f32 %v458, %v527
    %v560 = vadd.f32 %v459, %v528
    %v561 = vadd.f32 %v460, %v529
    %v562 = vadd.f32 %v461, %v530
    %v563 = vadd.f32 %v462, %v531
    %v564 = vadd.f32 %v463, %v532
    %v565 = vadd.f32 %v464, %v533
    %v566 = vadd.f32 %v465, %v534
    %v567 = vadd.f32 %v466, %v535
    %v568 = vadd.f32 %v467, %v536
    %v569 = vadd.f32 %v468, %v537
    %v570 = vadd.f32 %v469, %v538
    %v571 = vld [vmem:[%s101 + $0x8] sm:$0xff]
    %v572 = vld [vmem:[%s101 + $0x10] sm:$0xff]
    %v573 = vld [vmem:[%s101 + $0x28] sm:$0xff]
    %v574 = vld [vmem:[%s101 + $0x30] sm:$0xff]
    %v575 = vld [vmem:[%s101 + $0x48] sm:$0xff]
    %v576 = vld [vmem:[%s101 + $0x50] sm:$0xff]
    %v577 = vld [vmem:[%s101 + $0x68] sm:$0xff]
    %v578 = vld [vmem:[%s101 + $0x70] sm:$0xff]
    %v579 = vld [vmem:[%s101 + $0x88] sm:$0xff]
    %v580 = vld [vmem:[%s101 + $0x90] sm:$0xff]
    %v581 = vld [vmem:[%s101 + $0xa8] sm:$0xff]
    %v582 = vld [vmem:[%s101 + $0xb0] sm:$0xff]
    %v583 = vld [vmem:[%s101 + $0xc8] sm:$0xff]
    %v584 = vld [vmem:[%s101 + $0xd0] sm:$0xff]
    %v585 = vld [vmem:[%s101 + $0xe8] sm:$0xff]
    %v586 = vld [vmem:[%s101 + $0xf0] sm:$0xff]
    %v587 = vld [vmem:[%s101 + $0x108] sm:$0xff]
    %v588 = vld [vmem:[%s101 + $0x110] sm:$0xff]
    %v589 = vld [vmem:[%s101 + $0x128] sm:$0xff]
    %v590 = vld [vmem:[%s101 + $0x130] sm:$0xff]
    %v591 = vld [vmem:[%s101 + $0x148] sm:$0xff]
    %v592 = vld [vmem:[%s101 + $0x150] sm:$0xff]
    %v593 = vld [vmem:[%s101 + $0x168] sm:$0xff]
    %v594 = vld [vmem:[%s101 + $0x170] sm:$0xff]
    %v595 = vld [vmem:[%s101 + $0x188] sm:$0xff]
    %v596 = vld [vmem:[%s101 + $0x190] sm:$0xff]
    %v597 = vld [vmem:[%s101 + $0x1a8] sm:$0xff]
    %v598 = vld [vmem:[%s101 + $0x1b0] sm:$0xff]
    %v599 = vld [vmem:[%s101 + $0x1c8] sm:$0xff]
    %v600 = vld [vmem:[%s101 + $0x1d0] sm:$0xff]
    %v601 = vld [vmem:[%s101 + $0x1e8] sm:$0xff]
    %v602 = vld [vmem:[%s101 + $0x1f0] sm:$0xff]
    %v603 = vld [vmem:[%s1 + $0x4] sm:$0x1]
    %v604 = vlaneseq
    %v605 = vshrl.u32 %v604, 7
    %v606 = vsub.s32 0, %v605
    %v607 = vrot.slane %v603, %v606
    %v608 = vmul.f32 %v571, %v607
    %v609 = vmul.f32 %v572, %v607
    %v610 = vmul.f32 %v573, %v607
    %v611 = vmul.f32 %v574, %v607
    %v612 = vmul.f32 %v575, %v607
    %v613 = vmul.f32 %v576, %v607
    %v614 = vmul.f32 %v577, %v607
    %v615 = vmul.f32 %v578, %v607
    %v616 = vmul.f32 %v579, %v607
    %v617 = vmul.f32 %v580, %v607
    %v618 = vmul.f32 %v581, %v607
    %v619 = vmul.f32 %v582, %v607
    %v620 = vmul.f32 %v583, %v607
    %v621 = vmul.f32 %v584, %v607
    %v622 = vmul.f32 %v585, %v607
    %v623 = vmul.f32 %v586, %v607
    %v624 = vmul.f32 %v587, %v607
    %v625 = vmul.f32 %v588, %v607
    %v626 = vmul.f32 %v589, %v607
    %v627 = vmul.f32 %v590, %v607
    %v628 = vmul.f32 %v591, %v607
    %v629 = vmul.f32 %v592, %v607
    %v630 = vmul.f32 %v593, %v607
    %v631 = vmul.f32 %v594, %v607
    %v632 = vmul.f32 %v595, %v607
    %v633 = vmul.f32 %v596, %v607
    %v634 = vmul.f32 %v597, %v607
    %v635 = vmul.f32 %v598, %v607
    %v636 = vmul.f32 %v599, %v607
    %v637 = vmul.f32 %v600, %v607
    %v638 = vmul.f32 %v601, %v607
    %v639 = vmul.f32 %v602, %v607
    %v640 = vadd.f32 %v539, %v608
    %v641 = vadd.f32 %v540, %v609
    %v642 = vadd.f32 %v541, %v610
    %v643 = vadd.f32 %v542, %v611
    %v644 = vadd.f32 %v543, %v612
    %v645 = vadd.f32 %v544, %v613
    %v646 = vadd.f32 %v545, %v614
    %v647 = vadd.f32 %v546, %v615
    %v648 = vadd.f32 %v547, %v616
    %v649 = vadd.f32 %v548, %v617
    %v650 = vadd.f32 %v549, %v618
    %v651 = vadd.f32 %v550, %v619
    %v652 = vadd.f32 %v551, %v620
    %v653 = vadd.f32 %v552, %v621
    %v654 = vadd.f32 %v553, %v622
    %v655 = vadd.f32 %v554, %v623
    %v656 = vadd.f32 %v555, %v624
    %v657 = vadd.f32 %v556, %v625
    %v658 = vadd.f32 %v557, %v626
    %v659 = vadd.f32 %v558, %v627
    %v660 = vadd.f32 %v559, %v628
    %v661 = vadd.f32 %v560, %v629
    %v662 = vadd.f32 %v561, %v630
    %v663 = vadd.f32 %v562, %v631
    %v664 = vadd.f32 %v563, %v632
    %v665 = vadd.f32 %v564, %v633
    %v666 = vadd.f32 %v565, %v634
    %v667 = vadd.f32 %v566, %v635
    %v668 = vadd.f32 %v567, %v636
    %v669 = vadd.f32 %v568, %v637
    %v670 = vadd.f32 %v569, %v638
    %v671 = vadd.f32 %v570, %v639
    %v672 = vld [vmem:[%s101 + $0x9] sm:$0xff]
    %v673 = vld [vmem:[%s101 + $0x11] sm:$0xff]
    %v674 = vld [vmem:[%s101 + $0x29] sm:$0xff]
    %v675 = vld [vmem:[%s101 + $0x31] sm:$0xff]
    %v676 = vld [vmem:[%s101 + $0x49] sm:$0xff]
    %v677 = vld [vmem:[%s101 + $0x51] sm:$0xff]
    %v678 = vld [vmem:[%s101 + $0x69] sm:$0xff]
    %v679 = vld [vmem:[%s101 + $0x71] sm:$0xff]
    %v680 = vld [vmem:[%s101 + $0x89] sm:$0xff]
    %v681 = vld [vmem:[%s101 + $0x91] sm:$0xff]
    %v682 = vld [vmem:[%s101 + $0xa9] sm:$0xff]
    %v683 = vld [vmem:[%s101 + $0xb1] sm:$0xff]
    %v684 = vld [vmem:[%s101 + $0xc9] sm:$0xff]
    %v685 = vld [vmem:[%s101 + $0xd1] sm:$0xff]
    %v686 = vld [vmem:[%s101 + $0xe9] sm:$0xff]
    %v687 = vld [vmem:[%s101 + $0xf1] sm:$0xff]
    %v688 = vld [vmem:[%s101 + $0x109] sm:$0xff]
    %v689 = vld [vmem:[%s101 + $0x111] sm:$0xff]
    %v690 = vld [vmem:[%s101 + $0x129] sm:$0xff]
    %v691 = vld [vmem:[%s101 + $0x131] sm:$0xff]
    %v692 = vld [vmem:[%s101 + $0x149] sm:$0xff]
    %v693 = vld [vmem:[%s101 + $0x151] sm:$0xff]
    %v694 = vld [vmem:[%s101 + $0x169] sm:$0xff]
    %v695 = vld [vmem:[%s101 + $0x171] sm:$0xff]
    %v696 = vld [vmem:[%s101 + $0x189] sm:$0xff]
    %v697 = vld [vmem:[%s101 + $0x191] sm:$0xff]
    %v698 = vld [vmem:[%s101 + $0x1a9] sm:$0xff]
    %v699 = vld [vmem:[%s101 + $0x1b1] sm:$0xff]
    %v700 = vld [vmem:[%s101 + $0x1c9] sm:$0xff]
    %v701 = vld [vmem:[%s101 + $0x1d1] sm:$0xff]
    %v702 = vld [vmem:[%s101 + $0x1e9] sm:$0xff]
    %v703 = vld [vmem:[%s101 + $0x1f1] sm:$0xff]
    %v704 = vld [vmem:[%s1 + $0x5] sm:$0x1]
    %v705 = vlaneseq
    %v706 = vshrl.u32 %v705, 7
    %v707 = vsub.s32 0, %v706
    %v708 = vrot.slane %v704, %v707
    %v709 = vmul.f32 %v672, %v708
    %v710 = vmul.f32 %v673, %v708
    %v711 = vmul.f32 %v674, %v708
    %v712 = vmul.f32 %v675, %v708
    %v713 = vmul.f32 %v676, %v708
    %v714 = vmul.f32 %v677, %v708
    %v715 = vmul.f32 %v678, %v708
    %v716 = vmul.f32 %v679, %v708
    %v717 = vmul.f32 %v680, %v708
    %v718 = vmul.f32 %v681, %v708
    %v719 = vmul.f32 %v682, %v708
    %v720 = vmul.f32 %v683, %v708
    %v721 = vmul.f32 %v684, %v708
    %v722 = vmul.f32 %v685, %v708
    %v723 = vmul.f32 %v686, %v708
    %v724 = vmul.f32 %v687, %v708
    %v725 = vmul.f32 %v688, %v708
    %v726 = vmul.f32 %v689, %v708
    %v727 = vmul.f32 %v690, %v708
    %v728 = vmul.f32 %v691, %v708
    %v729 = vmul.f32 %v692, %v708
    %v730 = vmul.f32 %v693, %v708
    %v731 = vmul.f32 %v694, %v708
    %v732 = vmul.f32 %v695, %v708
    %v733 = vmul.f32 %v696, %v708
    %v734 = vmul.f32 %v697, %v708
    %v735 = vmul.f32 %v698, %v708
    %v736 = vmul.f32 %v699, %v708
    %v737 = vmul.f32 %v700, %v708
    %v738 = vmul.f32 %v701, %v708
    %v739 = vmul.f32 %v702, %v708
    %v740 = vmul.f32 %v703, %v708
    %v741 = vadd.f32 %v640, %v709
    %v742 = vadd.f32 %v641, %v710
    %v743 = vadd.f32 %v642, %v711
    %v744 = vadd.f32 %v643, %v712
    %v745 = vadd.f32 %v644, %v713
    %v746 = vadd.f32 %v645, %v714
    %v747 = vadd.f32 %v646, %v715
    %v748 = vadd.f32 %v647, %v716
    %v749 = vadd.f32 %v648, %v717
    %v750 = vadd.f32 %v649, %v718
    %v751 = vadd.f32 %v650, %v719
    %v752 = vadd.f32 %v651, %v720
    %v753 = vadd.f32 %v652, %v721
    %v754 = vadd.f32 %v653, %v722
    %v755 = vadd.f32 %v654, %v723
    %v756 = vadd.f32 %v655, %v724
    %v757 = vadd.f32 %v656, %v725
    %v758 = vadd.f32 %v657, %v726
    %v759 = vadd.f32 %v658, %v727
    %v760 = vadd.f32 %v659, %v728
    %v761 = vadd.f32 %v660, %v729
    %v762 = vadd.f32 %v661, %v730
    %v763 = vadd.f32 %v662, %v731
    %v764 = vadd.f32 %v663, %v732
    %v765 = vadd.f32 %v664, %v733
    %v766 = vadd.f32 %v665, %v734
    %v767 = vadd.f32 %v666, %v735
    %v768 = vadd.f32 %v667, %v736
    %v769 = vadd.f32 %v668, %v737
    %v770 = vadd.f32 %v669, %v738
    %v771 = vadd.f32 %v670, %v739
    %v772 = vadd.f32 %v671, %v740
    %s773 = scalar_lea.vmem [#allocation2], 288
    %v774 = vld [vmem:[%s773 + $0x7] sm:$0xff]
    %v775 = vld [vmem:[%s773 + $0xf] sm:$0xff]
    %v776 = vld [vmem:[%s773 + $0x27] sm:$0xff]
    %v777 = vld [vmem:[%s773 + $0x2f] sm:$0xff]
    %v778 = vld [vmem:[%s773 + $0x47] sm:$0xff]
    %v779 = vld [vmem:[%s773 + $0x4f] sm:$0xff]
    %v780 = vld [vmem:[%s773 + $0x67] sm:$0xff]
    %v781 = vld [vmem:[%s773 + $0x6f] sm:$0xff]
    %v782 = vld [vmem:[%s773 + $0x87] sm:$0xff]
    %v783 = vld [vmem:[%s773 + $0x8f] sm:$0xff]
    %v784 = vld [vmem:[%s773 + $0xa7] sm:$0xff]
    %v785 = vld [vmem:[%s773 + $0xaf] sm:$0xff]
    %v786 = vld [vmem:[%s773 + $0xc7] sm:$0xff]
    %v787 = vld [vmem:[%s773 + $0xcf] sm:$0xff]
    %v788 = vld [vmem:[%s773 + $0xe7] sm:$0xff]
    %v789 = vld [vmem:[%s773 + $0xef] sm:$0xff]
    %v790 = vld [vmem:[%s773 + $0x107] sm:$0xff]
    %v791 = vld [vmem:[%s773 + $0x10f] sm:$0xff]
    %v792 = vld [vmem:[%s773 + $0x127] sm:$0xff]
    %v793 = vld [vmem:[%s773 + $0x12f] sm:$0xff]
    %v794 = vld [vmem:[%s773 + $0x147] sm:$0xff]
    %v795 = vld [vmem:[%s773 + $0x14f] sm:$0xff]
    %v796 = vld [vmem:[%s773 + $0x167] sm:$0xff]
    %v797 = vld [vmem:[%s773 + $0x16f] sm:$0xff]
    %v798 = vld [vmem:[%s773 + $0x187] sm:$0xff]
    %v799 = vld [vmem:[%s773 + $0x18f] sm:$0xff]
    %v800 = vld [vmem:[%s773 + $0x1a7] sm:$0xff]
    %v801 = vld [vmem:[%s773 + $0x1af] sm:$0xff]
    %v802 = vld [vmem:[%s773 + $0x1c7] sm:$0xff]
    %v803 = vld [vmem:[%s773 + $0x1cf] sm:$0xff]
    %v804 = vld [vmem:[%s773 + $0x1e7] sm:$0xff]
    %v805 = vld [vmem:[%s773 + $0x1ef] sm:$0xff]
    %v806 = vld [vmem:[%s1 + $0x6] sm:$0x1]
    %v807 = vlaneseq
    %v808 = vshrl.u32 %v807, 7
    %v809 = vsub.s32 0, %v808
    %v810 = vrot.slane %v806, %v809
    %v811 = vmul.f32 %v774, %v810
    %v812 = vmul.f32 %v775, %v810
    %v813 = vmul.f32 %v776, %v810
    %v814 = vmul.f32 %v777, %v810
    %v815 = vmul.f32 %v778, %v810
    %v816 = vmul.f32 %v779, %v810
    %v817 = vmul.f32 %v780, %v810
    %v818 = vmul.f32 %v781, %v810
    %v819 = vmul.f32 %v782, %v810
    %v820 = vmul.f32 %v783, %v810
    %v821 = vmul.f32 %v784, %v810
    %v822 = vmul.f32 %v785, %v810
    %v823 = vmul.f32 %v786, %v810
    %v824 = vmul.f32 %v787, %v810
    %v825 = vmul.f32 %v788, %v810
    %v826 = vmul.f32 %v789, %v810
    %v827 = vmul.f32 %v790, %v810
    %v828 = vmul.f32 %v791, %v810
    %v829 = vmul.f32 %v792, %v810
    %v830 = vmul.f32 %v793, %v810
    %v831 = vmul.f32 %v794, %v810
    %v832 = vmul.f32 %v795, %v810
    %v833 = vmul.f32 %v796, %v810
    %v834 = vmul.f32 %v797, %v810
    %v835 = vmul.f32 %v798, %v810
    %v836 = vmul.f32 %v799, %v810
    %v837 = vmul.f32 %v800, %v810
    %v838 = vmul.f32 %v801, %v810
    %v839 = vmul.f32 %v802, %v810
    %v840 = vmul.f32 %v803, %v810
    %v841 = vmul.f32 %v804, %v810
    %v842 = vmul.f32 %v805, %v810
    %v843 = vadd.f32 %v741, %v811
    %v844 = vadd.f32 %v742, %v812
    %v845 = vadd.f32 %v743, %v813
    %v846 = vadd.f32 %v744, %v814
    %v847 = vadd.f32 %v745, %v815
    %v848 = vadd.f32 %v746, %v816
    %v849 = vadd.f32 %v747, %v817
    %v850 = vadd.f32 %v748, %v818
    %v851 = vadd.f32 %v749, %v819
    %v852 = vadd.f32 %v750, %v820
    %v853 = vadd.f32 %v751, %v821
    %v854 = vadd.f32 %v752, %v822
    %v855 = vadd.f32 %v753, %v823
    %v856 = vadd.f32 %v754, %v824
    %v857 = vadd.f32 %v755, %v825
    %v858 = vadd.f32 %v756, %v826
    %v859 = vadd.f32 %v757, %v827
    %v860 = vadd.f32 %v758, %v828
    %v861 = vadd.f32 %v759, %v829
    %v862 = vadd.f32 %v760, %v830
    %v863 = vadd.f32 %v761, %v831
    %v864 = vadd.f32 %v762, %v832
    %v865 = vadd.f32 %v763, %v833
    %v866 = vadd.f32 %v764, %v834
    %v867 = vadd.f32 %v765, %v835
    %v868 = vadd.f32 %v766, %v836
    %v869 = vadd.f32 %v767, %v837
    %v870 = vadd.f32 %v768, %v838
    %v871 = vadd.f32 %v769, %v839
    %v872 = vadd.f32 %v770, %v840
    %v873 = vadd.f32 %v771, %v841
    %v874 = vadd.f32 %v772, %v842
    %v875 = vld [vmem:[%s773 + $0x8] sm:$0xff]
    %v876 = vld [vmem:[%s773 + $0x10] sm:$0xff]
    %v877 = vld [vmem:[%s773 + $0x28] sm:$0xff]
    %v878 = vld [vmem:[%s773 + $0x30] sm:$0xff]
    %v879 = vld [vmem:[%s773 + $0x48] sm:$0xff]
    %v880 = vld [vmem:[%s773 + $0x50] sm:$0xff]
    %v881 = vld [vmem:[%s773 + $0x68] sm:$0xff]
    %v882 = vld [vmem:[%s773 + $0x70] sm:$0xff]
    %v883 = vld [vmem:[%s773 + $0x88] sm:$0xff]
    %v884 = vld [vmem:[%s773 + $0x90] sm:$0xff]
    %v885 = vld [vmem:[%s773 + $0xa8] sm:$0xff]
    %v886 = vld [vmem:[%s773 + $0xb0] sm:$0xff]
    %v887 = vld [vmem:[%s773 + $0xc8] sm:$0xff]
    %v888 = vld [vmem:[%s773 + $0xd0] sm:$0xff]
    %v889 = vld [vmem:[%s773 + $0xe8] sm:$0xff]
    %v890 = vld [vmem:[%s773 + $0xf0] sm:$0xff]
    %v891 = vld [vmem:[%s773 + $0x108] sm:$0xff]
    %v892 = vld [vmem:[%s773 + $0x110] sm:$0xff]
    %v893 = vld [vmem:[%s773 + $0x128] sm:$0xff]
    %v894 = vld [vmem:[%s773 + $0x130] sm:$0xff]
    %v895 = vld [vmem:[%s773 + $0x148] sm:$0xff]
    %v896 = vld [vmem:[%s773 + $0x150] sm:$0xff]
    %v897 = vld [vmem:[%s773 + $0x168] sm:$0xff]
    %v898 = vld [vmem:[%s773 + $0x170] sm:$0xff]
    %v899 = vld [vmem:[%s773 + $0x188] sm:$0xff]
    %v900 = vld [vmem:[%s773 + $0x190] sm:$0xff]
    %v901 = vld [vmem:[%s773 + $0x1a8] sm:$0xff]
    %v902 = vld [vmem:[%s773 + $0x1b0] sm:$0xff]
    %v903 = vld [vmem:[%s773 + $0x1c8] sm:$0xff]
    %v904 = vld [vmem:[%s773 + $0x1d0] sm:$0xff]
    %v905 = vld [vmem:[%s773 + $0x1e8] sm:$0xff]
    %v906 = vld [vmem:[%s773 + $0x1f0] sm:$0xff]
    %v907 = vld [vmem:[%s1 + $0x7] sm:$0x1]
    %v908 = vlaneseq
    %v909 = vshrl.u32 %v908, 7
    %v910 = vsub.s32 0, %v909
    %v911 = vrot.slane %v907, %v910
    %v912 = vmul.f32 %v875, %v911
    %v913 = vmul.f32 %v876, %v911
    %v914 = vmul.f32 %v877, %v911
    %v915 = vmul.f32 %v878, %v911
    %v916 = vmul.f32 %v879, %v911
    %v917 = vmul.f32 %v880, %v911
    %v918 = vmul.f32 %v881, %v911
    %v919 = vmul.f32 %v882, %v911
    %v920 = vmul.f32 %v883, %v911
    %v921 = vmul.f32 %v884, %v911
    %v922 = vmul.f32 %v885, %v911
    %v923 = vmul.f32 %v886, %v911
    %v924 = vmul.f32 %v887, %v911
    %v925 = vmul.f32 %v888, %v911
    %v926 = vmul.f32 %v889, %v911
    %v927 = vmul.f32 %v890, %v911
    %v928 = vmul.f32 %v891, %v911
    %v929 = vmul.f32 %v892, %v911
    %v930 = vmul.f32 %v893, %v911
    %v931 = vmul.f32 %v894, %v911
    %v932 = vmul.f32 %v895, %v911
    %v933 = vmul.f32 %v896, %v911
    %v934 = vmul.f32 %v897, %v911
    %v935 = vmul.f32 %v898, %v911
    %v936 = vmul.f32 %v899, %v911
    %v937 = vmul.f32 %v900, %v911
    %v938 = vmul.f32 %v901, %v911
    %v939 = vmul.f32 %v902, %v911
    %v940 = vmul.f32 %v903, %v911
    %v941 = vmul.f32 %v904, %v911
    %v942 = vmul.f32 %v905, %v911
    %v943 = vmul.f32 %v906, %v911
    %v944 = vadd.f32 %v843, %v912
    %v945 = vadd.f32 %v844, %v913
    %v946 = vadd.f32 %v845, %v914
    %v947 = vadd.f32 %v846, %v915
    %v948 = vadd.f32 %v847, %v916
    %v949 = vadd.f32 %v848, %v917
    %v950 = vadd.f32 %v849, %v918
    %v951 = vadd.f32 %v850, %v919
    %v952 = vadd.f32 %v851, %v920
    %v953 = vadd.f32 %v852, %v921
    %v954 = vadd.f32 %v853, %v922
    %v955 = vadd.f32 %v854, %v923
    %v956 = vadd.f32 %v855, %v924
    %v957 = vadd.f32 %v856, %v925
    %v958 = vadd.f32 %v857, %v926
    %v959 = vadd.f32 %v858, %v927
    %v960 = vadd.f32 %v859, %v928
    %v961 = vadd.f32 %v860, %v929
    %v962 = vadd.f32 %v861, %v930
    %v963 = vadd.f32 %v862, %v931
    %v964 = vadd.f32 %v863, %v932
    %v965 = vadd.f32 %v864, %v933
    %v966 = vadd.f32 %v865, %v934
    %v967 = vadd.f32 %v866, %v935
    %v968 = vadd.f32 %v867, %v936
    %v969 = vadd.f32 %v868, %v937
    %v970 = vadd.f32 %v869, %v938
    %v971 = vadd.f32 %v870, %v939
    %v972 = vadd.f32 %v871, %v940
    %v973 = vadd.f32 %v872, %v941
    %v974 = vadd.f32 %v873, %v942
    %v975 = vadd.f32 %v874, %v943
    %v976 = vld [vmem:[%s773 + $0x9] sm:$0xff]
    %v977 = vld [vmem:[%s773 + $0x11] sm:$0xff]
    %v978 = vld [vmem:[%s773 + $0x29] sm:$0xff]
    %v979 = vld [vmem:[%s773 + $0x31] sm:$0xff]
    %v980 = vld [vmem:[%s773 + $0x49] sm:$0xff]
    %v981 = vld [vmem:[%s773 + $0x51] sm:$0xff]
    %v982 = vld [vmem:[%s773 + $0x69] sm:$0xff]
    %v983 = vld [vmem:[%s773 + $0x71] sm:$0xff]
    %v984 = vld [vmem:[%s773 + $0x89] sm:$0xff]
    %v985 = vld [vmem:[%s773 + $0x91] sm:$0xff]
    %v986 = vld [vmem:[%s773 + $0xa9] sm:$0xff]
    %v987 = vld [vmem:[%s773 + $0xb1] sm:$0xff]
    %v988 = vld [vmem:[%s773 + $0xc9] sm:$0xff]
    %v989 = vld [vmem:[%s773 + $0xd1] sm:$0xff]
    %v990 = vld [vmem:[%s773 + $0xe9] sm:$0xff]
    %v991 = vld [vmem:[%s773 + $0xf1] sm:$0xff]
    %v992 = vld [vmem:[%s773 + $0x109] sm:$0xff]
    %v993 = vld [vmem:[%s773 + $0x111] sm:$0xff]
    %v994 = vld [vmem:[%s773 + $0x129] sm:$0xff]
    %v995 = vld [vmem:[%s773 + $0x131] sm:$0xff]
    %v996 = vld [vmem:[%s773 + $0x149] sm:$0xff]
    %v997 = vld [vmem:[%s773 + $0x151] sm:$0xff]
    %v998 = vld [vmem:[%s773 + $0x169] sm:$0xff]
    %v999 = vld [vmem:[%s773 + $0x171] sm:$0xff]
    %v1000 = vld [vmem:[%s773 + $0x189] sm:$0xff]
    %v1001 = vld [vmem:[%s773 + $0x191] sm:$0xff]
    %v1002 = vld [vmem:[%s773 + $0x1a9] sm:$0xff]
    %v1003 = vld [vmem:[%s773 + $0x1b1] sm:$0xff]
    %v1004 = vld [vmem:[%s773 + $0x1c9] sm:$0xff]
    %v1005 = vld [vmem:[%s773 + $0x1d1] sm:$0xff]
    %v1006 = vld [vmem:[%s773 + $0x1e9] sm:$0xff]
    %v1007 = vld [vmem:[%s773 + $0x1f1] sm:$0xff]
    %v1008 = vld [vmem:[%s1 + $0x8] sm:$0x1]
    %v1009 = vlaneseq
    %v1010 = vshrl.u32 %v1009, 7
    %v1011 = vsub.s32 0, %v1010
    %v1012 = vrot.slane %v1008, %v1011
    %v1013 = vmul.f32 %v976, %v1012
    %v1014 = vmul.f32 %v977, %v1012
    %v1015 = vmul.f32 %v978, %v1012
    %v1016 = vmul.f32 %v979, %v1012
    %v1017 = vmul.f32 %v980, %v1012
    %v1018 = vmul.f32 %v981, %v1012
    %v1019 = vmul.f32 %v982, %v1012
    %v1020 = vmul.f32 %v983, %v1012
    %v1021 = vmul.f32 %v984, %v1012
    %v1022 = vmul.f32 %v985, %v1012
    %v1023 = vmul.f32 %v986, %v1012
    %v1024 = vmul.f32 %v987, %v1012
    %v1025 = vmul.f32 %v988, %v1012
    %v1026 = vmul.f32 %v989, %v1012
    %v1027 = vmul.f32 %v990, %v1012
    %v1028 = vmul.f32 %v991, %v1012
    %v1029 = vmul.f32 %v992, %v1012
    %v1030 = vmul.f32 %v993, %v1012
    %v1031 = vmul.f32 %v994, %v1012
    %v1032 = vmul.f32 %v995, %v1012
    %v1033 = vmul.f32 %v996, %v1012
    %v1034 = vmul.f32 %v997, %v1012
    %v1035 = vmul.f32 %v998, %v1012
    %v1036 = vmul.f32 %v999, %v1012
    %v1037 = vmul.f32 %v1000, %v1012
    %v1038 = vmul.f32 %v1001, %v1012
    %v1039 = vmul.f32 %v1002, %v1012
    %v1040 = vmul.f32 %v1003, %v1012
    %v1041 = vmul.f32 %v1004, %v1012
    %v1042 = vmul.f32 %v1005, %v1012
    %v1043 = vmul.f32 %v1006, %v1012
    %v1044 = vmul.f32 %v1007, %v1012
    %v1045 = vadd.f32 %v944, %v1013
    %v1046 = vadd.f32 %v945, %v1014
    %v1047 = vadd.f32 %v946, %v1015
    %v1048 = vadd.f32 %v947, %v1016
    %v1049 = vadd.f32 %v948, %v1017
    %v1050 = vadd.f32 %v949, %v1018
    %v1051 = vadd.f32 %v950, %v1019
    %v1052 = vadd.f32 %v951, %v1020
    %v1053 = vadd.f32 %v952, %v1021
    %v1054 = vadd.f32 %v953, %v1022
    %v1055 = vadd.f32 %v954, %v1023
    %v1056 = vadd.f32 %v955, %v1024
    %v1057 = vadd.f32 %v956, %v1025
    %v1058 = vadd.f32 %v957, %v1026
    %v1059 = vadd.f32 %v958, %v1027
    %v1060 = vadd.f32 %v959, %v1028
    %v1061 = vadd.f32 %v960, %v1029
    %v1062 = vadd.f32 %v961, %v1030
    %v1063 = vadd.f32 %v962, %v1031
    %v1064 = vadd.f32 %v963, %v1032
    %v1065 = vadd.f32 %v964, %v1033
    %v1066 = vadd.f32 %v965, %v1034
    %v1067 = vadd.f32 %v966, %v1035
    %v1068 = vadd.f32 %v967, %v1036
    %v1069 = vadd.f32 %v968, %v1037
    %v1070 = vadd.f32 %v969, %v1038
    %v1071 = vadd.f32 %v970, %v1039
    %v1072 = vadd.f32 %v971, %v1040
    %v1073 = vadd.f32 %v972, %v1041
    %v1074 = vadd.f32 %v973, %v1042
    %v1075 = vadd.f32 %v974, %v1043
    %v1076 = vadd.f32 %v975, %v1044
    %v1077 = vld [vmem:[%s2] sm:$0x1]
    %v1078 = vlaneseq
    %v1079 = vshrl.u32 %v1078, 7
    %v1080 = vsub.s32 0, %v1079
    %v1081 = vrot.slane %v1077, %v1080
    %v1082 = vadd.f32 %v1045, %v1081
    %v1083 = vadd.f32 %v1046, %v1081
    %v1084 = vadd.f32 %v1047, %v1081
    %v1085 = vadd.f32 %v1048, %v1081
    %v1086 = vadd.f32 %v1049, %v1081
    %v1087 = vadd.f32 %v1050, %v1081
    %v1088 = vadd.f32 %v1051, %v1081
    %v1089 = vadd.f32 %v1052, %v1081
    %v1090 = vadd.f32 %v1053, %v1081
    %v1091 = vadd.f32 %v1054, %v1081
    %v1092 = vadd.f32 %v1055, %v1081
    %v1093 = vadd.f32 %v1056, %v1081
    %v1094 = vadd.f32 %v1057, %v1081
    %v1095 = vadd.f32 %v1058, %v1081
    %v1096 = vadd.f32 %v1059, %v1081
    %v1097 = vadd.f32 %v1060, %v1081
    %v1098 = vadd.f32 %v1061, %v1081
    %v1099 = vadd.f32 %v1062, %v1081
    %v1100 = vadd.f32 %v1063, %v1081
    %v1101 = vadd.f32 %v1064, %v1081
    %v1102 = vadd.f32 %v1065, %v1081
    %v1103 = vadd.f32 %v1066, %v1081
    %v1104 = vadd.f32 %v1067, %v1081
    %v1105 = vadd.f32 %v1068, %v1081
    %v1106 = vadd.f32 %v1069, %v1081
    %v1107 = vadd.f32 %v1070, %v1081
    %v1108 = vadd.f32 %v1071, %v1081
    %v1109 = vadd.f32 %v1072, %v1081
    %v1110 = vadd.f32 %v1073, %v1081
    %v1111 = vadd.f32 %v1074, %v1081
    %v1112 = vadd.f32 %v1075, %v1081
    %v1113 = vadd.f32 %v1076, %v1081
    %1114 = vst.msk [vmem:[%s101 + $0x8] sm:$0xff] %vm35, %v1082
    %1115 = vst.msk [vmem:[%s101 + $0x10] sm:$0xff] %vm35, %v1083
    %1116 = vst.msk [vmem:[%s101 + $0x28] sm:$0xff] %vm35, %v1084
    %1117 = vst.msk [vmem:[%s101 + $0x30] sm:$0xff] %vm35, %v1085
    %1118 = vst.msk [vmem:[%s101 + $0x48] sm:$0xff] %vm35, %v1086
    %1119 = vst.msk [vmem:[%s101 + $0x50] sm:$0xff] %vm35, %v1087
    %1120 = vst.msk [vmem:[%s101 + $0x68] sm:$0xff] %vm35, %v1088
    %1121 = vst.msk [vmem:[%s101 + $0x70] sm:$0xff] %vm35, %v1089
    %1122 = vst.msk [vmem:[%s101 + $0x88] sm:$0xff] %vm35, %v1090
    %1123 = vst.msk [vmem:[%s101 + $0x90] sm:$0xff] %vm35, %v1091
    %1124 = vst.msk [vmem:[%s101 + $0xa8] sm:$0xff] %vm35, %v1092
    %1125 = vst.msk [vmem:[%s101 + $0xb0] sm:$0xff] %vm35, %v1093
    %1126 = vst.msk [vmem:[%s101 + $0xc8] sm:$0xff] %vm35, %v1094
    %1127 = vst.msk [vmem:[%s101 + $0xd0] sm:$0xff] %vm35, %v1095
    %1128 = vst.msk [vmem:[%s101 + $0xe8] sm:$0xff] %vm35, %v1096
    %1129 = vst.msk [vmem:[%s101 + $0xf0] sm:$0xff] %vm35, %v1097
    %1130 = vst.msk [vmem:[%s101 + $0x108] sm:$0xff] %vm35, %v1098
    %1131 = vst.msk [vmem:[%s101 + $0x110] sm:$0xff] %vm35, %v1099
    %1132 = vst.msk [vmem:[%s101 + $0x128] sm:$0xff] %vm35, %v1100
    %1133 = vst.msk [vmem:[%s101 + $0x130] sm:$0xff] %vm35, %v1101
    %1134 = vst.msk [vmem:[%s101 + $0x148] sm:$0xff] %vm35, %v1102
    %1135 = vst.msk [vmem:[%s101 + $0x150] sm:$0xff] %vm35, %v1103
    %1136 = vst.msk [vmem:[%s101 + $0x168] sm:$0xff] %vm35, %v1104
    %1137 = vst.msk [vmem:[%s101 + $0x170] sm:$0xff] %vm35, %v1105
    %1138 = vst.msk [vmem:[%s101 + $0x188] sm:$0xff] %vm35, %v1106
    %1139 = vst.msk [vmem:[%s101 + $0x190] sm:$0xff] %vm35, %v1107
    %1140 = vst.msk [vmem:[%s101 + $0x1a8] sm:$0xff] %vm35, %v1108
    %1141 = vst.msk [vmem:[%s101 + $0x1b0] sm:$0xff] %vm35, %v1109
    %1142 = vst.msk [vmem:[%s101 + $0x1c8] sm:$0xff] %vm35, %v1110
    %1143 = vst.msk [vmem:[%s101 + $0x1d0] sm:$0xff] %vm35, %v1111
    %1144 = vst.msk [vmem:[%s101 + $0x1e8] sm:$0xff] %vm35, %v1112
    %1145 = vst.msk [vmem:[%s101 + $0x1f0] sm:$0xff] %vm35, %v1113
    %s1146 = scalar_lea.vmem [#allocation2], 160
    %v1147 = vld [vmem:[%s1146 + $0x5] sm:$0xff]
    %v1148 = vld [vmem:[%s1146 + $0xd] sm:$0xff]
    %v1149 = vld [vmem:[%s1146 + $0x25] sm:$0xff]
    %v1150 = vld [vmem:[%s1146 + $0x2d] sm:$0xff]
    %v1151 = vld [vmem:[%s1146 + $0x45] sm:$0xff]
    %v1152 = vld [vmem:[%s1146 + $0x4d] sm:$0xff]
    %v1153 = vld [vmem:[%s1146 + $0x65] sm:$0xff]
    %v1154 = vld [vmem:[%s1146 + $0x6d] sm:$0xff]
    %v1155 = vld [vmem:[%s1146 + $0x85] sm:$0xff]
    %v1156 = vld [vmem:[%s1146 + $0x8d] sm:$0xff]
    %v1157 = vld [vmem:[%s1146 + $0xa5] sm:$0xff]
    %v1158 = vld [vmem:[%s1146 + $0xad] sm:$0xff]
    %v1159 = vld [vmem:[%s1146 + $0xc5] sm:$0xff]
    %v1160 = vld [vmem:[%s1146 + $0xcd] sm:$0xff]
    %v1161 = vld [vmem:[%s1146 + $0xe5] sm:$0xff]
    %v1162 = vld [vmem:[%s1146 + $0xed] sm:$0xff]
    %v1163 = vld [vmem:[%s1146 + $0x105] sm:$0xff]
    %v1164 = vld [vmem:[%s1146 + $0x10d] sm:$0xff]
    %v1165 = vld [vmem:[%s1146 + $0x125] sm:$0xff]
    %v1166 = vld [vmem:[%s1146 + $0x12d] sm:$0xff]
    %v1167 = vld [vmem:[%s1146 + $0x145] sm:$0xff]
    %v1168 = vld [vmem:[%s1146 + $0x14d] sm:$0xff]
    %v1169 = vld [vmem:[%s1146 + $0x165] sm:$0xff]
    %v1170 = vld [vmem:[%s1146 + $0x16d] sm:$0xff]
    %v1171 = vld [vmem:[%s1146 + $0x185] sm:$0xff]
    %v1172 = vld [vmem:[%s1146 + $0x18d] sm:$0xff]
    %v1173 = vld [vmem:[%s1146 + $0x1a5] sm:$0xff]
    %v1174 = vld [vmem:[%s1146 + $0x1ad] sm:$0xff]
    %v1175 = vld [vmem:[%s1146 + $0x1c5] sm:$0xff]
    %v1176 = vld [vmem:[%s1146 + $0x1cd] sm:$0xff]
    %v1177 = vld [vmem:[%s1146 + $0x1e5] sm:$0xff]
    %v1178 = vld [vmem:[%s1146 + $0x1ed] sm:$0xff]
    %v1179 = vld [vmem:[%s1 + $0x9] sm:$0x1]
    %v1180 = vlaneseq
    %v1181 = vshrl.u32 %v1180, 7
    %v1182 = vsub.s32 0, %v1181
    %v1183 = vrot.slane %v1179, %v1182
    %v1184 = vmul.f32 %v1147, %v1183
    %v1185 = vmul.f32 %v1148, %v1183
    %v1186 = vmul.f32 %v1149, %v1183
    %v1187 = vmul.f32 %v1150, %v1183
    %v1188 = vmul.f32 %v1151, %v1183
    %v1189 = vmul.f32 %v1152, %v1183
    %v1190 = vmul.f32 %v1153, %v1183
    %v1191 = vmul.f32 %v1154, %v1183
    %v1192 = vmul.f32 %v1155, %v1183
    %v1193 = vmul.f32 %v1156, %v1183
    %v1194 = vmul.f32 %v1157, %v1183
    %v1195 = vmul.f32 %v1158, %v1183
    %v1196 = vmul.f32 %v1159, %v1183
    %v1197 = vmul.f32 %v1160, %v1183
    %v1198 = vmul.f32 %v1161, %v1183
    %v1199 = vmul.f32 %v1162, %v1183
    %v1200 = vmul.f32 %v1163, %v1183
    %v1201 = vmul.f32 %v1164, %v1183
    %v1202 = vmul.f32 %v1165, %v1183
    %v1203 = vmul.f32 %v1166, %v1183
    %v1204 = vmul.f32 %v1167, %v1183
    %v1205 = vmul.f32 %v1168, %v1183
    %v1206 = vmul.f32 %v1169, %v1183
    %v1207 = vmul.f32 %v1170, %v1183
    %v1208 = vmul.f32 %v1171, %v1183
    %v1209 = vmul.f32 %v1172, %v1183
    %v1210 = vmul.f32 %v1173, %v1183
    %v1211 = vmul.f32 %v1174, %v1183
    %v1212 = vmul.f32 %v1175, %v1183
    %v1213 = vmul.f32 %v1176, %v1183
    %v1214 = vmul.f32 %v1177, %v1183
    %v1215 = vmul.f32 %v1178, %v1183
    %v1216 = vld [vmem:[%s1146 + $0x8] sm:$0xff]
    %v1217 = vld [vmem:[%s1146 + $0x10] sm:$0xff]
    %v1218 = vld [vmem:[%s1146 + $0x28] sm:$0xff]
    %v1219 = vld [vmem:[%s1146 + $0x30] sm:$0xff]
    %v1220 = vld [vmem:[%s1146 + $0x48] sm:$0xff]
    %v1221 = vld [vmem:[%s1146 + $0x50] sm:$0xff]
    %v1222 = vld [vmem:[%s1146 + $0x68] sm:$0xff]
    %v1223 = vld [vmem:[%s1146 + $0x70] sm:$0xff]
    %v1224 = vld [vmem:[%s1146 + $0x88] sm:$0xff]
    %v1225 = vld [vmem:[%s1146 + $0x90] sm:$0xff]
    %v1226 = vld [vmem:[%s1146 + $0xa8] sm:$0xff]
    %v1227 = vld [vmem:[%s1146 + $0xb0] sm:$0xff]
    %v1228 = vld [vmem:[%s1146 + $0xc8] sm:$0xff]
    %v1229 = vld [vmem:[%s1146 + $0xd0] sm:$0xff]
    %v1230 = vld [vmem:[%s1146 + $0xe8] sm:$0xff]
    %v1231 = vld [vmem:[%s1146 + $0xf0] sm:$0xff]
    %v1232 = vld [vmem:[%s1146 + $0x108] sm:$0xff]
    %v1233 = vld [vmem:[%s1146 + $0x110] sm:$0xff]
    %v1234 = vld [vmem:[%s1146 + $0x128] sm:$0xff]
    %v1235 = vld [vmem:[%s1146 + $0x130] sm:$0xff]
    %v1236 = vld [vmem:[%s1146 + $0x148] sm:$0xff]
    %v1237 = vld [vmem:[%s1146 + $0x150] sm:$0xff]
    %v1238 = vld [vmem:[%s1146 + $0x168] sm:$0xff]
    %v1239 = vld [vmem:[%s1146 + $0x170] sm:$0xff]
    %v1240 = vld [vmem:[%s1146 + $0x188] sm:$0xff]
    %v1241 = vld [vmem:[%s1146 + $0x190] sm:$0xff]
    %v1242 = vld [vmem:[%s1146 + $0x1a8] sm:$0xff]
    %v1243 = vld [vmem:[%s1146 + $0x1b0] sm:$0xff]
    %v1244 = vld [vmem:[%s1146 + $0x1c8] sm:$0xff]
    %v1245 = vld [vmem:[%s1146 + $0x1d0] sm:$0xff]
    %v1246 = vld [vmem:[%s1146 + $0x1e8] sm:$0xff]
    %v1247 = vld [vmem:[%s1146 + $0x1f0] sm:$0xff]
    %v1248 = vld [vmem:[%s1 + $0xa] sm:$0x1]
    %v1249 = vlaneseq
    %v1250 = vshrl.u32 %v1249, 7
    %v1251 = vsub.s32 0, %v1250
    %v1252 = vrot.slane %v1248, %v1251
    %v1253 = vmul.f32 %v1216, %v1252
    %v1254 = vmul.f32 %v1217, %v1252
    %v1255 = vmul.f32 %v1218, %v1252
    %v1256 = vmul.f32 %v1219, %v1252
    %v1257 = vmul.f32 %v1220, %v1252
    %v1258 = vmul.f32 %v1221, %v1252
    %v1259 = vmul.f32 %v1222, %v1252
    %v1260 = vmul.f32 %v1223, %v1252
    %v1261 = vmul.f32 %v1224, %v1252
    %v1262 = vmul.f32 %v1225, %v1252
    %v1263 = vmul.f32 %v1226, %v1252
    %v1264 = vmul.f32 %v1227, %v1252
    %v1265 = vmul.f32 %v1228, %v1252
    %v1266 = vmul.f32 %v1229, %v1252
    %v1267 = vmul.f32 %v1230, %v1252
    %v1268 = vmul.f32 %v1231, %v1252
    %v1269 = vmul.f32 %v1232, %v1252
    %v1270 = vmul.f32 %v1233, %v1252
    %v1271 = vmul.f32 %v1234, %v1252
    %v1272 = vmul.f32 %v1235, %v1252
    %v1273 = vmul.f32 %v1236, %v1252
    %v1274 = vmul.f32 %v1237, %v1252
    %v1275 = vmul.f32 %v1238, %v1252
    %v1276 = vmul.f32 %v1239, %v1252
    %v1277 = vmul.f32 %v1240, %v1252
    %v1278 = vmul.f32 %v1241, %v1252
    %v1279 = vmul.f32 %v1242, %v1252
    %v1280 = vmul.f32 %v1243, %v1252
    %v1281 = vmul.f32 %v1244, %v1252
    %v1282 = vmul.f32 %v1245, %v1252
    %v1283 = vmul.f32 %v1246, %v1252
    %v1284 = vmul.f32 %v1247, %v1252
    %v1285 = vadd.f32 %v1184, %v1253
    %v1286 = vadd.f32 %v1185, %v1254
    %v1287 = vadd.f32 %v1186, %v1255
    %v1288 = vadd.f32 %v1187, %v1256
    %v1289 = vadd.f32 %v1188, %v1257
    %v1290 = vadd.f32 %v1189, %v1258
    %v1291 = vadd.f32 %v1190, %v1259
    %v1292 = vadd.f32 %v1191, %v1260
    %v1293 = vadd.f32 %v1192, %v1261
    %v1294 = vadd.f32 %v1193, %v1262
    %v1295 = vadd.f32 %v1194, %v1263
    %v1296 = vadd.f32 %v1195, %v1264
    %v1297 = vadd.f32 %v1196, %v1265
    %v1298 = vadd.f32 %v1197, %v1266
    %v1299 = vadd.f32 %v1198, %v1267
    %v1300 = vadd.f32 %v1199, %v1268
    %v1301 = vadd.f32 %v1200, %v1269
    %v1302 = vadd.f32 %v1201, %v1270
    %v1303 = vadd.f32 %v1202, %v1271
    %v1304 = vadd.f32 %v1203, %v1272
    %v1305 = vadd.f32 %v1204, %v1273
    %v1306 = vadd.f32 %v1205, %v1274
    %v1307 = vadd.f32 %v1206, %v1275
    %v1308 = vadd.f32 %v1207, %v1276
    %v1309 = vadd.f32 %v1208, %v1277
    %v1310 = vadd.f32 %v1209, %v1278
    %v1311 = vadd.f32 %v1210, %v1279
    %v1312 = vadd.f32 %v1211, %v1280
    %v1313 = vadd.f32 %v1212, %v1281
    %v1314 = vadd.f32 %v1213, %v1282
    %v1315 = vadd.f32 %v1214, %v1283
    %v1316 = vadd.f32 %v1215, %v1284
    %v1317 = vld [vmem:[%s1146 + $0xb] sm:$0xff]
    %v1318 = vld [vmem:[%s1146 + $0x13] sm:$0xff]
    %v1319 = vld [vmem:[%s1146 + $0x2b] sm:$0xff]
    %v1320 = vld [vmem:[%s1146 + $0x33] sm:$0xff]
    %v1321 = vld [vmem:[%s1146 + $0x4b] sm:$0xff]
    %v1322 = vld [vmem:[%s1146 + $0x53] sm:$0xff]
    %v1323 = vld [vmem:[%s1146 + $0x6b] sm:$0xff]
    %v1324 = vld [vmem:[%s1146 + $0x73] sm:$0xff]
    %v1325 = vld [vmem:[%s1146 + $0x8b] sm:$0xff]
    %v1326 = vld [vmem:[%s1146 + $0x93] sm:$0xff]
    %v1327 = vld [vmem:[%s1146 + $0xab] sm:$0xff]
    %v1328 = vld [vmem:[%s1146 + $0xb3] sm:$0xff]
    %v1329 = vld [vmem:[%s1146 + $0xcb] sm:$0xff]
    %v1330 = vld [vmem:[%s1146 + $0xd3] sm:$0xff]
    %v1331 = vld [vmem:[%s1146 + $0xeb] sm:$0xff]
    %v1332 = vld [vmem:[%s1146 + $0xf3] sm:$0xff]
    %v1333 = vld [vmem:[%s1146 + $0x10b] sm:$0xff]
    %v1334 = vld [vmem:[%s1146 + $0x113] sm:$0xff]
    %v1335 = vld [vmem:[%s1146 + $0x12b] sm:$0xff]
    %v1336 = vld [vmem:[%s1146 + $0x133] sm:$0xff]
    %v1337 = vld [vmem:[%s1146 + $0x14b] sm:$0xff]
    %v1338 = vld [vmem:[%s1146 + $0x153] sm:$0xff]
    %v1339 = vld [vmem:[%s1146 + $0x16b] sm:$0xff]
    %v1340 = vld [vmem:[%s1146 + $0x173] sm:$0xff]
    %v1341 = vld [vmem:[%s1146 + $0x18b] sm:$0xff]
    %v1342 = vld [vmem:[%s1146 + $0x193] sm:$0xff]
    %v1343 = vld [vmem:[%s1146 + $0x1ab] sm:$0xff]
    %v1344 = vld [vmem:[%s1146 + $0x1b3] sm:$0xff]
    %v1345 = vld [vmem:[%s1146 + $0x1cb] sm:$0xff]
    %v1346 = vld [vmem:[%s1146 + $0x1d3] sm:$0xff]
    %v1347 = vld [vmem:[%s1146 + $0x1eb] sm:$0xff]
    %v1348 = vld [vmem:[%s1146 + $0x1f3] sm:$0xff]
    %v1349 = vld [vmem:[%s1 + $0xb] sm:$0x1]
    %v1350 = vlaneseq
    %v1351 = vshrl.u32 %v1350, 7
    %v1352 = vsub.s32 0, %v1351
    %v1353 = vrot.slane %v1349, %v1352
    %v1354 = vmul.f32 %v1317, %v1353
    %v1355 = vmul.f32 %v1318, %v1353
    %v1356 = vmul.f32 %v1319, %v1353
    %v1357 = vmul.f32 %v1320, %v1353
    %v1358 = vmul.f32 %v1321, %v1353
    %v1359 = vmul.f32 %v1322, %v1353
    %v1360 = vmul.f32 %v1323, %v1353
    %v1361 = vmul.f32 %v1324, %v1353
    %v1362 = vmul.f32 %v1325, %v1353
    %v1363 = vmul.f32 %v1326, %v1353
    %v1364 = vmul.f32 %v1327, %v1353
    %v1365 = vmul.f32 %v1328, %v1353
    %v1366 = vmul.f32 %v1329, %v1353
    %v1367 = vmul.f32 %v1330, %v1353
    %v1368 = vmul.f32 %v1331, %v1353
    %v1369 = vmul.f32 %v1332, %v1353
    %v1370 = vmul.f32 %v1333, %v1353
    %v1371 = vmul.f32 %v1334, %v1353
    %v1372 = vmul.f32 %v1335, %v1353
    %v1373 = vmul.f32 %v1336, %v1353
    %v1374 = vmul.f32 %v1337, %v1353
    %v1375 = vmul.f32 %v1338, %v1353
    %v1376 = vmul.f32 %v1339, %v1353
    %v1377 = vmul.f32 %v1340, %v1353
    %v1378 = vmul.f32 %v1341, %v1353
    %v1379 = vmul.f32 %v1342, %v1353
    %v1380 = vmul.f32 %v1343, %v1353
    %v1381 = vmul.f32 %v1344, %v1353
    %v1382 = vmul.f32 %v1345, %v1353
    %v1383 = vmul.f32 %v1346, %v1353
    %v1384 = vmul.f32 %v1347, %v1353
    %v1385 = vmul.f32 %v1348, %v1353
    %v1386 = vadd.f32 %v1285, %v1354
    %v1387 = vadd.f32 %v1286, %v1355
    %v1388 = vadd.f32 %v1287, %v1356
    %v1389 = vadd.f32 %v1288, %v1357
    %v1390 = vadd.f32 %v1289, %v1358
    %v1391 = vadd.f32 %v1290, %v1359
    %v1392 = vadd.f32 %v1291, %v1360
    %v1393 = vadd.f32 %v1292, %v1361
    %v1394 = vadd.f32 %v1293, %v1362
    %v1395 = vadd.f32 %v1294, %v1363
    %v1396 = vadd.f32 %v1295, %v1364
    %v1397 = vadd.f32 %v1296, %v1365
    %v1398 = vadd.f32 %v1297, %v1366
    %v1399 = vadd.f32 %v1298, %v1367
    %v1400 = vadd.f32 %v1299, %v1368
    %v1401 = vadd.f32 %v1300, %v1369
    %v1402 = vadd.f32 %v1301, %v1370
    %v1403 = vadd.f32 %v1302, %v1371
    %v1404 = vadd.f32 %v1303, %v1372
    %v1405 = vadd.f32 %v1304, %v1373
    %v1406 = vadd.f32 %v1305, %v1374
    %v1407 = vadd.f32 %v1306, %v1375
    %v1408 = vadd.f32 %v1307, %v1376
    %v1409 = vadd.f32 %v1308, %v1377
    %v1410 = vadd.f32 %v1309, %v1378
    %v1411 = vadd.f32 %v1310, %v1379
    %v1412 = vadd.f32 %v1311, %v1380
    %v1413 = vadd.f32 %v1312, %v1381
    %v1414 = vadd.f32 %v1313, %v1382
    %v1415 = vadd.f32 %v1314, %v1383
    %v1416 = vadd.f32 %v1315, %v1384
    %v1417 = vadd.f32 %v1316, %v1385
    %v1418 = vld [vmem:[%s101 + $0x5] sm:$0xff]
    %v1419 = vld [vmem:[%s101 + $0xd] sm:$0xff]
    %v1420 = vld [vmem:[%s101 + $0x25] sm:$0xff]
    %v1421 = vld [vmem:[%s101 + $0x2d] sm:$0xff]
    %v1422 = vld [vmem:[%s101 + $0x45] sm:$0xff]
    %v1423 = vld [vmem:[%s101 + $0x4d] sm:$0xff]
    %v1424 = vld [vmem:[%s101 + $0x65] sm:$0xff]
    %v1425 = vld [vmem:[%s101 + $0x6d] sm:$0xff]
    %v1426 = vld [vmem:[%s101 + $0x85] sm:$0xff]
    %v1427 = vld [vmem:[%s101 + $0x8d] sm:$0xff]
    %v1428 = vld [vmem:[%s101 + $0xa5] sm:$0xff]
    %v1429 = vld [vmem:[%s101 + $0xad] sm:$0xff]
    %v1430 = vld [vmem:[%s101 + $0xc5] sm:$0xff]
    %v1431 = vld [vmem:[%s101 + $0xcd] sm:$0xff]
    %v1432 = vld [vmem:[%s101 + $0xe5] sm:$0xff]
    %v1433 = vld [vmem:[%s101 + $0xed] sm:$0xff]
    %v1434 = vld [vmem:[%s101 + $0x105] sm:$0xff]
    %v1435 = vld [vmem:[%s101 + $0x10d] sm:$0xff]
    %v1436 = vld [vmem:[%s101 + $0x125] sm:$0xff]
    %v1437 = vld [vmem:[%s101 + $0x12d] sm:$0xff]
    %v1438 = vld [vmem:[%s101 + $0x145] sm:$0xff]
    %v1439 = vld [vmem:[%s101 + $0x14d] sm:$0xff]
    %v1440 = vld [vmem:[%s101 + $0x165] sm:$0xff]
    %v1441 = vld [vmem:[%s101 + $0x16d] sm:$0xff]
    %v1442 = vld [vmem:[%s101 + $0x185] sm:$0xff]
    %v1443 = vld [vmem:[%s101 + $0x18d] sm:$0xff]
    %v1444 = vld [vmem:[%s101 + $0x1a5] sm:$0xff]
    %v1445 = vld [vmem:[%s101 + $0x1ad] sm:$0xff]
    %v1446 = vld [vmem:[%s101 + $0x1c5] sm:$0xff]
    %v1447 = vld [vmem:[%s101 + $0x1cd] sm:$0xff]
    %v1448 = vld [vmem:[%s101 + $0x1e5] sm:$0xff]
    %v1449 = vld [vmem:[%s101 + $0x1ed] sm:$0xff]
    %v1450 = vld [vmem:[%s1 + $0xc] sm:$0x1]
    %v1451 = vlaneseq
    %v1452 = vshrl.u32 %v1451, 7
    %v1453 = vsub.s32 0, %v1452
    %v1454 = vrot.slane %v1450, %v1453
    %v1455 = vmul.f32 %v1418, %v1454
    %v1456 = vmul.f32 %v1419, %v1454
    %v1457 = vmul.f32 %v1420, %v1454
    %v1458 = vmul.f32 %v1421, %v1454
    %v1459 = vmul.f32 %v1422, %v1454
    %v1460 = vmul.f32 %v1423, %v1454
    %v1461 = vmul.f32 %v1424, %v1454
    %v1462 = vmul.f32 %v1425, %v1454
    %v1463 = vmul.f32 %v1426, %v1454
    %v1464 = vmul.f32 %v1427, %v1454
    %v1465 = vmul.f32 %v1428, %v1454
    %v1466 = vmul.f32 %v1429, %v1454
    %v1467 = vmul.f32 %v1430, %v1454
    %v1468 = vmul.f32 %v1431, %v1454
    %v1469 = vmul.f32 %v1432, %v1454
    %v1470 = vmul.f32 %v1433, %v1454
    %v1471 = vmul.f32 %v1434, %v1454
    %v1472 = vmul.f32 %v1435, %v1454
    %v1473 = vmul.f32 %v1436, %v1454
    %v1474 = vmul.f32 %v1437, %v1454
    %v1475 = vmul.f32 %v1438, %v1454
    %v1476 = vmul.f32 %v1439, %v1454
    %v1477 = vmul.f32 %v1440, %v1454
    %v1478 = vmul.f32 %v1441, %v1454
    %v1479 = vmul.f32 %v1442, %v1454
    %v1480 = vmul.f32 %v1443, %v1454
    %v1481 = vmul.f32 %v1444, %v1454
    %v1482 = vmul.f32 %v1445, %v1454
    %v1483 = vmul.f32 %v1446, %v1454
    %v1484 = vmul.f32 %v1447, %v1454
    %v1485 = vmul.f32 %v1448, %v1454
    %v1486 = vmul.f32 %v1449, %v1454
    %v1487 = vadd.f32 %v1386, %v1455
    %v1488 = vadd.f32 %v1387, %v1456
    %v1489 = vadd.f32 %v1388, %v1457
    %v1490 = vadd.f32 %v1389, %v1458
    %v1491 = vadd.f32 %v1390, %v1459
    %v1492 = vadd.f32 %v1391, %v1460
    %v1493 = vadd.f32 %v1392, %v1461
    %v1494 = vadd.f32 %v1393, %v1462
    %v1495 = vadd.f32 %v1394, %v1463
    %v1496 = vadd.f32 %v1395, %v1464
    %v1497 = vadd.f32 %v1396, %v1465
    %v1498 = vadd.f32 %v1397, %v1466
    %v1499 = vadd.f32 %v1398, %v1467
    %v1500 = vadd.f32 %v1399, %v1468
    %v1501 = vadd.f32 %v1400, %v1469
    %v1502 = vadd.f32 %v1401, %v1470
    %v1503 = vadd.f32 %v1402, %v1471
    %v1504 = vadd.f32 %v1403, %v1472
    %v1505 = vadd.f32 %v1404, %v1473
    %v1506 = vadd.f32 %v1405, %v1474
    %v1507 = vadd.f32 %v1406, %v1475
    %v1508 = vadd.f32 %v1407, %v1476
    %v1509 = vadd.f32 %v1408, %v1477
    %v1510 = vadd.f32 %v1409, %v1478
    %v1511 = vadd.f32 %v1410, %v1479
    %v1512 = vadd.f32 %v1411, %v1480
    %v1513 = vadd.f32 %v1412, %v1481
    %v1514 = vadd.f32 %v1413, %v1482
    %v1515 = vadd.f32 %v1414, %v1483
    %v1516 = vadd.f32 %v1415, %v1484
    %v1517 = vadd.f32 %v1416, %v1485
    %v1518 = vadd.f32 %v1417, %v1486
    %v1519 = vld [vmem:[%s101 + $0x8] sm:$0xff]
    %v1520 = vld [vmem:[%s101 + $0x10] sm:$0xff]
    %v1521 = vld [vmem:[%s101 + $0x28] sm:$0xff]
    %v1522 = vld [vmem:[%s101 + $0x30] sm:$0xff]
    %v1523 = vld [vmem:[%s101 + $0x48] sm:$0xff]
    %v1524 = vld [vmem:[%s101 + $0x50] sm:$0xff]
    %v1525 = vld [vmem:[%s101 + $0x68] sm:$0xff]
    %v1526 = vld [vmem:[%s101 + $0x70] sm:$0xff]
    %v1527 = vld [vmem:[%s101 + $0x88] sm:$0xff]
    %v1528 = vld [vmem:[%s101 + $0x90] sm:$0xff]
    %v1529 = vld [vmem:[%s101 + $0xa8] sm:$0xff]
    %v1530 = vld [vmem:[%s101 + $0xb0] sm:$0xff]
    %v1531 = vld [vmem:[%s101 + $0xc8] sm:$0xff]
    %v1532 = vld [vmem:[%s101 + $0xd0] sm:$0xff]
    %v1533 = vld [vmem:[%s101 + $0xe8] sm:$0xff]
    %v1534 = vld [vmem:[%s101 + $0xf0] sm:$0xff]
    %v1535 = vld [vmem:[%s101 + $0x108] sm:$0xff]
    %v1536 = vld [vmem:[%s101 + $0x110] sm:$0xff]
    %v1537 = vld [vmem:[%s101 + $0x128] sm:$0xff]
    %v1538 = vld [vmem:[%s101 + $0x130] sm:$0xff]
    %v1539 = vld [vmem:[%s101 + $0x148] sm:$0xff]
    %v1540 = vld [vmem:[%s101 + $0x150] sm:$0xff]
    %v1541 = vld [vmem:[%s101 + $0x168] sm:$0xff]
    %v1542 = vld [vmem:[%s101 + $0x170] sm:$0xff]
    %v1543 = vld [vmem:[%s101 + $0x188] sm:$0xff]
    %v1544 = vld [vmem:[%s101 + $0x190] sm:$0xff]
    %v1545 = vld [vmem:[%s101 + $0x1a8] sm:$0xff]
    %v1546 = vld [vmem:[%s101 + $0x1b0] sm:$0xff]
    %v1547 = vld [vmem:[%s101 + $0x1c8] sm:$0xff]
    %v1548 = vld [vmem:[%s101 + $0x1d0] sm:$0xff]
    %v1549 = vld [vmem:[%s101 + $0x1e8] sm:$0xff]
    %v1550 = vld [vmem:[%s101 + $0x1f0] sm:$0xff]
    %v1551 = vld [vmem:[%s1 + $0xd] sm:$0x1]
    %v1552 = vlaneseq
    %v1553 = vshrl.u32 %v1552, 7
    %v1554 = vsub.s32 0, %v1553
    %v1555 = vrot.slane %v1551, %v1554
    %v1556 = vmul.f32 %v1519, %v1555
    %v1557 = vmul.f32 %v1520, %v1555
    %v1558 = vmul.f32 %v1521, %v1555
    %v1559 = vmul.f32 %v1522, %v1555
    %v1560 = vmul.f32 %v1523, %v1555
    %v1561 = vmul.f32 %v1524, %v1555
    %v1562 = vmul.f32 %v1525, %v1555
    %v1563 = vmul.f32 %v1526, %v1555
    %v1564 = vmul.f32 %v1527, %v1555
    %v1565 = vmul.f32 %v1528, %v1555
    %v1566 = vmul.f32 %v1529, %v1555
    %v1567 = vmul.f32 %v1530, %v1555
    %v1568 = vmul.f32 %v1531, %v1555
    %v1569 = vmul.f32 %v1532, %v1555
    %v1570 = vmul.f32 %v1533, %v1555
    %v1571 = vmul.f32 %v1534, %v1555
    %v1572 = vmul.f32 %v1535, %v1555
    %v1573 = vmul.f32 %v1536, %v1555
    %v1574 = vmul.f32 %v1537, %v1555
    %v1575 = vmul.f32 %v1538, %v1555
    %v1576 = vmul.f32 %v1539, %v1555
    %v1577 = vmul.f32 %v1540, %v1555
    %v1578 = vmul.f32 %v1541, %v1555
    %v1579 = vmul.f32 %v1542, %v1555
    %v1580 = vmul.f32 %v1543, %v1555
    %v1581 = vmul.f32 %v1544, %v1555
    %v1582 = vmul.f32 %v1545, %v1555
    %v1583 = vmul.f32 %v1546, %v1555
    %v1584 = vmul.f32 %v1547, %v1555
    %v1585 = vmul.f32 %v1548, %v1555
    %v1586 = vmul.f32 %v1549, %v1555
    %v1587 = vmul.f32 %v1550, %v1555
    %v1588 = vadd.f32 %v1487, %v1556
    %v1589 = vadd.f32 %v1488, %v1557
    %v1590 = vadd.f32 %v1489, %v1558
    %v1591 = vadd.f32 %v1490, %v1559
    %v1592 = vadd.f32 %v1491, %v1560
    %v1593 = vadd.f32 %v1492, %v1561
    %v1594 = vadd.f32 %v1493, %v1562
    %v1595 = vadd.f32 %v1494, %v1563
    %v1596 = vadd.f32 %v1495, %v1564
    %v1597 = vadd.f32 %v1496, %v1565
    %v1598 = vadd.f32 %v1497, %v1566
    %v1599 = vadd.f32 %v1498, %v1567
    %v1600 = vadd.f32 %v1499, %v1568
    %v1601 = vadd.f32 %v1500, %v1569
    %v1602 = vadd.f32 %v1501, %v1570
    %v1603 = vadd.f32 %v1502, %v1571
    %v1604 = vadd.f32 %v1503, %v1572
    %v1605 = vadd.f32 %v1504, %v1573
    %v1606 = vadd.f32 %v1505, %v1574
    %v1607 = vadd.f32 %v1506, %v1575
    %v1608 = vadd.f32 %v1507, %v1576
    %v1609 = vadd.f32 %v1508, %v1577
    %v1610 = vadd.f32 %v1509, %v1578
    %v1611 = vadd.f32 %v1510, %v1579
    %v1612 = vadd.f32 %v1511, %v1580
    %v1613 = vadd.f32 %v1512, %v1581
    %v1614 = vadd.f32 %v1513, %v1582
    %v1615 = vadd.f32 %v1514, %v1583
    %v1616 = vadd.f32 %v1515, %v1584
    %v1617 = vadd.f32 %v1516, %v1585
    %v1618 = vadd.f32 %v1517, %v1586
    %v1619 = vadd.f32 %v1518, %v1587
    %v1620 = vld [vmem:[%s101 + $0xb] sm:$0xff]
    %v1621 = vld [vmem:[%s101 + $0x13] sm:$0xff]
    %v1622 = vld [vmem:[%s101 + $0x2b] sm:$0xff]
    %v1623 = vld [vmem:[%s101 + $0x33] sm:$0xff]
    %v1624 = vld [vmem:[%s101 + $0x4b] sm:$0xff]
    %v1625 = vld [vmem:[%s101 + $0x53] sm:$0xff]
    %v1626 = vld [vmem:[%s101 + $0x6b] sm:$0xff]
    %v1627 = vld [vmem:[%s101 + $0x73] sm:$0xff]
    %v1628 = vld [vmem:[%s101 + $0x8b] sm:$0xff]
    %v1629 = vld [vmem:[%s101 + $0x93] sm:$0xff]
    %v1630 = vld [vmem:[%s101 + $0xab] sm:$0xff]
    %v1631 = vld [vmem:[%s101 + $0xb3] sm:$0xff]
    %v1632 = vld [vmem:[%s101 + $0xcb] sm:$0xff]
    %v1633 = vld [vmem:[%s101 + $0xd3] sm:$0xff]
    %v1634 = vld [vmem:[%s101 + $0xeb] sm:$0xff]
    %v1635 = vld [vmem:[%s101 + $0xf3] sm:$0xff]
    %v1636 = vld [vmem:[%s101 + $0x10b] sm:$0xff]
    %v1637 = vld [vmem:[%s101 + $0x113] sm:$0xff]
    %v1638 = vld [vmem:[%s101 + $0x12b] sm:$0xff]
    %v1639 = vld [vmem:[%s101 + $0x133] sm:$0xff]
    %v1640 = vld [vmem:[%s101 + $0x14b] sm:$0xff]
    %v1641 = vld [vmem:[%s101 + $0x153] sm:$0xff]
    %v1642 = vld [vmem:[%s101 + $0x16b] sm:$0xff]
    %v1643 = vld [vmem:[%s101 + $0x173] sm:$0xff]
    %v1644 = vld [vmem:[%s101 + $0x18b] sm:$0xff]
    %v1645 = vld [vmem:[%s101 + $0x193] sm:$0xff]
    %v1646 = vld [vmem:[%s101 + $0x1ab] sm:$0xff]
    %v1647 = vld [vmem:[%s101 + $0x1b3] sm:$0xff]
    %v1648 = vld [vmem:[%s101 + $0x1cb] sm:$0xff]
    %v1649 = vld [vmem:[%s101 + $0x1d3] sm:$0xff]
    %v1650 = vld [vmem:[%s101 + $0x1eb] sm:$0xff]
    %v1651 = vld [vmem:[%s101 + $0x1f3] sm:$0xff]
    %v1652 = vld [vmem:[%s1 + $0xe] sm:$0x1]
    %v1653 = vlaneseq
    %v1654 = vshrl.u32 %v1653, 7
    %v1655 = vsub.s32 0, %v1654
    %v1656 = vrot.slane %v1652, %v1655
    %v1657 = vmul.f32 %v1620, %v1656
    %v1658 = vmul.f32 %v1621, %v1656
    %v1659 = vmul.f32 %v1622, %v1656
    %v1660 = vmul.f32 %v1623, %v1656
    %v1661 = vmul.f32 %v1624, %v1656
    %v1662 = vmul.f32 %v1625, %v1656
    %v1663 = vmul.f32 %v1626, %v1656
    %v1664 = vmul.f32 %v1627, %v1656
    %v1665 = vmul.f32 %v1628, %v1656
    %v1666 = vmul.f32 %v1629, %v1656
    %v1667 = vmul.f32 %v1630, %v1656
    %v1668 = vmul.f32 %v1631, %v1656
    %v1669 = vmul.f32 %v1632, %v1656
    %v1670 = vmul.f32 %v1633, %v1656
    %v1671 = vmul.f32 %v1634, %v1656
    %v1672 = vmul.f32 %v1635, %v1656
    %v1673 = vmul.f32 %v1636, %v1656
    %v1674 = vmul.f32 %v1637, %v1656
    %v1675 = vmul.f32 %v1638, %v1656
    %v1676 = vmul.f32 %v1639, %v1656
    %v1677 = vmul.f32 %v1640, %v1656
    %v1678 = vmul.f32 %v1641, %v1656
    %v1679 = vmul.f32 %v1642, %v1656
    %v1680 = vmul.f32 %v1643, %v1656
    %v1681 = vmul.f32 %v1644, %v1656
    %v1682 = vmul.f32 %v1645, %v1656
    %v1683 = vmul.f32 %v1646, %v1656
    %v1684 = vmul.f32 %v1647, %v1656
    %v1685 = vmul.f32 %v1648, %v1656
    %v1686 = vmul.f32 %v1649, %v1656
    %v1687 = vmul.f32 %v1650, %v1656
    %v1688 = vmul.f32 %v1651, %v1656
    %v1689 = vadd.f32 %v1588, %v1657
    %v1690 = vadd.f32 %v1589, %v1658
    %v1691 = vadd.f32 %v1590, %v1659
    %v1692 = vadd.f32 %v1591, %v1660
    %v1693 = vadd.f32 %v1592, %v1661
    %v1694 = vadd.f32 %v1593, %v1662
    %v1695 = vadd.f32 %v1594, %v1663
    %v1696 = vadd.f32 %v1595, %v1664
    %v1697 = vadd.f32 %v1596, %v1665
    %v1698 = vadd.f32 %v1597, %v1666
    %v1699 = vadd.f32 %v1598, %v1667
    %v1700 = vadd.f32 %v1599, %v1668
    %v1701 = vadd.f32 %v1600, %v1669
    %v1702 = vadd.f32 %v1601, %v1670
    %v1703 = vadd.f32 %v1602, %v1671
    %v1704 = vadd.f32 %v1603, %v1672
    %v1705 = vadd.f32 %v1604, %v1673
    %v1706 = vadd.f32 %v1605, %v1674
    %v1707 = vadd.f32 %v1606, %v1675
    %v1708 = vadd.f32 %v1607, %v1676
    %v1709 = vadd.f32 %v1608, %v1677
    %v1710 = vadd.f32 %v1609, %v1678
    %v1711 = vadd.f32 %v1610, %v1679
    %v1712 = vadd.f32 %v1611, %v1680
    %v1713 = vadd.f32 %v1612, %v1681
    %v1714 = vadd.f32 %v1613, %v1682
    %v1715 = vadd.f32 %v1614, %v1683
    %v1716 = vadd.f32 %v1615, %v1684
    %v1717 = vadd.f32 %v1616, %v1685
    %v1718 = vadd.f32 %v1617, %v1686
    %v1719 = vadd.f32 %v1618, %v1687
    %v1720 = vadd.f32 %v1619, %v1688
    %s1721 = scalar_lea.vmem [#allocation2], 352
    %v1722 = vld [vmem:[%s1721 + $0x5] sm:$0xff]
    %v1723 = vld [vmem:[%s1721 + $0xd] sm:$0xff]
    %v1724 = vld [vmem:[%s1721 + $0x25] sm:$0xff]
    %v1725 = vld [vmem:[%s1721 + $0x2d] sm:$0xff]
    %v1726 = vld [vmem:[%s1721 + $0x45] sm:$0xff]
    %v1727 = vld [vmem:[%s1721 + $0x4d] sm:$0xff]
    %v1728 = vld [vmem:[%s1721 + $0x65] sm:$0xff]
    %v1729 = vld [vmem:[%s1721 + $0x6d] sm:$0xff]
    %v1730 = vld [vmem:[%s1721 + $0x85] sm:$0xff]
    %v1731 = vld [vmem:[%s1721 + $0x8d] sm:$0xff]
    %v1732 = vld [vmem:[%s1721 + $0xa5] sm:$0xff]
    %v1733 = vld [vmem:[%s1721 + $0xad] sm:$0xff]
    %v1734 = vld [vmem:[%s1721 + $0xc5] sm:$0xff]
    %v1735 = vld [vmem:[%s1721 + $0xcd] sm:$0xff]
    %v1736 = vld [vmem:[%s1721 + $0xe5] sm:$0xff]
    %v1737 = vld [vmem:[%s1721 + $0xed] sm:$0xff]
    %v1738 = vld [vmem:[%s1721 + $0x105] sm:$0xff]
    %v1739 = vld [vmem:[%s1721 + $0x10d] sm:$0xff]
    %v1740 = vld [vmem:[%s1721 + $0x125] sm:$0xff]
    %v1741 = vld [vmem:[%s1721 + $0x12d] sm:$0xff]
    %v1742 = vld [vmem:[%s1721 + $0x145] sm:$0xff]
    %v1743 = vld [vmem:[%s1721 + $0x14d] sm:$0xff]
    %v1744 = vld [vmem:[%s1721 + $0x165] sm:$0xff]
    %v1745 = vld [vmem:[%s1721 + $0x16d] sm:$0xff]
    %v1746 = vld [vmem:[%s1721 + $0x185] sm:$0xff]
    %v1747 = vld [vmem:[%s1721 + $0x18d] sm:$0xff]
    %v1748 = vld [vmem:[%s1721 + $0x1a5] sm:$0xff]
    %v1749 = vld [vmem:[%s1721 + $0x1ad] sm:$0xff]
    %v1750 = vld [vmem:[%s1721 + $0x1c5] sm:$0xff]
    %v1751 = vld [vmem:[%s1721 + $0x1cd] sm:$0xff]
    %v1752 = vld [vmem:[%s1721 + $0x1e5] sm:$0xff]
    %v1753 = vld [vmem:[%s1721 + $0x1ed] sm:$0xff]
    %v1754 = vld [vmem:[%s1 + $0xf] sm:$0x1]
    %v1755 = vlaneseq
    %v1756 = vshrl.u32 %v1755, 7
    %v1757 = vsub.s32 0, %v1756
    %v1758 = vrot.slane %v1754, %v1757
    %v1759 = vmul.f32 %v1722, %v1758
    %v1760 = vmul.f32 %v1723, %v1758
    %v1761 = vmul.f32 %v1724, %v1758
    %v1762 = vmul.f32 %v1725, %v1758
    %v1763 = vmul.f32 %v1726, %v1758
    %v1764 = vmul.f32 %v1727, %v1758
    %v1765 = vmul.f32 %v1728, %v1758
    %v1766 = vmul.f32 %v1729, %v1758
    %v1767 = vmul.f32 %v1730, %v1758
    %v1768 = vmul.f32 %v1731, %v1758
    %v1769 = vmul.f32 %v1732, %v1758
    %v1770 = vmul.f32 %v1733, %v1758
    %v1771 = vmul.f32 %v1734, %v1758
    %v1772 = vmul.f32 %v1735, %v1758
    %v1773 = vmul.f32 %v1736, %v1758
    %v1774 = vmul.f32 %v1737, %v1758
    %v1775 = vmul.f32 %v1738, %v1758
    %v1776 = vmul.f32 %v1739, %v1758
    %v1777 = vmul.f32 %v1740, %v1758
    %v1778 = vmul.f32 %v1741, %v1758
    %v1779 = vmul.f32 %v1742, %v1758
    %v1780 = vmul.f32 %v1743, %v1758
    %v1781 = vmul.f32 %v1744, %v1758
    %v1782 = vmul.f32 %v1745, %v1758
    %v1783 = vmul.f32 %v1746, %v1758
    %v1784 = vmul.f32 %v1747, %v1758
    %v1785 = vmul.f32 %v1748, %v1758
    %v1786 = vmul.f32 %v1749, %v1758
    %v1787 = vmul.f32 %v1750, %v1758
    %v1788 = vmul.f32 %v1751, %v1758
    %v1789 = vmul.f32 %v1752, %v1758
    %v1790 = vmul.f32 %v1753, %v1758
    %v1791 = vadd.f32 %v1689, %v1759
    %v1792 = vadd.f32 %v1690, %v1760
    %v1793 = vadd.f32 %v1691, %v1761
    %v1794 = vadd.f32 %v1692, %v1762
    %v1795 = vadd.f32 %v1693, %v1763
    %v1796 = vadd.f32 %v1694, %v1764
    %v1797 = vadd.f32 %v1695, %v1765
    %v1798 = vadd.f32 %v1696, %v1766
    %v1799 = vadd.f32 %v1697, %v1767
    %v1800 = vadd.f32 %v1698, %v1768
    %v1801 = vadd.f32 %v1699, %v1769
    %v1802 = vadd.f32 %v1700, %v1770
    %v1803 = vadd.f32 %v1701, %v1771
    %v1804 = vadd.f32 %v1702, %v1772
    %v1805 = vadd.f32 %v1703, %v1773
    %v1806 = vadd.f32 %v1704, %v1774
    %v1807 = vadd.f32 %v1705, %v1775
    %v1808 = vadd.f32 %v1706, %v1776
    %v1809 = vadd.f32 %v1707, %v1777
    %v1810 = vadd.f32 %v1708, %v1778
    %v1811 = vadd.f32 %v1709, %v1779
    %v1812 = vadd.f32 %v1710, %v1780
    %v1813 = vadd.f32 %v1711, %v1781
    %v1814 = vadd.f32 %v1712, %v1782
    %v1815 = vadd.f32 %v1713, %v1783
    %v1816 = vadd.f32 %v1714, %v1784
    %v1817 = vadd.f32 %v1715, %v1785
    %v1818 = vadd.f32 %v1716, %v1786
    %v1819 = vadd.f32 %v1717, %v1787
    %v1820 = vadd.f32 %v1718, %v1788
    %v1821 = vadd.f32 %v1719, %v1789
    %v1822 = vadd.f32 %v1720, %v1790
    %v1823 = vld [vmem:[%s1721 + $0x8] sm:$0xff]
    %v1824 = vld [vmem:[%s1721 + $0x10] sm:$0xff]
    %v1825 = vld [vmem:[%s1721 + $0x28] sm:$0xff]
    %v1826 = vld [vmem:[%s1721 + $0x30] sm:$0xff]
    %v1827 = vld [vmem:[%s1721 + $0x48] sm:$0xff]
    %v1828 = vld [vmem:[%s1721 + $0x50] sm:$0xff]
    %v1829 = vld [vmem:[%s1721 + $0x68] sm:$0xff]
    %v1830 = vld [vmem:[%s1721 + $0x70] sm:$0xff]
    %v1831 = vld [vmem:[%s1721 + $0x88] sm:$0xff]
    %v1832 = vld [vmem:[%s1721 + $0x90] sm:$0xff]
    %v1833 = vld [vmem:[%s1721 + $0xa8] sm:$0xff]
    %v1834 = vld [vmem:[%s1721 + $0xb0] sm:$0xff]
    %v1835 = vld [vmem:[%s1721 + $0xc8] sm:$0xff]
    %v1836 = vld [vmem:[%s1721 + $0xd0] sm:$0xff]
    %v1837 = vld [vmem:[%s1721 + $0xe8] sm:$0xff]
    %v1838 = vld [vmem:[%s1721 + $0xf0] sm:$0xff]
    %v1839 = vld [vmem:[%s1721 + $0x108] sm:$0xff]
    %v1840 = vld [vmem:[%s1721 + $0x110] sm:$0xff]
    %v1841 = vld [vmem:[%s1721 + $0x128] sm:$0xff]
    %v1842 = vld [vmem:[%s1721 + $0x130] sm:$0xff]
    %v1843 = vld [vmem:[%s1721 + $0x148] sm:$0xff]
    %v1844 = vld [vmem:[%s1721 + $0x150] sm:$0xff]
    %v1845 = vld [vmem:[%s1721 + $0x168] sm:$0xff]
    %v1846 = vld [vmem:[%s1721 + $0x170] sm:$0xff]
    %v1847 = vld [vmem:[%s1721 + $0x188] sm:$0xff]
    %v1848 = vld [vmem:[%s1721 + $0x190] sm:$0xff]
    %v1849 = vld [vmem:[%s1721 + $0x1a8] sm:$0xff]
    %v1850 = vld [vmem:[%s1721 + $0x1b0] sm:$0xff]
    %v1851 = vld [vmem:[%s1721 + $0x1c8] sm:$0xff]
    %v1852 = vld [vmem:[%s1721 + $0x1d0] sm:$0xff]
    %v1853 = vld [vmem:[%s1721 + $0x1e8] sm:$0xff]
    %v1854 = vld [vmem:[%s1721 + $0x1f0] sm:$0xff]
    %v1855 = vld [vmem:[%s1 + $0x10] sm:$0x1]
    %v1856 = vlaneseq
    %v1857 = vshrl.u32 %v1856, 7
    %v1858 = vsub.s32 0, %v1857
    %v1859 = vrot.slane %v1855, %v1858
    %v1860 = vmul.f32 %v1823, %v1859
    %v1861 = vmul.f32 %v1824, %v1859
    %v1862 = vmul.f32 %v1825, %v1859
    %v1863 = vmul.f32 %v1826, %v1859
    %v1864 = vmul.f32 %v1827, %v1859
    %v1865 = vmul.f32 %v1828, %v1859
    %v1866 = vmul.f32 %v1829, %v1859
    %v1867 = vmul.f32 %v1830, %v1859
    %v1868 = vmul.f32 %v1831, %v1859
    %v1869 = vmul.f32 %v1832, %v1859
    %v1870 = vmul.f32 %v1833, %v1859
    %v1871 = vmul.f32 %v1834, %v1859
    %v1872 = vmul.f32 %v1835, %v1859
    %v1873 = vmul.f32 %v1836, %v1859
    %v1874 = vmul.f32 %v1837, %v1859
    %v1875 = vmul.f32 %v1838, %v1859
    %v1876 = vmul.f32 %v1839, %v1859
    %v1877 = vmul.f32 %v1840, %v1859
    %v1878 = vmul.f32 %v1841, %v1859
    %v1879 = vmul.f32 %v1842, %v1859
    %v1880 = vmul.f32 %v1843, %v1859
    %v1881 = vmul.f32 %v1844, %v1859
    %v1882 = vmul.f32 %v1845, %v1859
    %v1883 = vmul.f32 %v1846, %v1859
    %v1884 = vmul.f32 %v1847, %v1859
    %v1885 = vmul.f32 %v1848, %v1859
    %v1886 = vmul.f32 %v1849, %v1859
    %v1887 = vmul.f32 %v1850, %v1859
    %v1888 = vmul.f32 %v1851, %v1859
    %v1889 = vmul.f32 %v1852, %v1859
    %v1890 = vmul.f32 %v1853, %v1859
    %v1891 = vmul.f32 %v1854, %v1859
    %v1892 = vadd.f32 %v1791, %v1860
    %v1893 = vadd.f32 %v1792, %v1861
    %v1894 = vadd.f32 %v1793, %v1862
    %v1895 = vadd.f32 %v1794, %v1863
    %v1896 = vadd.f32 %v1795, %v1864
    %v1897 = vadd.f32 %v1796, %v1865
    %v1898 = vadd.f32 %v1797, %v1866
    %v1899 = vadd.f32 %v1798, %v1867
    %v1900 = vadd.f32 %v1799, %v1868
    %v1901 = vadd.f32 %v1800, %v1869
    %v1902 = vadd.f32 %v1801, %v1870
    %v1903 = vadd.f32 %v1802, %v1871
    %v1904 = vadd.f32 %v1803, %v1872
    %v1905 = vadd.f32 %v1804, %v1873
    %v1906 = vadd.f32 %v1805, %v1874
    %v1907 = vadd.f32 %v1806, %v1875
    %v1908 = vadd.f32 %v1807, %v1876
    %v1909 = vadd.f32 %v1808, %v1877
    %v1910 = vadd.f32 %v1809, %v1878
    %v1911 = vadd.f32 %v1810, %v1879
    %v1912 = vadd.f32 %v1811, %v1880
    %v1913 = vadd.f32 %v1812, %v1881
    %v1914 = vadd.f32 %v1813, %v1882
    %v1915 = vadd.f32 %v1814, %v1883
    %v1916 = vadd.f32 %v1815, %v1884
    %v1917 = vadd.f32 %v1816, %v1885
    %v1918 = vadd.f32 %v1817, %v1886
    %v1919 = vadd.f32 %v1818, %v1887
    %v1920 = vadd.f32 %v1819, %v1888
    %v1921 = vadd.f32 %v1820, %v1889
    %v1922 = vadd.f32 %v1821, %v1890
    %v1923 = vadd.f32 %v1822, %v1891
    %v1924 = vld [vmem:[%s1721 + $0xb] sm:$0xff]
    %v1925 = vld [vmem:[%s1721 + $0x13] sm:$0xff]
    %v1926 = vld [vmem:[%s1721 + $0x2b] sm:$0xff]
    %v1927 = vld [vmem:[%s1721 + $0x33] sm:$0xff]
    %v1928 = vld [vmem:[%s1721 + $0x4b] sm:$0xff]
    %v1929 = vld [vmem:[%s1721 + $0x53] sm:$0xff]
    %v1930 = vld [vmem:[%s1721 + $0x6b] sm:$0xff]
    %v1931 = vld [vmem:[%s1721 + $0x73] sm:$0xff]
    %v1932 = vld [vmem:[%s1721 + $0x8b] sm:$0xff]
    %v1933 = vld [vmem:[%s1721 + $0x93] sm:$0xff]
    %v1934 = vld [vmem:[%s1721 + $0xab] sm:$0xff]
    %v1935 = vld [vmem:[%s1721 + $0xb3] sm:$0xff]
    %v1936 = vld [vmem:[%s1721 + $0xcb] sm:$0xff]
    %v1937 = vld [vmem:[%s1721 + $0xd3] sm:$0xff]
    %v1938 = vld [vmem:[%s1721 + $0xeb] sm:$0xff]
    %v1939 = vld [vmem:[%s1721 + $0xf3] sm:$0xff]
    %v1940 = vld [vmem:[%s1721 + $0x10b] sm:$0xff]
    %v1941 = vld [vmem:[%s1721 + $0x113] sm:$0xff]
    %v1942 = vld [vmem:[%s1721 + $0x12b] sm:$0xff]
    %v1943 = vld [vmem:[%s1721 + $0x133] sm:$0xff]
    %v1944 = vld [vmem:[%s1721 + $0x14b] sm:$0xff]
    %v1945 = vld [vmem:[%s1721 + $0x153] sm:$0xff]
    %v1946 = vld [vmem:[%s1721 + $0x16b] sm:$0xff]
    %v1947 = vld [vmem:[%s1721 + $0x173] sm:$0xff]
    %v1948 = vld [vmem:[%s1721 + $0x18b] sm:$0xff]
    %v1949 = vld [vmem:[%s1721 + $0x193] sm:$0xff]
    %v1950 = vld [vmem:[%s1721 + $0x1ab] sm:$0xff]
    %v1951 = vld [vmem:[%s1721 + $0x1b3] sm:$0xff]
    %v1952 = vld [vmem:[%s1721 + $0x1cb] sm:$0xff]
    %v1953 = vld [vmem:[%s1721 + $0x1d3] sm:$0xff]
    %v1954 = vld [vmem:[%s1721 + $0x1eb] sm:$0xff]
    %v1955 = vld [vmem:[%s1721 + $0x1f3] sm:$0xff]
    %v1956 = vld [vmem:[%s1 + $0x11] sm:$0x1]
    %v1957 = vlaneseq
    %v1958 = vshrl.u32 %v1957, 7
    %v1959 = vsub.s32 0, %v1958
    %v1960 = vrot.slane %v1956, %v1959
    %v1961 = vmul.f32 %v1924, %v1960
    %v1962 = vmul.f32 %v1925, %v1960
    %v1963 = vmul.f32 %v1926, %v1960
    %v1964 = vmul.f32 %v1927, %v1960
    %v1965 = vmul.f32 %v1928, %v1960
    %v1966 = vmul.f32 %v1929, %v1960
    %v1967 = vmul.f32 %v1930, %v1960
    %v1968 = vmul.f32 %v1931, %v1960
    %v1969 = vmul.f32 %v1932, %v1960
    %v1970 = vmul.f32 %v1933, %v1960
    %v1971 = vmul.f32 %v1934, %v1960
    %v1972 = vmul.f32 %v1935, %v1960
    %v1973 = vmul.f32 %v1936, %v1960
    %v1974 = vmul.f32 %v1937, %v1960
    %v1975 = vmul.f32 %v1938, %v1960
    %v1976 = vmul.f32 %v1939, %v1960
    %v1977 = vmul.f32 %v1940, %v1960
    %v1978 = vmul.f32 %v1941, %v1960
    %v1979 = vmul.f32 %v1942, %v1960
    %v1980 = vmul.f32 %v1943, %v1960
    %v1981 = vmul.f32 %v1944, %v1960
    %v1982 = vmul.f32 %v1945, %v1960
    %v1983 = vmul.f32 %v1946, %v1960
    %v1984 = vmul.f32 %v1947, %v1960
    %v1985 = vmul.f32 %v1948, %v1960
    %v1986 = vmul.f32 %v1949, %v1960
    %v1987 = vmul.f32 %v1950, %v1960
    %v1988 = vmul.f32 %v1951, %v1960
    %v1989 = vmul.f32 %v1952, %v1960
    %v1990 = vmul.f32 %v1953, %v1960
    %v1991 = vmul.f32 %v1954, %v1960
    %v1992 = vmul.f32 %v1955, %v1960
    %v1993 = vadd.f32 %v1892, %v1961
    %v1994 = vadd.f32 %v1893, %v1962
    %v1995 = vadd.f32 %v1894, %v1963
    %v1996 = vadd.f32 %v1895, %v1964
    %v1997 = vadd.f32 %v1896, %v1965
    %v1998 = vadd.f32 %v1897, %v1966
    %v1999 = vadd.f32 %v1898, %v1967
    %v2000 = vadd.f32 %v1899, %v1968
    %v2001 = vadd.f32 %v1900, %v1969
    %v2002 = vadd.f32 %v1901, %v1970
    %v2003 = vadd.f32 %v1902, %v1971
    %v2004 = vadd.f32 %v1903, %v1972
    %v2005 = vadd.f32 %v1904, %v1973
    %v2006 = vadd.f32 %v1905, %v1974
    %v2007 = vadd.f32 %v1906, %v1975
    %v2008 = vadd.f32 %v1907, %v1976
    %v2009 = vadd.f32 %v1908, %v1977
    %v2010 = vadd.f32 %v1909, %v1978
    %v2011 = vadd.f32 %v1910, %v1979
    %v2012 = vadd.f32 %v1911, %v1980
    %v2013 = vadd.f32 %v1912, %v1981
    %v2014 = vadd.f32 %v1913, %v1982
    %v2015 = vadd.f32 %v1914, %v1983
    %v2016 = vadd.f32 %v1915, %v1984
    %v2017 = vadd.f32 %v1916, %v1985
    %v2018 = vadd.f32 %v1917, %v1986
    %v2019 = vadd.f32 %v1918, %v1987
    %v2020 = vadd.f32 %v1919, %v1988
    %v2021 = vadd.f32 %v1920, %v1989
    %v2022 = vadd.f32 %v1921, %v1990
    %v2023 = vadd.f32 %v1922, %v1991
    %v2024 = vadd.f32 %v1923, %v1992
    %v2025 = vld [vmem:[%s2 + $0x1] sm:$0x1]
    %v2026 = vlaneseq
    %v2027 = vshrl.u32 %v2026, 7
    %v2028 = vsub.s32 0, %v2027
    %v2029 = vrot.slane %v2025, %v2028
    %v2030 = vadd.f32 %v1993, %v2029
    %v2031 = vadd.f32 %v1994, %v2029
    %v2032 = vadd.f32 %v1995, %v2029
    %v2033 = vadd.f32 %v1996, %v2029
    %v2034 = vadd.f32 %v1997, %v2029
    %v2035 = vadd.f32 %v1998, %v2029
    %v2036 = vadd.f32 %v1999, %v2029
    %v2037 = vadd.f32 %v2000, %v2029
    %v2038 = vadd.f32 %v2001, %v2029
    %v2039 = vadd.f32 %v2002, %v2029
    %v2040 = vadd.f32 %v2003, %v2029
    %v2041 = vadd.f32 %v2004, %v2029
    %v2042 = vadd.f32 %v2005, %v2029
    %v2043 = vadd.f32 %v2006, %v2029
    %v2044 = vadd.f32 %v2007, %v2029
    %v2045 = vadd.f32 %v2008, %v2029
    %v2046 = vadd.f32 %v2009, %v2029
    %v2047 = vadd.f32 %v2010, %v2029
    %v2048 = vadd.f32 %v2011, %v2029
    %v2049 = vadd.f32 %v2012, %v2029
    %v2050 = vadd.f32 %v2013, %v2029
    %v2051 = vadd.f32 %v2014, %v2029
    %v2052 = vadd.f32 %v2015, %v2029
    %v2053 = vadd.f32 %v2016, %v2029
    %v2054 = vadd.f32 %v2017, %v2029
    %v2055 = vadd.f32 %v2018, %v2029
    %v2056 = vadd.f32 %v2019, %v2029
    %v2057 = vadd.f32 %v2020, %v2029
    %v2058 = vadd.f32 %v2021, %v2029
    %v2059 = vadd.f32 %v2022, %v2029
    %v2060 = vadd.f32 %v2023, %v2029
    %v2061 = vadd.f32 %v2024, %v2029
    %v2062 = vadd.f32 %v1082, %v2030
    %v2063 = vadd.f32 %v1083, %v2031
    %v2064 = vadd.f32 %v1084, %v2032
    %v2065 = vadd.f32 %v1085, %v2033
    %v2066 = vadd.f32 %v1086, %v2034
    %v2067 = vadd.f32 %v1087, %v2035
    %v2068 = vadd.f32 %v1088, %v2036
    %v2069 = vadd.f32 %v1089, %v2037
    %v2070 = vadd.f32 %v1090, %v2038
    %v2071 = vadd.f32 %v1091, %v2039
    %v2072 = vadd.f32 %v1092, %v2040
    %v2073 = vadd.f32 %v1093, %v2041
    %v2074 = vadd.f32 %v1094, %v2042
    %v2075 = vadd.f32 %v1095, %v2043
    %v2076 = vadd.f32 %v1096, %v2044
    %v2077 = vadd.f32 %v1097, %v2045
    %v2078 = vadd.f32 %v1098, %v2046
    %v2079 = vadd.f32 %v1099, %v2047
    %v2080 = vadd.f32 %v1100, %v2048
    %v2081 = vadd.f32 %v1101, %v2049
    %v2082 = vadd.f32 %v1102, %v2050
    %v2083 = vadd.f32 %v1103, %v2051
    %v2084 = vadd.f32 %v1104, %v2052
    %v2085 = vadd.f32 %v1105, %v2053
    %v2086 = vadd.f32 %v1106, %v2054
    %v2087 = vadd.f32 %v1107, %v2055
    %v2088 = vadd.f32 %v1108, %v2056
    %v2089 = vadd.f32 %v1109, %v2057
    %v2090 = vadd.f32 %v1110, %v2058
    %v2091 = vadd.f32 %v1111, %v2059
    %v2092 = vadd.f32 %v1112, %v2060
    %v2093 = vadd.f32 %v1113, %v2061
    %2094 = vst.msk [vmem:[%s101 + $0x8] sm:$0xff] %vm35, %v2030
    %2095 = vst.msk [vmem:[%s101 + $0x10] sm:$0xff] %vm35, %v2031
    %2096 = vst.msk [vmem:[%s101 + $0x28] sm:$0xff] %vm35, %v2032
    %2097 = vst.msk [vmem:[%s101 + $0x30] sm:$0xff] %vm35, %v2033
    %2098 = vst.msk [vmem:[%s101 + $0x48] sm:$0xff] %vm35, %v2034
    %2099 = vst.msk [vmem:[%s101 + $0x50] sm:$0xff] %vm35, %v2035
    %2100 = vst.msk [vmem:[%s101 + $0x68] sm:$0xff] %vm35, %v2036
    %2101 = vst.msk [vmem:[%s101 + $0x70] sm:$0xff] %vm35, %v2037
    %2102 = vst.msk [vmem:[%s101 + $0x88] sm:$0xff] %vm35, %v2038
    %2103 = vst.msk [vmem:[%s101 + $0x90] sm:$0xff] %vm35, %v2039
    %2104 = vst.msk [vmem:[%s101 + $0xa8] sm:$0xff] %vm35, %v2040
    %2105 = vst.msk [vmem:[%s101 + $0xb0] sm:$0xff] %vm35, %v2041
    %2106 = vst.msk [vmem:[%s101 + $0xc8] sm:$0xff] %vm35, %v2042
    %2107 = vst.msk [vmem:[%s101 + $0xd0] sm:$0xff] %vm35, %v2043
    %2108 = vst.msk [vmem:[%s101 + $0xe8] sm:$0xff] %vm35, %v2044
    %2109 = vst.msk [vmem:[%s101 + $0xf0] sm:$0xff] %vm35, %v2045
    %2110 = vst.msk [vmem:[%s101 + $0x108] sm:$0xff] %vm35, %v2046
    %2111 = vst.msk [vmem:[%s101 + $0x110] sm:$0xff] %vm35, %v2047
    %2112 = vst.msk [vmem:[%s101 + $0x128] sm:$0xff] %vm35, %v2048
    %2113 = vst.msk [vmem:[%s101 + $0x130] sm:$0xff] %vm35, %v2049
    %2114 = vst.msk [vmem:[%s101 + $0x148] sm:$0xff] %vm35, %v2050
    %2115 = vst.msk [vmem:[%s101 + $0x150] sm:$0xff] %vm35, %v2051
    %2116 = vst.msk [vmem:[%s101 + $0x168] sm:$0xff] %vm35, %v2052
    %2117 = vst.msk [vmem:[%s101 + $0x170] sm:$0xff] %vm35, %v2053
    %2118 = vst.msk [vmem:[%s101 + $0x188] sm:$0xff] %vm35, %v2054
    %2119 = vst.msk [vmem:[%s101 + $0x190] sm:$0xff] %vm35, %v2055
    %2120 = vst.msk [vmem:[%s101 + $0x1a8] sm:$0xff] %vm35, %v2056
    %2121 = vst.msk [vmem:[%s101 + $0x1b0] sm:$0xff] %vm35, %v2057
    %2122 = vst.msk [vmem:[%s101 + $0x1c8] sm:$0xff] %vm35, %v2058
    %2123 = vst.msk [vmem:[%s101 + $0x1d0] sm:$0xff] %vm35, %v2059
    %2124 = vst.msk [vmem:[%s101 + $0x1e8] sm:$0xff] %vm35, %v2060
    %2125 = vst.msk [vmem:[%s101 + $0x1f0] sm:$0xff] %vm35, %v2061
    %v2126 = vld [vmem:[%s101 + $0x6] sm:$0xff]
    %v2127 = vld [vmem:[%s101 + $0xe] sm:$0xff]
    %v2128 = vld [vmem:[%s101 + $0x26] sm:$0xff]
    %v2129 = vld [vmem:[%s101 + $0x2e] sm:$0xff]
    %v2130 = vld [vmem:[%s101 + $0x46] sm:$0xff]
    %v2131 = vld [vmem:[%s101 + $0x4e] sm:$0xff]
    %v2132 = vld [vmem:[%s101 + $0x66] sm:$0xff]
    %v2133 = vld [vmem:[%s101 + $0x6e] sm:$0xff]
    %v2134 = vld [vmem:[%s101 + $0x86] sm:$0xff]
    %v2135 = vld [vmem:[%s101 + $0x8e] sm:$0xff]
    %v2136 = vld [vmem:[%s101 + $0xa6] sm:$0xff]
    %v2137 = vld [vmem:[%s101 + $0xae] sm:$0xff]
    %v2138 = vld [vmem:[%s101 + $0xc6] sm:$0xff]
    %v2139 = vld [vmem:[%s101 + $0xce] sm:$0xff]
    %v2140 = vld [vmem:[%s101 + $0xe6] sm:$0xff]
    %v2141 = vld [vmem:[%s101 + $0xee] sm:$0xff]
    %v2142 = vld [vmem:[%s101 + $0x106] sm:$0xff]
    %v2143 = vld [vmem:[%s101 + $0x10e] sm:$0xff]
    %v2144 = vld [vmem:[%s101 + $0x126] sm:$0xff]
    %v2145 = vld [vmem:[%s101 + $0x12e] sm:$0xff]
    %v2146 = vld [vmem:[%s101 + $0x146] sm:$0xff]
    %v2147 = vld [vmem:[%s101 + $0x14e] sm:$0xff]
    %v2148 = vld [vmem:[%s101 + $0x166] sm:$0xff]
    %v2149 = vld [vmem:[%s101 + $0x16e] sm:$0xff]
    %v2150 = vld [vmem:[%s101 + $0x186] sm:$0xff]
    %v2151 = vld [vmem:[%s101 + $0x18e] sm:$0xff]
    %v2152 = vld [vmem:[%s101 + $0x1a6] sm:$0xff]
    %v2153 = vld [vmem:[%s101 + $0x1ae] sm:$0xff]
    %v2154 = vld [vmem:[%s101 + $0x1c6] sm:$0xff]
    %v2155 = vld [vmem:[%s101 + $0x1ce] sm:$0xff]
    %v2156 = vld [vmem:[%s101 + $0x1e6] sm:$0xff]
    %v2157 = vld [vmem:[%s101 + $0x1ee] sm:$0xff]
    %v2158 = vld [vmem:[%s1 + $0x12] sm:$0x1]
    %v2159 = vlaneseq
    %v2160 = vshrl.u32 %v2159, 7
    %v2161 = vsub.s32 0, %v2160
    %v2162 = vrot.slane %v2158, %v2161
    %v2163 = vmul.f32 %v2126, %v2162
    %v2164 = vmul.f32 %v2127, %v2162
    %v2165 = vmul.f32 %v2128, %v2162
    %v2166 = vmul.f32 %v2129, %v2162
    %v2167 = vmul.f32 %v2130, %v2162
    %v2168 = vmul.f32 %v2131, %v2162
    %v2169 = vmul.f32 %v2132, %v2162
    %v2170 = vmul.f32 %v2133, %v2162
    %v2171 = vmul.f32 %v2134, %v2162
    %v2172 = vmul.f32 %v2135, %v2162
    %v2173 = vmul.f32 %v2136, %v2162
    %v2174 = vmul.f32 %v2137, %v2162
    %v2175 = vmul.f32 %v2138, %v2162
    %v2176 = vmul.f32 %v2139, %v2162
    %v2177 = vmul.f32 %v2140, %v2162
    %v2178 = vmul.f32 %v2141, %v2162
    %v2179 = vmul.f32 %v2142, %v2162
    %v2180 = vmul.f32 %v2143, %v2162
    %v2181 = vmul.f32 %v2144, %v2162
    %v2182 = vmul.f32 %v2145, %v2162
    %v2183 = vmul.f32 %v2146, %v2162
    %v2184 = vmul.f32 %v2147, %v2162
    %v2185 = vmul.f32 %v2148, %v2162
    %v2186 = vmul.f32 %v2149, %v2162
    %v2187 = vmul.f32 %v2150, %v2162
    %v2188 = vmul.f32 %v2151, %v2162
    %v2189 = vmul.f32 %v2152, %v2162
    %v2190 = vmul.f32 %v2153, %v2162
    %v2191 = vmul.f32 %v2154, %v2162
    %v2192 = vmul.f32 %v2155, %v2162
    %v2193 = vmul.f32 %v2156, %v2162
    %v2194 = vmul.f32 %v2157, %v2162
    %v2195 = vld [vmem:[%s101 + $0x7] sm:$0xff]
    %v2196 = vld [vmem:[%s101 + $0xf] sm:$0xff]
    %v2197 = vld [vmem:[%s101 + $0x27] sm:$0xff]
    %v2198 = vld [vmem:[%s101 + $0x2f] sm:$0xff]
    %v2199 = vld [vmem:[%s101 + $0x47] sm:$0xff]
    %v2200 = vld [vmem:[%s101 + $0x4f] sm:$0xff]
    %v2201 = vld [vmem:[%s101 + $0x67] sm:$0xff]
    %v2202 = vld [vmem:[%s101 + $0x6f] sm:$0xff]
    %v2203 = vld [vmem:[%s101 + $0x87] sm:$0xff]
    %v2204 = vld [vmem:[%s101 + $0x8f] sm:$0xff]
    %v2205 = vld [vmem:[%s101 + $0xa7] sm:$0xff]
    %v2206 = vld [vmem:[%s101 + $0xaf] sm:$0xff]
    %v2207 = vld [vmem:[%s101 + $0xc7] sm:$0xff]
    %v2208 = vld [vmem:[%s101 + $0xcf] sm:$0xff]
    %v2209 = vld [vmem:[%s101 + $0xe7] sm:$0xff]
    %v2210 = vld [vmem:[%s101 + $0xef] sm:$0xff]
    %v2211 = vld [vmem:[%s101 + $0x107] sm:$0xff]
    %v2212 = vld [vmem:[%s101 + $0x10f] sm:$0xff]
    %v2213 = vld [vmem:[%s101 + $0x127] sm:$0xff]
    %v2214 = vld [vmem:[%s101 + $0x12f] sm:$0xff]
    %v2215 = vld [vmem:[%s101 + $0x147] sm:$0xff]
    %v2216 = vld [vmem:[%s101 + $0x14f] sm:$0xff]
    %v2217 = vld [vmem:[%s101 + $0x167] sm:$0xff]
    %v2218 = vld [vmem:[%s101 + $0x16f] sm:$0xff]
    %v2219 = vld [vmem:[%s101 + $0x187] sm:$0xff]
    %v2220 = vld [vmem:[%s101 + $0x18f] sm:$0xff]
    %v2221 = vld [vmem:[%s101 + $0x1a7] sm:$0xff]
    %v2222 = vld [vmem:[%s101 + $0x1af] sm:$0xff]
    %v2223 = vld [vmem:[%s101 + $0x1c7] sm:$0xff]
    %v2224 = vld [vmem:[%s101 + $0x1cf] sm:$0xff]
    %v2225 = vld [vmem:[%s101 + $0x1e7] sm:$0xff]
    %v2226 = vld [vmem:[%s101 + $0x1ef] sm:$0xff]
    %v2227 = vld [vmem:[%s1 + $0x13] sm:$0x1]
    %v2228 = vlaneseq
    %v2229 = vshrl.u32 %v2228, 7
    %v2230 = vsub.s32 0, %v2229
    %v2231 = vrot.slane %v2227, %v2230
    %v2232 = vmul.f32 %v2195, %v2231
    %v2233 = vmul.f32 %v2196, %v2231
    %v2234 = vmul.f32 %v2197, %v2231
    %v2235 = vmul.f32 %v2198, %v2231
    %v2236 = vmul.f32 %v2199, %v2231
    %v2237 = vmul.f32 %v2200, %v2231
    %v2238 = vmul.f32 %v2201, %v2231
    %v2239 = vmul.f32 %v2202, %v2231
    %v2240 = vmul.f32 %v2203, %v2231
    %v2241 = vmul.f32 %v2204, %v2231
    %v2242 = vmul.f32 %v2205, %v2231
    %v2243 = vmul.f32 %v2206, %v2231
    %v2244 = vmul.f32 %v2207, %v2231
    %v2245 = vmul.f32 %v2208, %v2231
    %v2246 = vmul.f32 %v2209, %v2231
    %v2247 = vmul.f32 %v2210, %v2231
    %v2248 = vmul.f32 %v2211, %v2231
    %v2249 = vmul.f32 %v2212, %v2231
    %v2250 = vmul.f32 %v2213, %v2231
    %v2251 = vmul.f32 %v2214, %v2231
    %v2252 = vmul.f32 %v2215, %v2231
    %v2253 = vmul.f32 %v2216, %v2231
    %v2254 = vmul.f32 %v2217, %v2231
    %v2255 = vmul.f32 %v2218, %v2231
    %v2256 = vmul.f32 %v2219, %v2231
    %v2257 = vmul.f32 %v2220, %v2231
    %v2258 = vmul.f32 %v2221, %v2231
    %v2259 = vmul.f32 %v2222, %v2231
    %v2260 = vmul.f32 %v2223, %v2231
    %v2261 = vmul.f32 %v2224, %v2231
    %v2262 = vmul.f32 %v2225, %v2231
    %v2263 = vmul.f32 %v2226, %v2231
    %v2264 = vadd.f32 %v2163, %v2232
    %v2265 = vadd.f32 %v2164, %v2233
    %v2266 = vadd.f32 %v2165, %v2234
    %v2267 = vadd.f32 %v2166, %v2235
    %v2268 = vadd.f32 %v2167, %v2236
    %v2269 = vadd.f32 %v2168, %v2237
    %v2270 = vadd.f32 %v2169, %v2238
    %v2271 = vadd.f32 %v2170, %v2239
    %v2272 = vadd.f32 %v2171, %v2240
    %v2273 = vadd.f32 %v2172, %v2241
    %v2274 = vadd.f32 %v2173, %v2242
    %v2275 = vadd.f32 %v2174, %v2243
    %v2276 = vadd.f32 %v2175, %v2244
    %v2277 = vadd.f32 %v2176, %v2245
    %v2278 = vadd.f32 %v2177, %v2246
    %v2279 = vadd.f32 %v2178, %v2247
    %v2280 = vadd.f32 %v2179, %v2248
    %v2281 = vadd.f32 %v2180, %v2249
    %v2282 = vadd.f32 %v2181, %v2250
    %v2283 = vadd.f32 %v2182, %v2251
    %v2284 = vadd.f32 %v2183, %v2252
    %v2285 = vadd.f32 %v2184, %v2253
    %v2286 = vadd.f32 %v2185, %v2254
    %v2287 = vadd.f32 %v2186, %v2255
    %v2288 = vadd.f32 %v2187, %v2256
    %v2289 = vadd.f32 %v2188, %v2257
    %v2290 = vadd.f32 %v2189, %v2258
    %v2291 = vadd.f32 %v2190, %v2259
    %v2292 = vadd.f32 %v2191, %v2260
    %v2293 = vadd.f32 %v2192, %v2261
    %v2294 = vadd.f32 %v2193, %v2262
    %v2295 = vadd.f32 %v2194, %v2263
    %v2296 = vld [vmem:[%s101 + $0x8] sm:$0xff]
    %v2297 = vld [vmem:[%s101 + $0x10] sm:$0xff]
    %v2298 = vld [vmem:[%s101 + $0x28] sm:$0xff]
    %v2299 = vld [vmem:[%s101 + $0x30] sm:$0xff]
    %v2300 = vld [vmem:[%s101 + $0x48] sm:$0xff]
    %v2301 = vld [vmem:[%s101 + $0x50] sm:$0xff]
    %v2302 = vld [vmem:[%s101 + $0x68] sm:$0xff]
    %v2303 = vld [vmem:[%s101 + $0x70] sm:$0xff]
    %v2304 = vld [vmem:[%s101 + $0x88] sm:$0xff]
    %v2305 = vld [vmem:[%s101 + $0x90] sm:$0xff]
    %v2306 = vld [vmem:[%s101 + $0xa8] sm:$0xff]
    %v2307 = vld [vmem:[%s101 + $0xb0] sm:$0xff]
    %v2308 = vld [vmem:[%s101 + $0xc8] sm:$0xff]
    %v2309 = vld [vmem:[%s101 + $0xd0] sm:$0xff]
    %v2310 = vld [vmem:[%s101 + $0xe8] sm:$0xff]
    %v2311 = vld [vmem:[%s101 + $0xf0] sm:$0xff]
    %v2312 = vld [vmem:[%s101 + $0x108] sm:$0xff]
    %v2313 = vld [vmem:[%s101 + $0x110] sm:$0xff]
    %v2314 = vld [vmem:[%s101 + $0x128] sm:$0xff]
    %v2315 = vld [vmem:[%s101 + $0x130] sm:$0xff]
    %v2316 = vld [vmem:[%s101 + $0x148] sm:$0xff]
    %v2317 = vld [vmem:[%s101 + $0x150] sm:$0xff]
    %v2318 = vld [vmem:[%s101 + $0x168] sm:$0xff]
    %v2319 = vld [vmem:[%s101 + $0x170] sm:$0xff]
    %v2320 = vld [vmem:[%s101 + $0x188] sm:$0xff]
    %v2321 = vld [vmem:[%s101 + $0x190] sm:$0xff]
    %v2322 = vld [vmem:[%s101 + $0x1a8] sm:$0xff]
    %v2323 = vld [vmem:[%s101 + $0x1b0] sm:$0xff]
    %v2324 = vld [vmem:[%s101 + $0x1c8] sm:$0xff]
    %v2325 = vld [vmem:[%s101 + $0x1d0] sm:$0xff]
    %v2326 = vld [vmem:[%s101 + $0x1e8] sm:$0xff]
    %v2327 = vld [vmem:[%s101 + $0x1f0] sm:$0xff]
    %v2328 = vld [vmem:[%s1 + $0x14] sm:$0x1]
    %v2329 = vlaneseq
    %v2330 = vshrl.u32 %v2329, 7
    %v2331 = vsub.s32 0, %v2330
    %v2332 = vrot.slane %v2328, %v2331
    %v2333 = vmul.f32 %v2296, %v2332
    %v2334 = vmul.f32 %v2297, %v2332
    %v2335 = vmul.f32 %v2298, %v2332
    %v2336 = vmul.f32 %v2299, %v2332
    %v2337 = vmul.f32 %v2300, %v2332
    %v2338 = vmul.f32 %v2301, %v2332
    %v2339 = vmul.f32 %v2302, %v2332
    %v2340 = vmul.f32 %v2303, %v2332
    %v2341 = vmul.f32 %v2304, %v2332
    %v2342 = vmul.f32 %v2305, %v2332
    %v2343 = vmul.f32 %v2306, %v2332
    %v2344 = vmul.f32 %v2307, %v2332
    %v2345 = vmul.f32 %v2308, %v2332
    %v2346 = vmul.f32 %v2309, %v2332
    %v2347 = vmul.f32 %v2310, %v2332
    %v2348 = vmul.f32 %v2311, %v2332
    %v2349 = vmul.f32 %v2312, %v2332
    %v2350 = vmul.f32 %v2313, %v2332
    %v2351 = vmul.f32 %v2314, %v2332
    %v2352 = vmul.f32 %v2315, %v2332
    %v2353 = vmul.f32 %v2316, %v2332
    %v2354 = vmul.f32 %v2317, %v2332
    %v2355 = vmul.f32 %v2318, %v2332
    %v2356 = vmul.f32 %v2319, %v2332
    %v2357 = vmul.f32 %v2320, %v2332
    %v2358 = vmul.f32 %v2321, %v2332
    %v2359 = vmul.f32 %v2322, %v2332
    %v2360 = vmul.f32 %v2323, %v2332
    %v2361 = vmul.f32 %v2324, %v2332
    %v2362 = vmul.f32 %v2325, %v2332
    %v2363 = vmul.f32 %v2326, %v2332
    %v2364 = vmul.f32 %v2327, %v2332
    %v2365 = vadd.f32 %v2264, %v2333
    %v2366 = vadd.f32 %v2265, %v2334
    %v2367 = vadd.f32 %v2266, %v2335
    %v2368 = vadd.f32 %v2267, %v2336
    %v2369 = vadd.f32 %v2268, %v2337
    %v2370 = vadd.f32 %v2269, %v2338
    %v2371 = vadd.f32 %v2270, %v2339
    %v2372 = vadd.f32 %v2271, %v2340
    %v2373 = vadd.f32 %v2272, %v2341
    %v2374 = vadd.f32 %v2273, %v2342
    %v2375 = vadd.f32 %v2274, %v2343
    %v2376 = vadd.f32 %v2275, %v2344
    %v2377 = vadd.f32 %v2276, %v2345
    %v2378 = vadd.f32 %v2277, %v2346
    %v2379 = vadd.f32 %v2278, %v2347
    %v2380 = vadd.f32 %v2279, %v2348
    %v2381 = vadd.f32 %v2280, %v2349
    %v2382 = vadd.f32 %v2281, %v2350
    %v2383 = vadd.f32 %v2282, %v2351
    %v2384 = vadd.f32 %v2283, %v2352
    %v2385 = vadd.f32 %v2284, %v2353
    %v2386 = vadd.f32 %v2285, %v2354
    %v2387 = vadd.f32 %v2286, %v2355
    %v2388 = vadd.f32 %v2287, %v2356
    %v2389 = vadd.f32 %v2288, %v2357
    %v2390 = vadd.f32 %v2289, %v2358
    %v2391 = vadd.f32 %v2290, %v2359
    %v2392 = vadd.f32 %v2291, %v2360
    %v2393 = vadd.f32 %v2292, %v2361
    %v2394 = vadd.f32 %v2293, %v2362
    %v2395 = vadd.f32 %v2294, %v2363
    %v2396 = vadd.f32 %v2295, %v2364
    %v2397 = vld [vmem:[%s101 + $0x9] sm:$0xff]
    %v2398 = vld [vmem:[%s101 + $0x11] sm:$0xff]
    %v2399 = vld [vmem:[%s101 + $0x29] sm:$0xff]
    %v2400 = vld [vmem:[%s101 + $0x31] sm:$0xff]
    %v2401 = vld [vmem:[%s101 + $0x49] sm:$0xff]
    %v2402 = vld [vmem:[%s101 + $0x51] sm:$0xff]
    %v2403 = vld [vmem:[%s101 + $0x69] sm:$0xff]
    %v2404 = vld [vmem:[%s101 + $0x71] sm:$0xff]
    %v2405 = vld [vmem:[%s101 + $0x89] sm:$0xff]
    %v2406 = vld [vmem:[%s101 + $0x91] sm:$0xff]
    %v2407 = vld [vmem:[%s101 + $0xa9] sm:$0xff]
    %v2408 = vld [vmem:[%s101 + $0xb1] sm:$0xff]
    %v2409 = vld [vmem:[%s101 + $0xc9] sm:$0xff]
    %v2410 = vld [vmem:[%s101 + $0xd1] sm:$0xff]
    %v2411 = vld [vmem:[%s101 + $0xe9] sm:$0xff]
    %v2412 = vld [vmem:[%s101 + $0xf1] sm:$0xff]
    %v2413 = vld [vmem:[%s101 + $0x109] sm:$0xff]
    %v2414 = vld [vmem:[%s101 + $0x111] sm:$0xff]
    %v2415 = vld [vmem:[%s101 + $0x129] sm:$0xff]
    %v2416 = vld [vmem:[%s101 + $0x131] sm:$0xff]
    %v2417 = vld [vmem:[%s101 + $0x149] sm:$0xff]
    %v2418 = vld [vmem:[%s101 + $0x151] sm:$0xff]
    %v2419 = vld [vmem:[%s101 + $0x169] sm:$0xff]
    %v2420 = vld [vmem:[%s101 + $0x171] sm:$0xff]
    %v2421 = vld [vmem:[%s101 + $0x189] sm:$0xff]
    %v2422 = vld [vmem:[%s101 + $0x191] sm:$0xff]
    %v2423 = vld [vmem:[%s101 + $0x1a9] sm:$0xff]
    %v2424 = vld [vmem:[%s101 + $0x1b1] sm:$0xff]
    %v2425 = vld [vmem:[%s101 + $0x1c9] sm:$0xff]
    %v2426 = vld [vmem:[%s101 + $0x1d1] sm:$0xff]
    %v2427 = vld [vmem:[%s101 + $0x1e9] sm:$0xff]
    %v2428 = vld [vmem:[%s101 + $0x1f1] sm:$0xff]
    %v2429 = vld [vmem:[%s1 + $0x15] sm:$0x1]
    %v2430 = vlaneseq
    %v2431 = vshrl.u32 %v2430, 7
    %v2432 = vsub.s32 0, %v2431
    %v2433 = vrot.slane %v2429, %v2432
    %v2434 = vmul.f32 %v2397, %v2433
    %v2435 = vmul.f32 %v2398, %v2433
    %v2436 = vmul.f32 %v2399, %v2433
    %v2437 = vmul.f32 %v2400, %v2433
    %v2438 = vmul.f32 %v2401, %v2433
    %v2439 = vmul.f32 %v2402, %v2433
    %v2440 = vmul.f32 %v2403, %v2433
    %v2441 = vmul.f32 %v2404, %v2433
    %v2442 = vmul.f32 %v2405, %v2433
    %v2443 = vmul.f32 %v2406, %v2433
    %v2444 = vmul.f32 %v2407, %v2433
    %v2445 = vmul.f32 %v2408, %v2433
    %v2446 = vmul.f32 %v2409, %v2433
    %v2447 = vmul.f32 %v2410, %v2433
    %v2448 = vmul.f32 %v2411, %v2433
    %v2449 = vmul.f32 %v2412, %v2433
    %v2450 = vmul.f32 %v2413, %v2433
    %v2451 = vmul.f32 %v2414, %v2433
    %v2452 = vmul.f32 %v2415, %v2433
    %v2453 = vmul.f32 %v2416, %v2433
    %v2454 = vmul.f32 %v2417, %v2433
    %v2455 = vmul.f32 %v2418, %v2433
    %v2456 = vmul.f32 %v2419, %v2433
    %v2457 = vmul.f32 %v2420, %v2433
    %v2458 = vmul.f32 %v2421, %v2433
    %v2459 = vmul.f32 %v2422, %v2433
    %v2460 = vmul.f32 %v2423, %v2433
    %v2461 = vmul.f32 %v2424, %v2433
    %v2462 = vmul.f32 %v2425, %v2433
    %v2463 = vmul.f32 %v2426, %v2433
    %v2464 = vmul.f32 %v2427, %v2433
    %v2465 = vmul.f32 %v2428, %v2433
    %v2466 = vadd.f32 %v2365, %v2434
    %v2467 = vadd.f32 %v2366, %v2435
    %v2468 = vadd.f32 %v2367, %v2436
    %v2469 = vadd.f32 %v2368, %v2437
    %v2470 = vadd.f32 %v2369, %v2438
    %v2471 = vadd.f32 %v2370, %v2439
    %v2472 = vadd.f32 %v2371, %v2440
    %v2473 = vadd.f32 %v2372, %v2441
    %v2474 = vadd.f32 %v2373, %v2442
    %v2475 = vadd.f32 %v2374, %v2443
    %v2476 = vadd.f32 %v2375, %v2444
    %v2477 = vadd.f32 %v2376, %v2445
    %v2478 = vadd.f32 %v2377, %v2446
    %v2479 = vadd.f32 %v2378, %v2447
    %v2480 = vadd.f32 %v2379, %v2448
    %v2481 = vadd.f32 %v2380, %v2449
    %v2482 = vadd.f32 %v2381, %v2450
    %v2483 = vadd.f32 %v2382, %v2451
    %v2484 = vadd.f32 %v2383, %v2452
    %v2485 = vadd.f32 %v2384, %v2453
    %v2486 = vadd.f32 %v2385, %v2454
    %v2487 = vadd.f32 %v2386, %v2455
    %v2488 = vadd.f32 %v2387, %v2456
    %v2489 = vadd.f32 %v2388, %v2457
    %v2490 = vadd.f32 %v2389, %v2458
    %v2491 = vadd.f32 %v2390, %v2459
    %v2492 = vadd.f32 %v2391, %v2460
    %v2493 = vadd.f32 %v2392, %v2461
    %v2494 = vadd.f32 %v2393, %v2462
    %v2495 = vadd.f32 %v2394, %v2463
    %v2496 = vadd.f32 %v2395, %v2464
    %v2497 = vadd.f32 %v2396, %v2465
    %v2498 = vld [vmem:[%s101 + $0xa] sm:$0xff]
    %v2499 = vld [vmem:[%s101 + $0x12] sm:$0xff]
    %v2500 = vld [vmem:[%s101 + $0x2a] sm:$0xff]
    %v2501 = vld [vmem:[%s101 + $0x32] sm:$0xff]
    %v2502 = vld [vmem:[%s101 + $0x4a] sm:$0xff]
    %v2503 = vld [vmem:[%s101 + $0x52] sm:$0xff]
    %v2504 = vld [vmem:[%s101 + $0x6a] sm:$0xff]
    %v2505 = vld [vmem:[%s101 + $0x72] sm:$0xff]
    %v2506 = vld [vmem:[%s101 + $0x8a] sm:$0xff]
    %v2507 = vld [vmem:[%s101 + $0x92] sm:$0xff]
    %v2508 = vld [vmem:[%s101 + $0xaa] sm:$0xff]
    %v2509 = vld [vmem:[%s101 + $0xb2] sm:$0xff]
    %v2510 = vld [vmem:[%s101 + $0xca] sm:$0xff]
    %v2511 = vld [vmem:[%s101 + $0xd2] sm:$0xff]
    %v2512 = vld [vmem:[%s101 + $0xea] sm:$0xff]
    %v2513 = vld [vmem:[%s101 + $0xf2] sm:$0xff]
    %v2514 = vld [vmem:[%s101 + $0x10a] sm:$0xff]
    %v2515 = vld [vmem:[%s101 + $0x112] sm:$0xff]
    %v2516 = vld [vmem:[%s101 + $0x12a] sm:$0xff]
    %v2517 = vld [vmem:[%s101 + $0x132] sm:$0xff]
    %v2518 = vld [vmem:[%s101 + $0x14a] sm:$0xff]
    %v2519 = vld [vmem:[%s101 + $0x152] sm:$0xff]
    %v2520 = vld [vmem:[%s101 + $0x16a] sm:$0xff]
    %v2521 = vld [vmem:[%s101 + $0x172] sm:$0xff]
    %v2522 = vld [vmem:[%s101 + $0x18a] sm:$0xff]
    %v2523 = vld [vmem:[%s101 + $0x192] sm:$0xff]
    %v2524 = vld [vmem:[%s101 + $0x1aa] sm:$0xff]
    %v2525 = vld [vmem:[%s101 + $0x1b2] sm:$0xff]
    %v2526 = vld [vmem:[%s101 + $0x1ca] sm:$0xff]
    %v2527 = vld [vmem:[%s101 + $0x1d2] sm:$0xff]
    %v2528 = vld [vmem:[%s101 + $0x1ea] sm:$0xff]
    %v2529 = vld [vmem:[%s101 + $0x1f2] sm:$0xff]
    %v2530 = vld [vmem:[%s1 + $0x16] sm:$0x1]
    %v2531 = vlaneseq
    %v2532 = vshrl.u32 %v2531, 7
    %v2533 = vsub.s32 0, %v2532
    %v2534 = vrot.slane %v2530, %v2533
    %v2535 = vmul.f32 %v2498, %v2534
    %v2536 = vmul.f32 %v2499, %v2534
    %v2537 = vmul.f32 %v2500, %v2534
    %v2538 = vmul.f32 %v2501, %v2534
    %v2539 = vmul.f32 %v2502, %v2534
    %v2540 = vmul.f32 %v2503, %v2534
    %v2541 = vmul.f32 %v2504, %v2534
    %v2542 = vmul.f32 %v2505, %v2534
    %v2543 = vmul.f32 %v2506, %v2534
    %v2544 = vmul.f32 %v2507, %v2534
    %v2545 = vmul.f32 %v2508, %v2534
    %v2546 = vmul.f32 %v2509, %v2534
    %v2547 = vmul.f32 %v2510, %v2534
    %v2548 = vmul.f32 %v2511, %v2534
    %v2549 = vmul.f32 %v2512, %v2534
    %v2550 = vmul.f32 %v2513, %v2534
    %v2551 = vmul.f32 %v2514, %v2534
    %v2552 = vmul.f32 %v2515, %v2534
    %v2553 = vmul.f32 %v2516, %v2534
    %v2554 = vmul.f32 %v2517, %v2534
    %v2555 = vmul.f32 %v2518, %v2534
    %v2556 = vmul.f32 %v2519, %v2534
    %v2557 = vmul.f32 %v2520, %v2534
    %v2558 = vmul.f32 %v2521, %v2534
    %v2559 = vmul.f32 %v2522, %v2534
    %v2560 = vmul.f32 %v2523, %v2534
    %v2561 = vmul.f32 %v2524, %v2534
    %v2562 = vmul.f32 %v2525, %v2534
    %v2563 = vmul.f32 %v2526, %v2534
    %v2564 = vmul.f32 %v2527, %v2534
    %v2565 = vmul.f32 %v2528, %v2534
    %v2566 = vmul.f32 %v2529, %v2534
    %v2567 = vadd.f32 %v2466, %v2535
    %v2568 = vadd.f32 %v2467, %v2536
    %v2569 = vadd.f32 %v2468, %v2537
    %v2570 = vadd.f32 %v2469, %v2538
    %v2571 = vadd.f32 %v2470, %v2539
    %v2572 = vadd.f32 %v2471, %v2540
    %v2573 = vadd.f32 %v2472, %v2541
    %v2574 = vadd.f32 %v2473, %v2542
    %v2575 = vadd.f32 %v2474, %v2543
    %v2576 = vadd.f32 %v2475, %v2544
    %v2577 = vadd.f32 %v2476, %v2545
    %v2578 = vadd.f32 %v2477, %v2546
    %v2579 = vadd.f32 %v2478, %v2547
    %v2580 = vadd.f32 %v2479, %v2548
    %v2581 = vadd.f32 %v2480, %v2549
    %v2582 = vadd.f32 %v2481, %v2550
    %v2583 = vadd.f32 %v2482, %v2551
    %v2584 = vadd.f32 %v2483, %v2552
    %v2585 = vadd.f32 %v2484, %v2553
    %v2586 = vadd.f32 %v2485, %v2554
    %v2587 = vadd.f32 %v2486, %v2555
    %v2588 = vadd.f32 %v2487, %v2556
    %v2589 = vadd.f32 %v2488, %v2557
    %v2590 = vadd.f32 %v2489, %v2558
    %v2591 = vadd.f32 %v2490, %v2559
    %v2592 = vadd.f32 %v2491, %v2560
    %v2593 = vadd.f32 %v2492, %v2561
    %v2594 = vadd.f32 %v2493, %v2562
    %v2595 = vadd.f32 %v2494, %v2563
    %v2596 = vadd.f32 %v2495, %v2564
    %v2597 = vadd.f32 %v2496, %v2565
    %v2598 = vadd.f32 %v2497, %v2566
    %v2599 = vld [vmem:[%s2 + $0x2] sm:$0x1]
    %v2600 = vlaneseq
    %v2601 = vshrl.u32 %v2600, 7
    %v2602 = vsub.s32 0, %v2601
    %v2603 = vrot.slane %v2599, %v2602
    %v2604 = vadd.f32 %v2567, %v2603
    %v2605 = vadd.f32 %v2568, %v2603
    %v2606 = vadd.f32 %v2569, %v2603
    %v2607 = vadd.f32 %v2570, %v2603
    %v2608 = vadd.f32 %v2571, %v2603
    %v2609 = vadd.f32 %v2572, %v2603
    %v2610 = vadd.f32 %v2573, %v2603
    %v2611 = vadd.f32 %v2574, %v2603
    %v2612 = vadd.f32 %v2575, %v2603
    %v2613 = vadd.f32 %v2576, %v2603
    %v2614 = vadd.f32 %v2577, %v2603
    %v2615 = vadd.f32 %v2578, %v2603
    %v2616 = vadd.f32 %v2579, %v2603
    %v2617 = vadd.f32 %v2580, %v2603
    %v2618 = vadd.f32 %v2581, %v2603
    %v2619 = vadd.f32 %v2582, %v2603
    %v2620 = vadd.f32 %v2583, %v2603
    %v2621 = vadd.f32 %v2584, %v2603
    %v2622 = vadd.f32 %v2585, %v2603
    %v2623 = vadd.f32 %v2586, %v2603
    %v2624 = vadd.f32 %v2587, %v2603
    %v2625 = vadd.f32 %v2588, %v2603
    %v2626 = vadd.f32 %v2589, %v2603
    %v2627 = vadd.f32 %v2590, %v2603
    %v2628 = vadd.f32 %v2591, %v2603
    %v2629 = vadd.f32 %v2592, %v2603
    %v2630 = vadd.f32 %v2593, %v2603
    %v2631 = vadd.f32 %v2594, %v2603
    %v2632 = vadd.f32 %v2595, %v2603
    %v2633 = vadd.f32 %v2596, %v2603
    %v2634 = vadd.f32 %v2597, %v2603
    %v2635 = vadd.f32 %v2598, %v2603
    %v2636 = vld [vmem:[%s101 + $0x5] sm:$0xff]
    %v2637 = vld [vmem:[%s101 + $0xd] sm:$0xff]
    %v2638 = vld [vmem:[%s101 + $0x25] sm:$0xff]
    %v2639 = vld [vmem:[%s101 + $0x2d] sm:$0xff]
    %v2640 = vld [vmem:[%s101 + $0x45] sm:$0xff]
    %v2641 = vld [vmem:[%s101 + $0x4d] sm:$0xff]
    %v2642 = vld [vmem:[%s101 + $0x65] sm:$0xff]
    %v2643 = vld [vmem:[%s101 + $0x6d] sm:$0xff]
    %v2644 = vld [vmem:[%s101 + $0x85] sm:$0xff]
    %v2645 = vld [vmem:[%s101 + $0x8d] sm:$0xff]
    %v2646 = vld [vmem:[%s101 + $0xa5] sm:$0xff]
    %v2647 = vld [vmem:[%s101 + $0xad] sm:$0xff]
    %v2648 = vld [vmem:[%s101 + $0xc5] sm:$0xff]
    %v2649 = vld [vmem:[%s101 + $0xcd] sm:$0xff]
    %v2650 = vld [vmem:[%s101 + $0xe5] sm:$0xff]
    %v2651 = vld [vmem:[%s101 + $0xed] sm:$0xff]
    %v2652 = vld [vmem:[%s101 + $0x105] sm:$0xff]
    %v2653 = vld [vmem:[%s101 + $0x10d] sm:$0xff]
    %v2654 = vld [vmem:[%s101 + $0x125] sm:$0xff]
    %v2655 = vld [vmem:[%s101 + $0x12d] sm:$0xff]
    %v2656 = vld [vmem:[%s101 + $0x145] sm:$0xff]
    %v2657 = vld [vmem:[%s101 + $0x14d] sm:$0xff]
    %v2658 = vld [vmem:[%s101 + $0x165] sm:$0xff]
    %v2659 = vld [vmem:[%s101 + $0x16d] sm:$0xff]
    %v2660 = vld [vmem:[%s101 + $0x185] sm:$0xff]
    %v2661 = vld [vmem:[%s101 + $0x18d] sm:$0xff]
    %v2662 = vld [vmem:[%s101 + $0x1a5] sm:$0xff]
    %v2663 = vld [vmem:[%s101 + $0x1ad] sm:$0xff]
    %v2664 = vld [vmem:[%s101 + $0x1c5] sm:$0xff]
    %v2665 = vld [vmem:[%s101 + $0x1cd] sm:$0xff]
    %v2666 = vld [vmem:[%s101 + $0x1e5] sm:$0xff]
    %v2667 = vld [vmem:[%s101 + $0x1ed] sm:$0xff]
    %v2668 = vld [vmem:[%s1 + $0x1c] sm:$0x1]
    %v2669 = vlaneseq
    %v2670 = vshrl.u32 %v2669, 7
    %v2671 = vsub.s32 0, %v2670
    %v2672 = vrot.slane %v2668, %v2671
    %v2673 = vmul.f32 %v2636, %v2672
    %v2674 = vmul.f32 %v2637, %v2672
    %v2675 = vmul.f32 %v2638, %v2672
    %v2676 = vmul.f32 %v2639, %v2672
    %v2677 = vmul.f32 %v2640, %v2672
    %v2678 = vmul.f32 %v2641, %v2672
    %v2679 = vmul.f32 %v2642, %v2672
    %v2680 = vmul.f32 %v2643, %v2672
    %v2681 = vmul.f32 %v2644, %v2672
    %v2682 = vmul.f32 %v2645, %v2672
    %v2683 = vmul.f32 %v2646, %v2672
    %v2684 = vmul.f32 %v2647, %v2672
    %v2685 = vmul.f32 %v2648, %v2672
    %v2686 = vmul.f32 %v2649, %v2672
    %v2687 = vmul.f32 %v2650, %v2672
    %v2688 = vmul.f32 %v2651, %v2672
    %v2689 = vmul.f32 %v2652, %v2672
    %v2690 = vmul.f32 %v2653, %v2672
    %v2691 = vmul.f32 %v2654, %v2672
    %v2692 = vmul.f32 %v2655, %v2672
    %v2693 = vmul.f32 %v2656, %v2672
    %v2694 = vmul.f32 %v2657, %v2672
    %v2695 = vmul.f32 %v2658, %v2672
    %v2696 = vmul.f32 %v2659, %v2672
    %v2697 = vmul.f32 %v2660, %v2672
    %v2698 = vmul.f32 %v2661, %v2672
    %v2699 = vmul.f32 %v2662, %v2672
    %v2700 = vmul.f32 %v2663, %v2672
    %v2701 = vmul.f32 %v2664, %v2672
    %v2702 = vmul.f32 %v2665, %v2672
    %v2703 = vmul.f32 %v2666, %v2672
    %v2704 = vmul.f32 %v2667, %v2672
    %v2705 = vld [vmem:[%s1 + $0x1d] sm:$0x1]
    %v2706 = vlaneseq
    %v2707 = vshrl.u32 %v2706, 7
    %v2708 = vsub.s32 0, %v2707
    %v2709 = vrot.slane %v2705, %v2708
    %v2710 = vmul.f32 %v2126, %v2709
    %v2711 = vmul.f32 %v2127, %v2709
    %v2712 = vmul.f32 %v2128, %v2709
    %v2713 = vmul.f32 %v2129, %v2709
    %v2714 = vmul.f32 %v2130, %v2709
    %v2715 = vmul.f32 %v2131, %v2709
    %v2716 = vmul.f32 %v2132, %v2709
    %v2717 = vmul.f32 %v2133, %v2709
    %v2718 = vmul.f32 %v2134, %v2709
    %v2719 = vmul.f32 %v2135, %v2709
    %v2720 = vmul.f32 %v2136, %v2709
    %v2721 = vmul.f32 %v2137, %v2709
    %v2722 = vmul.f32 %v2138, %v2709
    %v2723 = vmul.f32 %v2139, %v2709
    %v2724 = vmul.f32 %v2140, %v2709
    %v2725 = vmul.f32 %v2141, %v2709
    %v2726 = vmul.f32 %v2142, %v2709
    %v2727 = vmul.f32 %v2143, %v2709
    %v2728 = vmul.f32 %v2144, %v2709
    %v2729 = vmul.f32 %v2145, %v2709
    %v2730 = vmul.f32 %v2146, %v2709
    %v2731 = vmul.f32 %v2147, %v2709
    %v2732 = vmul.f32 %v2148, %v2709
    %v2733 = vmul.f32 %v2149, %v2709
    %v2734 = vmul.f32 %v2150, %v2709
    %v2735 = vmul.f32 %v2151, %v2709
    %v2736 = vmul.f32 %v2152, %v2709
    %v2737 = vmul.f32 %v2153, %v2709
    %v2738 = vmul.f32 %v2154, %v2709
    %v2739 = vmul.f32 %v2155, %v2709
    %v2740 = vmul.f32 %v2156, %v2709
    %v2741 = vmul.f32 %v2157, %v2709
    %v2742 = vadd.f32 %v2673, %v2710
    %v2743 = vadd.f32 %v2674, %v2711
    %v2744 = vadd.f32 %v2675, %v2712
    %v2745 = vadd.f32 %v2676, %v2713
    %v2746 = vadd.f32 %v2677, %v2714
    %v2747 = vadd.f32 %v2678, %v2715
    %v2748 = vadd.f32 %v2679, %v2716
    %v2749 = vadd.f32 %v2680, %v2717
    %v2750 = vadd.f32 %v2681, %v2718
    %v2751 = vadd.f32 %v2682, %v2719
    %v2752 = vadd.f32 %v2683, %v2720
    %v2753 = vadd.f32 %v2684, %v2721
    %v2754 = vadd.f32 %v2685, %v2722
    %v2755 = vadd.f32 %v2686, %v2723
    %v2756 = vadd.f32 %v2687, %v2724
    %v2757 = vadd.f32 %v2688, %v2725
    %v2758 = vadd.f32 %v2689, %v2726
    %v2759 = vadd.f32 %v2690, %v2727
    %v2760 = vadd.f32 %v2691, %v2728
    %v2761 = vadd.f32 %v2692, %v2729
    %v2762 = vadd.f32 %v2693, %v2730
    %v2763 = vadd.f32 %v2694, %v2731
    %v2764 = vadd.f32 %v2695, %v2732
    %v2765 = vadd.f32 %v2696, %v2733
    %v2766 = vadd.f32 %v2697, %v2734
    %v2767 = vadd.f32 %v2698, %v2735
    %v2768 = vadd.f32 %v2699, %v2736
    %v2769 = vadd.f32 %v2700, %v2737
    %v2770 = vadd.f32 %v2701, %v2738
    %v2771 = vadd.f32 %v2702, %v2739
    %v2772 = vadd.f32 %v2703, %v2740
    %v2773 = vadd.f32 %v2704, %v2741
    %v2774 = vld [vmem:[%s1 + $0x1e] sm:$0x1]
    %v2775 = vlaneseq
    %v2776 = vshrl.u32 %v2775, 7
    %v2777 = vsub.s32 0, %v2776
    %v2778 = vrot.slane %v2774, %v2777
    %v2779 = vmul.f32 %v2195, %v2778
    %v2780 = vmul.f32 %v2196, %v2778
    %v2781 = vmul.f32 %v2197, %v2778
    %v2782 = vmul.f32 %v2198, %v2778
    %v2783 = vmul.f32 %v2199, %v2778
    %v2784 = vmul.f32 %v2200, %v2778
    %v2785 = vmul.f32 %v2201, %v2778
    %v2786 = vmul.f32 %v2202, %v2778
    %v2787 = vmul.f32 %v2203, %v2778
    %v2788 = vmul.f32 %v2204, %v2778
    %v2789 = vmul.f32 %v2205, %v2778
    %v2790 = vmul.f32 %v2206, %v2778
    %v2791 = vmul.f32 %v2207, %v2778
    %v2792 = vmul.f32 %v2208, %v2778
    %v2793 = vmul.f32 %v2209, %v2778
    %v2794 = vmul.f32 %v2210, %v2778
    %v2795 = vmul.f32 %v2211, %v2778
    %v2796 = vmul.f32 %v2212, %v2778
    %v2797 = vmul.f32 %v2213, %v2778
    %v2798 = vmul.f32 %v2214, %v2778
    %v2799 = vmul.f32 %v2215, %v2778
    %v2800 = vmul.f32 %v2216, %v2778
    %v2801 = vmul.f32 %v2217, %v2778
    %v2802 = vmul.f32 %v2218, %v2778
    %v2803 = vmul.f32 %v2219, %v2778
    %v2804 = vmul.f32 %v2220, %v2778
    %v2805 = vmul.f32 %v2221, %v2778
    %v2806 = vmul.f32 %v2222, %v2778
    %v2807 = vmul.f32 %v2223, %v2778
    %v2808 = vmul.f32 %v2224, %v2778
    %v2809 = vmul.f32 %v2225, %v2778
    %v2810 = vmul.f32 %v2226, %v2778
    %v2811 = vadd.f32 %v2742, %v2779
    %v2812 = vadd.f32 %v2743, %v2780
    %v2813 = vadd.f32 %v2744, %v2781
    %v2814 = vadd.f32 %v2745, %v2782
    %v2815 = vadd.f32 %v2746, %v2783
    %v2816 = vadd.f32 %v2747, %v2784
    %v2817 = vadd.f32 %v2748, %v2785
    %v2818 = vadd.f32 %v2749, %v2786
    %v2819 = vadd.f32 %v2750, %v2787
    %v2820 = vadd.f32 %v2751, %v2788
    %v2821 = vadd.f32 %v2752, %v2789
    %v2822 = vadd.f32 %v2753, %v2790
    %v2823 = vadd.f32 %v2754, %v2791
    %v2824 = vadd.f32 %v2755, %v2792
    %v2825 = vadd.f32 %v2756, %v2793
    %v2826 = vadd.f32 %v2757, %v2794
    %v2827 = vadd.f32 %v2758, %v2795
    %v2828 = vadd.f32 %v2759, %v2796
    %v2829 = vadd.f32 %v2760, %v2797
    %v2830 = vadd.f32 %v2761, %v2798
    %v2831 = vadd.f32 %v2762, %v2799
    %v2832 = vadd.f32 %v2763, %v2800
    %v2833 = vadd.f32 %v2764, %v2801
    %v2834 = vadd.f32 %v2765, %v2802
    %v2835 = vadd.f32 %v2766, %v2803
    %v2836 = vadd.f32 %v2767, %v2804
    %v2837 = vadd.f32 %v2768, %v2805
    %v2838 = vadd.f32 %v2769, %v2806
    %v2839 = vadd.f32 %v2770, %v2807
    %v2840 = vadd.f32 %v2771, %v2808
    %v2841 = vadd.f32 %v2772, %v2809
    %v2842 = vadd.f32 %v2773, %v2810
    %v2843 = vld [vmem:[%s1 + $0x1f] sm:$0x1]
    %v2844 = vlaneseq
    %v2845 = vshrl.u32 %v2844, 7
    %v2846 = vsub.s32 0, %v2845
    %v2847 = vrot.slane %v2843, %v2846
    %v2848 = vmul.f32 %v2296, %v2847
    %v2849 = vmul.f32 %v2297, %v2847
    %v2850 = vmul.f32 %v2298, %v2847
    %v2851 = vmul.f32 %v2299, %v2847
    %v2852 = vmul.f32 %v2300, %v2847
    %v2853 = vmul.f32 %v2301, %v2847
    %v2854 = vmul.f32 %v2302, %v2847
    %v2855 = vmul.f32 %v2303, %v2847
    %v2856 = vmul.f32 %v2304, %v2847
    %v2857 = vmul.f32 %v2305, %v2847
    %v2858 = vmul.f32 %v2306, %v2847
    %v2859 = vmul.f32 %v2307, %v2847
    %v2860 = vmul.f32 %v2308, %v2847
    %v2861 = vmul.f32 %v2309, %v2847
    %v2862 = vmul.f32 %v2310, %v2847
    %v2863 = vmul.f32 %v2311, %v2847
    %v2864 = vmul.f32 %v2312, %v2847
    %v2865 = vmul.f32 %v2313, %v2847
    %v2866 = vmul.f32 %v2314, %v2847
    %v2867 = vmul.f32 %v2315, %v2847
    %v2868 = vmul.f32 %v2316, %v2847
    %v2869 = vmul.f32 %v2317, %v2847
    %v2870 = vmul.f32 %v2318, %v2847
    %v2871 = vmul.f32 %v2319, %v2847
    %v2872 = vmul.f32 %v2320, %v2847
    %v2873 = vmul.f32 %v2321, %v2847
    %v2874 = vmul.f32 %v2322, %v2847
    %v2875 = vmul.f32 %v2323, %v2847
    %v2876 = vmul.f32 %v2324, %v2847
    %v2877 = vmul.f32 %v2325, %v2847
    %v2878 = vmul.f32 %v2326, %v2847
    %v2879 = vmul.f32 %v2327, %v2847
    %v2880 = vadd.f32 %v2811, %v2848
    %v2881 = vadd.f32 %v2812, %v2849
    %v2882 = vadd.f32 %v2813, %v2850
    %v2883 = vadd.f32 %v2814, %v2851
    %v2884 = vadd.f32 %v2815, %v2852
    %v2885 = vadd.f32 %v2816, %v2853
    %v2886 = vadd.f32 %v2817, %v2854
    %v2887 = vadd.f32 %v2818, %v2855
    %v2888 = vadd.f32 %v2819, %v2856
    %v2889 = vadd.f32 %v2820, %v2857
    %v2890 = vadd.f32 %v2821, %v2858
    %v2891 = vadd.f32 %v2822, %v2859
    %v2892 = vadd.f32 %v2823, %v2860
    %v2893 = vadd.f32 %v2824, %v2861
    %v2894 = vadd.f32 %v2825, %v2862
    %v2895 = vadd.f32 %v2826, %v2863
    %v2896 = vadd.f32 %v2827, %v2864
    %v2897 = vadd.f32 %v2828, %v2865
    %v2898 = vadd.f32 %v2829, %v2866
    %v2899 = vadd.f32 %v2830, %v2867
    %v2900 = vadd.f32 %v2831, %v2868
    %v2901 = vadd.f32 %v2832, %v2869
    %v2902 = vadd.f32 %v2833, %v2870
    %v2903 = vadd.f32 %v2834, %v2871
    %v2904 = vadd.f32 %v2835, %v2872
    %v2905 = vadd.f32 %v2836, %v2873
    %v2906 = vadd.f32 %v2837, %v2874
    %v2907 = vadd.f32 %v2838, %v2875
    %v2908 = vadd.f32 %v2839, %v2876
    %v2909 = vadd.f32 %v2840, %v2877
    %v2910 = vadd.f32 %v2841, %v2878
    %v2911 = vadd.f32 %v2842, %v2879
    %v2912 = vld [vmem:[%s1 + $0x20] sm:$0x1]
    %v2913 = vlaneseq
    %v2914 = vshrl.u32 %v2913, 7
    %v2915 = vsub.s32 0, %v2914
    %v2916 = vrot.slane %v2912, %v2915
    %v2917 = vmul.f32 %v2397, %v2916
    %v2918 = vmul.f32 %v2398, %v2916
    %v2919 = vmul.f32 %v2399, %v2916
    %v2920 = vmul.f32 %v2400, %v2916
    %v2921 = vmul.f32 %v2401, %v2916
    %v2922 = vmul.f32 %v2402, %v2916
    %v2923 = vmul.f32 %v2403, %v2916
    %v2924 = vmul.f32 %v2404, %v2916
    %v2925 = vmul.f32 %v2405, %v2916
    %v2926 = vmul.f32 %v2406, %v2916
    %v2927 = vmul.f32 %v2407, %v2916
    %v2928 = vmul.f32 %v2408, %v2916
    %v2929 = vmul.f32 %v2409, %v2916
    %v2930 = vmul.f32 %v2410, %v2916
    %v2931 = vmul.f32 %v2411, %v2916
    %v2932 = vmul.f32 %v2412, %v2916
    %v2933 = vmul.f32 %v2413, %v2916
    %v2934 = vmul.f32 %v2414, %v2916
    %v2935 = vmul.f32 %v2415, %v2916
    %v2936 = vmul.f32 %v2416, %v2916
    %v2937 = vmul.f32 %v2417, %v2916
    %v2938 = vmul.f32 %v2418, %v2916
    %v2939 = vmul.f32 %v2419, %v2916
    %v2940 = vmul.f32 %v2420, %v2916
    %v2941 = vmul.f32 %v2421, %v2916
    %v2942 = vmul.f32 %v2422, %v2916
    %v2943 = vmul.f32 %v2423, %v2916
    %v2944 = vmul.f32 %v2424, %v2916
    %v2945 = vmul.f32 %v2425, %v2916
    %v2946 = vmul.f32 %v2426, %v2916
    %v2947 = vmul.f32 %v2427, %v2916
    %v2948 = vmul.f32 %v2428, %v2916
    %v2949 = vadd.f32 %v2880, %v2917
    %v2950 = vadd.f32 %v2881, %v2918
    %v2951 = vadd.f32 %v2882, %v2919
    %v2952 = vadd.f32 %v2883, %v2920
    %v2953 = vadd.f32 %v2884, %v2921
    %v2954 = vadd.f32 %v2885, %v2922
    %v2955 = vadd.f32 %v2886, %v2923
    %v2956 = vadd.f32 %v2887, %v2924
    %v2957 = vadd.f32 %v2888, %v2925
    %v2958 = vadd.f32 %v2889, %v2926
    %v2959 = vadd.f32 %v2890, %v2927
    %v2960 = vadd.f32 %v2891, %v2928
    %v2961 = vadd.f32 %v2892, %v2929
    %v2962 = vadd.f32 %v2893, %v2930
    %v2963 = vadd.f32 %v2894, %v2931
    %v2964 = vadd.f32 %v2895, %v2932
    %v2965 = vadd.f32 %v2896, %v2933
    %v2966 = vadd.f32 %v2897, %v2934
    %v2967 = vadd.f32 %v2898, %v2935
    %v2968 = vadd.f32 %v2899, %v2936
    %v2969 = vadd.f32 %v2900, %v2937
    %v2970 = vadd.f32 %v2901, %v2938
    %v2971 = vadd.f32 %v2902, %v2939
    %v2972 = vadd.f32 %v2903, %v2940
    %v2973 = vadd.f32 %v2904, %v2941
    %v2974 = vadd.f32 %v2905, %v2942
    %v2975 = vadd.f32 %v2906, %v2943
    %v2976 = vadd.f32 %v2907, %v2944
    %v2977 = vadd.f32 %v2908, %v2945
    %v2978 = vadd.f32 %v2909, %v2946
    %v2979 = vadd.f32 %v2910, %v2947
    %v2980 = vadd.f32 %v2911, %v2948
    %v2981 = vld [vmem:[%s1 + $0x21] sm:$0x1]
    %v2982 = vlaneseq
    %v2983 = vshrl.u32 %v2982, 7
    %v2984 = vsub.s32 0, %v2983
    %v2985 = vrot.slane %v2981, %v2984
    %v2986 = vmul.f32 %v2498, %v2985
    %v2987 = vmul.f32 %v2499, %v2985
    %v2988 = vmul.f32 %v2500, %v2985
    %v2989 = vmul.f32 %v2501, %v2985
    %v2990 = vmul.f32 %v2502, %v2985
    %v2991 = vmul.f32 %v2503, %v2985
    %v2992 = vmul.f32 %v2504, %v2985
    %v2993 = vmul.f32 %v2505, %v2985
    %v2994 = vmul.f32 %v2506, %v2985
    %v2995 = vmul.f32 %v2507, %v2985
    %v2996 = vmul.f32 %v2508, %v2985
    %v2997 = vmul.f32 %v2509, %v2985
    %v2998 = vmul.f32 %v2510, %v2985
    %v2999 = vmul.f32 %v2511, %v2985
    %v3000 = vmul.f32 %v2512, %v2985
    %v3001 = vmul.f32 %v2513, %v2985
    %v3002 = vmul.f32 %v2514, %v2985
    %v3003 = vmul.f32 %v2515, %v2985
    %v3004 = vmul.f32 %v2516, %v2985
    %v3005 = vmul.f32 %v2517, %v2985
    %v3006 = vmul.f32 %v2518, %v2985
    %v3007 = vmul.f32 %v2519, %v2985
    %v3008 = vmul.f32 %v2520, %v2985
    %v3009 = vmul.f32 %v2521, %v2985
    %v3010 = vmul.f32 %v2522, %v2985
    %v3011 = vmul.f32 %v2523, %v2985
    %v3012 = vmul.f32 %v2524, %v2985
    %v3013 = vmul.f32 %v2525, %v2985
    %v3014 = vmul.f32 %v2526, %v2985
    %v3015 = vmul.f32 %v2527, %v2985
    %v3016 = vmul.f32 %v2528, %v2985
    %v3017 = vmul.f32 %v2529, %v2985
    %v3018 = vadd.f32 %v2949, %v2986
    %v3019 = vadd.f32 %v2950, %v2987
    %v3020 = vadd.f32 %v2951, %v2988
    %v3021 = vadd.f32 %v2952, %v2989
    %v3022 = vadd.f32 %v2953, %v2990
    %v3023 = vadd.f32 %v2954, %v2991
    %v3024 = vadd.f32 %v2955, %v2992
    %v3025 = vadd.f32 %v2956, %v2993
    %v3026 = vadd.f32 %v2957, %v2994
    %v3027 = vadd.f32 %v2958, %v2995
    %v3028 = vadd.f32 %v2959, %v2996
    %v3029 = vadd.f32 %v2960, %v2997
    %v3030 = vadd.f32 %v2961, %v2998
    %v3031 = vadd.f32 %v2962, %v2999
    %v3032 = vadd.f32 %v2963, %v3000
    %v3033 = vadd.f32 %v2964, %v3001
    %v3034 = vadd.f32 %v2965, %v3002
    %v3035 = vadd.f32 %v2966, %v3003
    %v3036 = vadd.f32 %v2967, %v3004
    %v3037 = vadd.f32 %v2968, %v3005
    %v3038 = vadd.f32 %v2969, %v3006
    %v3039 = vadd.f32 %v2970, %v3007
    %v3040 = vadd.f32 %v2971, %v3008
    %v3041 = vadd.f32 %v2972, %v3009
    %v3042 = vadd.f32 %v2973, %v3010
    %v3043 = vadd.f32 %v2974, %v3011
    %v3044 = vadd.f32 %v2975, %v3012
    %v3045 = vadd.f32 %v2976, %v3013
    %v3046 = vadd.f32 %v2977, %v3014
    %v3047 = vadd.f32 %v2978, %v3015
    %v3048 = vadd.f32 %v2979, %v3016
    %v3049 = vadd.f32 %v2980, %v3017
    %v3050 = vld [vmem:[%s101 + $0xb] sm:$0xff]
    %v3051 = vld [vmem:[%s101 + $0x13] sm:$0xff]
    %v3052 = vld [vmem:[%s101 + $0x2b] sm:$0xff]
    %v3053 = vld [vmem:[%s101 + $0x33] sm:$0xff]
    %v3054 = vld [vmem:[%s101 + $0x4b] sm:$0xff]
    %v3055 = vld [vmem:[%s101 + $0x53] sm:$0xff]
    %v3056 = vld [vmem:[%s101 + $0x6b] sm:$0xff]
    %v3057 = vld [vmem:[%s101 + $0x73] sm:$0xff]
    %v3058 = vld [vmem:[%s101 + $0x8b] sm:$0xff]
    %v3059 = vld [vmem:[%s101 + $0x93] sm:$0xff]
    %v3060 = vld [vmem:[%s101 + $0xab] sm:$0xff]
    %v3061 = vld [vmem:[%s101 + $0xb3] sm:$0xff]
    %v3062 = vld [vmem:[%s101 + $0xcb] sm:$0xff]
    %v3063 = vld [vmem:[%s101 + $0xd3] sm:$0xff]
    %v3064 = vld [vmem:[%s101 + $0xeb] sm:$0xff]
    %v3065 = vld [vmem:[%s101 + $0xf3] sm:$0xff]
    %v3066 = vld [vmem:[%s101 + $0x10b] sm:$0xff]
    %v3067 = vld [vmem:[%s101 + $0x113] sm:$0xff]
    %v3068 = vld [vmem:[%s101 + $0x12b] sm:$0xff]
    %v3069 = vld [vmem:[%s101 + $0x133] sm:$0xff]
    %v3070 = vld [vmem:[%s101 + $0x14b] sm:$0xff]
    %v3071 = vld [vmem:[%s101 + $0x153] sm:$0xff]
    %v3072 = vld [vmem:[%s101 + $0x16b] sm:$0xff]
    %v3073 = vld [vmem:[%s101 + $0x173] sm:$0xff]
    %v3074 = vld [vmem:[%s101 + $0x18b] sm:$0xff]
    %v3075 = vld [vmem:[%s101 + $0x193] sm:$0xff]
    %v3076 = vld [vmem:[%s101 + $0x1ab] sm:$0xff]
    %v3077 = vld [vmem:[%s101 + $0x1b3] sm:$0xff]
    %v3078 = vld [vmem:[%s101 + $0x1cb] sm:$0xff]
    %v3079 = vld [vmem:[%s101 + $0x1d3] sm:$0xff]
    %v3080 = vld [vmem:[%s101 + $0x1eb] sm:$0xff]
    %v3081 = vld [vmem:[%s101 + $0x1f3] sm:$0xff]
    %v3082 = vld [vmem:[%s1 + $0x22] sm:$0x1]
    %v3083 = vlaneseq
    %v3084 = vshrl.u32 %v3083, 7
    %v3085 = vsub.s32 0, %v3084
    %v3086 = vrot.slane %v3082, %v3085
    %v3087 = vmul.f32 %v3050, %v3086
    %v3088 = vmul.f32 %v3051, %v3086
    %v3089 = vmul.f32 %v3052, %v3086
    %v3090 = vmul.f32 %v3053, %v3086
    %v3091 = vmul.f32 %v3054, %v3086
    %v3092 = vmul.f32 %v3055, %v3086
    %v3093 = vmul.f32 %v3056, %v3086
    %v3094 = vmul.f32 %v3057, %v3086
    %v3095 = vmul.f32 %v3058, %v3086
    %v3096 = vmul.f32 %v3059, %v3086
    %v3097 = vmul.f32 %v3060, %v3086
    %v3098 = vmul.f32 %v3061, %v3086
    %v3099 = vmul.f32 %v3062, %v3086
    %v3100 = vmul.f32 %v3063, %v3086
    %v3101 = vmul.f32 %v3064, %v3086
    %v3102 = vmul.f32 %v3065, %v3086
    %v3103 = vmul.f32 %v3066, %v3086
    %v3104 = vmul.f32 %v3067, %v3086
    %v3105 = vmul.f32 %v3068, %v3086
    %v3106 = vmul.f32 %v3069, %v3086
    %v3107 = vmul.f32 %v3070, %v3086
    %v3108 = vmul.f32 %v3071, %v3086
    %v3109 = vmul.f32 %v3072, %v3086
    %v3110 = vmul.f32 %v3073, %v3086
    %v3111 = vmul.f32 %v3074, %v3086
    %v3112 = vmul.f32 %v3075, %v3086
    %v3113 = vmul.f32 %v3076, %v3086
    %v3114 = vmul.f32 %v3077, %v3086
    %v3115 = vmul.f32 %v3078, %v3086
    %v3116 = vmul.f32 %v3079, %v3086
    %v3117 = vmul.f32 %v3080, %v3086
    %v3118 = vmul.f32 %v3081, %v3086
    %v3119 = vadd.f32 %v3018, %v3087
    %v3120 = vadd.f32 %v3019, %v3088
    %v3121 = vadd.f32 %v3020, %v3089
    %v3122 = vadd.f32 %v3021, %v3090
    %v3123 = vadd.f32 %v3022, %v3091
    %v3124 = vadd.f32 %v3023, %v3092
    %v3125 = vadd.f32 %v3024, %v3093
    %v3126 = vadd.f32 %v3025, %v3094
    %v3127 = vadd.f32 %v3026, %v3095
    %v3128 = vadd.f32 %v3027, %v3096
    %v3129 = vadd.f32 %v3028, %v3097
    %v3130 = vadd.f32 %v3029, %v3098
    %v3131 = vadd.f32 %v3030, %v3099
    %v3132 = vadd.f32 %v3031, %v3100
    %v3133 = vadd.f32 %v3032, %v3101
    %v3134 = vadd.f32 %v3033, %v3102
    %v3135 = vadd.f32 %v3034, %v3103
    %v3136 = vadd.f32 %v3035, %v3104
    %v3137 = vadd.f32 %v3036, %v3105
    %v3138 = vadd.f32 %v3037, %v3106
    %v3139 = vadd.f32 %v3038, %v3107
    %v3140 = vadd.f32 %v3039, %v3108
    %v3141 = vadd.f32 %v3040, %v3109
    %v3142 = vadd.f32 %v3041, %v3110
    %v3143 = vadd.f32 %v3042, %v3111
    %v3144 = vadd.f32 %v3043, %v3112
    %v3145 = vadd.f32 %v3044, %v3113
    %v3146 = vadd.f32 %v3045, %v3114
    %v3147 = vadd.f32 %v3046, %v3115
    %v3148 = vadd.f32 %v3047, %v3116
    %v3149 = vadd.f32 %v3048, %v3117
    %v3150 = vadd.f32 %v3049, %v3118
    %v3151 = vld [vmem:[%s2 + $0x4] sm:$0x1]
    %v3152 = vlaneseq
    %v3153 = vshrl.u32 %v3152, 7
    %v3154 = vsub.s32 0, %v3153
    %v3155 = vrot.slane %v3151, %v3154
    %v3156 = vadd.f32 %v3119, %v3155
    %v3157 = vadd.f32 %v3120, %v3155
    %v3158 = vadd.f32 %v3121, %v3155
    %v3159 = vadd.f32 %v3122, %v3155
    %v3160 = vadd.f32 %v3123, %v3155
    %v3161 = vadd.f32 %v3124, %v3155
    %v3162 = vadd.f32 %v3125, %v3155
    %v3163 = vadd.f32 %v3126, %v3155
    %v3164 = vadd.f32 %v3127, %v3155
    %v3165 = vadd.f32 %v3128, %v3155
    %v3166 = vadd.f32 %v3129, %v3155
    %v3167 = vadd.f32 %v3130, %v3155
    %v3168 = vadd.f32 %v3131, %v3155
    %v3169 = vadd.f32 %v3132, %v3155
    %v3170 = vadd.f32 %v3133, %v3155
    %v3171 = vadd.f32 %v3134, %v3155
    %v3172 = vadd.f32 %v3135, %v3155
    %v3173 = vadd.f32 %v3136, %v3155
    %v3174 = vadd.f32 %v3137, %v3155
    %v3175 = vadd.f32 %v3138, %v3155
    %v3176 = vadd.f32 %v3139, %v3155
    %v3177 = vadd.f32 %v3140, %v3155
    %v3178 = vadd.f32 %v3141, %v3155
    %v3179 = vadd.f32 %v3142, %v3155
    %v3180 = vadd.f32 %v3143, %v3155
    %v3181 = vadd.f32 %v3144, %v3155
    %v3182 = vadd.f32 %v3145, %v3155
    %v3183 = vadd.f32 %v3146, %v3155
    %v3184 = vadd.f32 %v3147, %v3155
    %v3185 = vadd.f32 %v3148, %v3155
    %v3186 = vadd.f32 %v3149, %v3155
    %v3187 = vadd.f32 %v3150, %v3155
    %v3188 = vld [vmem:[%s101 + $0x3] sm:$0xff]
    %v3189 = vld [vmem:[%s101 + $0x23] sm:$0xff]
    %v3190 = vld [vmem:[%s101 + $0x43] sm:$0xff]
    %v3191 = vld [vmem:[%s101 + $0x63] sm:$0xff]
    %v3192 = vld [vmem:[%s101 + $0x83] sm:$0xff]
    %v3193 = vld [vmem:[%s101 + $0xa3] sm:$0xff]
    %v3194 = vld [vmem:[%s101 + $0xc3] sm:$0xff]
    %v3195 = vld [vmem:[%s101 + $0xe3] sm:$0xff]
    %v3196 = vld [vmem:[%s101 + $0x103] sm:$0xff]
    %v3197 = vld [vmem:[%s101 + $0x123] sm:$0xff]
    %v3198 = vld [vmem:[%s101 + $0x143] sm:$0xff]
    %v3199 = vld [vmem:[%s101 + $0x163] sm:$0xff]
    %v3200 = vld [vmem:[%s101 + $0x183] sm:$0xff]
    %v3201 = vld [vmem:[%s101 + $0x1a3] sm:$0xff]
    %v3202 = vld [vmem:[%s101 + $0x1c3] sm:$0xff]
    %v3203 = vld [vmem:[%s101 + $0x1e3] sm:$0xff]
    %v3204 = vld [vmem:[%s1 + $0x2a] sm:$0x1]
    %v3205 = vlaneseq
    %v3206 = vshrl.u32 %v3205, 7
    %v3207 = vsub.s32 0, %v3206
    %v3208 = vrot.slane %v3204, %v3207
    %v3209 = vmul.f32 %v3188, %v3208
    %v3210 = vmul.f32 %v3050, %v3208
    %v3211 = vmul.f32 %v3189, %v3208
    %v3212 = vmul.f32 %v3052, %v3208
    %v3213 = vmul.f32 %v3190, %v3208
    %v3214 = vmul.f32 %v3054, %v3208
    %v3215 = vmul.f32 %v3191, %v3208
    %v3216 = vmul.f32 %v3056, %v3208
    %v3217 = vmul.f32 %v3192, %v3208
    %v3218 = vmul.f32 %v3058, %v3208
    %v3219 = vmul.f32 %v3193, %v3208
    %v3220 = vmul.f32 %v3060, %v3208
    %v3221 = vmul.f32 %v3194, %v3208
    %v3222 = vmul.f32 %v3062, %v3208
    %v3223 = vmul.f32 %v3195, %v3208
    %v3224 = vmul.f32 %v3064, %v3208
    %v3225 = vmul.f32 %v3196, %v3208
    %v3226 = vmul.f32 %v3066, %v3208
    %v3227 = vmul.f32 %v3197, %v3208
    %v3228 = vmul.f32 %v3068, %v3208
    %v3229 = vmul.f32 %v3198, %v3208
    %v3230 = vmul.f32 %v3070, %v3208
    %v3231 = vmul.f32 %v3199, %v3208
    %v3232 = vmul.f32 %v3072, %v3208
    %v3233 = vmul.f32 %v3200, %v3208
    %v3234 = vmul.f32 %v3074, %v3208
    %v3235 = vmul.f32 %v3201, %v3208
    %v3236 = vmul.f32 %v3076, %v3208
    %v3237 = vmul.f32 %v3202, %v3208
    %v3238 = vmul.f32 %v3078, %v3208
    %v3239 = vmul.f32 %v3203, %v3208
    %v3240 = vmul.f32 %v3080, %v3208
    %v3241 = vld [vmem:[%s101 + $0x4] sm:$0xff]
    %v3242 = vld [vmem:[%s101 + $0xc] sm:$0xff]
    %v3243 = vld [vmem:[%s101 + $0x24] sm:$0xff]
    %v3244 = vld [vmem:[%s101 + $0x2c] sm:$0xff]
    %v3245 = vld [vmem:[%s101 + $0x44] sm:$0xff]
    %v3246 = vld [vmem:[%s101 + $0x4c] sm:$0xff]
    %v3247 = vld [vmem:[%s101 + $0x64] sm:$0xff]
    %v3248 = vld [vmem:[%s101 + $0x6c] sm:$0xff]
    %v3249 = vld [vmem:[%s101 + $0x84] sm:$0xff]
    %v3250 = vld [vmem:[%s101 + $0x8c] sm:$0xff]
    %v3251 = vld [vmem:[%s101 + $0xa4] sm:$0xff]
    %v3252 = vld [vmem:[%s101 + $0xac] sm:$0xff]
    %v3253 = vld [vmem:[%s101 + $0xc4] sm:$0xff]
    %v3254 = vld [vmem:[%s101 + $0xcc] sm:$0xff]
    %v3255 = vld [vmem:[%s101 + $0xe4] sm:$0xff]
    %v3256 = vld [vmem:[%s101 + $0xec] sm:$0xff]
    %v3257 = vld [vmem:[%s101 + $0x104] sm:$0xff]
    %v3258 = vld [vmem:[%s101 + $0x10c] sm:$0xff]
    %v3259 = vld [vmem:[%s101 + $0x124] sm:$0xff]
    %v3260 = vld [vmem:[%s101 + $0x12c] sm:$0xff]
    %v3261 = vld [vmem:[%s101 + $0x144] sm:$0xff]
    %v3262 = vld [vmem:[%s101 + $0x14c] sm:$0xff]
    %v3263 = vld [vmem:[%s101 + $0x164] sm:$0xff]
    %v3264 = vld [vmem:[%s101 + $0x16c] sm:$0xff]
    %v3265 = vld [vmem:[%s101 + $0x184] sm:$0xff]
    %v3266 = vld [vmem:[%s101 + $0x18c] sm:$0xff]
    %v3267 = vld [vmem:[%s101 + $0x1a4] sm:$0xff]
    %v3268 = vld [vmem:[%s101 + $0x1ac] sm:$0xff]
    %v3269 = vld [vmem:[%s101 + $0x1c4] sm:$0xff]
    %v3270 = vld [vmem:[%s101 + $0x1cc] sm:$0xff]
    %v3271 = vld [vmem:[%s101 + $0x1e4] sm:$0xff]
    %v3272 = vld [vmem:[%s101 + $0x1ec] sm:$0xff]
    %v3273 = vld [vmem:[%s1 + $0x2b] sm:$0x1]
    %v3274 = vlaneseq
    %v3275 = vshrl.u32 %v3274, 7
    %v3276 = vsub.s32 0, %v3275
    %v3277 = vrot.slane %v3273, %v3276
    %v3278 = vmul.f32 %v3241, %v3277
    %v3279 = vmul.f32 %v3242, %v3277
    %v3280 = vmul.f32 %v3243, %v3277
    %v3281 = vmul.f32 %v3244, %v3277
    %v3282 = vmul.f32 %v3245, %v3277
    %v3283 = vmul.f32 %v3246, %v3277
    %v3284 = vmul.f32 %v3247, %v3277
    %v3285 = vmul.f32 %v3248, %v3277
    %v3286 = vmul.f32 %v3249, %v3277
    %v3287 = vmul.f32 %v3250, %v3277
    %v3288 = vmul.f32 %v3251, %v3277
    %v3289 = vmul.f32 %v3252, %v3277
    %v3290 = vmul.f32 %v3253, %v3277
    %v3291 = vmul.f32 %v3254, %v3277
    %v3292 = vmul.f32 %v3255, %v3277
    %v3293 = vmul.f32 %v3256, %v3277
    %v3294 = vmul.f32 %v3257, %v3277
    %v3295 = vmul.f32 %v3258, %v3277
    %v3296 = vmul.f32 %v3259, %v3277
    %v3297 = vmul.f32 %v3260, %v3277
    %v3298 = vmul.f32 %v3261, %v3277
    %v3299 = vmul.f32 %v3262, %v3277
    %v3300 = vmul.f32 %v3263, %v3277
    %v3301 = vmul.f32 %v3264, %v3277
    %v3302 = vmul.f32 %v3265, %v3277
    %v3303 = vmul.f32 %v3266, %v3277
    %v3304 = vmul.f32 %v3267, %v3277
    %v3305 = vmul.f32 %v3268, %v3277
    %v3306 = vmul.f32 %v3269, %v3277
    %v3307 = vmul.f32 %v3270, %v3277
    %v3308 = vmul.f32 %v3271, %v3277
    %v3309 = vmul.f32 %v3272, %v3277
    %v3310 = vadd.f32 %v3209, %v3278
    %v3311 = vadd.f32 %v3210, %v3279
    %v3312 = vadd.f32 %v3211, %v3280
    %v3313 = vadd.f32 %v3212, %v3281
    %v3314 = vadd.f32 %v3213, %v3282
    %v3315 = vadd.f32 %v3214, %v3283
    %v3316 = vadd.f32 %v3215, %v3284
    %v3317 = vadd.f32 %v3216, %v3285
    %v3318 = vadd.f32 %v3217, %v3286
    %v3319 = vadd.f32 %v3218, %v3287
    %v3320 = vadd.f32 %v3219, %v3288
    %v3321 = vadd.f32 %v3220, %v3289
    %v3322 = vadd.f32 %v3221, %v3290
    %v3323 = vadd.f32 %v3222, %v3291
    %v3324 = vadd.f32 %v3223, %v3292
    %v3325 = vadd.f32 %v3224, %v3293
    %v3326 = vadd.f32 %v3225, %v3294
    %v3327 = vadd.f32 %v3226, %v3295
    %v3328 = vadd.f32 %v3227, %v3296
    %v3329 = vadd.f32 %v3228, %v3297
    %v3330 = vadd.f32 %v3229, %v3298
    %v3331 = vadd.f32 %v3230, %v3299
    %v3332 = vadd.f32 %v3231, %v3300
    %v3333 = vadd.f32 %v3232, %v3301
    %v3334 = vadd.f32 %v3233, %v3302
    %v3335 = vadd.f32 %v3234, %v3303
    %v3336 = vadd.f32 %v3235, %v3304
    %v3337 = vadd.f32 %v3236, %v3305
    %v3338 = vadd.f32 %v3237, %v3306
    %v3339 = vadd.f32 %v3238, %v3307
    %v3340 = vadd.f32 %v3239, %v3308
    %v3341 = vadd.f32 %v3240, %v3309
    %v3342 = vld [vmem:[%s1 + $0x2c] sm:$0x1]
    %v3343 = vlaneseq
    %v3344 = vshrl.u32 %v3343, 7
    %v3345 = vsub.s32 0, %v3344
    %v3346 = vrot.slane %v3342, %v3345
    %v3347 = vmul.f32 %v2636, %v3346
    %v3348 = vmul.f32 %v2637, %v3346
    %v3349 = vmul.f32 %v2638, %v3346
    %v3350 = vmul.f32 %v2639, %v3346
    %v3351 = vmul.f32 %v2640, %v3346
    %v3352 = vmul.f32 %v2641, %v3346
    %v3353 = vmul.f32 %v2642, %v3346
    %v3354 = vmul.f32 %v2643, %v3346
    %v3355 = vmul.f32 %v2644, %v3346
    %v3356 = vmul.f32 %v2645, %v3346
    %v3357 = vmul.f32 %v2646, %v3346
    %v3358 = vmul.f32 %v2647, %v3346
    %v3359 = vmul.f32 %v2648, %v3346
    %v3360 = vmul.f32 %v2649, %v3346
    %v3361 = vmul.f32 %v2650, %v3346
    %v3362 = vmul.f32 %v2651, %v3346
    %v3363 = vmul.f32 %v2652, %v3346
    %v3364 = vmul.f32 %v2653, %v3346
    %v3365 = vmul.f32 %v2654, %v3346
    %v3366 = vmul.f32 %v2655, %v3346
    %v3367 = vmul.f32 %v2656, %v3346
    %v3368 = vmul.f32 %v2657, %v3346
    %v3369 = vmul.f32 %v2658, %v3346
    %v3370 = vmul.f32 %v2659, %v3346
    %v3371 = vmul.f32 %v2660, %v3346
    %v3372 = vmul.f32 %v2661, %v3346
    %v3373 = vmul.f32 %v2662, %v3346
    %v3374 = vmul.f32 %v2663, %v3346
    %v3375 = vmul.f32 %v2664, %v3346
    %v3376 = vmul.f32 %v2665, %v3346
    %v3377 = vmul.f32 %v2666, %v3346
    %v3378 = vmul.f32 %v2667, %v3346
    %v3379 = vadd.f32 %v3310, %v3347
    %v3380 = vadd.f32 %v3311, %v3348
    %v3381 = vadd.f32 %v3312, %v3349
    %v3382 = vadd.f32 %v3313, %v3350
    %v3383 = vadd.f32 %v3314, %v3351
    %v3384 = vadd.f32 %v3315, %v3352
    %v3385 = vadd.f32 %v3316, %v3353
    %v3386 = vadd.f32 %v3317, %v3354
    %v3387 = vadd.f32 %v3318, %v3355
    %v3388 = vadd.f32 %v3319, %v3356
    %v3389 = vadd.f32 %v3320, %v3357
    %v3390 = vadd.f32 %v3321, %v3358
    %v3391 = vadd.f32 %v3322, %v3359
    %v3392 = vadd.f32 %v3323, %v3360
    %v3393 = vadd.f32 %v3324, %v3361
    %v3394 = vadd.f32 %v3325, %v3362
    %v3395 = vadd.f32 %v3326, %v3363
    %v3396 = vadd.f32 %v3327, %v3364
    %v3397 = vadd.f32 %v3328, %v3365
    %v3398 = vadd.f32 %v3329, %v3366
    %v3399 = vadd.f32 %v3330, %v3367
    %v3400 = vadd.f32 %v3331, %v3368
    %v3401 = vadd.f32 %v3332, %v3369
    %v3402 = vadd.f32 %v3333, %v3370
    %v3403 = vadd.f32 %v3334, %v3371
    %v3404 = vadd.f32 %v3335, %v3372
    %v3405 = vadd.f32 %v3336, %v3373
    %v3406 = vadd.f32 %v3337, %v3374
    %v3407 = vadd.f32 %v3338, %v3375
    %v3408 = vadd.f32 %v3339, %v3376
    %v3409 = vadd.f32 %v3340, %v3377
    %v3410 = vadd.f32 %v3341, %v3378
    %v3411 = vld [vmem:[%s1 + $0x2d] sm:$0x1]
    %v3412 = vlaneseq
    %v3413 = vshrl.u32 %v3412, 7
    %v3414 = vsub.s32 0, %v3413
    %v3415 = vrot.slane %v3411, %v3414
    %v3416 = vmul.f32 %v2126, %v3415
    %v3417 = vmul.f32 %v2127, %v3415
    %v3418 = vmul.f32 %v2128, %v3415
    %v3419 = vmul.f32 %v2129, %v3415
    %v3420 = vmul.f32 %v2130, %v3415
    %v3421 = vmul.f32 %v2131, %v3415
    %v3422 = vmul.f32 %v2132, %v3415
    %v3423 = vmul.f32 %v2133, %v3415
    %v3424 = vmul.f32 %v2134, %v3415
    %v3425 = vmul.f32 %v2135, %v3415
    %v3426 = vmul.f32 %v2136, %v3415
    %v3427 = vmul.f32 %v2137, %v3415
    %v3428 = vmul.f32 %v2138, %v3415
    %v3429 = vmul.f32 %v2139, %v3415
    %v3430 = vmul.f32 %v2140, %v3415
    %v3431 = vmul.f32 %v2141, %v3415
    %v3432 = vmul.f32 %v2142, %v3415
    %v3433 = vmul.f32 %v2143, %v3415
    %v3434 = vmul.f32 %v2144, %v3415
    %v3435 = vmul.f32 %v2145, %v3415
    %v3436 = vmul.f32 %v2146, %v3415
    %v3437 = vmul.f32 %v2147, %v3415
    %v3438 = vmul.f32 %v2148, %v3415
    %v3439 = vmul.f32 %v2149, %v3415
    %v3440 = vmul.f32 %v2150, %v3415
    %v3441 = vmul.f32 %v2151, %v3415
    %v3442 = vmul.f32 %v2152, %v3415
    %v3443 = vmul.f32 %v2153, %v3415
    %v3444 = vmul.f32 %v2154, %v3415
    %v3445 = vmul.f32 %v2155, %v3415
    %v3446 = vmul.f32 %v2156, %v3415
    %v3447 = vmul.f32 %v2157, %v3415
    %v3448 = vadd.f32 %v3379, %v3416
    %v3449 = vadd.f32 %v3380, %v3417
    %v3450 = vadd.f32 %v3381, %v3418
    %v3451 = vadd.f32 %v3382, %v3419
    %v3452 = vadd.f32 %v3383, %v3420
    %v3453 = vadd.f32 %v3384, %v3421
    %v3454 = vadd.f32 %v3385, %v3422
    %v3455 = vadd.f32 %v3386, %v3423
    %v3456 = vadd.f32 %v3387, %v3424
    %v3457 = vadd.f32 %v3388, %v3425
    %v3458 = vadd.f32 %v3389, %v3426
    %v3459 = vadd.f32 %v3390, %v3427
    %v3460 = vadd.f32 %v3391, %v3428
    %v3461 = vadd.f32 %v3392, %v3429
    %v3462 = vadd.f32 %v3393, %v3430
    %v3463 = vadd.f32 %v3394, %v3431
    %v3464 = vadd.f32 %v3395, %v3432
    %v3465 = vadd.f32 %v3396, %v3433
    %v3466 = vadd.f32 %v3397, %v3434
    %v3467 = vadd.f32 %v3398, %v3435
    %v3468 = vadd.f32 %v3399, %v3436
    %v3469 = vadd.f32 %v3400, %v3437
    %v3470 = vadd.f32 %v3401, %v3438
    %v3471 = vadd.f32 %v3402, %v3439
    %v3472 = vadd.f32 %v3403, %v3440
    %v3473 = vadd.f32 %v3404, %v3441
    %v3474 = vadd.f32 %v3405, %v3442
    %v3475 = vadd.f32 %v3406, %v3443
    %v3476 = vadd.f32 %v3407, %v3444
    %v3477 = vadd.f32 %v3408, %v3445
    %v3478 = vadd.f32 %v3409, %v3446
    %v3479 = vadd.f32 %v3410, %v3447
    %v3480 = vld [vmem:[%s1 + $0x2e] sm:$0x1]
    %v3481 = vlaneseq
    %v3482 = vshrl.u32 %v3481, 7
    %v3483 = vsub.s32 0, %v3482
    %v3484 = vrot.slane %v3480, %v3483
    %v3485 = vmul.f32 %v2195, %v3484
    %v3486 = vmul.f32 %v2196, %v3484
    %v3487 = vmul.f32 %v2197, %v3484
    %v3488 = vmul.f32 %v2198, %v3484
    %v3489 = vmul.f32 %v2199, %v3484
    %v3490 = vmul.f32 %v2200, %v3484
    %v3491 = vmul.f32 %v2201, %v3484
    %v3492 = vmul.f32 %v2202, %v3484
    %v3493 = vmul.f32 %v2203, %v3484
    %v3494 = vmul.f32 %v2204, %v3484
    %v3495 = vmul.f32 %v2205, %v3484
    %v3496 = vmul.f32 %v2206, %v3484
    %v3497 = vmul.f32 %v2207, %v3484
    %v3498 = vmul.f32 %v2208, %v3484
    %v3499 = vmul.f32 %v2209, %v3484
    %v3500 = vmul.f32 %v2210, %v3484
    %v3501 = vmul.f32 %v2211, %v3484
    %v3502 = vmul.f32 %v2212, %v3484
    %v3503 = vmul.f32 %v2213, %v3484
    %v3504 = vmul.f32 %v2214, %v3484
    %v3505 = vmul.f32 %v2215, %v3484
    %v3506 = vmul.f32 %v2216, %v3484
    %v3507 = vmul.f32 %v2217, %v3484
    %v3508 = vmul.f32 %v2218, %v3484
    %v3509 = vmul.f32 %v2219, %v3484
    %v3510 = vmul.f32 %v2220, %v3484
    %v3511 = vmul.f32 %v2221, %v3484
    %v3512 = vmul.f32 %v2222, %v3484
    %v3513 = vmul.f32 %v2223, %v3484
    %v3514 = vmul.f32 %v2224, %v3484
    %v3515 = vmul.f32 %v2225, %v3484
    %v3516 = vmul.f32 %v2226, %v3484
    %v3517 = vadd.f32 %v3448, %v3485
    %v3518 = vadd.f32 %v3449, %v3486
    %v3519 = vadd.f32 %v3450, %v3487
    %v3520 = vadd.f32 %v3451, %v3488
    %v3521 = vadd.f32 %v3452, %v3489
    %v3522 = vadd.f32 %v3453, %v3490
    %v3523 = vadd.f32 %v3454, %v3491
    %v3524 = vadd.f32 %v3455, %v3492
    %v3525 = vadd.f32 %v3456, %v3493
    %v3526 = vadd.f32 %v3457, %v3494
    %v3527 = vadd.f32 %v3458, %v3495
    %v3528 = vadd.f32 %v3459, %v3496
    %v3529 = vadd.f32 %v3460, %v3497
    %v3530 = vadd.f32 %v3461, %v3498
    %v3531 = vadd.f32 %v3462, %v3499
    %v3532 = vadd.f32 %v3463, %v3500
    %v3533 = vadd.f32 %v3464, %v3501
    %v3534 = vadd.f32 %v3465, %v3502
    %v3535 = vadd.f32 %v3466, %v3503
    %v3536 = vadd.f32 %v3467, %v3504
    %v3537 = vadd.f32 %v3468, %v3505
    %v3538 = vadd.f32 %v3469, %v3506
    %v3539 = vadd.f32 %v3470, %v3507
    %v3540 = vadd.f32 %v3471, %v3508
    %v3541 = vadd.f32 %v3472, %v3509
    %v3542 = vadd.f32 %v3473, %v3510
    %v3543 = vadd.f32 %v3474, %v3511
    %v3544 = vadd.f32 %v3475, %v3512
    %v3545 = vadd.f32 %v3476, %v3513
    %v3546 = vadd.f32 %v3477, %v3514
    %v3547 = vadd.f32 %v3478, %v3515
    %v3548 = vadd.f32 %v3479, %v3516
    %v3549 = vld [vmem:[%s1 + $0x2f] sm:$0x1]
    %v3550 = vlaneseq
    %v3551 = vshrl.u32 %v3550, 7
    %v3552 = vsub.s32 0, %v3551
    %v3553 = vrot.slane %v3549, %v3552
    %v3554 = vmul.f32 %v2296, %v3553
    %v3555 = vmul.f32 %v2297, %v3553
    %v3556 = vmul.f32 %v2298, %v3553
    %v3557 = vmul.f32 %v2299, %v3553
    %v3558 = vmul.f32 %v2300, %v3553
    %v3559 = vmul.f32 %v2301, %v3553
    %v3560 = vmul.f32 %v2302, %v3553
    %v3561 = vmul.f32 %v2303, %v3553
    %v3562 = vmul.f32 %v2304, %v3553
    %v3563 = vmul.f32 %v2305, %v3553
    %v3564 = vmul.f32 %v2306, %v3553
    %v3565 = vmul.f32 %v2307, %v3553
    %v3566 = vmul.f32 %v2308, %v3553
    %v3567 = vmul.f32 %v2309, %v3553
    %v3568 = vmul.f32 %v2310, %v3553
    %v3569 = vmul.f32 %v2311, %v3553
    %v3570 = vmul.f32 %v2312, %v3553
    %v3571 = vmul.f32 %v2313, %v3553
    %v3572 = vmul.f32 %v2314, %v3553
    %v3573 = vmul.f32 %v2315, %v3553
    %v3574 = vmul.f32 %v2316, %v3553
    %v3575 = vmul.f32 %v2317, %v3553
    %v3576 = vmul.f32 %v2318, %v3553
    %v3577 = vmul.f32 %v2319, %v3553
    %v3578 = vmul.f32 %v2320, %v3553
    %v3579 = vmul.f32 %v2321, %v3553
    %v3580 = vmul.f32 %v2322, %v3553
    %v3581 = vmul.f32 %v2323, %v3553
    %v3582 = vmul.f32 %v2324, %v3553
    %v3583 = vmul.f32 %v2325, %v3553
    %v3584 = vmul.f32 %v2326, %v3553
    %v3585 = vmul.f32 %v2327, %v3553
    %v3586 = vadd.f32 %v3517, %v3554
    %v3587 = vadd.f32 %v3518, %v3555
    %v3588 = vadd.f32 %v3519, %v3556
    %v3589 = vadd.f32 %v3520, %v3557
    %v3590 = vadd.f32 %v3521, %v3558
    %v3591 = vadd.f32 %v3522, %v3559
    %v3592 = vadd.f32 %v3523, %v3560
    %v3593 = vadd.f32 %v3524, %v3561
    %v3594 = vadd.f32 %v3525, %v3562
    %v3595 = vadd.f32 %v3526, %v3563
    %v3596 = vadd.f32 %v3527, %v3564
    %v3597 = vadd.f32 %v3528, %v3565
    %v3598 = vadd.f32 %v3529, %v3566
    %v3599 = vadd.f32 %v3530, %v3567
    %v3600 = vadd.f32 %v3531, %v3568
    %v3601 = vadd.f32 %v3532, %v3569
    %v3602 = vadd.f32 %v3533, %v3570
    %v3603 = vadd.f32 %v3534, %v3571
    %v3604 = vadd.f32 %v3535, %v3572
    %v3605 = vadd.f32 %v3536, %v3573
    %v3606 = vadd.f32 %v3537, %v3574
    %v3607 = vadd.f32 %v3538, %v3575
    %v3608 = vadd.f32 %v3539, %v3576
    %v3609 = vadd.f32 %v3540, %v3577
    %v3610 = vadd.f32 %v3541, %v3578
    %v3611 = vadd.f32 %v3542, %v3579
    %v3612 = vadd.f32 %v3543, %v3580
    %v3613 = vadd.f32 %v3544, %v3581
    %v3614 = vadd.f32 %v3545, %v3582
    %v3615 = vadd.f32 %v3546, %v3583
    %v3616 = vadd.f32 %v3547, %v3584
    %v3617 = vadd.f32 %v3548, %v3585
    %v3618 = vld [vmem:[%s1 + $0x30] sm:$0x1]
    %v3619 = vlaneseq
    %v3620 = vshrl.u32 %v3619, 7
    %v3621 = vsub.s32 0, %v3620
    %v3622 = vrot.slane %v3618, %v3621
    %v3623 = vmul.f32 %v2397, %v3622
    %v3624 = vmul.f32 %v2398, %v3622
    %v3625 = vmul.f32 %v2399, %v3622
    %v3626 = vmul.f32 %v2400, %v3622
    %v3627 = vmul.f32 %v2401, %v3622
    %v3628 = vmul.f32 %v2402, %v3622
    %v3629 = vmul.f32 %v2403, %v3622
    %v3630 = vmul.f32 %v2404, %v3622
    %v3631 = vmul.f32 %v2405, %v3622
    %v3632 = vmul.f32 %v2406, %v3622
    %v3633 = vmul.f32 %v2407, %v3622
    %v3634 = vmul.f32 %v2408, %v3622
    %v3635 = vmul.f32 %v2409, %v3622
    %v3636 = vmul.f32 %v2410, %v3622
    %v3637 = vmul.f32 %v2411, %v3622
    %v3638 = vmul.f32 %v2412, %v3622
    %v3639 = vmul.f32 %v2413, %v3622
    %v3640 = vmul.f32 %v2414, %v3622
    %v3641 = vmul.f32 %v2415, %v3622
    %v3642 = vmul.f32 %v2416, %v3622
    %v3643 = vmul.f32 %v2417, %v3622
    %v3644 = vmul.f32 %v2418, %v3622
    %v3645 = vmul.f32 %v2419, %v3622
    %v3646 = vmul.f32 %v2420, %v3622
    %v3647 = vmul.f32 %v2421, %v3622
    %v3648 = vmul.f32 %v2422, %v3622
    %v3649 = vmul.f32 %v2423, %v3622
    %v3650 = vmul.f32 %v2424, %v3622
    %v3651 = vmul.f32 %v2425, %v3622
    %v3652 = vmul.f32 %v2426, %v3622
    %v3653 = vmul.f32 %v2427, %v3622
    %v3654 = vmul.f32 %v2428, %v3622
    %v3655 = vadd.f32 %v3586, %v3623
    %v3656 = vadd.f32 %v3587, %v3624
    %v3657 = vadd.f32 %v3588, %v3625
    %v3658 = vadd.f32 %v3589, %v3626
    %v3659 = vadd.f32 %v3590, %v3627
    %v3660 = vadd.f32 %v3591, %v3628
    %v3661 = vadd.f32 %v3592, %v3629
    %v3662 = vadd.f32 %v3593, %v3630
    %v3663 = vadd.f32 %v3594, %v3631
    %v3664 = vadd.f32 %v3595, %v3632
    %v3665 = vadd.f32 %v3596, %v3633
    %v3666 = vadd.f32 %v3597, %v3634
    %v3667 = vadd.f32 %v3598, %v3635
    %v3668 = vadd.f32 %v3599, %v3636
    %v3669 = vadd.f32 %v3600, %v3637
    %v3670 = vadd.f32 %v3601, %v3638
    %v3671 = vadd.f32 %v3602, %v3639
    %v3672 = vadd.f32 %v3603, %v3640
    %v3673 = vadd.f32 %v3604, %v3641
    %v3674 = vadd.f32 %v3605, %v3642
    %v3675 = vadd.f32 %v3606, %v3643
    %v3676 = vadd.f32 %v3607, %v3644
    %v3677 = vadd.f32 %v3608, %v3645
    %v3678 = vadd.f32 %v3609, %v3646
    %v3679 = vadd.f32 %v3610, %v3647
    %v3680 = vadd.f32 %v3611, %v3648
    %v3681 = vadd.f32 %v3612, %v3649
    %v3682 = vadd.f32 %v3613, %v3650
    %v3683 = vadd.f32 %v3614, %v3651
    %v3684 = vadd.f32 %v3615, %v3652
    %v3685 = vadd.f32 %v3616, %v3653
    %v3686 = vadd.f32 %v3617, %v3654
    %v3687 = vld [vmem:[%s1 + $0x31] sm:$0x1]
    %v3688 = vlaneseq
    %v3689 = vshrl.u32 %v3688, 7
    %v3690 = vsub.s32 0, %v3689
    %v3691 = vrot.slane %v3687, %v3690
    %v3692 = vmul.f32 %v2498, %v3691
    %v3693 = vmul.f32 %v2499, %v3691
    %v3694 = vmul.f32 %v2500, %v3691
    %v3695 = vmul.f32 %v2501, %v3691
    %v3696 = vmul.f32 %v2502, %v3691
    %v3697 = vmul.f32 %v2503, %v3691
    %v3698 = vmul.f32 %v2504, %v3691
    %v3699 = vmul.f32 %v2505, %v3691
    %v3700 = vmul.f32 %v2506, %v3691
    %v3701 = vmul.f32 %v2507, %v3691
    %v3702 = vmul.f32 %v2508, %v3691
    %v3703 = vmul.f32 %v2509, %v3691
    %v3704 = vmul.f32 %v2510, %v3691
    %v3705 = vmul.f32 %v2511, %v3691
    %v3706 = vmul.f32 %v2512, %v3691
    %v3707 = vmul.f32 %v2513, %v3691
    %v3708 = vmul.f32 %v2514, %v3691
    %v3709 = vmul.f32 %v2515, %v3691
    %v3710 = vmul.f32 %v2516, %v3691
    %v3711 = vmul.f32 %v2517, %v3691
    %v3712 = vmul.f32 %v2518, %v3691
    %v3713 = vmul.f32 %v2519, %v3691
    %v3714 = vmul.f32 %v2520, %v3691
    %v3715 = vmul.f32 %v2521, %v3691
    %v3716 = vmul.f32 %v2522, %v3691
    %v3717 = vmul.f32 %v2523, %v3691
    %v3718 = vmul.f32 %v2524, %v3691
    %v3719 = vmul.f32 %v2525, %v3691
    %v3720 = vmul.f32 %v2526, %v3691
    %v3721 = vmul.f32 %v2527, %v3691
    %v3722 = vmul.f32 %v2528, %v3691
    %v3723 = vmul.f32 %v2529, %v3691
    %v3724 = vadd.f32 %v3655, %v3692
    %v3725 = vadd.f32 %v3656, %v3693
    %v3726 = vadd.f32 %v3657, %v3694
    %v3727 = vadd.f32 %v3658, %v3695
    %v3728 = vadd.f32 %v3659, %v3696
    %v3729 = vadd.f32 %v3660, %v3697
    %v3730 = vadd.f32 %v3661, %v3698
    %v3731 = vadd.f32 %v3662, %v3699
    %v3732 = vadd.f32 %v3663, %v3700
    %v3733 = vadd.f32 %v3664, %v3701
    %v3734 = vadd.f32 %v3665, %v3702
    %v3735 = vadd.f32 %v3666, %v3703
    %v3736 = vadd.f32 %v3667, %v3704
    %v3737 = vadd.f32 %v3668, %v3705
    %v3738 = vadd.f32 %v3669, %v3706
    %v3739 = vadd.f32 %v3670, %v3707
    %v3740 = vadd.f32 %v3671, %v3708
    %v3741 = vadd.f32 %v3672, %v3709
    %v3742 = vadd.f32 %v3673, %v3710
    %v3743 = vadd.f32 %v3674, %v3711
    %v3744 = vadd.f32 %v3675, %v3712
    %v3745 = vadd.f32 %v3676, %v3713
    %v3746 = vadd.f32 %v3677, %v3714
    %v3747 = vadd.f32 %v3678, %v3715
    %v3748 = vadd.f32 %v3679, %v3716
    %v3749 = vadd.f32 %v3680, %v3717
    %v3750 = vadd.f32 %v3681, %v3718
    %v3751 = vadd.f32 %v3682, %v3719
    %v3752 = vadd.f32 %v3683, %v3720
    %v3753 = vadd.f32 %v3684, %v3721
    %v3754 = vadd.f32 %v3685, %v3722
    %v3755 = vadd.f32 %v3686, %v3723
    %v3756 = vld [vmem:[%s1 + $0x32] sm:$0x1]
    %v3757 = vlaneseq
    %v3758 = vshrl.u32 %v3757, 7
    %v3759 = vsub.s32 0, %v3758
    %v3760 = vrot.slane %v3756, %v3759
    %v3761 = vmul.f32 %v3050, %v3760
    %v3762 = vmul.f32 %v3051, %v3760
    %v3763 = vmul.f32 %v3052, %v3760
    %v3764 = vmul.f32 %v3053, %v3760
    %v3765 = vmul.f32 %v3054, %v3760
    %v3766 = vmul.f32 %v3055, %v3760
    %v3767 = vmul.f32 %v3056, %v3760
    %v3768 = vmul.f32 %v3057, %v3760
    %v3769 = vmul.f32 %v3058, %v3760
    %v3770 = vmul.f32 %v3059, %v3760
    %v3771 = vmul.f32 %v3060, %v3760
    %v3772 = vmul.f32 %v3061, %v3760
    %v3773 = vmul.f32 %v3062, %v3760
    %v3774 = vmul.f32 %v3063, %v3760
    %v3775 = vmul.f32 %v3064, %v3760
    %v3776 = vmul.f32 %v3065, %v3760
    %v3777 = vmul.f32 %v3066, %v3760
    %v3778 = vmul.f32 %v3067, %v3760
    %v3779 = vmul.f32 %v3068, %v3760
    %v3780 = vmul.f32 %v3069, %v3760
    %v3781 = vmul.f32 %v3070, %v3760
    %v3782 = vmul.f32 %v3071, %v3760
    %v3783 = vmul.f32 %v3072, %v3760
    %v3784 = vmul.f32 %v3073, %v3760
    %v3785 = vmul.f32 %v3074, %v3760
    %v3786 = vmul.f32 %v3075, %v3760
    %v3787 = vmul.f32 %v3076, %v3760
    %v3788 = vmul.f32 %v3077, %v3760
    %v3789 = vmul.f32 %v3078, %v3760
    %v3790 = vmul.f32 %v3079, %v3760
    %v3791 = vmul.f32 %v3080, %v3760
    %v3792 = vmul.f32 %v3081, %v3760
    %v3793 = vadd.f32 %v3724, %v3761
    %v3794 = vadd.f32 %v3725, %v3762
    %v3795 = vadd.f32 %v3726, %v3763
    %v3796 = vadd.f32 %v3727, %v3764
    %v3797 = vadd.f32 %v3728, %v3765
    %v3798 = vadd.f32 %v3729, %v3766
    %v3799 = vadd.f32 %v3730, %v3767
    %v3800 = vadd.f32 %v3731, %v3768
    %v3801 = vadd.f32 %v3732, %v3769
    %v3802 = vadd.f32 %v3733, %v3770
    %v3803 = vadd.f32 %v3734, %v3771
    %v3804 = vadd.f32 %v3735, %v3772
    %v3805 = vadd.f32 %v3736, %v3773
    %v3806 = vadd.f32 %v3737, %v3774
    %v3807 = vadd.f32 %v3738, %v3775
    %v3808 = vadd.f32 %v3739, %v3776
    %v3809 = vadd.f32 %v3740, %v3777
    %v3810 = vadd.f32 %v3741, %v3778
    %v3811 = vadd.f32 %v3742, %v3779
    %v3812 = vadd.f32 %v3743, %v3780
    %v3813 = vadd.f32 %v3744, %v3781
    %v3814 = vadd.f32 %v3745, %v3782
    %v3815 = vadd.f32 %v3746, %v3783
    %v3816 = vadd.f32 %v3747, %v3784
    %v3817 = vadd.f32 %v3748, %v3785
    %v3818 = vadd.f32 %v3749, %v3786
    %v3819 = vadd.f32 %v3750, %v3787
    %v3820 = vadd.f32 %v3751, %v3788
    %v3821 = vadd.f32 %v3752, %v3789
    %v3822 = vadd.f32 %v3753, %v3790
    %v3823 = vadd.f32 %v3754, %v3791
    %v3824 = vadd.f32 %v3755, %v3792
    %v3825 = vld [vmem:[%s101 + $0x14] sm:$0xff]
    %v3826 = vld [vmem:[%s101 + $0x34] sm:$0xff]
    %v3827 = vld [vmem:[%s101 + $0x54] sm:$0xff]
    %v3828 = vld [vmem:[%s101 + $0x74] sm:$0xff]
    %v3829 = vld [vmem:[%s101 + $0x94] sm:$0xff]
    %v3830 = vld [vmem:[%s101 + $0xb4] sm:$0xff]
    %v3831 = vld [vmem:[%s101 + $0xd4] sm:$0xff]
    %v3832 = vld [vmem:[%s101 + $0xf4] sm:$0xff]
    %v3833 = vld [vmem:[%s101 + $0x114] sm:$0xff]
    %v3834 = vld [vmem:[%s101 + $0x134] sm:$0xff]
    %v3835 = vld [vmem:[%s101 + $0x154] sm:$0xff]
    %v3836 = vld [vmem:[%s101 + $0x174] sm:$0xff]
    %v3837 = vld [vmem:[%s101 + $0x194] sm:$0xff]
    %v3838 = vld [vmem:[%s101 + $0x1b4] sm:$0xff]
    %v3839 = vld [vmem:[%s101 + $0x1d4] sm:$0xff]
    %v3840 = vld [vmem:[%s101 + $0x1f4] sm:$0xff]
    %v3841 = vld [vmem:[%s1 + $0x33] sm:$0x1]
    %v3842 = vlaneseq
    %v3843 = vshrl.u32 %v3842, 7
    %v3844 = vsub.s32 0, %v3843
    %v3845 = vrot.slane %v3841, %v3844
    %v3846 = vmul.f32 %v3242, %v3845
    %v3847 = vmul.f32 %v3825, %v3845
    %v3848 = vmul.f32 %v3244, %v3845
    %v3849 = vmul.f32 %v3826, %v3845
    %v3850 = vmul.f32 %v3246, %v3845
    %v3851 = vmul.f32 %v3827, %v3845
    %v3852 = vmul.f32 %v3248, %v3845
    %v3853 = vmul.f32 %v3828, %v3845
    %v3854 = vmul.f32 %v3250, %v3845
    %v3855 = vmul.f32 %v3829, %v3845
    %v3856 = vmul.f32 %v3252, %v3845
    %v3857 = vmul.f32 %v3830, %v3845
    %v3858 = vmul.f32 %v3254, %v3845
    %v3859 = vmul.f32 %v3831, %v3845
    %v3860 = vmul.f32 %v3256, %v3845
    %v3861 = vmul.f32 %v3832, %v3845
    %v3862 = vmul.f32 %v3258, %v3845
    %v3863 = vmul.f32 %v3833, %v3845
    %v3864 = vmul.f32 %v3260, %v3845
    %v3865 = vmul.f32 %v3834, %v3845
    %v3866 = vmul.f32 %v3262, %v3845
    %v3867 = vmul.f32 %v3835, %v3845
    %v3868 = vmul.f32 %v3264, %v3845
    %v3869 = vmul.f32 %v3836, %v3845
    %v3870 = vmul.f32 %v3266, %v3845
    %v3871 = vmul.f32 %v3837, %v3845
    %v3872 = vmul.f32 %v3268, %v3845
    %v3873 = vmul.f32 %v3838, %v3845
    %v3874 = vmul.f32 %v3270, %v3845
    %v3875 = vmul.f32 %v3839, %v3845
    %v3876 = vmul.f32 %v3272, %v3845
    %v3877 = vmul.f32 %v3840, %v3845
    %v3878 = vadd.f32 %v3793, %v3846
    %v3879 = vadd.f32 %v3794, %v3847
    %v3880 = vadd.f32 %v3795, %v3848
    %v3881 = vadd.f32 %v3796, %v3849
    %v3882 = vadd.f32 %v3797, %v3850
    %v3883 = vadd.f32 %v3798, %v3851
    %v3884 = vadd.f32 %v3799, %v3852
    %v3885 = vadd.f32 %v3800, %v3853
    %v3886 = vadd.f32 %v3801, %v3854
    %v3887 = vadd.f32 %v3802, %v3855
    %v3888 = vadd.f32 %v3803, %v3856
    %v3889 = vadd.f32 %v3804, %v3857
    %v3890 = vadd.f32 %v3805, %v3858
    %v3891 = vadd.f32 %v3806, %v3859
    %v3892 = vadd.f32 %v3807, %v3860
    %v3893 = vadd.f32 %v3808, %v3861
    %v3894 = vadd.f32 %v3809, %v3862
    %v3895 = vadd.f32 %v3810, %v3863
    %v3896 = vadd.f32 %v3811, %v3864
    %v3897 = vadd.f32 %v3812, %v3865
    %v3898 = vadd.f32 %v3813, %v3866
    %v3899 = vadd.f32 %v3814, %v3867
    %v3900 = vadd.f32 %v3815, %v3868
    %v3901 = vadd.f32 %v3816, %v3869
    %v3902 = vadd.f32 %v3817, %v3870
    %v3903 = vadd.f32 %v3818, %v3871
    %v3904 = vadd.f32 %v3819, %v3872
    %v3905 = vadd.f32 %v3820, %v3873
    %v3906 = vadd.f32 %v3821, %v3874
    %v3907 = vadd.f32 %v3822, %v3875
    %v3908 = vadd.f32 %v3823, %v3876
    %v3909 = vadd.f32 %v3824, %v3877
    %v3910 = vld [vmem:[%s101 + $0x15] sm:$0xff]
    %v3911 = vld [vmem:[%s101 + $0x35] sm:$0xff]
    %v3912 = vld [vmem:[%s101 + $0x55] sm:$0xff]
    %v3913 = vld [vmem:[%s101 + $0x75] sm:$0xff]
    %v3914 = vld [vmem:[%s101 + $0x95] sm:$0xff]
    %v3915 = vld [vmem:[%s101 + $0xb5] sm:$0xff]
    %v3916 = vld [vmem:[%s101 + $0xd5] sm:$0xff]
    %v3917 = vld [vmem:[%s101 + $0xf5] sm:$0xff]
    %v3918 = vld [vmem:[%s101 + $0x115] sm:$0xff]
    %v3919 = vld [vmem:[%s101 + $0x135] sm:$0xff]
    %v3920 = vld [vmem:[%s101 + $0x155] sm:$0xff]
    %v3921 = vld [vmem:[%s101 + $0x175] sm:$0xff]
    %v3922 = vld [vmem:[%s101 + $0x195] sm:$0xff]
    %v3923 = vld [vmem:[%s101 + $0x1b5] sm:$0xff]
    %v3924 = vld [vmem:[%s101 + $0x1d5] sm:$0xff]
    %v3925 = vld [vmem:[%s101 + $0x1f5] sm:$0xff]
    %v3926 = vld [vmem:[%s1 + $0x34] sm:$0x1]
    %v3927 = vlaneseq
    %v3928 = vshrl.u32 %v3927, 7
    %v3929 = vsub.s32 0, %v3928
    %v3930 = vrot.slane %v3926, %v3929
    %v3931 = vmul.f32 %v2637, %v3930
    %v3932 = vmul.f32 %v3910, %v3930
    %v3933 = vmul.f32 %v2639, %v3930
    %v3934 = vmul.f32 %v3911, %v3930
    %v3935 = vmul.f32 %v2641, %v3930
    %v3936 = vmul.f32 %v3912, %v3930
    %v3937 = vmul.f32 %v2643, %v3930
    %v3938 = vmul.f32 %v3913, %v3930
    %v3939 = vmul.f32 %v2645, %v3930
    %v3940 = vmul.f32 %v3914, %v3930
    %v3941 = vmul.f32 %v2647, %v3930
    %v3942 = vmul.f32 %v3915, %v3930
    %v3943 = vmul.f32 %v2649, %v3930
    %v3944 = vmul.f32 %v3916, %v3930
    %v3945 = vmul.f32 %v2651, %v3930
    %v3946 = vmul.f32 %v3917, %v3930
    %v3947 = vmul.f32 %v2653, %v3930
    %v3948 = vmul.f32 %v3918, %v3930
    %v3949 = vmul.f32 %v2655, %v3930
    %v3950 = vmul.f32 %v3919, %v3930
    %v3951 = vmul.f32 %v2657, %v3930
    %v3952 = vmul.f32 %v3920, %v3930
    %v3953 = vmul.f32 %v2659, %v3930
    %v3954 = vmul.f32 %v3921, %v3930
    %v3955 = vmul.f32 %v2661, %v3930
    %v3956 = vmul.f32 %v3922, %v3930
    %v3957 = vmul.f32 %v2663, %v3930
    %v3958 = vmul.f32 %v3923, %v3930
    %v3959 = vmul.f32 %v2665, %v3930
    %v3960 = vmul.f32 %v3924, %v3930
    %v3961 = vmul.f32 %v2667, %v3930
    %v3962 = vmul.f32 %v3925, %v3930
    %v3963 = vadd.f32 %v3878, %v3931
    %v3964 = vadd.f32 %v3879, %v3932
    %v3965 = vadd.f32 %v3880, %v3933
    %v3966 = vadd.f32 %v3881, %v3934
    %v3967 = vadd.f32 %v3882, %v3935
    %v3968 = vadd.f32 %v3883, %v3936
    %v3969 = vadd.f32 %v3884, %v3937
    %v3970 = vadd.f32 %v3885, %v3938
    %v3971 = vadd.f32 %v3886, %v3939
    %v3972 = vadd.f32 %v3887, %v3940
    %v3973 = vadd.f32 %v3888, %v3941
    %v3974 = vadd.f32 %v3889, %v3942
    %v3975 = vadd.f32 %v3890, %v3943
    %v3976 = vadd.f32 %v3891, %v3944
    %v3977 = vadd.f32 %v3892, %v3945
    %v3978 = vadd.f32 %v3893, %v3946
    %v3979 = vadd.f32 %v3894, %v3947
    %v3980 = vadd.f32 %v3895, %v3948
    %v3981 = vadd.f32 %v3896, %v3949
    %v3982 = vadd.f32 %v3897, %v3950
    %v3983 = vadd.f32 %v3898, %v3951
    %v3984 = vadd.f32 %v3899, %v3952
    %v3985 = vadd.f32 %v3900, %v3953
    %v3986 = vadd.f32 %v3901, %v3954
    %v3987 = vadd.f32 %v3902, %v3955
    %v3988 = vadd.f32 %v3903, %v3956
    %v3989 = vadd.f32 %v3904, %v3957
    %v3990 = vadd.f32 %v3905, %v3958
    %v3991 = vadd.f32 %v3906, %v3959
    %v3992 = vadd.f32 %v3907, %v3960
    %v3993 = vadd.f32 %v3908, %v3961
    %v3994 = vadd.f32 %v3909, %v3962
    %v3995 = vld [vmem:[%s2 + $0x6] sm:$0x1]
    %v3996 = vlaneseq
    %v3997 = vshrl.u32 %v3996, 7
    %v3998 = vsub.s32 0, %v3997
    %v3999 = vrot.slane %v3995, %v3998
    %v4000 = vadd.f32 %v3963, %v3999
    %v4001 = vadd.f32 %v3964, %v3999
    %v4002 = vadd.f32 %v3965, %v3999
    %v4003 = vadd.f32 %v3966, %v3999
    %v4004 = vadd.f32 %v3967, %v3999
    %v4005 = vadd.f32 %v3968, %v3999
    %v4006 = vadd.f32 %v3969, %v3999
    %v4007 = vadd.f32 %v3970, %v3999
    %v4008 = vadd.f32 %v3971, %v3999
    %v4009 = vadd.f32 %v3972, %v3999
    %v4010 = vadd.f32 %v3973, %v3999
    %v4011 = vadd.f32 %v3974, %v3999
    %v4012 = vadd.f32 %v3975, %v3999
    %v4013 = vadd.f32 %v3976, %v3999
    %v4014 = vadd.f32 %v3977, %v3999
    %v4015 = vadd.f32 %v3978, %v3999
    %v4016 = vadd.f32 %v3979, %v3999
    %v4017 = vadd.f32 %v3980, %v3999
    %v4018 = vadd.f32 %v3981, %v3999
    %v4019 = vadd.f32 %v3982, %v3999
    %v4020 = vadd.f32 %v3983, %v3999
    %v4021 = vadd.f32 %v3984, %v3999
    %v4022 = vadd.f32 %v3985, %v3999
    %v4023 = vadd.f32 %v3986, %v3999
    %v4024 = vadd.f32 %v3987, %v3999
    %v4025 = vadd.f32 %v3988, %v3999
    %v4026 = vadd.f32 %v3989, %v3999
    %v4027 = vadd.f32 %v3990, %v3999
    %v4028 = vadd.f32 %v3991, %v3999
    %v4029 = vadd.f32 %v3992, %v3999
    %v4030 = vadd.f32 %v3993, %v3999
    %v4031 = vadd.f32 %v3994, %v3999
    %4032 = vst.msk [vmem:[%s101 + $0x8] sm:$0xff] %vm35, %v2604
    %4033 = vst.msk [vmem:[%s101 + $0x10] sm:$0xff] %vm35, %v2605
    %4034 = vst.msk [vmem:[%s101 + $0x28] sm:$0xff] %vm35, %v2606
    %4035 = vst.msk [vmem:[%s101 + $0x30] sm:$0xff] %vm35, %v2607
    %4036 = vst.msk [vmem:[%s101 + $0x48] sm:$0xff] %vm35, %v2608
    %4037 = vst.msk [vmem:[%s101 + $0x50] sm:$0xff] %vm35, %v2609
    %4038 = vst.msk [vmem:[%s101 + $0x68] sm:$0xff] %vm35, %v2610
    %4039 = vst.msk [vmem:[%s101 + $0x70] sm:$0xff] %vm35, %v2611
    %4040 = vst.msk [vmem:[%s101 + $0x88] sm:$0xff] %vm35, %v2612
    %4041 = vst.msk [vmem:[%s101 + $0x90] sm:$0xff] %vm35, %v2613
    %4042 = vst.msk [vmem:[%s101 + $0xa8] sm:$0xff] %vm35, %v2614
    %4043 = vst.msk [vmem:[%s101 + $0xb0] sm:$0xff] %vm35, %v2615
    %4044 = vst.msk [vmem:[%s101 + $0xc8] sm:$0xff] %vm35, %v2616
    %4045 = vst.msk [vmem:[%s101 + $0xd0] sm:$0xff] %vm35, %v2617
    %4046 = vst.msk [vmem:[%s101 + $0xe8] sm:$0xff] %vm35, %v2618
    %4047 = vst.msk [vmem:[%s101 + $0xf0] sm:$0xff] %vm35, %v2619
    %4048 = vst.msk [vmem:[%s101 + $0x108] sm:$0xff] %vm35, %v2620
    %4049 = vst.msk [vmem:[%s101 + $0x110] sm:$0xff] %vm35, %v2621
    %4050 = vst.msk [vmem:[%s101 + $0x128] sm:$0xff] %vm35, %v2622
    %4051 = vst.msk [vmem:[%s101 + $0x130] sm:$0xff] %vm35, %v2623
    %4052 = vst.msk [vmem:[%s101 + $0x148] sm:$0xff] %vm35, %v2624
    %4053 = vst.msk [vmem:[%s101 + $0x150] sm:$0xff] %vm35, %v2625
    %4054 = vst.msk [vmem:[%s101 + $0x168] sm:$0xff] %vm35, %v2626
    %4055 = vst.msk [vmem:[%s101 + $0x170] sm:$0xff] %vm35, %v2627
    %4056 = vst.msk [vmem:[%s101 + $0x188] sm:$0xff] %vm35, %v2628
    %4057 = vst.msk [vmem:[%s101 + $0x190] sm:$0xff] %vm35, %v2629
    %4058 = vst.msk [vmem:[%s101 + $0x1a8] sm:$0xff] %vm35, %v2630
    %4059 = vst.msk [vmem:[%s101 + $0x1b0] sm:$0xff] %vm35, %v2631
    %4060 = vst.msk [vmem:[%s101 + $0x1c8] sm:$0xff] %vm35, %v2632
    %4061 = vst.msk [vmem:[%s101 + $0x1d0] sm:$0xff] %vm35, %v2633
    %4062 = vst.msk [vmem:[%s101 + $0x1e8] sm:$0xff] %vm35, %v2634
    %4063 = vst.msk [vmem:[%s101 + $0x1f0] sm:$0xff] %vm35, %v2635
    %s4064 = scalar_lea.vmem [#allocation2], 192
    %v4065 = vld [vmem:[%s4064 + $0x8] sm:$0xff]
    %v4066 = vld [vmem:[%s4064 + $0x10] sm:$0xff]
    %v4067 = vld [vmem:[%s4064 + $0x28] sm:$0xff]
    %v4068 = vld [vmem:[%s4064 + $0x30] sm:$0xff]
    %v4069 = vld [vmem:[%s4064 + $0x48] sm:$0xff]
    %v4070 = vld [vmem:[%s4064 + $0x50] sm:$0xff]
    %v4071 = vld [vmem:[%s4064 + $0x68] sm:$0xff]
    %v4072 = vld [vmem:[%s4064 + $0x70] sm:$0xff]
    %v4073 = vld [vmem:[%s4064 + $0x88] sm:$0xff]
    %v4074 = vld [vmem:[%s4064 + $0x90] sm:$0xff]
    %v4075 = vld [vmem:[%s4064 + $0xa8] sm:$0xff]
    %v4076 = vld [vmem:[%s4064 + $0xb0] sm:$0xff]
    %v4077 = vld [vmem:[%s4064 + $0xc8] sm:$0xff]
    %v4078 = vld [vmem:[%s4064 + $0xd0] sm:$0xff]
    %v4079 = vld [vmem:[%s4064 + $0xe8] sm:$0xff]
    %v4080 = vld [vmem:[%s4064 + $0xf0] sm:$0xff]
    %v4081 = vld [vmem:[%s4064 + $0x108] sm:$0xff]
    %v4082 = vld [vmem:[%s4064 + $0x110] sm:$0xff]
    %v4083 = vld [vmem:[%s4064 + $0x128] sm:$0xff]
    %v4084 = vld [vmem:[%s4064 + $0x130] sm:$0xff]
    %v4085 = vld [vmem:[%s4064 + $0x148] sm:$0xff]
    %v4086 = vld [vmem:[%s4064 + $0x150] sm:$0xff]
    %v4087 = vld [vmem:[%s4064 + $0x168] sm:$0xff]
    %v4088 = vld [vmem:[%s4064 + $0x170] sm:$0xff]
    %v4089 = vld [vmem:[%s4064 + $0x188] sm:$0xff]
    %v4090 = vld [vmem:[%s4064 + $0x190] sm:$0xff]
    %v4091 = vld [vmem:[%s4064 + $0x1a8] sm:$0xff]
    %v4092 = vld [vmem:[%s4064 + $0x1b0] sm:$0xff]
    %v4093 = vld [vmem:[%s4064 + $0x1c8] sm:$0xff]
    %v4094 = vld [vmem:[%s4064 + $0x1d0] sm:$0xff]
    %v4095 = vld [vmem:[%s4064 + $0x1e8] sm:$0xff]
    %v4096 = vld [vmem:[%s4064 + $0x1f0] sm:$0xff]
    %v4097 = vld [vmem:[%s1 + $0x17] sm:$0x1]
    %v4098 = vlaneseq
    %v4099 = vshrl.u32 %v4098, 7
    %v4100 = vsub.s32 0, %v4099
    %v4101 = vrot.slane %v4097, %v4100
    %v4102 = vmul.f32 %v4065, %v4101
    %v4103 = vmul.f32 %v4066, %v4101
    %v4104 = vmul.f32 %v4067, %v4101
    %v4105 = vmul.f32 %v4068, %v4101
    %v4106 = vmul.f32 %v4069, %v4101
    %v4107 = vmul.f32 %v4070, %v4101
    %v4108 = vmul.f32 %v4071, %v4101
    %v4109 = vmul.f32 %v4072, %v4101
    %v4110 = vmul.f32 %v4073, %v4101
    %v4111 = vmul.f32 %v4074, %v4101
    %v4112 = vmul.f32 %v4075, %v4101
    %v4113 = vmul.f32 %v4076, %v4101
    %v4114 = vmul.f32 %v4077, %v4101
    %v4115 = vmul.f32 %v4078, %v4101
    %v4116 = vmul.f32 %v4079, %v4101
    %v4117 = vmul.f32 %v4080, %v4101
    %v4118 = vmul.f32 %v4081, %v4101
    %v4119 = vmul.f32 %v4082, %v4101
    %v4120 = vmul.f32 %v4083, %v4101
    %v4121 = vmul.f32 %v4084, %v4101
    %v4122 = vmul.f32 %v4085, %v4101
    %v4123 = vmul.f32 %v4086, %v4101
    %v4124 = vmul.f32 %v4087, %v4101
    %v4125 = vmul.f32 %v4088, %v4101
    %v4126 = vmul.f32 %v4089, %v4101
    %v4127 = vmul.f32 %v4090, %v4101
    %v4128 = vmul.f32 %v4091, %v4101
    %v4129 = vmul.f32 %v4092, %v4101
    %v4130 = vmul.f32 %v4093, %v4101
    %v4131 = vmul.f32 %v4094, %v4101
    %v4132 = vmul.f32 %v4095, %v4101
    %v4133 = vmul.f32 %v4096, %v4101
    %v4134 = vld [vmem:[%s198 + $0x8] sm:$0xff]
    %v4135 = vld [vmem:[%s198 + $0x10] sm:$0xff]
    %v4136 = vld [vmem:[%s198 + $0x28] sm:$0xff]
    %v4137 = vld [vmem:[%s198 + $0x30] sm:$0xff]
    %v4138 = vld [vmem:[%s198 + $0x48] sm:$0xff]
    %v4139 = vld [vmem:[%s198 + $0x50] sm:$0xff]
    %v4140 = vld [vmem:[%s198 + $0x68] sm:$0xff]
    %v4141 = vld [vmem:[%s198 + $0x70] sm:$0xff]
    %v4142 = vld [vmem:[%s198 + $0x88] sm:$0xff]
    %v4143 = vld [vmem:[%s198 + $0x90] sm:$0xff]
    %v4144 = vld [vmem:[%s198 + $0xa8] sm:$0xff]
    %v4145 = vld [vmem:[%s198 + $0xb0] sm:$0xff]
    %v4146 = vld [vmem:[%s198 + $0xc8] sm:$0xff]
    %v4147 = vld [vmem:[%s198 + $0xd0] sm:$0xff]
    %v4148 = vld [vmem:[%s198 + $0xe8] sm:$0xff]
    %v4149 = vld [vmem:[%s198 + $0xf0] sm:$0xff]
    %v4150 = vld [vmem:[%s198 + $0x108] sm:$0xff]
    %v4151 = vld [vmem:[%s198 + $0x110] sm:$0xff]
    %v4152 = vld [vmem:[%s198 + $0x128] sm:$0xff]
    %v4153 = vld [vmem:[%s198 + $0x130] sm:$0xff]
    %v4154 = vld [vmem:[%s198 + $0x148] sm:$0xff]
    %v4155 = vld [vmem:[%s198 + $0x150] sm:$0xff]
    %v4156 = vld [vmem:[%s198 + $0x168] sm:$0xff]
    %v4157 = vld [vmem:[%s198 + $0x170] sm:$0xff]
    %v4158 = vld [vmem:[%s198 + $0x188] sm:$0xff]
    %v4159 = vld [vmem:[%s198 + $0x190] sm:$0xff]
    %v4160 = vld [vmem:[%s198 + $0x1a8] sm:$0xff]
    %v4161 = vld [vmem:[%s198 + $0x1b0] sm:$0xff]
    %v4162 = vld [vmem:[%s198 + $0x1c8] sm:$0xff]
    %v4163 = vld [vmem:[%s198 + $0x1d0] sm:$0xff]
    %v4164 = vld [vmem:[%s198 + $0x1e8] sm:$0xff]
    %v4165 = vld [vmem:[%s198 + $0x1f0] sm:$0xff]
    %v4166 = vld [vmem:[%s1 + $0x18] sm:$0x1]
    %v4167 = vlaneseq
    %v4168 = vshrl.u32 %v4167, 7
    %v4169 = vsub.s32 0, %v4168
    %v4170 = vrot.slane %v4166, %v4169
    %v4171 = vmul.f32 %v4134, %v4170
    %v4172 = vmul.f32 %v4135, %v4170
    %v4173 = vmul.f32 %v4136, %v4170
    %v4174 = vmul.f32 %v4137, %v4170
    %v4175 = vmul.f32 %v4138, %v4170
    %v4176 = vmul.f32 %v4139, %v4170
    %v4177 = vmul.f32 %v4140, %v4170
    %v4178 = vmul.f32 %v4141, %v4170
    %v4179 = vmul.f32 %v4142, %v4170
    %v4180 = vmul.f32 %v4143, %v4170
    %v4181 = vmul.f32 %v4144, %v4170
    %v4182 = vmul.f32 %v4145, %v4170
    %v4183 = vmul.f32 %v4146, %v4170
    %v4184 = vmul.f32 %v4147, %v4170
    %v4185 = vmul.f32 %v4148, %v4170
    %v4186 = vmul.f32 %v4149, %v4170
    %v4187 = vmul.f32 %v4150, %v4170
    %v4188 = vmul.f32 %v4151, %v4170
    %v4189 = vmul.f32 %v4152, %v4170
    %v4190 = vmul.f32 %v4153, %v4170
    %v4191 = vmul.f32 %v4154, %v4170
    %v4192 = vmul.f32 %v4155, %v4170
    %v4193 = vmul.f32 %v4156, %v4170
    %v4194 = vmul.f32 %v4157, %v4170
    %v4195 = vmul.f32 %v4158, %v4170
    %v4196 = vmul.f32 %v4159, %v4170
    %v4197 = vmul.f32 %v4160, %v4170
    %v4198 = vmul.f32 %v4161, %v4170
    %v4199 = vmul.f32 %v4162, %v4170
    %v4200 = vmul.f32 %v4163, %v4170
    %v4201 = vmul.f32 %v4164, %v4170
    %v4202 = vmul.f32 %v4165, %v4170
    %v4203 = vadd.f32 %v4102, %v4171
    %v4204 = vadd.f32 %v4103, %v4172
    %v4205 = vadd.f32 %v4104, %v4173
    %v4206 = vadd.f32 %v4105, %v4174
    %v4207 = vadd.f32 %v4106, %v4175
    %v4208 = vadd.f32 %v4107, %v4176
    %v4209 = vadd.f32 %v4108, %v4177
    %v4210 = vadd.f32 %v4109, %v4178
    %v4211 = vadd.f32 %v4110, %v4179
    %v4212 = vadd.f32 %v4111, %v4180
    %v4213 = vadd.f32 %v4112, %v4181
    %v4214 = vadd.f32 %v4113, %v4182
    %v4215 = vadd.f32 %v4114, %v4183
    %v4216 = vadd.f32 %v4115, %v4184
    %v4217 = vadd.f32 %v4116, %v4185
    %v4218 = vadd.f32 %v4117, %v4186
    %v4219 = vadd.f32 %v4118, %v4187
    %v4220 = vadd.f32 %v4119, %v4188
    %v4221 = vadd.f32 %v4120, %v4189
    %v4222 = vadd.f32 %v4121, %v4190
    %v4223 = vadd.f32 %v4122, %v4191
    %v4224 = vadd.f32 %v4123, %v4192
    %v4225 = vadd.f32 %v4124, %v4193
    %v4226 = vadd.f32 %v4125, %v4194
    %v4227 = vadd.f32 %v4126, %v4195
    %v4228 = vadd.f32 %v4127, %v4196
    %v4229 = vadd.f32 %v4128, %v4197
    %v4230 = vadd.f32 %v4129, %v4198
    %v4231 = vadd.f32 %v4130, %v4199
    %v4232 = vadd.f32 %v4131, %v4200
    %v4233 = vadd.f32 %v4132, %v4201
    %v4234 = vadd.f32 %v4133, %v4202
    %v4235 = vld [vmem:[%s101 + $0x8] sm:$0xff]
    %v4236 = vld [vmem:[%s101 + $0x10] sm:$0xff]
    %v4237 = vld [vmem:[%s101 + $0x28] sm:$0xff]
    %v4238 = vld [vmem:[%s101 + $0x30] sm:$0xff]
    %v4239 = vld [vmem:[%s101 + $0x48] sm:$0xff]
    %v4240 = vld [vmem:[%s101 + $0x50] sm:$0xff]
    %v4241 = vld [vmem:[%s101 + $0x68] sm:$0xff]
    %v4242 = vld [vmem:[%s101 + $0x70] sm:$0xff]
    %v4243 = vld [vmem:[%s101 + $0x88] sm:$0xff]
    %v4244 = vld [vmem:[%s101 + $0x90] sm:$0xff]
    %v4245 = vld [vmem:[%s101 + $0xa8] sm:$0xff]
    %v4246 = vld [vmem:[%s101 + $0xb0] sm:$0xff]
    %v4247 = vld [vmem:[%s101 + $0xc8] sm:$0xff]
    %v4248 = vld [vmem:[%s101 + $0xd0] sm:$0xff]
    %v4249 = vld [vmem:[%s101 + $0xe8] sm:$0xff]
    %v4250 = vld [vmem:[%s101 + $0xf0] sm:$0xff]
    %v4251 = vld [vmem:[%s101 + $0x108] sm:$0xff]
    %v4252 = vld [vmem:[%s101 + $0x110] sm:$0xff]
    %v4253 = vld [vmem:[%s101 + $0x128] sm:$0xff]
    %v4254 = vld [vmem:[%s101 + $0x130] sm:$0xff]
    %v4255 = vld [vmem:[%s101 + $0x148] sm:$0xff]
    %v4256 = vld [vmem:[%s101 + $0x150] sm:$0xff]
    %v4257 = vld [vmem:[%s101 + $0x168] sm:$0xff]
    %v4258 = vld [vmem:[%s101 + $0x170] sm:$0xff]
    %v4259 = vld [vmem:[%s101 + $0x188] sm:$0xff]
    %v4260 = vld [vmem:[%s101 + $0x190] sm:$0xff]
    %v4261 = vld [vmem:[%s101 + $0x1a8] sm:$0xff]
    %v4262 = vld [vmem:[%s101 + $0x1b0] sm:$0xff]
    %v4263 = vld [vmem:[%s101 + $0x1c8] sm:$0xff]
    %v4264 = vld [vmem:[%s101 + $0x1d0] sm:$0xff]
    %v4265 = vld [vmem:[%s101 + $0x1e8] sm:$0xff]
    %v4266 = vld [vmem:[%s101 + $0x1f0] sm:$0xff]
    %v4267 = vld [vmem:[%s1 + $0x19] sm:$0x1]
    %v4268 = vlaneseq
    %v4269 = vshrl.u32 %v4268, 7
    %v4270 = vsub.s32 0, %v4269
    %v4271 = vrot.slane %v4267, %v4270
    %v4272 = vmul.f32 %v4235, %v4271
    %v4273 = vmul.f32 %v4236, %v4271
    %v4274 = vmul.f32 %v4237, %v4271
    %v4275 = vmul.f32 %v4238, %v4271
    %v4276 = vmul.f32 %v4239, %v4271
    %v4277 = vmul.f32 %v4240, %v4271
    %v4278 = vmul.f32 %v4241, %v4271
    %v4279 = vmul.f32 %v4242, %v4271
    %v4280 = vmul.f32 %v4243, %v4271
    %v4281 = vmul.f32 %v4244, %v4271
    %v4282 = vmul.f32 %v4245, %v4271
    %v4283 = vmul.f32 %v4246, %v4271
    %v4284 = vmul.f32 %v4247, %v4271
    %v4285 = vmul.f32 %v4248, %v4271
    %v4286 = vmul.f32 %v4249, %v4271
    %v4287 = vmul.f32 %v4250, %v4271
    %v4288 = vmul.f32 %v4251, %v4271
    %v4289 = vmul.f32 %v4252, %v4271
    %v4290 = vmul.f32 %v4253, %v4271
    %v4291 = vmul.f32 %v4254, %v4271
    %v4292 = vmul.f32 %v4255, %v4271
    %v4293 = vmul.f32 %v4256, %v4271
    %v4294 = vmul.f32 %v4257, %v4271
    %v4295 = vmul.f32 %v4258, %v4271
    %v4296 = vmul.f32 %v4259, %v4271
    %v4297 = vmul.f32 %v4260, %v4271
    %v4298 = vmul.f32 %v4261, %v4271
    %v4299 = vmul.f32 %v4262, %v4271
    %v4300 = vmul.f32 %v4263, %v4271
    %v4301 = vmul.f32 %v4264, %v4271
    %v4302 = vmul.f32 %v4265, %v4271
    %v4303 = vmul.f32 %v4266, %v4271
    %v4304 = vadd.f32 %v4203, %v4272
    %v4305 = vadd.f32 %v4204, %v4273
    %v4306 = vadd.f32 %v4205, %v4274
    %v4307 = vadd.f32 %v4206, %v4275
    %v4308 = vadd.f32 %v4207, %v4276
    %v4309 = vadd.f32 %v4208, %v4277
    %v4310 = vadd.f32 %v4209, %v4278
    %v4311 = vadd.f32 %v4210, %v4279
    %v4312 = vadd.f32 %v4211, %v4280
    %v4313 = vadd.f32 %v4212, %v4281
    %v4314 = vadd.f32 %v4213, %v4282
    %v4315 = vadd.f32 %v4214, %v4283
    %v4316 = vadd.f32 %v4215, %v4284
    %v4317 = vadd.f32 %v4216, %v4285
    %v4318 = vadd.f32 %v4217, %v4286
    %v4319 = vadd.f32 %v4218, %v4287
    %v4320 = vadd.f32 %v4219, %v4288
    %v4321 = vadd.f32 %v4220, %v4289
    %v4322 = vadd.f32 %v4221, %v4290
    %v4323 = vadd.f32 %v4222, %v4291
    %v4324 = vadd.f32 %v4223, %v4292
    %v4325 = vadd.f32 %v4224, %v4293
    %v4326 = vadd.f32 %v4225, %v4294
    %v4327 = vadd.f32 %v4226, %v4295
    %v4328 = vadd.f32 %v4227, %v4296
    %v4329 = vadd.f32 %v4228, %v4297
    %v4330 = vadd.f32 %v4229, %v4298
    %v4331 = vadd.f32 %v4230, %v4299
    %v4332 = vadd.f32 %v4231, %v4300
    %v4333 = vadd.f32 %v4232, %v4301
    %v4334 = vadd.f32 %v4233, %v4302
    %v4335 = vadd.f32 %v4234, %v4303
    %v4336 = vld [vmem:[%s773 + $0x8] sm:$0xff]
    %v4337 = vld [vmem:[%s773 + $0x10] sm:$0xff]
    %v4338 = vld [vmem:[%s773 + $0x28] sm:$0xff]
    %v4339 = vld [vmem:[%s773 + $0x30] sm:$0xff]
    %v4340 = vld [vmem:[%s773 + $0x48] sm:$0xff]
    %v4341 = vld [vmem:[%s773 + $0x50] sm:$0xff]
    %v4342 = vld [vmem:[%s773 + $0x68] sm:$0xff]
    %v4343 = vld [vmem:[%s773 + $0x70] sm:$0xff]
    %v4344 = vld [vmem:[%s773 + $0x88] sm:$0xff]
    %v4345 = vld [vmem:[%s773 + $0x90] sm:$0xff]
    %v4346 = vld [vmem:[%s773 + $0xa8] sm:$0xff]
    %v4347 = vld [vmem:[%s773 + $0xb0] sm:$0xff]
    %v4348 = vld [vmem:[%s773 + $0xc8] sm:$0xff]
    %v4349 = vld [vmem:[%s773 + $0xd0] sm:$0xff]
    %v4350 = vld [vmem:[%s773 + $0xe8] sm:$0xff]
    %v4351 = vld [vmem:[%s773 + $0xf0] sm:$0xff]
    %v4352 = vld [vmem:[%s773 + $0x108] sm:$0xff]
    %v4353 = vld [vmem:[%s773 + $0x110] sm:$0xff]
    %v4354 = vld [vmem:[%s773 + $0x128] sm:$0xff]
    %v4355 = vld [vmem:[%s773 + $0x130] sm:$0xff]
    %v4356 = vld [vmem:[%s773 + $0x148] sm:$0xff]
    %v4357 = vld [vmem:[%s773 + $0x150] sm:$0xff]
    %v4358 = vld [vmem:[%s773 + $0x168] sm:$0xff]
    %v4359 = vld [vmem:[%s773 + $0x170] sm:$0xff]
    %v4360 = vld [vmem:[%s773 + $0x188] sm:$0xff]
    %v4361 = vld [vmem:[%s773 + $0x190] sm:$0xff]
    %v4362 = vld [vmem:[%s773 + $0x1a8] sm:$0xff]
    %v4363 = vld [vmem:[%s773 + $0x1b0] sm:$0xff]
    %v4364 = vld [vmem:[%s773 + $0x1c8] sm:$0xff]
    %v4365 = vld [vmem:[%s773 + $0x1d0] sm:$0xff]
    %v4366 = vld [vmem:[%s773 + $0x1e8] sm:$0xff]
    %v4367 = vld [vmem:[%s773 + $0x1f0] sm:$0xff]
    %v4368 = vld [vmem:[%s1 + $0x1a] sm:$0x1]
    %v4369 = vlaneseq
    %v4370 = vshrl.u32 %v4369, 7
    %v4371 = vsub.s32 0, %v4370
    %v4372 = vrot.slane %v4368, %v4371
    %v4373 = vmul.f32 %v4336, %v4372
    %v4374 = vmul.f32 %v4337, %v4372
    %v4375 = vmul.f32 %v4338, %v4372
    %v4376 = vmul.f32 %v4339, %v4372
    %v4377 = vmul.f32 %v4340, %v4372
    %v4378 = vmul.f32 %v4341, %v4372
    %v4379 = vmul.f32 %v4342, %v4372
    %v4380 = vmul.f32 %v4343, %v4372
    %v4381 = vmul.f32 %v4344, %v4372
    %v4382 = vmul.f32 %v4345, %v4372
    %v4383 = vmul.f32 %v4346, %v4372
    %v4384 = vmul.f32 %v4347, %v4372
    %v4385 = vmul.f32 %v4348, %v4372
    %v4386 = vmul.f32 %v4349, %v4372
    %v4387 = vmul.f32 %v4350, %v4372
    %v4388 = vmul.f32 %v4351, %v4372
    %v4389 = vmul.f32 %v4352, %v4372
    %v4390 = vmul.f32 %v4353, %v4372
    %v4391 = vmul.f32 %v4354, %v4372
    %v4392 = vmul.f32 %v4355, %v4372
    %v4393 = vmul.f32 %v4356, %v4372
    %v4394 = vmul.f32 %v4357, %v4372
    %v4395 = vmul.f32 %v4358, %v4372
    %v4396 = vmul.f32 %v4359, %v4372
    %v4397 = vmul.f32 %v4360, %v4372
    %v4398 = vmul.f32 %v4361, %v4372
    %v4399 = vmul.f32 %v4362, %v4372
    %v4400 = vmul.f32 %v4363, %v4372
    %v4401 = vmul.f32 %v4364, %v4372
    %v4402 = vmul.f32 %v4365, %v4372
    %v4403 = vmul.f32 %v4366, %v4372
    %v4404 = vmul.f32 %v4367, %v4372
    %v4405 = vadd.f32 %v4304, %v4373
    %v4406 = vadd.f32 %v4305, %v4374
    %v4407 = vadd.f32 %v4306, %v4375
    %v4408 = vadd.f32 %v4307, %v4376
    %v4409 = vadd.f32 %v4308, %v4377
    %v4410 = vadd.f32 %v4309, %v4378
    %v4411 = vadd.f32 %v4310, %v4379
    %v4412 = vadd.f32 %v4311, %v4380
    %v4413 = vadd.f32 %v4312, %v4381
    %v4414 = vadd.f32 %v4313, %v4382
    %v4415 = vadd.f32 %v4314, %v4383
    %v4416 = vadd.f32 %v4315, %v4384
    %v4417 = vadd.f32 %v4316, %v4385
    %v4418 = vadd.f32 %v4317, %v4386
    %v4419 = vadd.f32 %v4318, %v4387
    %v4420 = vadd.f32 %v4319, %v4388
    %v4421 = vadd.f32 %v4320, %v4389
    %v4422 = vadd.f32 %v4321, %v4390
    %v4423 = vadd.f32 %v4322, %v4391
    %v4424 = vadd.f32 %v4323, %v4392
    %v4425 = vadd.f32 %v4324, %v4393
    %v4426 = vadd.f32 %v4325, %v4394
    %v4427 = vadd.f32 %v4326, %v4395
    %v4428 = vadd.f32 %v4327, %v4396
    %v4429 = vadd.f32 %v4328, %v4397
    %v4430 = vadd.f32 %v4329, %v4398
    %v4431 = vadd.f32 %v4330, %v4399
    %v4432 = vadd.f32 %v4331, %v4400
    %v4433 = vadd.f32 %v4332, %v4401
    %v4434 = vadd.f32 %v4333, %v4402
    %v4435 = vadd.f32 %v4334, %v4403
    %v4436 = vadd.f32 %v4335, %v4404
    %s4437 = scalar_lea.vmem [#allocation2], 320
    %v4438 = vld [vmem:[%s4437 + $0x8] sm:$0xff]
    %v4439 = vld [vmem:[%s4437 + $0x10] sm:$0xff]
    %v4440 = vld [vmem:[%s4437 + $0x28] sm:$0xff]
    %v4441 = vld [vmem:[%s4437 + $0x30] sm:$0xff]
    %v4442 = vld [vmem:[%s4437 + $0x48] sm:$0xff]
    %v4443 = vld [vmem:[%s4437 + $0x50] sm:$0xff]
    %v4444 = vld [vmem:[%s4437 + $0x68] sm:$0xff]
    %v4445 = vld [vmem:[%s4437 + $0x70] sm:$0xff]
    %v4446 = vld [vmem:[%s4437 + $0x88] sm:$0xff]
    %v4447 = vld [vmem:[%s4437 + $0x90] sm:$0xff]
    %v4448 = vld [vmem:[%s4437 + $0xa8] sm:$0xff]
    %v4449 = vld [vmem:[%s4437 + $0xb0] sm:$0xff]
    %v4450 = vld [vmem:[%s4437 + $0xc8] sm:$0xff]
    %v4451 = vld [vmem:[%s4437 + $0xd0] sm:$0xff]
    %v4452 = vld [vmem:[%s4437 + $0xe8] sm:$0xff]
    %v4453 = vld [vmem:[%s4437 + $0xf0] sm:$0xff]
    %v4454 = vld [vmem:[%s4437 + $0x108] sm:$0xff]
    %v4455 = vld [vmem:[%s4437 + $0x110] sm:$0xff]
    %v4456 = vld [vmem:[%s4437 + $0x128] sm:$0xff]
    %v4457 = vld [vmem:[%s4437 + $0x130] sm:$0xff]
    %v4458 = vld [vmem:[%s4437 + $0x148] sm:$0xff]
    %v4459 = vld [vmem:[%s4437 + $0x150] sm:$0xff]
    %v4460 = vld [vmem:[%s4437 + $0x168] sm:$0xff]
    %v4461 = vld [vmem:[%s4437 + $0x170] sm:$0xff]
    %v4462 = vld [vmem:[%s4437 + $0x188] sm:$0xff]
    %v4463 = vld [vmem:[%s4437 + $0x190] sm:$0xff]
    %v4464 = vld [vmem:[%s4437 + $0x1a8] sm:$0xff]
    %v4465 = vld [vmem:[%s4437 + $0x1b0] sm:$0xff]
    %v4466 = vld [vmem:[%s4437 + $0x1c8] sm:$0xff]
    %v4467 = vld [vmem:[%s4437 + $0x1d0] sm:$0xff]
    %v4468 = vld [vmem:[%s4437 + $0x1e8] sm:$0xff]
    %v4469 = vld [vmem:[%s4437 + $0x1f0] sm:$0xff]
    %v4470 = vld [vmem:[%s1 + $0x1b] sm:$0x1]
    %v4471 = vlaneseq
    %v4472 = vshrl.u32 %v4471, 7
    %v4473 = vsub.s32 0, %v4472
    %v4474 = vrot.slane %v4470, %v4473
    %v4475 = vmul.f32 %v4438, %v4474
    %v4476 = vmul.f32 %v4439, %v4474
    %v4477 = vmul.f32 %v4440, %v4474
    %v4478 = vmul.f32 %v4441, %v4474
    %v4479 = vmul.f32 %v4442, %v4474
    %v4480 = vmul.f32 %v4443, %v4474
    %v4481 = vmul.f32 %v4444, %v4474
    %v4482 = vmul.f32 %v4445, %v4474
    %v4483 = vmul.f32 %v4446, %v4474
    %v4484 = vmul.f32 %v4447, %v4474
    %v4485 = vmul.f32 %v4448, %v4474
    %v4486 = vmul.f32 %v4449, %v4474
    %v4487 = vmul.f32 %v4450, %v4474
    %v4488 = vmul.f32 %v4451, %v4474
    %v4489 = vmul.f32 %v4452, %v4474
    %v4490 = vmul.f32 %v4453, %v4474
    %v4491 = vmul.f32 %v4454, %v4474
    %v4492 = vmul.f32 %v4455, %v4474
    %v4493 = vmul.f32 %v4456, %v4474
    %v4494 = vmul.f32 %v4457, %v4474
    %v4495 = vmul.f32 %v4458, %v4474
    %v4496 = vmul.f32 %v4459, %v4474
    %v4497 = vmul.f32 %v4460, %v4474
    %v4498 = vmul.f32 %v4461, %v4474
    %v4499 = vmul.f32 %v4462, %v4474
    %v4500 = vmul.f32 %v4463, %v4474
    %v4501 = vmul.f32 %v4464, %v4474
    %v4502 = vmul.f32 %v4465, %v4474
    %v4503 = vmul.f32 %v4466, %v4474
    %v4504 = vmul.f32 %v4467, %v4474
    %v4505 = vmul.f32 %v4468, %v4474
    %v4506 = vmul.f32 %v4469, %v4474
    %v4507 = vadd.f32 %v4405, %v4475
    %v4508 = vadd.f32 %v4406, %v4476
    %v4509 = vadd.f32 %v4407, %v4477
    %v4510 = vadd.f32 %v4408, %v4478
    %v4511 = vadd.f32 %v4409, %v4479
    %v4512 = vadd.f32 %v4410, %v4480
    %v4513 = vadd.f32 %v4411, %v4481
    %v4514 = vadd.f32 %v4412, %v4482
    %v4515 = vadd.f32 %v4413, %v4483
    %v4516 = vadd.f32 %v4414, %v4484
    %v4517 = vadd.f32 %v4415, %v4485
    %v4518 = vadd.f32 %v4416, %v4486
    %v4519 = vadd.f32 %v4417, %v4487
    %v4520 = vadd.f32 %v4418, %v4488
    %v4521 = vadd.f32 %v4419, %v4489
    %v4522 = vadd.f32 %v4420, %v4490
    %v4523 = vadd.f32 %v4421, %v4491
    %v4524 = vadd.f32 %v4422, %v4492
    %v4525 = vadd.f32 %v4423, %v4493
    %v4526 = vadd.f32 %v4424, %v4494
    %v4527 = vadd.f32 %v4425, %v4495
    %v4528 = vadd.f32 %v4426, %v4496
    %v4529 = vadd.f32 %v4427, %v4497
    %v4530 = vadd.f32 %v4428, %v4498
    %v4531 = vadd.f32 %v4429, %v4499
    %v4532 = vadd.f32 %v4430, %v4500
    %v4533 = vadd.f32 %v4431, %v4501
    %v4534 = vadd.f32 %v4432, %v4502
    %v4535 = vadd.f32 %v4433, %v4503
    %v4536 = vadd.f32 %v4434, %v4504
    %v4537 = vadd.f32 %v4435, %v4505
    %v4538 = vadd.f32 %v4436, %v4506
    %v4539 = vld [vmem:[%s2 + $0x3] sm:$0x1]
    %v4540 = vlaneseq
    %v4541 = vshrl.u32 %v4540, 7
    %v4542 = vsub.s32 0, %v4541
    %v4543 = vrot.slane %v4539, %v4542
    %v4544 = vadd.f32 %v4507, %v4543
    %v4545 = vadd.f32 %v4508, %v4543
    %v4546 = vadd.f32 %v4509, %v4543
    %v4547 = vadd.f32 %v4510, %v4543
    %v4548 = vadd.f32 %v4511, %v4543
    %v4549 = vadd.f32 %v4512, %v4543
    %v4550 = vadd.f32 %v4513, %v4543
    %v4551 = vadd.f32 %v4514, %v4543
    %v4552 = vadd.f32 %v4515, %v4543
    %v4553 = vadd.f32 %v4516, %v4543
    %v4554 = vadd.f32 %v4517, %v4543
    %v4555 = vadd.f32 %v4518, %v4543
    %v4556 = vadd.f32 %v4519, %v4543
    %v4557 = vadd.f32 %v4520, %v4543
    %v4558 = vadd.f32 %v4521, %v4543
    %v4559 = vadd.f32 %v4522, %v4543
    %v4560 = vadd.f32 %v4523, %v4543
    %v4561 = vadd.f32 %v4524, %v4543
    %v4562 = vadd.f32 %v4525, %v4543
    %v4563 = vadd.f32 %v4526, %v4543
    %v4564 = vadd.f32 %v4527, %v4543
    %v4565 = vadd.f32 %v4528, %v4543
    %v4566 = vadd.f32 %v4529, %v4543
    %v4567 = vadd.f32 %v4530, %v4543
    %v4568 = vadd.f32 %v4531, %v4543
    %v4569 = vadd.f32 %v4532, %v4543
    %v4570 = vadd.f32 %v4533, %v4543
    %v4571 = vadd.f32 %v4534, %v4543
    %v4572 = vadd.f32 %v4535, %v4543
    %v4573 = vadd.f32 %v4536, %v4543
    %v4574 = vadd.f32 %v4537, %v4543
    %v4575 = vadd.f32 %v4538, %v4543
    %v4576 = vadd.f32 %v2062, %v4544
    %v4577 = vadd.f32 %v2063, %v4545
    %v4578 = vadd.f32 %v2064, %v4546
    %v4579 = vadd.f32 %v2065, %v4547
    %v4580 = vadd.f32 %v2066, %v4548
    %v4581 = vadd.f32 %v2067, %v4549
    %v4582 = vadd.f32 %v2068, %v4550
    %v4583 = vadd.f32 %v2069, %v4551
    %v4584 = vadd.f32 %v2070, %v4552
    %v4585 = vadd.f32 %v2071, %v4553
    %v4586 = vadd.f32 %v2072, %v4554
    %v4587 = vadd.f32 %v2073, %v4555
    %v4588 = vadd.f32 %v2074, %v4556
    %v4589 = vadd.f32 %v2075, %v4557
    %v4590 = vadd.f32 %v2076, %v4558
    %v4591 = vadd.f32 %v2077, %v4559
    %v4592 = vadd.f32 %v2078, %v4560
    %v4593 = vadd.f32 %v2079, %v4561
    %v4594 = vadd.f32 %v2080, %v4562
    %v4595 = vadd.f32 %v2081, %v4563
    %v4596 = vadd.f32 %v2082, %v4564
    %v4597 = vadd.f32 %v2083, %v4565
    %v4598 = vadd.f32 %v2084, %v4566
    %v4599 = vadd.f32 %v2085, %v4567
    %v4600 = vadd.f32 %v2086, %v4568
    %v4601 = vadd.f32 %v2087, %v4569
    %v4602 = vadd.f32 %v2088, %v4570
    %v4603 = vadd.f32 %v2089, %v4571
    %v4604 = vadd.f32 %v2090, %v4572
    %v4605 = vadd.f32 %v2091, %v4573
    %v4606 = vadd.f32 %v2092, %v4574
    %v4607 = vadd.f32 %v2093, %v4575
    %4608 = vst.msk [vmem:[%s101 + $0x8] sm:$0xff] %vm35, %v3156
    %4609 = vst.msk [vmem:[%s101 + $0x10] sm:$0xff] %vm35, %v3157
    %4610 = vst.msk [vmem:[%s101 + $0x28] sm:$0xff] %vm35, %v3158
    %4611 = vst.msk [vmem:[%s101 + $0x30] sm:$0xff] %vm35, %v3159
    %4612 = vst.msk [vmem:[%s101 + $0x48] sm:$0xff] %vm35, %v3160
    %4613 = vst.msk [vmem:[%s101 + $0x50] sm:$0xff] %vm35, %v3161
    %4614 = vst.msk [vmem:[%s101 + $0x68] sm:$0xff] %vm35, %v3162
    %4615 = vst.msk [vmem:[%s101 + $0x70] sm:$0xff] %vm35, %v3163
    %4616 = vst.msk [vmem:[%s101 + $0x88] sm:$0xff] %vm35, %v3164
    %4617 = vst.msk [vmem:[%s101 + $0x90] sm:$0xff] %vm35, %v3165
    %4618 = vst.msk [vmem:[%s101 + $0xa8] sm:$0xff] %vm35, %v3166
    %4619 = vst.msk [vmem:[%s101 + $0xb0] sm:$0xff] %vm35, %v3167
    %4620 = vst.msk [vmem:[%s101 + $0xc8] sm:$0xff] %vm35, %v3168
    %4621 = vst.msk [vmem:[%s101 + $0xd0] sm:$0xff] %vm35, %v3169
    %4622 = vst.msk [vmem:[%s101 + $0xe8] sm:$0xff] %vm35, %v3170
    %4623 = vst.msk [vmem:[%s101 + $0xf0] sm:$0xff] %vm35, %v3171
    %4624 = vst.msk [vmem:[%s101 + $0x108] sm:$0xff] %vm35, %v3172
    %4625 = vst.msk [vmem:[%s101 + $0x110] sm:$0xff] %vm35, %v3173
    %4626 = vst.msk [vmem:[%s101 + $0x128] sm:$0xff] %vm35, %v3174
    %4627 = vst.msk [vmem:[%s101 + $0x130] sm:$0xff] %vm35, %v3175
    %4628 = vst.msk [vmem:[%s101 + $0x148] sm:$0xff] %vm35, %v3176
    %4629 = vst.msk [vmem:[%s101 + $0x150] sm:$0xff] %vm35, %v3177
    %4630 = vst.msk [vmem:[%s101 + $0x168] sm:$0xff] %vm35, %v3178
    %4631 = vst.msk [vmem:[%s101 + $0x170] sm:$0xff] %vm35, %v3179
    %4632 = vst.msk [vmem:[%s101 + $0x188] sm:$0xff] %vm35, %v3180
    %4633 = vst.msk [vmem:[%s101 + $0x190] sm:$0xff] %vm35, %v3181
    %4634 = vst.msk [vmem:[%s101 + $0x1a8] sm:$0xff] %vm35, %v3182
    %4635 = vst.msk [vmem:[%s101 + $0x1b0] sm:$0xff] %vm35, %v3183
    %4636 = vst.msk [vmem:[%s101 + $0x1c8] sm:$0xff] %vm35, %v3184
    %4637 = vst.msk [vmem:[%s101 + $0x1d0] sm:$0xff] %vm35, %v3185
    %4638 = vst.msk [vmem:[%s101 + $0x1e8] sm:$0xff] %vm35, %v3186
    %4639 = vst.msk [vmem:[%s101 + $0x1f0] sm:$0xff] %vm35, %v3187
    %v4640 = vld [vmem:[%s1146 + $0x8] sm:$0xff]
    %v4641 = vld [vmem:[%s1146 + $0x10] sm:$0xff]
    %v4642 = vld [vmem:[%s1146 + $0x28] sm:$0xff]
    %v4643 = vld [vmem:[%s1146 + $0x30] sm:$0xff]
    %v4644 = vld [vmem:[%s1146 + $0x48] sm:$0xff]
    %v4645 = vld [vmem:[%s1146 + $0x50] sm:$0xff]
    %v4646 = vld [vmem:[%s1146 + $0x68] sm:$0xff]
    %v4647 = vld [vmem:[%s1146 + $0x70] sm:$0xff]
    %v4648 = vld [vmem:[%s1146 + $0x88] sm:$0xff]
    %v4649 = vld [vmem:[%s1146 + $0x90] sm:$0xff]
    %v4650 = vld [vmem:[%s1146 + $0xa8] sm:$0xff]
    %v4651 = vld [vmem:[%s1146 + $0xb0] sm:$0xff]
    %v4652 = vld [vmem:[%s1146 + $0xc8] sm:$0xff]
    %v4653 = vld [vmem:[%s1146 + $0xd0] sm:$0xff]
    %v4654 = vld [vmem:[%s1146 + $0xe8] sm:$0xff]
    %v4655 = vld [vmem:[%s1146 + $0xf0] sm:$0xff]
    %v4656 = vld [vmem:[%s1146 + $0x108] sm:$0xff]
    %v4657 = vld [vmem:[%s1146 + $0x110] sm:$0xff]
    %v4658 = vld [vmem:[%s1146 + $0x128] sm:$0xff]
    %v4659 = vld [vmem:[%s1146 + $0x130] sm:$0xff]
    %v4660 = vld [vmem:[%s1146 + $0x148] sm:$0xff]
    %v4661 = vld [vmem:[%s1146 + $0x150] sm:$0xff]
    %v4662 = vld [vmem:[%s1146 + $0x168] sm:$0xff]
    %v4663 = vld [vmem:[%s1146 + $0x170] sm:$0xff]
    %v4664 = vld [vmem:[%s1146 + $0x188] sm:$0xff]
    %v4665 = vld [vmem:[%s1146 + $0x190] sm:$0xff]
    %v4666 = vld [vmem:[%s1146 + $0x1a8] sm:$0xff]
    %v4667 = vld [vmem:[%s1146 + $0x1b0] sm:$0xff]
    %v4668 = vld [vmem:[%s1146 + $0x1c8] sm:$0xff]
    %v4669 = vld [vmem:[%s1146 + $0x1d0] sm:$0xff]
    %v4670 = vld [vmem:[%s1146 + $0x1e8] sm:$0xff]
    %v4671 = vld [vmem:[%s1146 + $0x1f0] sm:$0xff]
    %v4672 = vld [vmem:[%s1 + $0x23] sm:$0x1]
    %v4673 = vlaneseq
    %v4674 = vshrl.u32 %v4673, 7
    %v4675 = vsub.s32 0, %v4674
    %v4676 = vrot.slane %v4672, %v4675
    %v4677 = vmul.f32 %v4640, %v4676
    %v4678 = vmul.f32 %v4641, %v4676
    %v4679 = vmul.f32 %v4642, %v4676
    %v4680 = vmul.f32 %v4643, %v4676
    %v4681 = vmul.f32 %v4644, %v4676
    %v4682 = vmul.f32 %v4645, %v4676
    %v4683 = vmul.f32 %v4646, %v4676
    %v4684 = vmul.f32 %v4647, %v4676
    %v4685 = vmul.f32 %v4648, %v4676
    %v4686 = vmul.f32 %v4649, %v4676
    %v4687 = vmul.f32 %v4650, %v4676
    %v4688 = vmul.f32 %v4651, %v4676
    %v4689 = vmul.f32 %v4652, %v4676
    %v4690 = vmul.f32 %v4653, %v4676
    %v4691 = vmul.f32 %v4654, %v4676
    %v4692 = vmul.f32 %v4655, %v4676
    %v4693 = vmul.f32 %v4656, %v4676
    %v4694 = vmul.f32 %v4657, %v4676
    %v4695 = vmul.f32 %v4658, %v4676
    %v4696 = vmul.f32 %v4659, %v4676
    %v4697 = vmul.f32 %v4660, %v4676
    %v4698 = vmul.f32 %v4661, %v4676
    %v4699 = vmul.f32 %v4662, %v4676
    %v4700 = vmul.f32 %v4663, %v4676
    %v4701 = vmul.f32 %v4664, %v4676
    %v4702 = vmul.f32 %v4665, %v4676
    %v4703 = vmul.f32 %v4666, %v4676
    %v4704 = vmul.f32 %v4667, %v4676
    %v4705 = vmul.f32 %v4668, %v4676
    %v4706 = vmul.f32 %v4669, %v4676
    %v4707 = vmul.f32 %v4670, %v4676
    %v4708 = vmul.f32 %v4671, %v4676
    %v4709 = vld [vmem:[%s4064 + $0x8] sm:$0xff]
    %v4710 = vld [vmem:[%s4064 + $0x10] sm:$0xff]
    %v4711 = vld [vmem:[%s4064 + $0x28] sm:$0xff]
    %v4712 = vld [vmem:[%s4064 + $0x30] sm:$0xff]
    %v4713 = vld [vmem:[%s4064 + $0x48] sm:$0xff]
    %v4714 = vld [vmem:[%s4064 + $0x50] sm:$0xff]
    %v4715 = vld [vmem:[%s4064 + $0x68] sm:$0xff]
    %v4716 = vld [vmem:[%s4064 + $0x70] sm:$0xff]
    %v4717 = vld [vmem:[%s4064 + $0x88] sm:$0xff]
    %v4718 = vld [vmem:[%s4064 + $0x90] sm:$0xff]
    %v4719 = vld [vmem:[%s4064 + $0xa8] sm:$0xff]
    %v4720 = vld [vmem:[%s4064 + $0xb0] sm:$0xff]
    %v4721 = vld [vmem:[%s4064 + $0xc8] sm:$0xff]
    %v4722 = vld [vmem:[%s4064 + $0xd0] sm:$0xff]
    %v4723 = vld [vmem:[%s4064 + $0xe8] sm:$0xff]
    %v4724 = vld [vmem:[%s4064 + $0xf0] sm:$0xff]
    %v4725 = vld [vmem:[%s4064 + $0x108] sm:$0xff]
    %v4726 = vld [vmem:[%s4064 + $0x110] sm:$0xff]
    %v4727 = vld [vmem:[%s4064 + $0x128] sm:$0xff]
    %v4728 = vld [vmem:[%s4064 + $0x130] sm:$0xff]
    %v4729 = vld [vmem:[%s4064 + $0x148] sm:$0xff]
    %v4730 = vld [vmem:[%s4064 + $0x150] sm:$0xff]
    %v4731 = vld [vmem:[%s4064 + $0x168] sm:$0xff]
    %v4732 = vld [vmem:[%s4064 + $0x170] sm:$0xff]
    %v4733 = vld [vmem:[%s4064 + $0x188] sm:$0xff]
    %v4734 = vld [vmem:[%s4064 + $0x190] sm:$0xff]
    %v4735 = vld [vmem:[%s4064 + $0x1a8] sm:$0xff]
    %v4736 = vld [vmem:[%s4064 + $0x1b0] sm:$0xff]
    %v4737 = vld [vmem:[%s4064 + $0x1c8] sm:$0xff]
    %v4738 = vld [vmem:[%s4064 + $0x1d0] sm:$0xff]
    %v4739 = vld [vmem:[%s4064 + $0x1e8] sm:$0xff]
    %v4740 = vld [vmem:[%s4064 + $0x1f0] sm:$0xff]
    %v4741 = vld [vmem:[%s1 + $0x24] sm:$0x1]
    %v4742 = vlaneseq
    %v4743 = vshrl.u32 %v4742, 7
    %v4744 = vsub.s32 0, %v4743
    %v4745 = vrot.slane %v4741, %v4744
    %v4746 = vmul.f32 %v4709, %v4745
    %v4747 = vmul.f32 %v4710, %v4745
    %v4748 = vmul.f32 %v4711, %v4745
    %v4749 = vmul.f32 %v4712, %v4745
    %v4750 = vmul.f32 %v4713, %v4745
    %v4751 = vmul.f32 %v4714, %v4745
    %v4752 = vmul.f32 %v4715, %v4745
    %v4753 = vmul.f32 %v4716, %v4745
    %v4754 = vmul.f32 %v4717, %v4745
    %v4755 = vmul.f32 %v4718, %v4745
    %v4756 = vmul.f32 %v4719, %v4745
    %v4757 = vmul.f32 %v4720, %v4745
    %v4758 = vmul.f32 %v4721, %v4745
    %v4759 = vmul.f32 %v4722, %v4745
    %v4760 = vmul.f32 %v4723, %v4745
    %v4761 = vmul.f32 %v4724, %v4745
    %v4762 = vmul.f32 %v4725, %v4745
    %v4763 = vmul.f32 %v4726, %v4745
    %v4764 = vmul.f32 %v4727, %v4745
    %v4765 = vmul.f32 %v4728, %v4745
    %v4766 = vmul.f32 %v4729, %v4745
    %v4767 = vmul.f32 %v4730, %v4745
    %v4768 = vmul.f32 %v4731, %v4745
    %v4769 = vmul.f32 %v4732, %v4745
    %v4770 = vmul.f32 %v4733, %v4745
    %v4771 = vmul.f32 %v4734, %v4745
    %v4772 = vmul.f32 %v4735, %v4745
    %v4773 = vmul.f32 %v4736, %v4745
    %v4774 = vmul.f32 %v4737, %v4745
    %v4775 = vmul.f32 %v4738, %v4745
    %v4776 = vmul.f32 %v4739, %v4745
    %v4777 = vmul.f32 %v4740, %v4745
    %v4778 = vadd.f32 %v4677, %v4746
    %v4779 = vadd.f32 %v4678, %v4747
    %v4780 = vadd.f32 %v4679, %v4748
    %v4781 = vadd.f32 %v4680, %v4749
    %v4782 = vadd.f32 %v4681, %v4750
    %v4783 = vadd.f32 %v4682, %v4751
    %v4784 = vadd.f32 %v4683, %v4752
    %v4785 = vadd.f32 %v4684, %v4753
    %v4786 = vadd.f32 %v4685, %v4754
    %v4787 = vadd.f32 %v4686, %v4755
    %v4788 = vadd.f32 %v4687, %v4756
    %v4789 = vadd.f32 %v4688, %v4757
    %v4790 = vadd.f32 %v4689, %v4758
    %v4791 = vadd.f32 %v4690, %v4759
    %v4792 = vadd.f32 %v4691, %v4760
    %v4793 = vadd.f32 %v4692, %v4761
    %v4794 = vadd.f32 %v4693, %v4762
    %v4795 = vadd.f32 %v4694, %v4763
    %v4796 = vadd.f32 %v4695, %v4764
    %v4797 = vadd.f32 %v4696, %v4765
    %v4798 = vadd.f32 %v4697, %v4766
    %v4799 = vadd.f32 %v4698, %v4767
    %v4800 = vadd.f32 %v4699, %v4768
    %v4801 = vadd.f32 %v4700, %v4769
    %v4802 = vadd.f32 %v4701, %v4770
    %v4803 = vadd.f32 %v4702, %v4771
    %v4804 = vadd.f32 %v4703, %v4772
    %v4805 = vadd.f32 %v4704, %v4773
    %v4806 = vadd.f32 %v4705, %v4774
    %v4807 = vadd.f32 %v4706, %v4775
    %v4808 = vadd.f32 %v4707, %v4776
    %v4809 = vadd.f32 %v4708, %v4777
    %v4810 = vld [vmem:[%s198 + $0x8] sm:$0xff]
    %v4811 = vld [vmem:[%s198 + $0x10] sm:$0xff]
    %v4812 = vld [vmem:[%s198 + $0x28] sm:$0xff]
    %v4813 = vld [vmem:[%s198 + $0x30] sm:$0xff]
    %v4814 = vld [vmem:[%s198 + $0x48] sm:$0xff]
    %v4815 = vld [vmem:[%s198 + $0x50] sm:$0xff]
    %v4816 = vld [vmem:[%s198 + $0x68] sm:$0xff]
    %v4817 = vld [vmem:[%s198 + $0x70] sm:$0xff]
    %v4818 = vld [vmem:[%s198 + $0x88] sm:$0xff]
    %v4819 = vld [vmem:[%s198 + $0x90] sm:$0xff]
    %v4820 = vld [vmem:[%s198 + $0xa8] sm:$0xff]
    %v4821 = vld [vmem:[%s198 + $0xb0] sm:$0xff]
    %v4822 = vld [vmem:[%s198 + $0xc8] sm:$0xff]
    %v4823 = vld [vmem:[%s198 + $0xd0] sm:$0xff]
    %v4824 = vld [vmem:[%s198 + $0xe8] sm:$0xff]
    %v4825 = vld [vmem:[%s198 + $0xf0] sm:$0xff]
    %v4826 = vld [vmem:[%s198 + $0x108] sm:$0xff]
    %v4827 = vld [vmem:[%s198 + $0x110] sm:$0xff]
    %v4828 = vld [vmem:[%s198 + $0x128] sm:$0xff]
    %v4829 = vld [vmem:[%s198 + $0x130] sm:$0xff]
    %v4830 = vld [vmem:[%s198 + $0x148] sm:$0xff]
    %v4831 = vld [vmem:[%s198 + $0x150] sm:$0xff]
    %v4832 = vld [vmem:[%s198 + $0x168] sm:$0xff]
    %v4833 = vld [vmem:[%s198 + $0x170] sm:$0xff]
    %v4834 = vld [vmem:[%s198 + $0x188] sm:$0xff]
    %v4835 = vld [vmem:[%s198 + $0x190] sm:$0xff]
    %v4836 = vld [vmem:[%s198 + $0x1a8] sm:$0xff]
    %v4837 = vld [vmem:[%s198 + $0x1b0] sm:$0xff]
    %v4838 = vld [vmem:[%s198 + $0x1c8] sm:$0xff]
    %v4839 = vld [vmem:[%s198 + $0x1d0] sm:$0xff]
    %v4840 = vld [vmem:[%s198 + $0x1e8] sm:$0xff]
    %v4841 = vld [vmem:[%s198 + $0x1f0] sm:$0xff]
    %v4842 = vld [vmem:[%s1 + $0x25] sm:$0x1]
    %v4843 = vlaneseq
    %v4844 = vshrl.u32 %v4843, 7
    %v4845 = vsub.s32 0, %v4844
    %v4846 = vrot.slane %v4842, %v4845
    %v4847 = vmul.f32 %v4810, %v4846
    %v4848 = vmul.f32 %v4811, %v4846
    %v4849 = vmul.f32 %v4812, %v4846
    %v4850 = vmul.f32 %v4813, %v4846
    %v4851 = vmul.f32 %v4814, %v4846
    %v4852 = vmul.f32 %v4815, %v4846
    %v4853 = vmul.f32 %v4816, %v4846
    %v4854 = vmul.f32 %v4817, %v4846
    %v4855 = vmul.f32 %v4818, %v4846
    %v4856 = vmul.f32 %v4819, %v4846
    %v4857 = vmul.f32 %v4820, %v4846
    %v4858 = vmul.f32 %v4821, %v4846
    %v4859 = vmul.f32 %v4822, %v4846
    %v4860 = vmul.f32 %v4823, %v4846
    %v4861 = vmul.f32 %v4824, %v4846
    %v4862 = vmul.f32 %v4825, %v4846
    %v4863 = vmul.f32 %v4826, %v4846
    %v4864 = vmul.f32 %v4827, %v4846
    %v4865 = vmul.f32 %v4828, %v4846
    %v4866 = vmul.f32 %v4829, %v4846
    %v4867 = vmul.f32 %v4830, %v4846
    %v4868 = vmul.f32 %v4831, %v4846
    %v4869 = vmul.f32 %v4832, %v4846
    %v4870 = vmul.f32 %v4833, %v4846
    %v4871 = vmul.f32 %v4834, %v4846
    %v4872 = vmul.f32 %v4835, %v4846
    %v4873 = vmul.f32 %v4836, %v4846
    %v4874 = vmul.f32 %v4837, %v4846
    %v4875 = vmul.f32 %v4838, %v4846
    %v4876 = vmul.f32 %v4839, %v4846
    %v4877 = vmul.f32 %v4840, %v4846
    %v4878 = vmul.f32 %v4841, %v4846
    %v4879 = vadd.f32 %v4778, %v4847
    %v4880 = vadd.f32 %v4779, %v4848
    %v4881 = vadd.f32 %v4780, %v4849
    %v4882 = vadd.f32 %v4781, %v4850
    %v4883 = vadd.f32 %v4782, %v4851
    %v4884 = vadd.f32 %v4783, %v4852
    %v4885 = vadd.f32 %v4784, %v4853
    %v4886 = vadd.f32 %v4785, %v4854
    %v4887 = vadd.f32 %v4786, %v4855
    %v4888 = vadd.f32 %v4787, %v4856
    %v4889 = vadd.f32 %v4788, %v4857
    %v4890 = vadd.f32 %v4789, %v4858
    %v4891 = vadd.f32 %v4790, %v4859
    %v4892 = vadd.f32 %v4791, %v4860
    %v4893 = vadd.f32 %v4792, %v4861
    %v4894 = vadd.f32 %v4793, %v4862
    %v4895 = vadd.f32 %v4794, %v4863
    %v4896 = vadd.f32 %v4795, %v4864
    %v4897 = vadd.f32 %v4796, %v4865
    %v4898 = vadd.f32 %v4797, %v4866
    %v4899 = vadd.f32 %v4798, %v4867
    %v4900 = vadd.f32 %v4799, %v4868
    %v4901 = vadd.f32 %v4800, %v4869
    %v4902 = vadd.f32 %v4801, %v4870
    %v4903 = vadd.f32 %v4802, %v4871
    %v4904 = vadd.f32 %v4803, %v4872
    %v4905 = vadd.f32 %v4804, %v4873
    %v4906 = vadd.f32 %v4805, %v4874
    %v4907 = vadd.f32 %v4806, %v4875
    %v4908 = vadd.f32 %v4807, %v4876
    %v4909 = vadd.f32 %v4808, %v4877
    %v4910 = vadd.f32 %v4809, %v4878
    %v4911 = vld [vmem:[%s101 + $0x8] sm:$0xff]
    %v4912 = vld [vmem:[%s101 + $0x10] sm:$0xff]
    %v4913 = vld [vmem:[%s101 + $0x28] sm:$0xff]
    %v4914 = vld [vmem:[%s101 + $0x30] sm:$0xff]
    %v4915 = vld [vmem:[%s101 + $0x48] sm:$0xff]
    %v4916 = vld [vmem:[%s101 + $0x50] sm:$0xff]
    %v4917 = vld [vmem:[%s101 + $0x68] sm:$0xff]
    %v4918 = vld [vmem:[%s101 + $0x70] sm:$0xff]
    %v4919 = vld [vmem:[%s101 + $0x88] sm:$0xff]
    %v4920 = vld [vmem:[%s101 + $0x90] sm:$0xff]
    %v4921 = vld [vmem:[%s101 + $0xa8] sm:$0xff]
    %v4922 = vld [vmem:[%s101 + $0xb0] sm:$0xff]
    %v4923 = vld [vmem:[%s101 + $0xc8] sm:$0xff]
    %v4924 = vld [vmem:[%s101 + $0xd0] sm:$0xff]
    %v4925 = vld [vmem:[%s101 + $0xe8] sm:$0xff]
    %v4926 = vld [vmem:[%s101 + $0xf0] sm:$0xff]
    %v4927 = vld [vmem:[%s101 + $0x108] sm:$0xff]
    %v4928 = vld [vmem:[%s101 + $0x110] sm:$0xff]
    %v4929 = vld [vmem:[%s101 + $0x128] sm:$0xff]
    %v4930 = vld [vmem:[%s101 + $0x130] sm:$0xff]
    %v4931 = vld [vmem:[%s101 + $0x148] sm:$0xff]
    %v4932 = vld [vmem:[%s101 + $0x150] sm:$0xff]
    %v4933 = vld [vmem:[%s101 + $0x168] sm:$0xff]
    %v4934 = vld [vmem:[%s101 + $0x170] sm:$0xff]
    %v4935 = vld [vmem:[%s101 + $0x188] sm:$0xff]
    %v4936 = vld [vmem:[%s101 + $0x190] sm:$0xff]
    %v4937 = vld [vmem:[%s101 + $0x1a8] sm:$0xff]
    %v4938 = vld [vmem:[%s101 + $0x1b0] sm:$0xff]
    %v4939 = vld [vmem:[%s101 + $0x1c8] sm:$0xff]
    %v4940 = vld [vmem:[%s101 + $0x1d0] sm:$0xff]
    %v4941 = vld [vmem:[%s101 + $0x1e8] sm:$0xff]
    %v4942 = vld [vmem:[%s101 + $0x1f0] sm:$0xff]
    %v4943 = vld [vmem:[%s1 + $0x26] sm:$0x1]
    %v4944 = vlaneseq
    %v4945 = vshrl.u32 %v4944, 7
    %v4946 = vsub.s32 0, %v4945
    %v4947 = vrot.slane %v4943, %v4946
    %v4948 = vmul.f32 %v4911, %v4947
    %v4949 = vmul.f32 %v4912, %v4947
    %v4950 = vmul.f32 %v4913, %v4947
    %v4951 = vmul.f32 %v4914, %v4947
    %v4952 = vmul.f32 %v4915, %v4947
    %v4953 = vmul.f32 %v4916, %v4947
    %v4954 = vmul.f32 %v4917, %v4947
    %v4955 = vmul.f32 %v4918, %v4947
    %v4956 = vmul.f32 %v4919, %v4947
    %v4957 = vmul.f32 %v4920, %v4947
    %v4958 = vmul.f32 %v4921, %v4947
    %v4959 = vmul.f32 %v4922, %v4947
    %v4960 = vmul.f32 %v4923, %v4947
    %v4961 = vmul.f32 %v4924, %v4947
    %v4962 = vmul.f32 %v4925, %v4947
    %v4963 = vmul.f32 %v4926, %v4947
    %v4964 = vmul.f32 %v4927, %v4947
    %v4965 = vmul.f32 %v4928, %v4947
    %v4966 = vmul.f32 %v4929, %v4947
    %v4967 = vmul.f32 %v4930, %v4947
    %v4968 = vmul.f32 %v4931, %v4947
    %v4969 = vmul.f32 %v4932, %v4947
    %v4970 = vmul.f32 %v4933, %v4947
    %v4971 = vmul.f32 %v4934, %v4947
    %v4972 = vmul.f32 %v4935, %v4947
    %v4973 = vmul.f32 %v4936, %v4947
    %v4974 = vmul.f32 %v4937, %v4947
    %v4975 = vmul.f32 %v4938, %v4947
    %v4976 = vmul.f32 %v4939, %v4947
    %v4977 = vmul.f32 %v4940, %v4947
    %v4978 = vmul.f32 %v4941, %v4947
    %v4979 = vmul.f32 %v4942, %v4947
    %v4980 = vadd.f32 %v4879, %v4948
    %v4981 = vadd.f32 %v4880, %v4949
    %v4982 = vadd.f32 %v4881, %v4950
    %v4983 = vadd.f32 %v4882, %v4951
    %v4984 = vadd.f32 %v4883, %v4952
    %v4985 = vadd.f32 %v4884, %v4953
    %v4986 = vadd.f32 %v4885, %v4954
    %v4987 = vadd.f32 %v4886, %v4955
    %v4988 = vadd.f32 %v4887, %v4956
    %v4989 = vadd.f32 %v4888, %v4957
    %v4990 = vadd.f32 %v4889, %v4958
    %v4991 = vadd.f32 %v4890, %v4959
    %v4992 = vadd.f32 %v4891, %v4960
    %v4993 = vadd.f32 %v4892, %v4961
    %v4994 = vadd.f32 %v4893, %v4962
    %v4995 = vadd.f32 %v4894, %v4963
    %v4996 = vadd.f32 %v4895, %v4964
    %v4997 = vadd.f32 %v4896, %v4965
    %v4998 = vadd.f32 %v4897, %v4966
    %v4999 = vadd.f32 %v4898, %v4967
    %v5000 = vadd.f32 %v4899, %v4968
    %v5001 = vadd.f32 %v4900, %v4969
    %v5002 = vadd.f32 %v4901, %v4970
    %v5003 = vadd.f32 %v4902, %v4971
    %v5004 = vadd.f32 %v4903, %v4972
    %v5005 = vadd.f32 %v4904, %v4973
    %v5006 = vadd.f32 %v4905, %v4974
    %v5007 = vadd.f32 %v4906, %v4975
    %v5008 = vadd.f32 %v4907, %v4976
    %v5009 = vadd.f32 %v4908, %v4977
    %v5010 = vadd.f32 %v4909, %v4978
    %v5011 = vadd.f32 %v4910, %v4979
    %v5012 = vld [vmem:[%s773 + $0x8] sm:$0xff]
    %v5013 = vld [vmem:[%s773 + $0x10] sm:$0xff]
    %v5014 = vld [vmem:[%s773 + $0x28] sm:$0xff]
    %v5015 = vld [vmem:[%s773 + $0x30] sm:$0xff]
    %v5016 = vld [vmem:[%s773 + $0x48] sm:$0xff]
    %v5017 = vld [vmem:[%s773 + $0x50] sm:$0xff]
    %v5018 = vld [vmem:[%s773 + $0x68] sm:$0xff]
    %v5019 = vld [vmem:[%s773 + $0x70] sm:$0xff]
    %v5020 = vld [vmem:[%s773 + $0x88] sm:$0xff]
    %v5021 = vld [vmem:[%s773 + $0x90] sm:$0xff]
    %v5022 = vld [vmem:[%s773 + $0xa8] sm:$0xff]
    %v5023 = vld [vmem:[%s773 + $0xb0] sm:$0xff]
    %v5024 = vld [vmem:[%s773 + $0xc8] sm:$0xff]
    %v5025 = vld [vmem:[%s773 + $0xd0] sm:$0xff]
    %v5026 = vld [vmem:[%s773 + $0xe8] sm:$0xff]
    %v5027 = vld [vmem:[%s773 + $0xf0] sm:$0xff]
    %v5028 = vld [vmem:[%s773 + $0x108] sm:$0xff]
    %v5029 = vld [vmem:[%s773 + $0x110] sm:$0xff]
    %v5030 = vld [vmem:[%s773 + $0x128] sm:$0xff]
    %v5031 = vld [vmem:[%s773 + $0x130] sm:$0xff]
    %v5032 = vld [vmem:[%s773 + $0x148] sm:$0xff]
    %v5033 = vld [vmem:[%s773 + $0x150] sm:$0xff]
    %v5034 = vld [vmem:[%s773 + $0x168] sm:$0xff]
    %v5035 = vld [vmem:[%s773 + $0x170] sm:$0xff]
    %v5036 = vld [vmem:[%s773 + $0x188] sm:$0xff]
    %v5037 = vld [vmem:[%s773 + $0x190] sm:$0xff]
    %v5038 = vld [vmem:[%s773 + $0x1a8] sm:$0xff]
    %v5039 = vld [vmem:[%s773 + $0x1b0] sm:$0xff]
    %v5040 = vld [vmem:[%s773 + $0x1c8] sm:$0xff]
    %v5041 = vld [vmem:[%s773 + $0x1d0] sm:$0xff]
    %v5042 = vld [vmem:[%s773 + $0x1e8] sm:$0xff]
    %v5043 = vld [vmem:[%s773 + $0x1f0] sm:$0xff]
    %v5044 = vld [vmem:[%s1 + $0x27] sm:$0x1]
    %v5045 = vlaneseq
    %v5046 = vshrl.u32 %v5045, 7
    %v5047 = vsub.s32 0, %v5046
    %v5048 = vrot.slane %v5044, %v5047
    %v5049 = vmul.f32 %v5012, %v5048
    %v5050 = vmul.f32 %v5013, %v5048
    %v5051 = vmul.f32 %v5014, %v5048
    %v5052 = vmul.f32 %v5015, %v5048
    %v5053 = vmul.f32 %v5016, %v5048
    %v5054 = vmul.f32 %v5017, %v5048
    %v5055 = vmul.f32 %v5018, %v5048
    %v5056 = vmul.f32 %v5019, %v5048
    %v5057 = vmul.f32 %v5020, %v5048
    %v5058 = vmul.f32 %v5021, %v5048
    %v5059 = vmul.f32 %v5022, %v5048
    %v5060 = vmul.f32 %v5023, %v5048
    %v5061 = vmul.f32 %v5024, %v5048
    %v5062 = vmul.f32 %v5025, %v5048
    %v5063 = vmul.f32 %v5026, %v5048
    %v5064 = vmul.f32 %v5027, %v5048
    %v5065 = vmul.f32 %v5028, %v5048
    %v5066 = vmul.f32 %v5029, %v5048
    %v5067 = vmul.f32 %v5030, %v5048
    %v5068 = vmul.f32 %v5031, %v5048
    %v5069 = vmul.f32 %v5032, %v5048
    %v5070 = vmul.f32 %v5033, %v5048
    %v5071 = vmul.f32 %v5034, %v5048
    %v5072 = vmul.f32 %v5035, %v5048
    %v5073 = vmul.f32 %v5036, %v5048
    %v5074 = vmul.f32 %v5037, %v5048
    %v5075 = vmul.f32 %v5038, %v5048
    %v5076 = vmul.f32 %v5039, %v5048
    %v5077 = vmul.f32 %v5040, %v5048
    %v5078 = vmul.f32 %v5041, %v5048
    %v5079 = vmul.f32 %v5042, %v5048
    %v5080 = vmul.f32 %v5043, %v5048
    %v5081 = vadd.f32 %v4980, %v5049
    %v5082 = vadd.f32 %v4981, %v5050
    %v5083 = vadd.f32 %v4982, %v5051
    %v5084 = vadd.f32 %v4983, %v5052
    %v5085 = vadd.f32 %v4984, %v5053
    %v5086 = vadd.f32 %v4985, %v5054
    %v5087 = vadd.f32 %v4986, %v5055
    %v5088 = vadd.f32 %v4987, %v5056
    %v5089 = vadd.f32 %v4988, %v5057
    %v5090 = vadd.f32 %v4989, %v5058
    %v5091 = vadd.f32 %v4990, %v5059
    %v5092 = vadd.f32 %v4991, %v5060
    %v5093 = vadd.f32 %v4992, %v5061
    %v5094 = vadd.f32 %v4993, %v5062
    %v5095 = vadd.f32 %v4994, %v5063
    %v5096 = vadd.f32 %v4995, %v5064
    %v5097 = vadd.f32 %v4996, %v5065
    %v5098 = vadd.f32 %v4997, %v5066
    %v5099 = vadd.f32 %v4998, %v5067
    %v5100 = vadd.f32 %v4999, %v5068
    %v5101 = vadd.f32 %v5000, %v5069
    %v5102 = vadd.f32 %v5001, %v5070
    %v5103 = vadd.f32 %v5002, %v5071
    %v5104 = vadd.f32 %v5003, %v5072
    %v5105 = vadd.f32 %v5004, %v5073
    %v5106 = vadd.f32 %v5005, %v5074
    %v5107 = vadd.f32 %v5006, %v5075
    %v5108 = vadd.f32 %v5007, %v5076
    %v5109 = vadd.f32 %v5008, %v5077
    %v5110 = vadd.f32 %v5009, %v5078
    %v5111 = vadd.f32 %v5010, %v5079
    %v5112 = vadd.f32 %v5011, %v5080
    %v5113 = vld [vmem:[%s4437 + $0x8] sm:$0xff]
    %v5114 = vld [vmem:[%s4437 + $0x10] sm:$0xff]
    %v5115 = vld [vmem:[%s4437 + $0x28] sm:$0xff]
    %v5116 = vld [vmem:[%s4437 + $0x30] sm:$0xff]
    %v5117 = vld [vmem:[%s4437 + $0x48] sm:$0xff]
    %v5118 = vld [vmem:[%s4437 + $0x50] sm:$0xff]
    %v5119 = vld [vmem:[%s4437 + $0x68] sm:$0xff]
    %v5120 = vld [vmem:[%s4437 + $0x70] sm:$0xff]
    %v5121 = vld [vmem:[%s4437 + $0x88] sm:$0xff]
    %v5122 = vld [vmem:[%s4437 + $0x90] sm:$0xff]
    %v5123 = vld [vmem:[%s4437 + $0xa8] sm:$0xff]
    %v5124 = vld [vmem:[%s4437 + $0xb0] sm:$0xff]
    %v5125 = vld [vmem:[%s4437 + $0xc8] sm:$0xff]
    %v5126 = vld [vmem:[%s4437 + $0xd0] sm:$0xff]
    %v5127 = vld [vmem:[%s4437 + $0xe8] sm:$0xff]
    %v5128 = vld [vmem:[%s4437 + $0xf0] sm:$0xff]
    %v5129 = vld [vmem:[%s4437 + $0x108] sm:$0xff]
    %v5130 = vld [vmem:[%s4437 + $0x110] sm:$0xff]
    %v5131 = vld [vmem:[%s4437 + $0x128] sm:$0xff]
    %v5132 = vld [vmem:[%s4437 + $0x130] sm:$0xff]
    %v5133 = vld [vmem:[%s4437 + $0x148] sm:$0xff]
    %v5134 = vld [vmem:[%s4437 + $0x150] sm:$0xff]
    %v5135 = vld [vmem:[%s4437 + $0x168] sm:$0xff]
    %v5136 = vld [vmem:[%s4437 + $0x170] sm:$0xff]
    %v5137 = vld [vmem:[%s4437 + $0x188] sm:$0xff]
    %v5138 = vld [vmem:[%s4437 + $0x190] sm:$0xff]
    %v5139 = vld [vmem:[%s4437 + $0x1a8] sm:$0xff]
    %v5140 = vld [vmem:[%s4437 + $0x1b0] sm:$0xff]
    %v5141 = vld [vmem:[%s4437 + $0x1c8] sm:$0xff]
    %v5142 = vld [vmem:[%s4437 + $0x1d0] sm:$0xff]
    %v5143 = vld [vmem:[%s4437 + $0x1e8] sm:$0xff]
    %v5144 = vld [vmem:[%s4437 + $0x1f0] sm:$0xff]
    %v5145 = vld [vmem:[%s1 + $0x28] sm:$0x1]
    %v5146 = vlaneseq
    %v5147 = vshrl.u32 %v5146, 7
    %v5148 = vsub.s32 0, %v5147
    %v5149 = vrot.slane %v5145, %v5148
    %v5150 = vmul.f32 %v5113, %v5149
    %v5151 = vmul.f32 %v5114, %v5149
    %v5152 = vmul.f32 %v5115, %v5149
    %v5153 = vmul.f32 %v5116, %v5149
    %v5154 = vmul.f32 %v5117, %v5149
    %v5155 = vmul.f32 %v5118, %v5149
    %v5156 = vmul.f32 %v5119, %v5149
    %v5157 = vmul.f32 %v5120, %v5149
    %v5158 = vmul.f32 %v5121, %v5149
    %v5159 = vmul.f32 %v5122, %v5149
    %v5160 = vmul.f32 %v5123, %v5149
    %v5161 = vmul.f32 %v5124, %v5149
    %v5162 = vmul.f32 %v5125, %v5149
    %v5163 = vmul.f32 %v5126, %v5149
    %v5164 = vmul.f32 %v5127, %v5149
    %v5165 = vmul.f32 %v5128, %v5149
    %v5166 = vmul.f32 %v5129, %v5149
    %v5167 = vmul.f32 %v5130, %v5149
    %v5168 = vmul.f32 %v5131, %v5149
    %v5169 = vmul.f32 %v5132, %v5149
    %v5170 = vmul.f32 %v5133, %v5149
    %v5171 = vmul.f32 %v5134, %v5149
    %v5172 = vmul.f32 %v5135, %v5149
    %v5173 = vmul.f32 %v5136, %v5149
    %v5174 = vmul.f32 %v5137, %v5149
    %v5175 = vmul.f32 %v5138, %v5149
    %v5176 = vmul.f32 %v5139, %v5149
    %v5177 = vmul.f32 %v5140, %v5149
    %v5178 = vmul.f32 %v5141, %v5149
    %v5179 = vmul.f32 %v5142, %v5149
    %v5180 = vmul.f32 %v5143, %v5149
    %v5181 = vmul.f32 %v5144, %v5149
    %v5182 = vadd.f32 %v5081, %v5150
    %v5183 = vadd.f32 %v5082, %v5151
    %v5184 = vadd.f32 %v5083, %v5152
    %v5185 = vadd.f32 %v5084, %v5153
    %v5186 = vadd.f32 %v5085, %v5154
    %v5187 = vadd.f32 %v5086, %v5155
    %v5188 = vadd.f32 %v5087, %v5156
    %v5189 = vadd.f32 %v5088, %v5157
    %v5190 = vadd.f32 %v5089, %v5158
    %v5191 = vadd.f32 %v5090, %v5159
    %v5192 = vadd.f32 %v5091, %v5160
    %v5193 = vadd.f32 %v5092, %v5161
    %v5194 = vadd.f32 %v5093, %v5162
    %v5195 = vadd.f32 %v5094, %v5163
    %v5196 = vadd.f32 %v5095, %v5164
    %v5197 = vadd.f32 %v5096, %v5165
    %v5198 = vadd.f32 %v5097, %v5166
    %v5199 = vadd.f32 %v5098, %v5167
    %v5200 = vadd.f32 %v5099, %v5168
    %v5201 = vadd.f32 %v5100, %v5169
    %v5202 = vadd.f32 %v5101, %v5170
    %v5203 = vadd.f32 %v5102, %v5171
    %v5204 = vadd.f32 %v5103, %v5172
    %v5205 = vadd.f32 %v5104, %v5173
    %v5206 = vadd.f32 %v5105, %v5174
    %v5207 = vadd.f32 %v5106, %v5175
    %v5208 = vadd.f32 %v5107, %v5176
    %v5209 = vadd.f32 %v5108, %v5177
    %v5210 = vadd.f32 %v5109, %v5178
    %v5211 = vadd.f32 %v5110, %v5179
    %v5212 = vadd.f32 %v5111, %v5180
    %v5213 = vadd.f32 %v5112, %v5181
    %v5214 = vld [vmem:[%s1721 + $0x8] sm:$0xff]
    %v5215 = vld [vmem:[%s1721 + $0x10] sm:$0xff]
    %v5216 = vld [vmem:[%s1721 + $0x28] sm:$0xff]
    %v5217 = vld [vmem:[%s1721 + $0x30] sm:$0xff]
    %v5218 = vld [vmem:[%s1721 + $0x48] sm:$0xff]
    %v5219 = vld [vmem:[%s1721 + $0x50] sm:$0xff]
    %v5220 = vld [vmem:[%s1721 + $0x68] sm:$0xff]
    %v5221 = vld [vmem:[%s1721 + $0x70] sm:$0xff]
    %v5222 = vld [vmem:[%s1721 + $0x88] sm:$0xff]
    %v5223 = vld [vmem:[%s1721 + $0x90] sm:$0xff]
    %v5224 = vld [vmem:[%s1721 + $0xa8] sm:$0xff]
    %v5225 = vld [vmem:[%s1721 + $0xb0] sm:$0xff]
    %v5226 = vld [vmem:[%s1721 + $0xc8] sm:$0xff]
    %v5227 = vld [vmem:[%s1721 + $0xd0] sm:$0xff]
    %v5228 = vld [vmem:[%s1721 + $0xe8] sm:$0xff]
    %v5229 = vld [vmem:[%s1721 + $0xf0] sm:$0xff]
    %v5230 = vld [vmem:[%s1721 + $0x108] sm:$0xff]
    %v5231 = vld [vmem:[%s1721 + $0x110] sm:$0xff]
    %v5232 = vld [vmem:[%s1721 + $0x128] sm:$0xff]
    %v5233 = vld [vmem:[%s1721 + $0x130] sm:$0xff]
    %v5234 = vld [vmem:[%s1721 + $0x148] sm:$0xff]
    %v5235 = vld [vmem:[%s1721 + $0x150] sm:$0xff]
    %v5236 = vld [vmem:[%s1721 + $0x168] sm:$0xff]
    %v5237 = vld [vmem:[%s1721 + $0x170] sm:$0xff]
    %v5238 = vld [vmem:[%s1721 + $0x188] sm:$0xff]
    %v5239 = vld [vmem:[%s1721 + $0x190] sm:$0xff]
    %v5240 = vld [vmem:[%s1721 + $0x1a8] sm:$0xff]
    %v5241 = vld [vmem:[%s1721 + $0x1b0] sm:$0xff]
    %v5242 = vld [vmem:[%s1721 + $0x1c8] sm:$0xff]
    %v5243 = vld [vmem:[%s1721 + $0x1d0] sm:$0xff]
    %v5244 = vld [vmem:[%s1721 + $0x1e8] sm:$0xff]
    %v5245 = vld [vmem:[%s1721 + $0x1f0] sm:$0xff]
    %v5246 = vld [vmem:[%s1 + $0x29] sm:$0x1]
    %v5247 = vlaneseq
    %v5248 = vshrl.u32 %v5247, 7
    %v5249 = vsub.s32 0, %v5248
    %v5250 = vrot.slane %v5246, %v5249
    %v5251 = vmul.f32 %v5214, %v5250
    %v5252 = vmul.f32 %v5215, %v5250
    %v5253 = vmul.f32 %v5216, %v5250
    %v5254 = vmul.f32 %v5217, %v5250
    %v5255 = vmul.f32 %v5218, %v5250
    %v5256 = vmul.f32 %v5219, %v5250
    %v5257 = vmul.f32 %v5220, %v5250
    %v5258 = vmul.f32 %v5221, %v5250
    %v5259 = vmul.f32 %v5222, %v5250
    %v5260 = vmul.f32 %v5223, %v5250
    %v5261 = vmul.f32 %v5224, %v5250
    %v5262 = vmul.f32 %v5225, %v5250
    %v5263 = vmul.f32 %v5226, %v5250
    %v5264 = vmul.f32 %v5227, %v5250
    %v5265 = vmul.f32 %v5228, %v5250
    %v5266 = vmul.f32 %v5229, %v5250
    %v5267 = vmul.f32 %v5230, %v5250
    %v5268 = vmul.f32 %v5231, %v5250
    %v5269 = vmul.f32 %v5232, %v5250
    %v5270 = vmul.f32 %v5233, %v5250
    %v5271 = vmul.f32 %v5234, %v5250
    %v5272 = vmul.f32 %v5235, %v5250
    %v5273 = vmul.f32 %v5236, %v5250
    %v5274 = vmul.f32 %v5237, %v5250
    %v5275 = vmul.f32 %v5238, %v5250
    %v5276 = vmul.f32 %v5239, %v5250
    %v5277 = vmul.f32 %v5240, %v5250
    %v5278 = vmul.f32 %v5241, %v5250
    %v5279 = vmul.f32 %v5242, %v5250
    %v5280 = vmul.f32 %v5243, %v5250
    %v5281 = vmul.f32 %v5244, %v5250
    %v5282 = vmul.f32 %v5245, %v5250
    %v5283 = vadd.f32 %v5182, %v5251
    %v5284 = vadd.f32 %v5183, %v5252
    %v5285 = vadd.f32 %v5184, %v5253
    %v5286 = vadd.f32 %v5185, %v5254
    %v5287 = vadd.f32 %v5186, %v5255
    %v5288 = vadd.f32 %v5187, %v5256
    %v5289 = vadd.f32 %v5188, %v5257
    %v5290 = vadd.f32 %v5189, %v5258
    %v5291 = vadd.f32 %v5190, %v5259
    %v5292 = vadd.f32 %v5191, %v5260
    %v5293 = vadd.f32 %v5192, %v5261
    %v5294 = vadd.f32 %v5193, %v5262
    %v5295 = vadd.f32 %v5194, %v5263
    %v5296 = vadd.f32 %v5195, %v5264
    %v5297 = vadd.f32 %v5196, %v5265
    %v5298 = vadd.f32 %v5197, %v5266
    %v5299 = vadd.f32 %v5198, %v5267
    %v5300 = vadd.f32 %v5199, %v5268
    %v5301 = vadd.f32 %v5200, %v5269
    %v5302 = vadd.f32 %v5201, %v5270
    %v5303 = vadd.f32 %v5202, %v5271
    %v5304 = vadd.f32 %v5203, %v5272
    %v5305 = vadd.f32 %v5204, %v5273
    %v5306 = vadd.f32 %v5205, %v5274
    %v5307 = vadd.f32 %v5206, %v5275
    %v5308 = vadd.f32 %v5207, %v5276
    %v5309 = vadd.f32 %v5208, %v5277
    %v5310 = vadd.f32 %v5209, %v5278
    %v5311 = vadd.f32 %v5210, %v5279
    %v5312 = vadd.f32 %v5211, %v5280
    %v5313 = vadd.f32 %v5212, %v5281
    %v5314 = vadd.f32 %v5213, %v5282
    %v5315 = vld [vmem:[%s2 + $0x5] sm:$0x1]
    %v5316 = vlaneseq
    %v5317 = vshrl.u32 %v5316, 7
    %v5318 = vsub.s32 0, %v5317
    %v5319 = vrot.slane %v5315, %v5318
    %v5320 = vadd.f32 %v5283, %v5319
    %v5321 = vadd.f32 %v5284, %v5319
    %v5322 = vadd.f32 %v5285, %v5319
    %v5323 = vadd.f32 %v5286, %v5319
    %v5324 = vadd.f32 %v5287, %v5319
    %v5325 = vadd.f32 %v5288, %v5319
    %v5326 = vadd.f32 %v5289, %v5319
    %v5327 = vadd.f32 %v5290, %v5319
    %v5328 = vadd.f32 %v5291, %v5319
    %v5329 = vadd.f32 %v5292, %v5319
    %v5330 = vadd.f32 %v5293, %v5319
    %v5331 = vadd.f32 %v5294, %v5319
    %v5332 = vadd.f32 %v5295, %v5319
    %v5333 = vadd.f32 %v5296, %v5319
    %v5334 = vadd.f32 %v5297, %v5319
    %v5335 = vadd.f32 %v5298, %v5319
    %v5336 = vadd.f32 %v5299, %v5319
    %v5337 = vadd.f32 %v5300, %v5319
    %v5338 = vadd.f32 %v5301, %v5319
    %v5339 = vadd.f32 %v5302, %v5319
    %v5340 = vadd.f32 %v5303, %v5319
    %v5341 = vadd.f32 %v5304, %v5319
    %v5342 = vadd.f32 %v5305, %v5319
    %v5343 = vadd.f32 %v5306, %v5319
    %v5344 = vadd.f32 %v5307, %v5319
    %v5345 = vadd.f32 %v5308, %v5319
    %v5346 = vadd.f32 %v5309, %v5319
    %v5347 = vadd.f32 %v5310, %v5319
    %v5348 = vadd.f32 %v5311, %v5319
    %v5349 = vadd.f32 %v5312, %v5319
    %v5350 = vadd.f32 %v5313, %v5319
    %v5351 = vadd.f32 %v5314, %v5319
    %v5352 = vadd.f32 %v4576, %v5320
    %v5353 = vadd.f32 %v4577, %v5321
    %v5354 = vadd.f32 %v4578, %v5322
    %v5355 = vadd.f32 %v4579, %v5323
    %v5356 = vadd.f32 %v4580, %v5324
    %v5357 = vadd.f32 %v4581, %v5325
    %v5358 = vadd.f32 %v4582, %v5326
    %v5359 = vadd.f32 %v4583, %v5327
    %v5360 = vadd.f32 %v4584, %v5328
    %v5361 = vadd.f32 %v4585, %v5329
    %v5362 = vadd.f32 %v4586, %v5330
    %v5363 = vadd.f32 %v4587, %v5331
    %v5364 = vadd.f32 %v4588, %v5332
    %v5365 = vadd.f32 %v4589, %v5333
    %v5366 = vadd.f32 %v4590, %v5334
    %v5367 = vadd.f32 %v4591, %v5335
    %v5368 = vadd.f32 %v4592, %v5336
    %v5369 = vadd.f32 %v4593, %v5337
    %v5370 = vadd.f32 %v4594, %v5338
    %v5371 = vadd.f32 %v4595, %v5339
    %v5372 = vadd.f32 %v4596, %v5340
    %v5373 = vadd.f32 %v4597, %v5341
    %v5374 = vadd.f32 %v4598, %v5342
    %v5375 = vadd.f32 %v4599, %v5343
    %v5376 = vadd.f32 %v4600, %v5344
    %v5377 = vadd.f32 %v4601, %v5345
    %v5378 = vadd.f32 %v4602, %v5346
    %v5379 = vadd.f32 %v4603, %v5347
    %v5380 = vadd.f32 %v4604, %v5348
    %v5381 = vadd.f32 %v4605, %v5349
    %v5382 = vadd.f32 %v4606, %v5350
    %v5383 = vadd.f32 %v4607, %v5351
    %5384 = vst.msk [vmem:[%s101 + $0x8] sm:$0xff] %vm35, %v4000
    %5385 = vst.msk [vmem:[%s101 + $0x10] sm:$0xff] %vm35, %v4001
    %5386 = vst.msk [vmem:[%s101 + $0x28] sm:$0xff] %vm35, %v4002
    %5387 = vst.msk [vmem:[%s101 + $0x30] sm:$0xff] %vm35, %v4003
    %5388 = vst.msk [vmem:[%s101 + $0x48] sm:$0xff] %vm35, %v4004
    %5389 = vst.msk [vmem:[%s101 + $0x50] sm:$0xff] %vm35, %v4005
    %5390 = vst.msk [vmem:[%s101 + $0x68] sm:$0xff] %vm35, %v4006
    %5391 = vst.msk [vmem:[%s101 + $0x70] sm:$0xff] %vm35, %v4007
    %5392 = vst.msk [vmem:[%s101 + $0x88] sm:$0xff] %vm35, %v4008
    %5393 = vst.msk [vmem:[%s101 + $0x90] sm:$0xff] %vm35, %v4009
    %5394 = vst.msk [vmem:[%s101 + $0xa8] sm:$0xff] %vm35, %v4010
    %5395 = vst.msk [vmem:[%s101 + $0xb0] sm:$0xff] %vm35, %v4011
    %5396 = vst.msk [vmem:[%s101 + $0xc8] sm:$0xff] %vm35, %v4012
    %5397 = vst.msk [vmem:[%s101 + $0xd0] sm:$0xff] %vm35, %v4013
    %5398 = vst.msk [vmem:[%s101 + $0xe8] sm:$0xff] %vm35, %v4014
    %5399 = vst.msk [vmem:[%s101 + $0xf0] sm:$0xff] %vm35, %v4015
    %5400 = vst.msk [vmem:[%s101 + $0x108] sm:$0xff] %vm35, %v4016
    %5401 = vst.msk [vmem:[%s101 + $0x110] sm:$0xff] %vm35, %v4017
    %5402 = vst.msk [vmem:[%s101 + $0x128] sm:$0xff] %vm35, %v4018
    %5403 = vst.msk [vmem:[%s101 + $0x130] sm:$0xff] %vm35, %v4019
    %5404 = vst.msk [vmem:[%s101 + $0x148] sm:$0xff] %vm35, %v4020
    %5405 = vst.msk [vmem:[%s101 + $0x150] sm:$0xff] %vm35, %v4021
    %5406 = vst.msk [vmem:[%s101 + $0x168] sm:$0xff] %vm35, %v4022
    %5407 = vst.msk [vmem:[%s101 + $0x170] sm:$0xff] %vm35, %v4023
    %5408 = vst.msk [vmem:[%s101 + $0x188] sm:$0xff] %vm35, %v4024
    %5409 = vst.msk [vmem:[%s101 + $0x190] sm:$0xff] %vm35, %v4025
    %5410 = vst.msk [vmem:[%s101 + $0x1a8] sm:$0xff] %vm35, %v4026
    %5411 = vst.msk [vmem:[%s101 + $0x1b0] sm:$0xff] %vm35, %v4027
    %5412 = vst.msk [vmem:[%s101 + $0x1c8] sm:$0xff] %vm35, %v4028
    %5413 = vst.msk [vmem:[%s101 + $0x1d0] sm:$0xff] %vm35, %v4029
    %5414 = vst.msk [vmem:[%s101 + $0x1e8] sm:$0xff] %vm35, %v4030
    %5415 = vst.msk [vmem:[%s101 + $0x1f0] sm:$0xff] %vm35, %v4031
    %s5416 = scalar_lea.vmem [#allocation2], 96
    %v5417 = vld [vmem:[%s5416 + $0x8] sm:$0xff]
    %v5418 = vld [vmem:[%s5416 + $0x10] sm:$0xff]
    %v5419 = vld [vmem:[%s5416 + $0x28] sm:$0xff]
    %v5420 = vld [vmem:[%s5416 + $0x30] sm:$0xff]
    %v5421 = vld [vmem:[%s5416 + $0x48] sm:$0xff]
    %v5422 = vld [vmem:[%s5416 + $0x50] sm:$0xff]
    %v5423 = vld [vmem:[%s5416 + $0x68] sm:$0xff]
    %v5424 = vld [vmem:[%s5416 + $0x70] sm:$0xff]
    %v5425 = vld [vmem:[%s5416 + $0x88] sm:$0xff]
    %v5426 = vld [vmem:[%s5416 + $0x90] sm:$0xff]
    %v5427 = vld [vmem:[%s5416 + $0xa8] sm:$0xff]
    %v5428 = vld [vmem:[%s5416 + $0xb0] sm:$0xff]
    %v5429 = vld [vmem:[%s5416 + $0xc8] sm:$0xff]
    %v5430 = vld [vmem:[%s5416 + $0xd0] sm:$0xff]
    %v5431 = vld [vmem:[%s5416 + $0xe8] sm:$0xff]
    %v5432 = vld [vmem:[%s5416 + $0xf0] sm:$0xff]
    %v5433 = vld [vmem:[%s5416 + $0x108] sm:$0xff]
    %v5434 = vld [vmem:[%s5416 + $0x110] sm:$0xff]
    %v5435 = vld [vmem:[%s5416 + $0x128] sm:$0xff]
    %v5436 = vld [vmem:[%s5416 + $0x130] sm:$0xff]
    %v5437 = vld [vmem:[%s5416 + $0x148] sm:$0xff]
    %v5438 = vld [vmem:[%s5416 + $0x150] sm:$0xff]
    %v5439 = vld [vmem:[%s5416 + $0x168] sm:$0xff]
    %v5440 = vld [vmem:[%s5416 + $0x170] sm:$0xff]
    %v5441 = vld [vmem:[%s5416 + $0x188] sm:$0xff]
    %v5442 = vld [vmem:[%s5416 + $0x190] sm:$0xff]
    %v5443 = vld [vmem:[%s5416 + $0x1a8] sm:$0xff]
    %v5444 = vld [vmem:[%s5416 + $0x1b0] sm:$0xff]
    %v5445 = vld [vmem:[%s5416 + $0x1c8] sm:$0xff]
    %v5446 = vld [vmem:[%s5416 + $0x1d0] sm:$0xff]
    %v5447 = vld [vmem:[%s5416 + $0x1e8] sm:$0xff]
    %v5448 = vld [vmem:[%s5416 + $0x1f0] sm:$0xff]
    %v5449 = vld [vmem:[%s1 + $0x35] sm:$0x1]
    %v5450 = vlaneseq
    %v5451 = vshrl.u32 %v5450, 7
    %v5452 = vsub.s32 0, %v5451
    %v5453 = vrot.slane %v5449, %v5452
    %v5454 = vmul.f32 %v5417, %v5453
    %v5455 = vmul.f32 %v5418, %v5453
    %v5456 = vmul.f32 %v5419, %v5453
    %v5457 = vmul.f32 %v5420, %v5453
    %v5458 = vmul.f32 %v5421, %v5453
    %v5459 = vmul.f32 %v5422, %v5453
    %v5460 = vmul.f32 %v5423, %v5453
    %v5461 = vmul.f32 %v5424, %v5453
    %v5462 = vmul.f32 %v5425, %v5453
    %v5463 = vmul.f32 %v5426, %v5453
    %v5464 = vmul.f32 %v5427, %v5453
    %v5465 = vmul.f32 %v5428, %v5453
    %v5466 = vmul.f32 %v5429, %v5453
    %v5467 = vmul.f32 %v5430, %v5453
    %v5468 = vmul.f32 %v5431, %v5453
    %v5469 = vmul.f32 %v5432, %v5453
    %v5470 = vmul.f32 %v5433, %v5453
    %v5471 = vmul.f32 %v5434, %v5453
    %v5472 = vmul.f32 %v5435, %v5453
    %v5473 = vmul.f32 %v5436, %v5453
    %v5474 = vmul.f32 %v5437, %v5453
    %v5475 = vmul.f32 %v5438, %v5453
    %v5476 = vmul.f32 %v5439, %v5453
    %v5477 = vmul.f32 %v5440, %v5453
    %v5478 = vmul.f32 %v5441, %v5453
    %v5479 = vmul.f32 %v5442, %v5453
    %v5480 = vmul.f32 %v5443, %v5453
    %v5481 = vmul.f32 %v5444, %v5453
    %v5482 = vmul.f32 %v5445, %v5453
    %v5483 = vmul.f32 %v5446, %v5453
    %v5484 = vmul.f32 %v5447, %v5453
    %v5485 = vmul.f32 %v5448, %v5453
    %s5486 = scalar_lea.vmem [#allocation2], 128
    %v5487 = vld [vmem:[%s5486 + $0x8] sm:$0xff]
    %v5488 = vld [vmem:[%s5486 + $0x10] sm:$0xff]
    %v5489 = vld [vmem:[%s5486 + $0x28] sm:$0xff]
    %v5490 = vld [vmem:[%s5486 + $0x30] sm:$0xff]
    %v5491 = vld [vmem:[%s5486 + $0x48] sm:$0xff]
    %v5492 = vld [vmem:[%s5486 + $0x50] sm:$0xff]
    %v5493 = vld [vmem:[%s5486 + $0x68] sm:$0xff]
    %v5494 = vld [vmem:[%s5486 + $0x70] sm:$0xff]
    %v5495 = vld [vmem:[%s5486 + $0x88] sm:$0xff]
    %v5496 = vld [vmem:[%s5486 + $0x90] sm:$0xff]
    %v5497 = vld [vmem:[%s5486 + $0xa8] sm:$0xff]
    %v5498 = vld [vmem:[%s5486 + $0xb0] sm:$0xff]
    %v5499 = vld [vmem:[%s5486 + $0xc8] sm:$0xff]
    %v5500 = vld [vmem:[%s5486 + $0xd0] sm:$0xff]
    %v5501 = vld [vmem:[%s5486 + $0xe8] sm:$0xff]
    %v5502 = vld [vmem:[%s5486 + $0xf0] sm:$0xff]
    %v5503 = vld [vmem:[%s5486 + $0x108] sm:$0xff]
    %v5504 = vld [vmem:[%s5486 + $0x110] sm:$0xff]
    %v5505 = vld [vmem:[%s5486 + $0x128] sm:$0xff]
    %v5506 = vld [vmem:[%s5486 + $0x130] sm:$0xff]
    %v5507 = vld [vmem:[%s5486 + $0x148] sm:$0xff]
    %v5508 = vld [vmem:[%s5486 + $0x150] sm:$0xff]
    %v5509 = vld [vmem:[%s5486 + $0x168] sm:$0xff]
    %v5510 = vld [vmem:[%s5486 + $0x170] sm:$0xff]
    %v5511 = vld [vmem:[%s5486 + $0x188] sm:$0xff]
    %v5512 = vld [vmem:[%s5486 + $0x190] sm:$0xff]
    %v5513 = vld [vmem:[%s5486 + $0x1a8] sm:$0xff]
    %v5514 = vld [vmem:[%s5486 + $0x1b0] sm:$0xff]
    %v5515 = vld [vmem:[%s5486 + $0x1c8] sm:$0xff]
    %v5516 = vld [vmem:[%s5486 + $0x1d0] sm:$0xff]
    %v5517 = vld [vmem:[%s5486 + $0x1e8] sm:$0xff]
    %v5518 = vld [vmem:[%s5486 + $0x1f0] sm:$0xff]
    %v5519 = vld [vmem:[%s1 + $0x36] sm:$0x1]
    %v5520 = vlaneseq
    %v5521 = vshrl.u32 %v5520, 7
    %v5522 = vsub.s32 0, %v5521
    %v5523 = vrot.slane %v5519, %v5522
    %v5524 = vmul.f32 %v5487, %v5523
    %v5525 = vmul.f32 %v5488, %v5523
    %v5526 = vmul.f32 %v5489, %v5523
    %v5527 = vmul.f32 %v5490, %v5523
    %v5528 = vmul.f32 %v5491, %v5523
    %v5529 = vmul.f32 %v5492, %v5523
    %v5530 = vmul.f32 %v5493, %v5523
    %v5531 = vmul.f32 %v5494, %v5523
    %v5532 = vmul.f32 %v5495, %v5523
    %v5533 = vmul.f32 %v5496, %v5523
    %v5534 = vmul.f32 %v5497, %v5523
    %v5535 = vmul.f32 %v5498, %v5523
    %v5536 = vmul.f32 %v5499, %v5523
    %v5537 = vmul.f32 %v5500, %v5523
    %v5538 = vmul.f32 %v5501, %v5523
    %v5539 = vmul.f32 %v5502, %v5523
    %v5540 = vmul.f32 %v5503, %v5523
    %v5541 = vmul.f32 %v5504, %v5523
    %v5542 = vmul.f32 %v5505, %v5523
    %v5543 = vmul.f32 %v5506, %v5523
    %v5544 = vmul.f32 %v5507, %v5523
    %v5545 = vmul.f32 %v5508, %v5523
    %v5546 = vmul.f32 %v5509, %v5523
    %v5547 = vmul.f32 %v5510, %v5523
    %v5548 = vmul.f32 %v5511, %v5523
    %v5549 = vmul.f32 %v5512, %v5523
    %v5550 = vmul.f32 %v5513, %v5523
    %v5551 = vmul.f32 %v5514, %v5523
    %v5552 = vmul.f32 %v5515, %v5523
    %v5553 = vmul.f32 %v5516, %v5523
    %v5554 = vmul.f32 %v5517, %v5523
    %v5555 = vmul.f32 %v5518, %v5523
    %v5556 = vadd.f32 %v5454, %v5524
    %v5557 = vadd.f32 %v5455, %v5525
    %v5558 = vadd.f32 %v5456, %v5526
    %v5559 = vadd.f32 %v5457, %v5527
    %v5560 = vadd.f32 %v5458, %v5528
    %v5561 = vadd.f32 %v5459, %v5529
    %v5562 = vadd.f32 %v5460, %v5530
    %v5563 = vadd.f32 %v5461, %v5531
    %v5564 = vadd.f32 %v5462, %v5532
    %v5565 = vadd.f32 %v5463, %v5533
    %v5566 = vadd.f32 %v5464, %v5534
    %v5567 = vadd.f32 %v5465, %v5535
    %v5568 = vadd.f32 %v5466, %v5536
    %v5569 = vadd.f32 %v5467, %v5537
    %v5570 = vadd.f32 %v5468, %v5538
    %v5571 = vadd.f32 %v5469, %v5539
    %v5572 = vadd.f32 %v5470, %v5540
    %v5573 = vadd.f32 %v5471, %v5541
    %v5574 = vadd.f32 %v5472, %v5542
    %v5575 = vadd.f32 %v5473, %v5543
    %v5576 = vadd.f32 %v5474, %v5544
    %v5577 = vadd.f32 %v5475, %v5545
    %v5578 = vadd.f32 %v5476, %v5546
    %v5579 = vadd.f32 %v5477, %v5547
    %v5580 = vadd.f32 %v5478, %v5548
    %v5581 = vadd.f32 %v5479, %v5549
    %v5582 = vadd.f32 %v5480, %v5550
    %v5583 = vadd.f32 %v5481, %v5551
    %v5584 = vadd.f32 %v5482, %v5552
    %v5585 = vadd.f32 %v5483, %v5553
    %v5586 = vadd.f32 %v5484, %v5554
    %v5587 = vadd.f32 %v5485, %v5555
    %v5588 = vld [vmem:[%s1146 + $0x8] sm:$0xff]
    %v5589 = vld [vmem:[%s1146 + $0x10] sm:$0xff]
    %v5590 = vld [vmem:[%s1146 + $0x28] sm:$0xff]
    %v5591 = vld [vmem:[%s1146 + $0x30] sm:$0xff]
    %v5592 = vld [vmem:[%s1146 + $0x48] sm:$0xff]
    %v5593 = vld [vmem:[%s1146 + $0x50] sm:$0xff]
    %v5594 = vld [vmem:[%s1146 + $0x68] sm:$0xff]
    %v5595 = vld [vmem:[%s1146 + $0x70] sm:$0xff]
    %v5596 = vld [vmem:[%s1146 + $0x88] sm:$0xff]
    %v5597 = vld [vmem:[%s1146 + $0x90] sm:$0xff]
    %v5598 = vld [vmem:[%s1146 + $0xa8] sm:$0xff]
    %v5599 = vld [vmem:[%s1146 + $0xb0] sm:$0xff]
    %v5600 = vld [vmem:[%s1146 + $0xc8] sm:$0xff]
    %v5601 = vld [vmem:[%s1146 + $0xd0] sm:$0xff]
    %v5602 = vld [vmem:[%s1146 + $0xe8] sm:$0xff]
    %v5603 = vld [vmem:[%s1146 + $0xf0] sm:$0xff]
    %v5604 = vld [vmem:[%s1146 + $0x108] sm:$0xff]
    %v5605 = vld [vmem:[%s1146 + $0x110] sm:$0xff]
    %v5606 = vld [vmem:[%s1146 + $0x128] sm:$0xff]
    %v5607 = vld [vmem:[%s1146 + $0x130] sm:$0xff]
    %v5608 = vld [vmem:[%s1146 + $0x148] sm:$0xff]
    %v5609 = vld [vmem:[%s1146 + $0x150] sm:$0xff]
    %v5610 = vld [vmem:[%s1146 + $0x168] sm:$0xff]
    %v5611 = vld [vmem:[%s1146 + $0x170] sm:$0xff]
    %v5612 = vld [vmem:[%s1146 + $0x188] sm:$0xff]
    %v5613 = vld [vmem:[%s1146 + $0x190] sm:$0xff]
    %v5614 = vld [vmem:[%s1146 + $0x1a8] sm:$0xff]
    %v5615 = vld [vmem:[%s1146 + $0x1b0] sm:$0xff]
    %v5616 = vld [vmem:[%s1146 + $0x1c8] sm:$0xff]
    %v5617 = vld [vmem:[%s1146 + $0x1d0] sm:$0xff]
    %v5618 = vld [vmem:[%s1146 + $0x1e8] sm:$0xff]
    %v5619 = vld [vmem:[%s1146 + $0x1f0] sm:$0xff]
    %v5620 = vld [vmem:[%s1 + $0x37] sm:$0x1]
    %v5621 = vlaneseq
    %v5622 = vshrl.u32 %v5621, 7
    %v5623 = vsub.s32 0, %v5622
    %v5624 = vrot.slane %v5620, %v5623
    %v5625 = vmul.f32 %v5588, %v5624
    %v5626 = vmul.f32 %v5589, %v5624
    %v5627 = vmul.f32 %v5590, %v5624
    %v5628 = vmul.f32 %v5591, %v5624
    %v5629 = vmul.f32 %v5592, %v5624
    %v5630 = vmul.f32 %v5593, %v5624
    %v5631 = vmul.f32 %v5594, %v5624
    %v5632 = vmul.f32 %v5595, %v5624
    %v5633 = vmul.f32 %v5596, %v5624
    %v5634 = vmul.f32 %v5597, %v5624
    %v5635 = vmul.f32 %v5598, %v5624
    %v5636 = vmul.f32 %v5599, %v5624
    %v5637 = vmul.f32 %v5600, %v5624
    %v5638 = vmul.f32 %v5601, %v5624
    %v5639 = vmul.f32 %v5602, %v5624
    %v5640 = vmul.f32 %v5603, %v5624
    %v5641 = vmul.f32 %v5604, %v5624
    %v5642 = vmul.f32 %v5605, %v5624
    %v5643 = vmul.f32 %v5606, %v5624
    %v5644 = vmul.f32 %v5607, %v5624
    %v5645 = vmul.f32 %v5608, %v5624
    %v5646 = vmul.f32 %v5609, %v5624
    %v5647 = vmul.f32 %v5610, %v5624
    %v5648 = vmul.f32 %v5611, %v5624
    %v5649 = vmul.f32 %v5612, %v5624
    %v5650 = vmul.f32 %v5613, %v5624
    %v5651 = vmul.f32 %v5614, %v5624
    %v5652 = vmul.f32 %v5615, %v5624
    %v5653 = vmul.f32 %v5616, %v5624
    %v5654 = vmul.f32 %v5617, %v5624
    %v5655 = vmul.f32 %v5618, %v5624
    %v5656 = vmul.f32 %v5619, %v5624
    %v5657 = vadd.f32 %v5556, %v5625
    %v5658 = vadd.f32 %v5557, %v5626
    %v5659 = vadd.f32 %v5558, %v5627
    %v5660 = vadd.f32 %v5559, %v5628
    %v5661 = vadd.f32 %v5560, %v5629
    %v5662 = vadd.f32 %v5561, %v5630
    %v5663 = vadd.f32 %v5562, %v5631
    %v5664 = vadd.f32 %v5563, %v5632
    %v5665 = vadd.f32 %v5564, %v5633
    %v5666 = vadd.f32 %v5565, %v5634
    %v5667 = vadd.f32 %v5566, %v5635
    %v5668 = vadd.f32 %v5567, %v5636
    %v5669 = vadd.f32 %v5568, %v5637
    %v5670 = vadd.f32 %v5569, %v5638
    %v5671 = vadd.f32 %v5570, %v5639
    %v5672 = vadd.f32 %v5571, %v5640
    %v5673 = vadd.f32 %v5572, %v5641
    %v5674 = vadd.f32 %v5573, %v5642
    %v5675 = vadd.f32 %v5574, %v5643
    %v5676 = vadd.f32 %v5575, %v5644
    %v5677 = vadd.f32 %v5576, %v5645
    %v5678 = vadd.f32 %v5577, %v5646
    %v5679 = vadd.f32 %v5578, %v5647
    %v5680 = vadd.f32 %v5579, %v5648
    %v5681 = vadd.f32 %v5580, %v5649
    %v5682 = vadd.f32 %v5581, %v5650
    %v5683 = vadd.f32 %v5582, %v5651
    %v5684 = vadd.f32 %v5583, %v5652
    %v5685 = vadd.f32 %v5584, %v5653
    %v5686 = vadd.f32 %v5585, %v5654
    %v5687 = vadd.f32 %v5586, %v5655
    %v5688 = vadd.f32 %v5587, %v5656
    %v5689 = vld [vmem:[%s4064 + $0x8] sm:$0xff]
    %v5690 = vld [vmem:[%s4064 + $0x10] sm:$0xff]
    %v5691 = vld [vmem:[%s4064 + $0x28] sm:$0xff]
    %v5692 = vld [vmem:[%s4064 + $0x30] sm:$0xff]
    %v5693 = vld [vmem:[%s4064 + $0x48] sm:$0xff]
    %v5694 = vld [vmem:[%s4064 + $0x50] sm:$0xff]
    %v5695 = vld [vmem:[%s4064 + $0x68] sm:$0xff]
    %v5696 = vld [vmem:[%s4064 + $0x70] sm:$0xff]
    %v5697 = vld [vmem:[%s4064 + $0x88] sm:$0xff]
    %v5698 = vld [vmem:[%s4064 + $0x90] sm:$0xff]
    %v5699 = vld [vmem:[%s4064 + $0xa8] sm:$0xff]
    %v5700 = vld [vmem:[%s4064 + $0xb0] sm:$0xff]
    %v5701 = vld [vmem:[%s4064 + $0xc8] sm:$0xff]
    %v5702 = vld [vmem:[%s4064 + $0xd0] sm:$0xff]
    %v5703 = vld [vmem:[%s4064 + $0xe8] sm:$0xff]
    %v5704 = vld [vmem:[%s4064 + $0xf0] sm:$0xff]
    %v5705 = vld [vmem:[%s4064 + $0x108] sm:$0xff]
    %v5706 = vld [vmem:[%s4064 + $0x110] sm:$0xff]
    %v5707 = vld [vmem:[%s4064 + $0x128] sm:$0xff]
    %v5708 = vld [vmem:[%s4064 + $0x130] sm:$0xff]
    %v5709 = vld [vmem:[%s4064 + $0x148] sm:$0xff]
    %v5710 = vld [vmem:[%s4064 + $0x150] sm:$0xff]
    %v5711 = vld [vmem:[%s4064 + $0x168] sm:$0xff]
    %v5712 = vld [vmem:[%s4064 + $0x170] sm:$0xff]
    %v5713 = vld [vmem:[%s4064 + $0x188] sm:$0xff]
    %v5714 = vld [vmem:[%s4064 + $0x190] sm:$0xff]
    %v5715 = vld [vmem:[%s4064 + $0x1a8] sm:$0xff]
    %v5716 = vld [vmem:[%s4064 + $0x1b0] sm:$0xff]
    %v5717 = vld [vmem:[%s4064 + $0x1c8] sm:$0xff]
    %v5718 = vld [vmem:[%s4064 + $0x1d0] sm:$0xff]
    %v5719 = vld [vmem:[%s4064 + $0x1e8] sm:$0xff]
    %v5720 = vld [vmem:[%s4064 + $0x1f0] sm:$0xff]
    %v5721 = vld [vmem:[%s1 + $0x38] sm:$0x1]
    %v5722 = vlaneseq
    %v5723 = vshrl.u32 %v5722, 7
    %v5724 = vsub.s32 0, %v5723
    %v5725 = vrot.slane %v5721, %v5724
    %v5726 = vmul.f32 %v5689, %v5725
    %v5727 = vmul.f32 %v5690, %v5725
    %v5728 = vmul.f32 %v5691, %v5725
    %v5729 = vmul.f32 %v5692, %v5725
    %v5730 = vmul.f32 %v5693, %v5725
    %v5731 = vmul.f32 %v5694, %v5725
    %v5732 = vmul.f32 %v5695, %v5725
    %v5733 = vmul.f32 %v5696, %v5725
    %v5734 = vmul.f32 %v5697, %v5725
    %v5735 = vmul.f32 %v5698, %v5725
    %v5736 = vmul.f32 %v5699, %v5725
    %v5737 = vmul.f32 %v5700, %v5725
    %v5738 = vmul.f32 %v5701, %v5725
    %v5739 = vmul.f32 %v5702, %v5725
    %v5740 = vmul.f32 %v5703, %v5725
    %v5741 = vmul.f32 %v5704, %v5725
    %v5742 = vmul.f32 %v5705, %v5725
    %v5743 = vmul.f32 %v5706, %v5725
    %v5744 = vmul.f32 %v5707, %v5725
    %v5745 = vmul.f32 %v5708, %v5725
    %v5746 = vmul.f32 %v5709, %v5725
    %v5747 = vmul.f32 %v5710, %v5725
    %v5748 = vmul.f32 %v5711, %v5725
    %v5749 = vmul.f32 %v5712, %v5725
    %v5750 = vmul.f32 %v5713, %v5725
    %v5751 = vmul.f32 %v5714, %v5725
    %v5752 = vmul.f32 %v5715, %v5725
    %v5753 = vmul.f32 %v5716, %v5725
    %v5754 = vmul.f32 %v5717, %v5725
    %v5755 = vmul.f32 %v5718, %v5725
    %v5756 = vmul.f32 %v5719, %v5725
    %v5757 = vmul.f32 %v5720, %v5725
    %v5758 = vadd.f32 %v5657, %v5726
    %v5759 = vadd.f32 %v5658, %v5727
    %v5760 = vadd.f32 %v5659, %v5728
    %v5761 = vadd.f32 %v5660, %v5729
    %v5762 = vadd.f32 %v5661, %v5730
    %v5763 = vadd.f32 %v5662, %v5731
    %v5764 = vadd.f32 %v5663, %v5732
    %v5765 = vadd.f32 %v5664, %v5733
    %v5766 = vadd.f32 %v5665, %v5734
    %v5767 = vadd.f32 %v5666, %v5735
    %v5768 = vadd.f32 %v5667, %v5736
    %v5769 = vadd.f32 %v5668, %v5737
    %v5770 = vadd.f32 %v5669, %v5738
    %v5771 = vadd.f32 %v5670, %v5739
    %v5772 = vadd.f32 %v5671, %v5740
    %v5773 = vadd.f32 %v5672, %v5741
    %v5774 = vadd.f32 %v5673, %v5742
    %v5775 = vadd.f32 %v5674, %v5743
    %v5776 = vadd.f32 %v5675, %v5744
    %v5777 = vadd.f32 %v5676, %v5745
    %v5778 = vadd.f32 %v5677, %v5746
    %v5779 = vadd.f32 %v5678, %v5747
    %v5780 = vadd.f32 %v5679, %v5748
    %v5781 = vadd.f32 %v5680, %v5749
    %v5782 = vadd.f32 %v5681, %v5750
    %v5783 = vadd.f32 %v5682, %v5751
    %v5784 = vadd.f32 %v5683, %v5752
    %v5785 = vadd.f32 %v5684, %v5753
    %v5786 = vadd.f32 %v5685, %v5754
    %v5787 = vadd.f32 %v5686, %v5755
    %v5788 = vadd.f32 %v5687, %v5756
    %v5789 = vadd.f32 %v5688, %v5757
    %v5790 = vld [vmem:[%s198 + $0x8] sm:$0xff]
    %v5791 = vld [vmem:[%s198 + $0x10] sm:$0xff]
    %v5792 = vld [vmem:[%s198 + $0x28] sm:$0xff]
    %v5793 = vld [vmem:[%s198 + $0x30] sm:$0xff]
    %v5794 = vld [vmem:[%s198 + $0x48] sm:$0xff]
    %v5795 = vld [vmem:[%s198 + $0x50] sm:$0xff]
    %v5796 = vld [vmem:[%s198 + $0x68] sm:$0xff]
    %v5797 = vld [vmem:[%s198 + $0x70] sm:$0xff]
    %v5798 = vld [vmem:[%s198 + $0x88] sm:$0xff]
    %v5799 = vld [vmem:[%s198 + $0x90] sm:$0xff]
    %v5800 = vld [vmem:[%s198 + $0xa8] sm:$0xff]
    %v5801 = vld [vmem:[%s198 + $0xb0] sm:$0xff]
    %v5802 = vld [vmem:[%s198 + $0xc8] sm:$0xff]
    %v5803 = vld [vmem:[%s198 + $0xd0] sm:$0xff]
    %v5804 = vld [vmem:[%s198 + $0xe8] sm:$0xff]
    %v5805 = vld [vmem:[%s198 + $0xf0] sm:$0xff]
    %v5806 = vld [vmem:[%s198 + $0x108] sm:$0xff]
    %v5807 = vld [vmem:[%s198 + $0x110] sm:$0xff]
    %v5808 = vld [vmem:[%s198 + $0x128] sm:$0xff]
    %v5809 = vld [vmem:[%s198 + $0x130] sm:$0xff]
    %v5810 = vld [vmem:[%s198 + $0x148] sm:$0xff]
    %v5811 = vld [vmem:[%s198 + $0x150] sm:$0xff]
    %v5812 = vld [vmem:[%s198 + $0x168] sm:$0xff]
    %v5813 = vld [vmem:[%s198 + $0x170] sm:$0xff]
    %v5814 = vld [vmem:[%s198 + $0x188] sm:$0xff]
    %v5815 = vld [vmem:[%s198 + $0x190] sm:$0xff]
    %v5816 = vld [vmem:[%s198 + $0x1a8] sm:$0xff]
    %v5817 = vld [vmem:[%s198 + $0x1b0] sm:$0xff]
    %v5818 = vld [vmem:[%s198 + $0x1c8] sm:$0xff]
    %v5819 = vld [vmem:[%s198 + $0x1d0] sm:$0xff]
    %v5820 = vld [vmem:[%s198 + $0x1e8] sm:$0xff]
    %v5821 = vld [vmem:[%s198 + $0x1f0] sm:$0xff]
    %v5822 = vld [vmem:[%s1 + $0x39] sm:$0x1]
    %v5823 = vlaneseq
    %v5824 = vshrl.u32 %v5823, 7
    %v5825 = vsub.s32 0, %v5824
    %v5826 = vrot.slane %v5822, %v5825
    %v5827 = vmul.f32 %v5790, %v5826
    %v5828 = vmul.f32 %v5791, %v5826
    %v5829 = vmul.f32 %v5792, %v5826
    %v5830 = vmul.f32 %v5793, %v5826
    %v5831 = vmul.f32 %v5794, %v5826
    %v5832 = vmul.f32 %v5795, %v5826
    %v5833 = vmul.f32 %v5796, %v5826
    %v5834 = vmul.f32 %v5797, %v5826
    %v5835 = vmul.f32 %v5798, %v5826
    %v5836 = vmul.f32 %v5799, %v5826
    %v5837 = vmul.f32 %v5800, %v5826
    %v5838 = vmul.f32 %v5801, %v5826
    %v5839 = vmul.f32 %v5802, %v5826
    %v5840 = vmul.f32 %v5803, %v5826
    %v5841 = vmul.f32 %v5804, %v5826
    %v5842 = vmul.f32 %v5805, %v5826
    %v5843 = vmul.f32 %v5806, %v5826
    %v5844 = vmul.f32 %v5807, %v5826
    %v5845 = vmul.f32 %v5808, %v5826
    %v5846 = vmul.f32 %v5809, %v5826
    %v5847 = vmul.f32 %v5810, %v5826
    %v5848 = vmul.f32 %v5811, %v5826
    %v5849 = vmul.f32 %v5812, %v5826
    %v5850 = vmul.f32 %v5813, %v5826
    %v5851 = vmul.f32 %v5814, %v5826
    %v5852 = vmul.f32 %v5815, %v5826
    %v5853 = vmul.f32 %v5816, %v5826
    %v5854 = vmul.f32 %v5817, %v5826
    %v5855 = vmul.f32 %v5818, %v5826
    %v5856 = vmul.f32 %v5819, %v5826
    %v5857 = vmul.f32 %v5820, %v5826
    %v5858 = vmul.f32 %v5821, %v5826
    %v5859 = vadd.f32 %v5758, %v5827
    %v5860 = vadd.f32 %v5759, %v5828
    %v5861 = vadd.f32 %v5760, %v5829
    %v5862 = vadd.f32 %v5761, %v5830
    %v5863 = vadd.f32 %v5762, %v5831
    %v5864 = vadd.f32 %v5763, %v5832
    %v5865 = vadd.f32 %v5764, %v5833
    %v5866 = vadd.f32 %v5765, %v5834
    %v5867 = vadd.f32 %v5766, %v5835
    %v5868 = vadd.f32 %v5767, %v5836
    %v5869 = vadd.f32 %v5768, %v5837
    %v5870 = vadd.f32 %v5769, %v5838
    %v5871 = vadd.f32 %v5770, %v5839
    %v5872 = vadd.f32 %v5771, %v5840
    %v5873 = vadd.f32 %v5772, %v5841
    %v5874 = vadd.f32 %v5773, %v5842
    %v5875 = vadd.f32 %v5774, %v5843
    %v5876 = vadd.f32 %v5775, %v5844
    %v5877 = vadd.f32 %v5776, %v5845
    %v5878 = vadd.f32 %v5777, %v5846
    %v5879 = vadd.f32 %v5778, %v5847
    %v5880 = vadd.f32 %v5779, %v5848
    %v5881 = vadd.f32 %v5780, %v5849
    %v5882 = vadd.f32 %v5781, %v5850
    %v5883 = vadd.f32 %v5782, %v5851
    %v5884 = vadd.f32 %v5783, %v5852
    %v5885 = vadd.f32 %v5784, %v5853
    %v5886 = vadd.f32 %v5785, %v5854
    %v5887 = vadd.f32 %v5786, %v5855
    %v5888 = vadd.f32 %v5787, %v5856
    %v5889 = vadd.f32 %v5788, %v5857
    %v5890 = vadd.f32 %v5789, %v5858
    %v5891 = vld [vmem:[%s101 + $0x8] sm:$0xff]
    %v5892 = vld [vmem:[%s101 + $0x10] sm:$0xff]
    %v5893 = vld [vmem:[%s101 + $0x28] sm:$0xff]
    %v5894 = vld [vmem:[%s101 + $0x30] sm:$0xff]
    %v5895 = vld [vmem:[%s101 + $0x48] sm:$0xff]
    %v5896 = vld [vmem:[%s101 + $0x50] sm:$0xff]
    %v5897 = vld [vmem:[%s101 + $0x68] sm:$0xff]
    %v5898 = vld [vmem:[%s101 + $0x70] sm:$0xff]
    %v5899 = vld [vmem:[%s101 + $0x88] sm:$0xff]
    %v5900 = vld [vmem:[%s101 + $0x90] sm:$0xff]
    %v5901 = vld [vmem:[%s101 + $0xa8] sm:$0xff]
    %v5902 = vld [vmem:[%s101 + $0xb0] sm:$0xff]
    %v5903 = vld [vmem:[%s101 + $0xc8] sm:$0xff]
    %v5904 = vld [vmem:[%s101 + $0xd0] sm:$0xff]
    %v5905 = vld [vmem:[%s101 + $0xe8] sm:$0xff]
    %v5906 = vld [vmem:[%s101 + $0xf0] sm:$0xff]
    %v5907 = vld [vmem:[%s101 + $0x108] sm:$0xff]
    %v5908 = vld [vmem:[%s101 + $0x110] sm:$0xff]
    %v5909 = vld [vmem:[%s101 + $0x128] sm:$0xff]
    %v5910 = vld [vmem:[%s101 + $0x130] sm:$0xff]
    %v5911 = vld [vmem:[%s101 + $0x148] sm:$0xff]
    %v5912 = vld [vmem:[%s101 + $0x150] sm:$0xff]
    %v5913 = vld [vmem:[%s101 + $0x168] sm:$0xff]
    %v5914 = vld [vmem:[%s101 + $0x170] sm:$0xff]
    %v5915 = vld [vmem:[%s101 + $0x188] sm:$0xff]
    %v5916 = vld [vmem:[%s101 + $0x190] sm:$0xff]
    %v5917 = vld [vmem:[%s101 + $0x1a8] sm:$0xff]
    %v5918 = vld [vmem:[%s101 + $0x1b0] sm:$0xff]
    %v5919 = vld [vmem:[%s101 + $0x1c8] sm:$0xff]
    %v5920 = vld [vmem:[%s101 + $0x1d0] sm:$0xff]
    %v5921 = vld [vmem:[%s101 + $0x1e8] sm:$0xff]
    %v5922 = vld [vmem:[%s101 + $0x1f0] sm:$0xff]
    %v5923 = vld [vmem:[%s1 + $0x3a] sm:$0x1]
    %v5924 = vlaneseq
    %v5925 = vshrl.u32 %v5924, 7
    %v5926 = vsub.s32 0, %v5925
    %v5927 = vrot.slane %v5923, %v5926
    %v5928 = vmul.f32 %v5891, %v5927
    %v5929 = vmul.f32 %v5892, %v5927
    %v5930 = vmul.f32 %v5893, %v5927
    %v5931 = vmul.f32 %v5894, %v5927
    %v5932 = vmul.f32 %v5895, %v5927
    %v5933 = vmul.f32 %v5896, %v5927
    %v5934 = vmul.f32 %v5897, %v5927
    %v5935 = vmul.f32 %v5898, %v5927
    %v5936 = vmul.f32 %v5899, %v5927
    %v5937 = vmul.f32 %v5900, %v5927
    %v5938 = vmul.f32 %v5901, %v5927
    %v5939 = vmul.f32 %v5902, %v5927
    %v5940 = vmul.f32 %v5903, %v5927
    %v5941 = vmul.f32 %v5904, %v5927
    %v5942 = vmul.f32 %v5905, %v5927
    %v5943 = vmul.f32 %v5906, %v5927
    %v5944 = vmul.f32 %v5907, %v5927
    %v5945 = vmul.f32 %v5908, %v5927
    %v5946 = vmul.f32 %v5909, %v5927
    %v5947 = vmul.f32 %v5910, %v5927
    %v5948 = vmul.f32 %v5911, %v5927
    %v5949 = vmul.f32 %v5912, %v5927
    %v5950 = vmul.f32 %v5913, %v5927
    %v5951 = vmul.f32 %v5914, %v5927
    %v5952 = vmul.f32 %v5915, %v5927
    %v5953 = vmul.f32 %v5916, %v5927
    %v5954 = vmul.f32 %v5917, %v5927
    %v5955 = vmul.f32 %v5918, %v5927
    %v5956 = vmul.f32 %v5919, %v5927
    %v5957 = vmul.f32 %v5920, %v5927
    %v5958 = vmul.f32 %v5921, %v5927
    %v5959 = vmul.f32 %v5922, %v5927
    %v5960 = vadd.f32 %v5859, %v5928
    %v5961 = vadd.f32 %v5860, %v5929
    %v5962 = vadd.f32 %v5861, %v5930
    %v5963 = vadd.f32 %v5862, %v5931
    %v5964 = vadd.f32 %v5863, %v5932
    %v5965 = vadd.f32 %v5864, %v5933
    %v5966 = vadd.f32 %v5865, %v5934
    %v5967 = vadd.f32 %v5866, %v5935
    %v5968 = vadd.f32 %v5867, %v5936
    %v5969 = vadd.f32 %v5868, %v5937
    %v5970 = vadd.f32 %v5869, %v5938
    %v5971 = vadd.f32 %v5870, %v5939
    %v5972 = vadd.f32 %v5871, %v5940
    %v5973 = vadd.f32 %v5872, %v5941
    %v5974 = vadd.f32 %v5873, %v5942
    %v5975 = vadd.f32 %v5874, %v5943
    %v5976 = vadd.f32 %v5875, %v5944
    %v5977 = vadd.f32 %v5876, %v5945
    %v5978 = vadd.f32 %v5877, %v5946
    %v5979 = vadd.f32 %v5878, %v5947
    %v5980 = vadd.f32 %v5879, %v5948
    %v5981 = vadd.f32 %v5880, %v5949
    %v5982 = vadd.f32 %v5881, %v5950
    %v5983 = vadd.f32 %v5882, %v5951
    %v5984 = vadd.f32 %v5883, %v5952
    %v5985 = vadd.f32 %v5884, %v5953
    %v5986 = vadd.f32 %v5885, %v5954
    %v5987 = vadd.f32 %v5886, %v5955
    %v5988 = vadd.f32 %v5887, %v5956
    %v5989 = vadd.f32 %v5888, %v5957
    %v5990 = vadd.f32 %v5889, %v5958
    %v5991 = vadd.f32 %v5890, %v5959
    %v5992 = vld [vmem:[%s773 + $0x8] sm:$0xff]
    %v5993 = vld [vmem:[%s773 + $0x10] sm:$0xff]
    %v5994 = vld [vmem:[%s773 + $0x28] sm:$0xff]
    %v5995 = vld [vmem:[%s773 + $0x30] sm:$0xff]
    %v5996 = vld [vmem:[%s773 + $0x48] sm:$0xff]
    %v5997 = vld [vmem:[%s773 + $0x50] sm:$0xff]
    %v5998 = vld [vmem:[%s773 + $0x68] sm:$0xff]
    %v5999 = vld [vmem:[%s773 + $0x70] sm:$0xff]
    %v6000 = vld [vmem:[%s773 + $0x88] sm:$0xff]
    %v6001 = vld [vmem:[%s773 + $0x90] sm:$0xff]
    %v6002 = vld [vmem:[%s773 + $0xa8] sm:$0xff]
    %v6003 = vld [vmem:[%s773 + $0xb0] sm:$0xff]
    %v6004 = vld [vmem:[%s773 + $0xc8] sm:$0xff]
    %v6005 = vld [vmem:[%s773 + $0xd0] sm:$0xff]
    %v6006 = vld [vmem:[%s773 + $0xe8] sm:$0xff]
    %v6007 = vld [vmem:[%s773 + $0xf0] sm:$0xff]
    %v6008 = vld [vmem:[%s773 + $0x108] sm:$0xff]
    %v6009 = vld [vmem:[%s773 + $0x110] sm:$0xff]
    %v6010 = vld [vmem:[%s773 + $0x128] sm:$0xff]
    %v6011 = vld [vmem:[%s773 + $0x130] sm:$0xff]
    %v6012 = vld [vmem:[%s773 + $0x148] sm:$0xff]
    %v6013 = vld [vmem:[%s773 + $0x150] sm:$0xff]
    %v6014 = vld [vmem:[%s773 + $0x168] sm:$0xff]
    %v6015 = vld [vmem:[%s773 + $0x170] sm:$0xff]
    %v6016 = vld [vmem:[%s773 + $0x188] sm:$0xff]
    %v6017 = vld [vmem:[%s773 + $0x190] sm:$0xff]
    %v6018 = vld [vmem:[%s773 + $0x1a8] sm:$0xff]
    %v6019 = vld [vmem:[%s773 + $0x1b0] sm:$0xff]
    %v6020 = vld [vmem:[%s773 + $0x1c8] sm:$0xff]
    %v6021 = vld [vmem:[%s773 + $0x1d0] sm:$0xff]
    %v6022 = vld [vmem:[%s773 + $0x1e8] sm:$0xff]
    %v6023 = vld [vmem:[%s773 + $0x1f0] sm:$0xff]
    %v6024 = vld [vmem:[%s1 + $0x3b] sm:$0x1]
    %v6025 = vlaneseq
    %v6026 = vshrl.u32 %v6025, 7
    %v6027 = vsub.s32 0, %v6026
    %v6028 = vrot.slane %v6024, %v6027
    %v6029 = vmul.f32 %v5992, %v6028
    %v6030 = vmul.f32 %v5993, %v6028
    %v6031 = vmul.f32 %v5994, %v6028
    %v6032 = vmul.f32 %v5995, %v6028
    %v6033 = vmul.f32 %v5996, %v6028
    %v6034 = vmul.f32 %v5997, %v6028
    %v6035 = vmul.f32 %v5998, %v6028
    %v6036 = vmul.f32 %v5999, %v6028
    %v6037 = vmul.f32 %v6000, %v6028
    %v6038 = vmul.f32 %v6001, %v6028
    %v6039 = vmul.f32 %v6002, %v6028
    %v6040 = vmul.f32 %v6003, %v6028
    %v6041 = vmul.f32 %v6004, %v6028
    %v6042 = vmul.f32 %v6005, %v6028
    %v6043 = vmul.f32 %v6006, %v6028
    %v6044 = vmul.f32 %v6007, %v6028
    %v6045 = vmul.f32 %v6008, %v6028
    %v6046 = vmul.f32 %v6009, %v6028
    %v6047 = vmul.f32 %v6010, %v6028
    %v6048 = vmul.f32 %v6011, %v6028
    %v6049 = vmul.f32 %v6012, %v6028
    %v6050 = vmul.f32 %v6013, %v6028
    %v6051 = vmul.f32 %v6014, %v6028
    %v6052 = vmul.f32 %v6015, %v6028
    %v6053 = vmul.f32 %v6016, %v6028
    %v6054 = vmul.f32 %v6017, %v6028
    %v6055 = vmul.f32 %v6018, %v6028
    %v6056 = vmul.f32 %v6019, %v6028
    %v6057 = vmul.f32 %v6020, %v6028
    %v6058 = vmul.f32 %v6021, %v6028
    %v6059 = vmul.f32 %v6022, %v6028
    %v6060 = vmul.f32 %v6023, %v6028
    %v6061 = vadd.f32 %v5960, %v6029
    %v6062 = vadd.f32 %v5961, %v6030
    %v6063 = vadd.f32 %v5962, %v6031
    %v6064 = vadd.f32 %v5963, %v6032
    %v6065 = vadd.f32 %v5964, %v6033
    %v6066 = vadd.f32 %v5965, %v6034
    %v6067 = vadd.f32 %v5966, %v6035
    %v6068 = vadd.f32 %v5967, %v6036
    %v6069 = vadd.f32 %v5968, %v6037
    %v6070 = vadd.f32 %v5969, %v6038
    %v6071 = vadd.f32 %v5970, %v6039
    %v6072 = vadd.f32 %v5971, %v6040
    %v6073 = vadd.f32 %v5972, %v6041
    %v6074 = vadd.f32 %v5973, %v6042
    %v6075 = vadd.f32 %v5974, %v6043
    %v6076 = vadd.f32 %v5975, %v6044
    %v6077 = vadd.f32 %v5976, %v6045
    %v6078 = vadd.f32 %v5977, %v6046
    %v6079 = vadd.f32 %v5978, %v6047
    %v6080 = vadd.f32 %v5979, %v6048
    %v6081 = vadd.f32 %v5980, %v6049
    %v6082 = vadd.f32 %v5981, %v6050
    %v6083 = vadd.f32 %v5982, %v6051
    %v6084 = vadd.f32 %v5983, %v6052
    %v6085 = vadd.f32 %v5984, %v6053
    %v6086 = vadd.f32 %v5985, %v6054
    %v6087 = vadd.f32 %v5986, %v6055
    %v6088 = vadd.f32 %v5987, %v6056
    %v6089 = vadd.f32 %v5988, %v6057
    %v6090 = vadd.f32 %v5989, %v6058
    %v6091 = vadd.f32 %v5990, %v6059
    %v6092 = vadd.f32 %v5991, %v6060
    %v6093 = vld [vmem:[%s4437 + $0x8] sm:$0xff]
    %v6094 = vld [vmem:[%s4437 + $0x10] sm:$0xff]
    %v6095 = vld [vmem:[%s4437 + $0x28] sm:$0xff]
    %v6096 = vld [vmem:[%s4437 + $0x30] sm:$0xff]
    %v6097 = vld [vmem:[%s4437 + $0x48] sm:$0xff]
    %v6098 = vld [vmem:[%s4437 + $0x50] sm:$0xff]
    %v6099 = vld [vmem:[%s4437 + $0x68] sm:$0xff]
    %v6100 = vld [vmem:[%s4437 + $0x70] sm:$0xff]
    %v6101 = vld [vmem:[%s4437 + $0x88] sm:$0xff]
    %v6102 = vld [vmem:[%s4437 + $0x90] sm:$0xff]
    %v6103 = vld [vmem:[%s4437 + $0xa8] sm:$0xff]
    %v6104 = vld [vmem:[%s4437 + $0xb0] sm:$0xff]
    %v6105 = vld [vmem:[%s4437 + $0xc8] sm:$0xff]
    %v6106 = vld [vmem:[%s4437 + $0xd0] sm:$0xff]
    %v6107 = vld [vmem:[%s4437 + $0xe8] sm:$0xff]
    %v6108 = vld [vmem:[%s4437 + $0xf0] sm:$0xff]
    %v6109 = vld [vmem:[%s4437 + $0x108] sm:$0xff]
    %v6110 = vld [vmem:[%s4437 + $0x110] sm:$0xff]
    %v6111 = vld [vmem:[%s4437 + $0x128] sm:$0xff]
    %v6112 = vld [vmem:[%s4437 + $0x130] sm:$0xff]
    %v6113 = vld [vmem:[%s4437 + $0x148] sm:$0xff]
    %v6114 = vld [vmem:[%s4437 + $0x150] sm:$0xff]
    %v6115 = vld [vmem:[%s4437 + $0x168] sm:$0xff]
    %v6116 = vld [vmem:[%s4437 + $0x170] sm:$0xff]
    %v6117 = vld [vmem:[%s4437 + $0x188] sm:$0xff]
    %v6118 = vld [vmem:[%s4437 + $0x190] sm:$0xff]
    %v6119 = vld [vmem:[%s4437 + $0x1a8] sm:$0xff]
    %v6120 = vld [vmem:[%s4437 + $0x1b0] sm:$0xff]
    %v6121 = vld [vmem:[%s4437 + $0x1c8] sm:$0xff]
    %v6122 = vld [vmem:[%s4437 + $0x1d0] sm:$0xff]
    %v6123 = vld [vmem:[%s4437 + $0x1e8] sm:$0xff]
    %v6124 = vld [vmem:[%s4437 + $0x1f0] sm:$0xff]
    %v6125 = vld [vmem:[%s1 + $0x3c] sm:$0x1]
    %v6126 = vlaneseq
    %v6127 = vshrl.u32 %v6126, 7
    %v6128 = vsub.s32 0, %v6127
    %v6129 = vrot.slane %v6125, %v6128
    %v6130 = vmul.f32 %v6093, %v6129
    %v6131 = vmul.f32 %v6094, %v6129
    %v6132 = vmul.f32 %v6095, %v6129
    %v6133 = vmul.f32 %v6096, %v6129
    %v6134 = vmul.f32 %v6097, %v6129
    %v6135 = vmul.f32 %v6098, %v6129
    %v6136 = vmul.f32 %v6099, %v6129
    %v6137 = vmul.f32 %v6100, %v6129
    %v6138 = vmul.f32 %v6101, %v6129
    %v6139 = vmul.f32 %v6102, %v6129
    %v6140 = vmul.f32 %v6103, %v6129
    %v6141 = vmul.f32 %v6104, %v6129
    %v6142 = vmul.f32 %v6105, %v6129
    %v6143 = vmul.f32 %v6106, %v6129
    %v6144 = vmul.f32 %v6107, %v6129
    %v6145 = vmul.f32 %v6108, %v6129
    %v6146 = vmul.f32 %v6109, %v6129
    %v6147 = vmul.f32 %v6110, %v6129
    %v6148 = vmul.f32 %v6111, %v6129
    %v6149 = vmul.f32 %v6112, %v6129
    %v6150 = vmul.f32 %v6113, %v6129
    %v6151 = vmul.f32 %v6114, %v6129
    %v6152 = vmul.f32 %v6115, %v6129
    %v6153 = vmul.f32 %v6116, %v6129
    %v6154 = vmul.f32 %v6117, %v6129
    %v6155 = vmul.f32 %v6118, %v6129
    %v6156 = vmul.f32 %v6119, %v6129
    %v6157 = vmul.f32 %v6120, %v6129
    %v6158 = vmul.f32 %v6121, %v6129
    %v6159 = vmul.f32 %v6122, %v6129
    %v6160 = vmul.f32 %v6123, %v6129
    %v6161 = vmul.f32 %v6124, %v6129
    %v6162 = vadd.f32 %v6061, %v6130
    %v6163 = vadd.f32 %v6062, %v6131
    %v6164 = vadd.f32 %v6063, %v6132
    %v6165 = vadd.f32 %v6064, %v6133
    %v6166 = vadd.f32 %v6065, %v6134
    %v6167 = vadd.f32 %v6066, %v6135
    %v6168 = vadd.f32 %v6067, %v6136
    %v6169 = vadd.f32 %v6068, %v6137
    %v6170 = vadd.f32 %v6069, %v6138
    %v6171 = vadd.f32 %v6070, %v6139
    %v6172 = vadd.f32 %v6071, %v6140
    %v6173 = vadd.f32 %v6072, %v6141
    %v6174 = vadd.f32 %v6073, %v6142
    %v6175 = vadd.f32 %v6074, %v6143
    %v6176 = vadd.f32 %v6075, %v6144
    %v6177 = vadd.f32 %v6076, %v6145
    %v6178 = vadd.f32 %v6077, %v6146
    %v6179 = vadd.f32 %v6078, %v6147
    %v6180 = vadd.f32 %v6079, %v6148
    %v6181 = vadd.f32 %v6080, %v6149
    %v6182 = vadd.f32 %v6081, %v6150
    %v6183 = vadd.f32 %v6082, %v6151
    %v6184 = vadd.f32 %v6083, %v6152
    %v6185 = vadd.f32 %v6084, %v6153
    %v6186 = vadd.f32 %v6085, %v6154
    %v6187 = vadd.f32 %v6086, %v6155
    %v6188 = vadd.f32 %v6087, %v6156
    %v6189 = vadd.f32 %v6088, %v6157
    %v6190 = vadd.f32 %v6089, %v6158
    %v6191 = vadd.f32 %v6090, %v6159
    %v6192 = vadd.f32 %v6091, %v6160
    %v6193 = vadd.f32 %v6092, %v6161
    %v6194 = vld [vmem:[%s1721 + $0x8] sm:$0xff]
    %v6195 = vld [vmem:[%s1721 + $0x10] sm:$0xff]
    %v6196 = vld [vmem:[%s1721 + $0x28] sm:$0xff]
    %v6197 = vld [vmem:[%s1721 + $0x30] sm:$0xff]
    %v6198 = vld [vmem:[%s1721 + $0x48] sm:$0xff]
    %v6199 = vld [vmem:[%s1721 + $0x50] sm:$0xff]
    %v6200 = vld [vmem:[%s1721 + $0x68] sm:$0xff]
    %v6201 = vld [vmem:[%s1721 + $0x70] sm:$0xff]
    %v6202 = vld [vmem:[%s1721 + $0x88] sm:$0xff]
    %v6203 = vld [vmem:[%s1721 + $0x90] sm:$0xff]
    %v6204 = vld [vmem:[%s1721 + $0xa8] sm:$0xff]
    %v6205 = vld [vmem:[%s1721 + $0xb0] sm:$0xff]
    %v6206 = vld [vmem:[%s1721 + $0xc8] sm:$0xff]
    %v6207 = vld [vmem:[%s1721 + $0xd0] sm:$0xff]
    %v6208 = vld [vmem:[%s1721 + $0xe8] sm:$0xff]
    %v6209 = vld [vmem:[%s1721 + $0xf0] sm:$0xff]
    %v6210 = vld [vmem:[%s1721 + $0x108] sm:$0xff]
    %v6211 = vld [vmem:[%s1721 + $0x110] sm:$0xff]
    %v6212 = vld [vmem:[%s1721 + $0x128] sm:$0xff]
    %v6213 = vld [vmem:[%s1721 + $0x130] sm:$0xff]
    %v6214 = vld [vmem:[%s1721 + $0x148] sm:$0xff]
    %v6215 = vld [vmem:[%s1721 + $0x150] sm:$0xff]
    %v6216 = vld [vmem:[%s1721 + $0x168] sm:$0xff]
    %v6217 = vld [vmem:[%s1721 + $0x170] sm:$0xff]
    %v6218 = vld [vmem:[%s1721 + $0x188] sm:$0xff]
    %v6219 = vld [vmem:[%s1721 + $0x190] sm:$0xff]
    %v6220 = vld [vmem:[%s1721 + $0x1a8] sm:$0xff]
    %v6221 = vld [vmem:[%s1721 + $0x1b0] sm:$0xff]
    %v6222 = vld [vmem:[%s1721 + $0x1c8] sm:$0xff]
    %v6223 = vld [vmem:[%s1721 + $0x1d0] sm:$0xff]
    %v6224 = vld [vmem:[%s1721 + $0x1e8] sm:$0xff]
    %v6225 = vld [vmem:[%s1721 + $0x1f0] sm:$0xff]
    %v6226 = vld [vmem:[%s1 + $0x3d] sm:$0x1]
    %v6227 = vlaneseq
    %v6228 = vshrl.u32 %v6227, 7
    %v6229 = vsub.s32 0, %v6228
    %v6230 = vrot.slane %v6226, %v6229
    %v6231 = vmul.f32 %v6194, %v6230
    %v6232 = vmul.f32 %v6195, %v6230
    %v6233 = vmul.f32 %v6196, %v6230
    %v6234 = vmul.f32 %v6197, %v6230
    %v6235 = vmul.f32 %v6198, %v6230
    %v6236 = vmul.f32 %v6199, %v6230
    %v6237 = vmul.f32 %v6200, %v6230
    %v6238 = vmul.f32 %v6201, %v6230
    %v6239 = vmul.f32 %v6202, %v6230
    %v6240 = vmul.f32 %v6203, %v6230
    %v6241 = vmul.f32 %v6204, %v6230
    %v6242 = vmul.f32 %v6205, %v6230
    %v6243 = vmul.f32 %v6206, %v6230
    %v6244 = vmul.f32 %v6207, %v6230
    %v6245 = vmul.f32 %v6208, %v6230
    %v6246 = vmul.f32 %v6209, %v6230
    %v6247 = vmul.f32 %v6210, %v6230
    %v6248 = vmul.f32 %v6211, %v6230
    %v6249 = vmul.f32 %v6212, %v6230
    %v6250 = vmul.f32 %v6213, %v6230
    %v6251 = vmul.f32 %v6214, %v6230
    %v6252 = vmul.f32 %v6215, %v6230
    %v6253 = vmul.f32 %v6216, %v6230
    %v6254 = vmul.f32 %v6217, %v6230
    %v6255 = vmul.f32 %v6218, %v6230
    %v6256 = vmul.f32 %v6219, %v6230
    %v6257 = vmul.f32 %v6220, %v6230
    %v6258 = vmul.f32 %v6221, %v6230
    %v6259 = vmul.f32 %v6222, %v6230
    %v6260 = vmul.f32 %v6223, %v6230
    %v6261 = vmul.f32 %v6224, %v6230
    %v6262 = vmul.f32 %v6225, %v6230
    %v6263 = vadd.f32 %v6162, %v6231
    %v6264 = vadd.f32 %v6163, %v6232
    %v6265 = vadd.f32 %v6164, %v6233
    %v6266 = vadd.f32 %v6165, %v6234
    %v6267 = vadd.f32 %v6166, %v6235
    %v6268 = vadd.f32 %v6167, %v6236
    %v6269 = vadd.f32 %v6168, %v6237
    %v6270 = vadd.f32 %v6169, %v6238
    %v6271 = vadd.f32 %v6170, %v6239
    %v6272 = vadd.f32 %v6171, %v6240
    %v6273 = vadd.f32 %v6172, %v6241
    %v6274 = vadd.f32 %v6173, %v6242
    %v6275 = vadd.f32 %v6174, %v6243
    %v6276 = vadd.f32 %v6175, %v6244
    %v6277 = vadd.f32 %v6176, %v6245
    %v6278 = vadd.f32 %v6177, %v6246
    %v6279 = vadd.f32 %v6178, %v6247
    %v6280 = vadd.f32 %v6179, %v6248
    %v6281 = vadd.f32 %v6180, %v6249
    %v6282 = vadd.f32 %v6181, %v6250
    %v6283 = vadd.f32 %v6182, %v6251
    %v6284 = vadd.f32 %v6183, %v6252
    %v6285 = vadd.f32 %v6184, %v6253
    %v6286 = vadd.f32 %v6185, %v6254
    %v6287 = vadd.f32 %v6186, %v6255
    %v6288 = vadd.f32 %v6187, %v6256
    %v6289 = vadd.f32 %v6188, %v6257
    %v6290 = vadd.f32 %v6189, %v6258
    %v6291 = vadd.f32 %v6190, %v6259
    %v6292 = vadd.f32 %v6191, %v6260
    %v6293 = vadd.f32 %v6192, %v6261
    %v6294 = vadd.f32 %v6193, %v6262
    %s6295 = scalar_lea.vmem [#allocation2], 384
    %v6296 = vld [vmem:[%s6295 + $0x8] sm:$0xff]
    %v6297 = vld [vmem:[%s6295 + $0x10] sm:$0xff]
    %v6298 = vld [vmem:[%s6295 + $0x28] sm:$0xff]
    %v6299 = vld [vmem:[%s6295 + $0x30] sm:$0xff]
    %v6300 = vld [vmem:[%s6295 + $0x48] sm:$0xff]
    %v6301 = vld [vmem:[%s6295 + $0x50] sm:$0xff]
    %v6302 = vld [vmem:[%s6295 + $0x68] sm:$0xff]
    %v6303 = vld [vmem:[%s6295 + $0x70] sm:$0xff]
    %v6304 = vld [vmem:[%s6295 + $0x88] sm:$0xff]
    %v6305 = vld [vmem:[%s6295 + $0x90] sm:$0xff]
    %v6306 = vld [vmem:[%s6295 + $0xa8] sm:$0xff]
    %v6307 = vld [vmem:[%s6295 + $0xb0] sm:$0xff]
    %v6308 = vld [vmem:[%s6295 + $0xc8] sm:$0xff]
    %v6309 = vld [vmem:[%s6295 + $0xd0] sm:$0xff]
    %v6310 = vld [vmem:[%s6295 + $0xe8] sm:$0xff]
    %v6311 = vld [vmem:[%s6295 + $0xf0] sm:$0xff]
    %v6312 = vld [vmem:[%s6295 + $0x108] sm:$0xff]
    %v6313 = vld [vmem:[%s6295 + $0x110] sm:$0xff]
    %v6314 = vld [vmem:[%s6295 + $0x128] sm:$0xff]
    %v6315 = vld [vmem:[%s6295 + $0x130] sm:$0xff]
    %v6316 = vld [vmem:[%s6295 + $0x148] sm:$0xff]
    %v6317 = vld [vmem:[%s6295 + $0x150] sm:$0xff]
    %v6318 = vld [vmem:[%s6295 + $0x168] sm:$0xff]
    %v6319 = vld [vmem:[%s6295 + $0x170] sm:$0xff]
    %v6320 = vld [vmem:[%s6295 + $0x188] sm:$0xff]
    %v6321 = vld [vmem:[%s6295 + $0x190] sm:$0xff]
    %v6322 = vld [vmem:[%s6295 + $0x1a8] sm:$0xff]
    %v6323 = vld [vmem:[%s6295 + $0x1b0] sm:$0xff]
    %v6324 = vld [vmem:[%s6295 + $0x1c8] sm:$0xff]
    %v6325 = vld [vmem:[%s6295 + $0x1d0] sm:$0xff]
    %v6326 = vld [vmem:[%s6295 + $0x1e8] sm:$0xff]
    %v6327 = vld [vmem:[%s6295 + $0x1f0] sm:$0xff]
    %v6328 = vld [vmem:[%s1 + $0x3e] sm:$0x1]
    %v6329 = vlaneseq
    %v6330 = vshrl.u32 %v6329, 7
    %v6331 = vsub.s32 0, %v6330
    %v6332 = vrot.slane %v6328, %v6331
    %v6333 = vmul.f32 %v6296, %v6332
    %v6334 = vmul.f32 %v6297, %v6332
    %v6335 = vmul.f32 %v6298, %v6332
    %v6336 = vmul.f32 %v6299, %v6332
    %v6337 = vmul.f32 %v6300, %v6332
    %v6338 = vmul.f32 %v6301, %v6332
    %v6339 = vmul.f32 %v6302, %v6332
    %v6340 = vmul.f32 %v6303, %v6332
    %v6341 = vmul.f32 %v6304, %v6332
    %v6342 = vmul.f32 %v6305, %v6332
    %v6343 = vmul.f32 %v6306, %v6332
    %v6344 = vmul.f32 %v6307, %v6332
    %v6345 = vmul.f32 %v6308, %v6332
    %v6346 = vmul.f32 %v6309, %v6332
    %v6347 = vmul.f32 %v6310, %v6332
    %v6348 = vmul.f32 %v6311, %v6332
    %v6349 = vmul.f32 %v6312, %v6332
    %v6350 = vmul.f32 %v6313, %v6332
    %v6351 = vmul.f32 %v6314, %v6332
    %v6352 = vmul.f32 %v6315, %v6332
    %v6353 = vmul.f32 %v6316, %v6332
    %v6354 = vmul.f32 %v6317, %v6332
    %v6355 = vmul.f32 %v6318, %v6332
    %v6356 = vmul.f32 %v6319, %v6332
    %v6357 = vmul.f32 %v6320, %v6332
    %v6358 = vmul.f32 %v6321, %v6332
    %v6359 = vmul.f32 %v6322, %v6332
    %v6360 = vmul.f32 %v6323, %v6332
    %v6361 = vmul.f32 %v6324, %v6332
    %v6362 = vmul.f32 %v6325, %v6332
    %v6363 = vmul.f32 %v6326, %v6332
    %v6364 = vmul.f32 %v6327, %v6332
    %v6365 = vadd.f32 %v6263, %v6333
    %v6366 = vadd.f32 %v6264, %v6334
    %v6367 = vadd.f32 %v6265, %v6335
    %v6368 = vadd.f32 %v6266, %v6336
    %v6369 = vadd.f32 %v6267, %v6337
    %v6370 = vadd.f32 %v6268, %v6338
    %v6371 = vadd.f32 %v6269, %v6339
    %v6372 = vadd.f32 %v6270, %v6340
    %v6373 = vadd.f32 %v6271, %v6341
    %v6374 = vadd.f32 %v6272, %v6342
    %v6375 = vadd.f32 %v6273, %v6343
    %v6376 = vadd.f32 %v6274, %v6344
    %v6377 = vadd.f32 %v6275, %v6345
    %v6378 = vadd.f32 %v6276, %v6346
    %v6379 = vadd.f32 %v6277, %v6347
    %v6380 = vadd.f32 %v6278, %v6348
    %v6381 = vadd.f32 %v6279, %v6349
    %v6382 = vadd.f32 %v6280, %v6350
    %v6383 = vadd.f32 %v6281, %v6351
    %v6384 = vadd.f32 %v6282, %v6352
    %v6385 = vadd.f32 %v6283, %v6353
    %v6386 = vadd.f32 %v6284, %v6354
    %v6387 = vadd.f32 %v6285, %v6355
    %v6388 = vadd.f32 %v6286, %v6356
    %v6389 = vadd.f32 %v6287, %v6357
    %v6390 = vadd.f32 %v6288, %v6358
    %v6391 = vadd.f32 %v6289, %v6359
    %v6392 = vadd.f32 %v6290, %v6360
    %v6393 = vadd.f32 %v6291, %v6361
    %v6394 = vadd.f32 %v6292, %v6362
    %v6395 = vadd.f32 %v6293, %v6363
    %v6396 = vadd.f32 %v6294, %v6364
    %s6397 = scalar_lea.vmem [#allocation2], 416
    %v6398 = vld [vmem:[%s6397 + $0x8] sm:$0xff]
    %v6399 = vld [vmem:[%s6397 + $0x10] sm:$0xff]
    %v6400 = vld [vmem:[%s6397 + $0x28] sm:$0xff]
    %v6401 = vld [vmem:[%s6397 + $0x30] sm:$0xff]
    %v6402 = vld [vmem:[%s6397 + $0x48] sm:$0xff]
    %v6403 = vld [vmem:[%s6397 + $0x50] sm:$0xff]
    %v6404 = vld [vmem:[%s6397 + $0x68] sm:$0xff]
    %v6405 = vld [vmem:[%s6397 + $0x70] sm:$0xff]
    %v6406 = vld [vmem:[%s6397 + $0x88] sm:$0xff]
    %v6407 = vld [vmem:[%s6397 + $0x90] sm:$0xff]
    %v6408 = vld [vmem:[%s6397 + $0xa8] sm:$0xff]
    %v6409 = vld [vmem:[%s6397 + $0xb0] sm:$0xff]
    %v6410 = vld [vmem:[%s6397 + $0xc8] sm:$0xff]
    %v6411 = vld [vmem:[%s6397 + $0xd0] sm:$0xff]
    %v6412 = vld [vmem:[%s6397 + $0xe8] sm:$0xff]
    %v6413 = vld [vmem:[%s6397 + $0xf0] sm:$0xff]
    %v6414 = vld [vmem:[%s6397 + $0x108] sm:$0xff]
    %v6415 = vld [vmem:[%s6397 + $0x110] sm:$0xff]
    %v6416 = vld [vmem:[%s6397 + $0x128] sm:$0xff]
    %v6417 = vld [vmem:[%s6397 + $0x130] sm:$0xff]
    %v6418 = vld [vmem:[%s6397 + $0x148] sm:$0xff]
    %v6419 = vld [vmem:[%s6397 + $0x150] sm:$0xff]
    %v6420 = vld [vmem:[%s6397 + $0x168] sm:$0xff]
    %v6421 = vld [vmem:[%s6397 + $0x170] sm:$0xff]
    %v6422 = vld [vmem:[%s6397 + $0x188] sm:$0xff]
    %v6423 = vld [vmem:[%s6397 + $0x190] sm:$0xff]
    %v6424 = vld [vmem:[%s6397 + $0x1a8] sm:$0xff]
    %v6425 = vld [vmem:[%s6397 + $0x1b0] sm:$0xff]
    %v6426 = vld [vmem:[%s6397 + $0x1c8] sm:$0xff]
    %v6427 = vld [vmem:[%s6397 + $0x1d0] sm:$0xff]
    %v6428 = vld [vmem:[%s6397 + $0x1e8] sm:$0xff]
    %v6429 = vld [vmem:[%s6397 + $0x1f0] sm:$0xff]
    %v6430 = vld [vmem:[%s1 + $0x3f] sm:$0x1]
    %v6431 = vlaneseq
    %v6432 = vshrl.u32 %v6431, 7
    %v6433 = vsub.s32 0, %v6432
    %v6434 = vrot.slane %v6430, %v6433
    %v6435 = vmul.f32 %v6398, %v6434
    %v6436 = vmul.f32 %v6399, %v6434
    %v6437 = vmul.f32 %v6400, %v6434
    %v6438 = vmul.f32 %v6401, %v6434
    %v6439 = vmul.f32 %v6402, %v6434
    %v6440 = vmul.f32 %v6403, %v6434
    %v6441 = vmul.f32 %v6404, %v6434
    %v6442 = vmul.f32 %v6405, %v6434
    %v6443 = vmul.f32 %v6406, %v6434
    %v6444 = vmul.f32 %v6407, %v6434
    %v6445 = vmul.f32 %v6408, %v6434
    %v6446 = vmul.f32 %v6409, %v6434
    %v6447 = vmul.f32 %v6410, %v6434
    %v6448 = vmul.f32 %v6411, %v6434
    %v6449 = vmul.f32 %v6412, %v6434
    %v6450 = vmul.f32 %v6413, %v6434
    %v6451 = vmul.f32 %v6414, %v6434
    %v6452 = vmul.f32 %v6415, %v6434
    %v6453 = vmul.f32 %v6416, %v6434
    %v6454 = vmul.f32 %v6417, %v6434
    %v6455 = vmul.f32 %v6418, %v6434
    %v6456 = vmul.f32 %v6419, %v6434
    %v6457 = vmul.f32 %v6420, %v6434
    %v6458 = vmul.f32 %v6421, %v6434
    %v6459 = vmul.f32 %v6422, %v6434
    %v6460 = vmul.f32 %v6423, %v6434
    %v6461 = vmul.f32 %v6424, %v6434
    %v6462 = vmul.f32 %v6425, %v6434
    %v6463 = vmul.f32 %v6426, %v6434
    %v6464 = vmul.f32 %v6427, %v6434
    %v6465 = vmul.f32 %v6428, %v6434
    %v6466 = vmul.f32 %v6429, %v6434
    %v6467 = vadd.f32 %v6365, %v6435
    %v6468 = vadd.f32 %v6366, %v6436
    %v6469 = vadd.f32 %v6367, %v6437
    %v6470 = vadd.f32 %v6368, %v6438
    %v6471 = vadd.f32 %v6369, %v6439
    %v6472 = vadd.f32 %v6370, %v6440
    %v6473 = vadd.f32 %v6371, %v6441
    %v6474 = vadd.f32 %v6372, %v6442
    %v6475 = vadd.f32 %v6373, %v6443
    %v6476 = vadd.f32 %v6374, %v6444
    %v6477 = vadd.f32 %v6375, %v6445
    %v6478 = vadd.f32 %v6376, %v6446
    %v6479 = vadd.f32 %v6377, %v6447
    %v6480 = vadd.f32 %v6378, %v6448
    %v6481 = vadd.f32 %v6379, %v6449
    %v6482 = vadd.f32 %v6380, %v6450
    %v6483 = vadd.f32 %v6381, %v6451
    %v6484 = vadd.f32 %v6382, %v6452
    %v6485 = vadd.f32 %v6383, %v6453
    %v6486 = vadd.f32 %v6384, %v6454
    %v6487 = vadd.f32 %v6385, %v6455
    %v6488 = vadd.f32 %v6386, %v6456
    %v6489 = vadd.f32 %v6387, %v6457
    %v6490 = vadd.f32 %v6388, %v6458
    %v6491 = vadd.f32 %v6389, %v6459
    %v6492 = vadd.f32 %v6390, %v6460
    %v6493 = vadd.f32 %v6391, %v6461
    %v6494 = vadd.f32 %v6392, %v6462
    %v6495 = vadd.f32 %v6393, %v6463
    %v6496 = vadd.f32 %v6394, %v6464
    %v6497 = vadd.f32 %v6395, %v6465
    %v6498 = vadd.f32 %v6396, %v6466
    %v6499 = vld [vmem:[%s2 + $0x7] sm:$0x1]
    %v6500 = vlaneseq
    %v6501 = vshrl.u32 %v6500, 7
    %v6502 = vsub.s32 0, %v6501
    %v6503 = vrot.slane %v6499, %v6502
    %v6504 = vadd.f32 %v6467, %v6503
    %v6505 = vadd.f32 %v6468, %v6503
    %v6506 = vadd.f32 %v6469, %v6503
    %v6507 = vadd.f32 %v6470, %v6503
    %v6508 = vadd.f32 %v6471, %v6503
    %v6509 = vadd.f32 %v6472, %v6503
    %v6510 = vadd.f32 %v6473, %v6503
    %v6511 = vadd.f32 %v6474, %v6503
    %v6512 = vadd.f32 %v6475, %v6503
    %v6513 = vadd.f32 %v6476, %v6503
    %v6514 = vadd.f32 %v6477, %v6503
    %v6515 = vadd.f32 %v6478, %v6503
    %v6516 = vadd.f32 %v6479, %v6503
    %v6517 = vadd.f32 %v6480, %v6503
    %v6518 = vadd.f32 %v6481, %v6503
    %v6519 = vadd.f32 %v6482, %v6503
    %v6520 = vadd.f32 %v6483, %v6503
    %v6521 = vadd.f32 %v6484, %v6503
    %v6522 = vadd.f32 %v6485, %v6503
    %v6523 = vadd.f32 %v6486, %v6503
    %v6524 = vadd.f32 %v6487, %v6503
    %v6525 = vadd.f32 %v6488, %v6503
    %v6526 = vadd.f32 %v6489, %v6503
    %v6527 = vadd.f32 %v6490, %v6503
    %v6528 = vadd.f32 %v6491, %v6503
    %v6529 = vadd.f32 %v6492, %v6503
    %v6530 = vadd.f32 %v6493, %v6503
    %v6531 = vadd.f32 %v6494, %v6503
    %v6532 = vadd.f32 %v6495, %v6503
    %v6533 = vadd.f32 %v6496, %v6503
    %v6534 = vadd.f32 %v6497, %v6503
    %v6535 = vadd.f32 %v6498, %v6503
    %v6536 = vadd.f32 %v5352, %v6504
    %v6537 = vadd.f32 %v5353, %v6505
    %v6538 = vadd.f32 %v5354, %v6506
    %v6539 = vadd.f32 %v5355, %v6507
    %v6540 = vadd.f32 %v5356, %v6508
    %v6541 = vadd.f32 %v5357, %v6509
    %v6542 = vadd.f32 %v5358, %v6510
    %v6543 = vadd.f32 %v5359, %v6511
    %v6544 = vadd.f32 %v5360, %v6512
    %v6545 = vadd.f32 %v5361, %v6513
    %v6546 = vadd.f32 %v5362, %v6514
    %v6547 = vadd.f32 %v5363, %v6515
    %v6548 = vadd.f32 %v5364, %v6516
    %v6549 = vadd.f32 %v5365, %v6517
    %v6550 = vadd.f32 %v5366, %v6518
    %v6551 = vadd.f32 %v5367, %v6519
    %v6552 = vadd.f32 %v5368, %v6520
    %v6553 = vadd.f32 %v5369, %v6521
    %v6554 = vadd.f32 %v5370, %v6522
    %v6555 = vadd.f32 %v5371, %v6523
    %v6556 = vadd.f32 %v5372, %v6524
    %v6557 = vadd.f32 %v5373, %v6525
    %v6558 = vadd.f32 %v5374, %v6526
    %v6559 = vadd.f32 %v5375, %v6527
    %v6560 = vadd.f32 %v5376, %v6528
    %v6561 = vadd.f32 %v5377, %v6529
    %v6562 = vadd.f32 %v5378, %v6530
    %v6563 = vadd.f32 %v5379, %v6531
    %v6564 = vadd.f32 %v5380, %v6532
    %v6565 = vadd.f32 %v5381, %v6533
    %v6566 = vadd.f32 %v5382, %v6534
    %v6567 = vadd.f32 %v5383, %v6535
    %v6568 = vmul.f32 %v6536, 0.2
    %v6569 = vmul.f32 %v6537, 0.2
    %v6570 = vmul.f32 %v6538, 0.2
    %v6571 = vmul.f32 %v6539, 0.2
    %v6572 = vmul.f32 %v6540, 0.2
    %v6573 = vmul.f32 %v6541, 0.2
    %v6574 = vmul.f32 %v6542, 0.2
    %v6575 = vmul.f32 %v6543, 0.2
    %v6576 = vmul.f32 %v6544, 0.2
    %v6577 = vmul.f32 %v6545, 0.2
    %v6578 = vmul.f32 %v6546, 0.2
    %v6579 = vmul.f32 %v6547, 0.2
    %v6580 = vmul.f32 %v6548, 0.2
    %v6581 = vmul.f32 %v6549, 0.2
    %v6582 = vmul.f32 %v6550, 0.2
    %v6583 = vmul.f32 %v6551, 0.2
    %v6584 = vmul.f32 %v6552, 0.2
    %v6585 = vmul.f32 %v6553, 0.2
    %v6586 = vmul.f32 %v6554, 0.2
    %v6587 = vmul.f32 %v6555, 0.2
    %v6588 = vmul.f32 %v6556, 0.2
    %v6589 = vmul.f32 %v6557, 0.2
    %v6590 = vmul.f32 %v6558, 0.2
    %v6591 = vmul.f32 %v6559, 0.2
    %v6592 = vmul.f32 %v6560, 0.2
    %v6593 = vmul.f32 %v6561, 0.2
    %v6594 = vmul.f32 %v6562, 0.2
    %v6595 = vmul.f32 %v6563, 0.2
    %v6596 = vmul.f32 %v6564, 0.2
    %v6597 = vmul.f32 %v6565, 0.2
    %v6598 = vmul.f32 %v6566, 0.2
    %v6599 = vmul.f32 %v6567, 0.2
    %v6600 = vld [vmem:[%s3] sm:$0xff]
    %v6601 = vld [vmem:[%s3 + $0x8] sm:$0xff]
    %v6602 = vld [vmem:[%s3 + $0x10] sm:$0xff]
    %v6603 = vld [vmem:[%s3 + $0x18] sm:$0xff]
    %v6604 = vld [vmem:[%s3 + $0x20] sm:$0xff]
    %v6605 = vld [vmem:[%s3 + $0x28] sm:$0xff]
    %v6606 = vld [vmem:[%s3 + $0x30] sm:$0xff]
    %v6607 = vld [vmem:[%s3 + $0x38] sm:$0xff]
    %v6608 = vld [vmem:[%s3 + $0x40] sm:$0xff]
    %v6609 = vld [vmem:[%s3 + $0x48] sm:$0xff]
    %v6610 = vld [vmem:[%s3 + $0x50] sm:$0xff]
    %v6611 = vld [vmem:[%s3 + $0x58] sm:$0xff]
    %v6612 = vld [vmem:[%s3 + $0x60] sm:$0xff]
    %v6613 = vld [vmem:[%s3 + $0x68] sm:$0xff]
    %v6614 = vld [vmem:[%s3 + $0x70] sm:$0xff]
    %v6615 = vld [vmem:[%s3 + $0x78] sm:$0xff]
    %v6617 = vsel %vm35, %v134, 0
    %v6620 = vsel %vm35, %v135, 0
    %v6623 = vsel %vm35, %v136, 0
    %v6626 = vsel %vm35, %v137, 0
    %v6629 = vsel %vm35, %v138, 0
    %v6632 = vsel %vm35, %v139, 0
    %v6635 = vsel %vm35, %v140, 0
    %v6638 = vsel %vm35, %v141, 0
    %v6641 = vsel %vm35, %v142, 0
    %v6644 = vsel %vm35, %v143, 0
    %v6647 = vsel %vm35, %v144, 0
    %v6650 = vsel %vm35, %v145, 0
    %v6653 = vsel %vm35, %v146, 0
    %v6656 = vsel %vm35, %v147, 0
    %v6659 = vsel %vm35, %v148, 0
    %v6662 = vsel %vm35, %v149, 0
    %v6665 = vsel %vm35, %v150, 0
    %v6668 = vsel %vm35, %v151, 0
    %v6671 = vsel %vm35, %v152, 0
    %v6674 = vsel %vm35, %v153, 0
    %v6677 = vsel %vm35, %v154, 0
    %v6680 = vsel %vm35, %v155, 0
    %v6683 = vsel %vm35, %v156, 0
    %v6686 = vsel %vm35, %v157, 0
    %v6689 = vsel %vm35, %v158, 0
    %v6692 = vsel %vm35, %v159, 0
    %v6695 = vsel %vm35, %v160, 0
    %v6698 = vsel %vm35, %v161, 0
    %v6701 = vsel %vm35, %v162, 0
    %v6704 = vsel %vm35, %v163, 0
    %v6707 = vsel %vm35, %v164, 0
    %v6710 = vsel %vm35, %v165, 0
    %6712 = vmatprep.subr.mxu0 0.0
    %6713 = vmatpush1.msra.mxu0 %v6608
    %6714 = vmatprep.subr.mxu0 0.0
    %6715 = vmatpush1.msra.mxu0 %v6609
    %6716 = vmatprep.subr.mxu0 0.0
    %6717 = vmatpush1.msra.mxu0 %v6610
    %6718 = vmatprep.subr.mxu0 0.0
    %6719 = vmatpush1.msra.mxu0 %v6611
    %6720 = vmatprep.subr.mxu0 0.0
    %6721 = vmatpush1.msra.mxu0 %v6612
    %6722 = vmatprep.subr.mxu0 0.0
    %6723 = vmatpush1.msra.mxu0 %v6613
    %6724 = vmatprep.subr.mxu0 0.0
    %6725 = vmatpush1.msra.mxu0 %v6614
    %6726 = vmatprep.subr.mxu0 0.0
    %6727 = vmatpush1.msra.mxu0 %v6615
    %6728 = vmatprep.subr.mxu0 0.0
    %6729 = vmatpush1.msra.mxu0 0.0
    %6730 = vmatprep.subr.mxu0 0.0
    %6731 = vmatpush1.msra.mxu0 0.0
    %6732 = vmatprep.subr.mxu0 0.0
    %6733 = vmatpush1.msra.mxu0 0.0
    %6734 = vmatprep.subr.mxu0 0.0
    %6735 = vmatpush1.msra.mxu0 0.0
    %6736 = vmatprep.subr.mxu0 0.0
    %6737 = vmatpush1.msra.mxu0 0.0
    %6738 = vmatprep.subr.mxu0 0.0
    %6739 = vmatpush1.msra.mxu0 0.0
    %6740 = vmatprep.subr.mxu0 0.0
    %6741 = vmatpush1.msra.mxu0 0.0
    %6742 = vmatprep.subr.mxu0 0.0
    %6743 = vmatpush1.msra.mxu0 0.0
    %6744 = vmatprep.subr.mxu0 0.0
    %6745 = vmatpush1.msra.mxu0 0.0
    %6746 = vmatprep.subr.mxu0 0.0
    %6747 = vmatpush1.msra.mxu0 0.0
    %6748 = vmatprep.subr.mxu0 0.0
    %6749 = vmatpush1.msra.mxu0 0.0
    %6750 = vmatprep.subr.mxu0 0.0
    %6751 = vmatpush1.msra.mxu0 0.0
    %6752 = vmatprep.subr.mxu0 0.0
    %6753 = vmatpush1.msra.mxu0 0.0
    %6754 = vmatprep.subr.mxu0 0.0
    %6755 = vmatpush1.msra.mxu0 0.0
    %6756 = vmatprep.subr.mxu0 0.0
    %6757 = vmatpush1.msra.mxu0 0.0
    %6758 = vmatprep.subr.mxu0 0.0
    %6759 = vmatpush1.msra.mxu0 0.0
    %6760 = vmatprep.subr.mxu0 0.0
    %6761 = vmatpush1.msra.mxu0 0.0
    %6762 = vmatprep.subr.mxu0 0.0
    %6763 = vmatpush1.msra.mxu0 0.0
    %6764 = vmatprep.subr.mxu0 0.0
    %6765 = vmatpush1.msra.mxu0 0.0
    %6766 = vmatprep.subr.mxu0 0.0
    %6767 = vmatpush1.msra.mxu0 0.0
    %6768 = vmatprep.subr.mxu0 0.0
    %6769 = vmatpush1.msra.mxu0 0.0
    %6770 = vmatprep.subr.mxu0 0.0
    %6771 = vmatpush1.msra.mxu0 0.0
    %6772 = vmatprep.subr.mxu0 0.0
    %6773 = vmatpush1.msra.mxu0 0.0
    %6774 = vmatprep.subr.mxu0 0.0
    %6775 = vmatpush1.msra.mxu0 0.0
    %6776 = vmatprep.mubr.f32.mxu0 0.0
    %6777 = vmatmul.mubr.f32.gmra.mrb[0].mxu0 %v6617
    %v6778 = vpop.f32.mrb[0].mxu0
    %v6779 = vadd.f32 0.0, %v6778
    %v6780 = vpop.f32.mrb[0].mxu0
    %6781 = vmatprep.mubr.f32.mxu0 0.0
    %6782 = vmatmul.mubr.f32.gmra.mrb[0].mxu0 %v6620
    %v6783 = vpop.f32.mrb[0].mxu0
    %v6784 = vadd.f32 0.0, %v6783
    %v6785 = vpop.f32.mrb[0].mxu0
    %6786 = vmatprep.mubr.f32.mxu0 0.0
    %6787 = vmatmul.mubr.f32.gmra.mrb[0].mxu0 %v6623
    %v6788 = vpop.f32.mrb[0].mxu0
    %v6789 = vadd.f32 0.0, %v6788
    %v6790 = vpop.f32.mrb[0].mxu0
    %6791 = vmatprep.mubr.f32.mxu0 0.0
    %6792 = vmatmul.mubr.f32.gmra.mrb[0].mxu0 %v6626
    %v6793 = vpop.f32.mrb[0].mxu0
    %v6794 = vadd.f32 0.0, %v6793
    %v6795 = vpop.f32.mrb[0].mxu0
    %6796 = vmatprep.mubr.f32.mxu0 0.0
    %6797 = vmatmul.mubr.f32.gmra.mrb[0].mxu0 %v6629
    %v6798 = vpop.f32.mrb[0].mxu0
    %v6799 = vadd.f32 0.0, %v6798
    %v6800 = vpop.f32.mrb[0].mxu0
    %6801 = vmatprep.mubr.f32.mxu0 0.0
    %6802 = vmatmul.mubr.f32.gmra.mrb[0].mxu0 %v6632
    %v6803 = vpop.f32.mrb[0].mxu0
    %v6804 = vadd.f32 0.0, %v6803
    %v6805 = vpop.f32.mrb[0].mxu0
    %6806 = vmatprep.mubr.f32.mxu0 0.0
    %6807 = vmatmul.mubr.f32.gmra.mrb[0].mxu0 %v6635
    %v6808 = vpop.f32.mrb[0].mxu0
    %v6809 = vadd.f32 0.0, %v6808
    %v6810 = vpop.f32.mrb[0].mxu0
    %6811 = vmatprep.mubr.f32.mxu0 0.0
    %6812 = vmatmul.mubr.f32.gmra.mrb[0].mxu0 %v6638
    %v6813 = vpop.f32.mrb[0].mxu0
    %v6814 = vadd.f32 0.0, %v6813
    %v6815 = vpop.f32.mrb[0].mxu0
    %6816 = vmatprep.mubr.f32.mxu0 0.0
    %6817 = vmatmul.mubr.f32.gmra.mrb[0].mxu0 %v6641
    %v6818 = vpop.f32.mrb[0].mxu0
    %v6819 = vadd.f32 0.0, %v6818
    %v6820 = vpop.f32.mrb[0].mxu0
    %6821 = vmatprep.mubr.f32.mxu0 0.0
    %6822 = vmatmul.mubr.f32.gmra.mrb[0].mxu0 %v6644
    %v6823 = vpop.f32.mrb[0].mxu0
    %v6824 = vadd.f32 0.0, %v6823
    %v6825 = vpop.f32.mrb[0].mxu0
    %6826 = vmatprep.mubr.f32.mxu0 0.0
    %6827 = vmatmul.mubr.f32.gmra.mrb[0].mxu0 %v6647
    %v6828 = vpop.f32.mrb[0].mxu0
    %v6829 = vadd.f32 0.0, %v6828
    %v6830 = vpop.f32.mrb[0].mxu0
    %6831 = vmatprep.mubr.f32.mxu0 0.0
    %6832 = vmatmul.mubr.f32.gmra.mrb[0].mxu0 %v6650
    %v6833 = vpop.f32.mrb[0].mxu0
    %v6834 = vadd.f32 0.0, %v6833
    %v6835 = vpop.f32.mrb[0].mxu0
    %6836 = vmatprep.mubr.f32.mxu0 0.0
    %6837 = vmatmul.mubr.f32.gmra.mrb[0].mxu0 %v6653
    %v6838 = vpop.f32.mrb[0].mxu0
    %v6839 = vadd.f32 0.0, %v6838
    %v6840 = vpop.f32.mrb[0].mxu0
    %6841 = vmatprep.mubr.f32.mxu0 0.0
    %6842 = vmatmul.mubr.f32.gmra.mrb[0].mxu0 %v6656
    %v6843 = vpop.f32.mrb[0].mxu0
    %v6844 = vadd.f32 0.0, %v6843
    %v6845 = vpop.f32.mrb[0].mxu0
    %6846 = vmatprep.mubr.f32.mxu0 0.0
    %6847 = vmatmul.mubr.f32.gmra.mrb[0].mxu0 %v6659
    %v6848 = vpop.f32.mrb[0].mxu0
    %v6849 = vadd.f32 0.0, %v6848
    %v6850 = vpop.f32.mrb[0].mxu0
    %6851 = vmatprep.mubr.f32.mxu0 0.0
    %6852 = vmatmul.mubr.f32.gmra.mrb[0].mxu0 %v6662
    %v6853 = vpop.f32.mrb[0].mxu0
    %v6854 = vadd.f32 0.0, %v6853
    %v6855 = vpop.f32.mrb[0].mxu0
    %6856 = vmatprep.mubr.f32.mxu0 0.0
    %6857 = vmatmul.mubr.f32.gmra.mrb[0].mxu0 %v6665
    %v6858 = vpop.f32.mrb[0].mxu0
    %v6859 = vadd.f32 0.0, %v6858
    %v6860 = vpop.f32.mrb[0].mxu0
    %6861 = vmatprep.mubr.f32.mxu0 0.0
    %6862 = vmatmul.mubr.f32.gmra.mrb[0].mxu0 %v6668
    %v6863 = vpop.f32.mrb[0].mxu0
    %v6864 = vadd.f32 0.0, %v6863
    %v6865 = vpop.f32.mrb[0].mxu0
    %6866 = vmatprep.mubr.f32.mxu0 0.0
    %6867 = vmatmul.mubr.f32.gmra.mrb[0].mxu0 %v6671
    %v6868 = vpop.f32.mrb[0].mxu0
    %v6869 = vadd.f32 0.0, %v6868
    %v6870 = vpop.f32.mrb[0].mxu0
    %6871 = vmatprep.mubr.f32.mxu0 0.0
    %6872 = vmatmul.mubr.f32.gmra.mrb[0].mxu0 %v6674
    %v6873 = vpop.f32.mrb[0].mxu0
    %v6874 = vadd.f32 0.0, %v6873
    %v6875 = vpop.f32.mrb[0].mxu0
    %6876 = vmatprep.mubr.f32.mxu0 0.0
    %6877 = vmatmul.mubr.f32.gmra.mrb[0].mxu0 %v6677
    %v6878 = vpop.f32.mrb[0].mxu0
    %v6879 = vadd.f32 0.0, %v6878
    %v6880 = vpop.f32.mrb[0].mxu0
    %6881 = vmatprep.mubr.f32.mxu0 0.0
    %6882 = vmatmul.mubr.f32.gmra.mrb[0].mxu0 %v6680
    %v6883 = vpop.f32.mrb[0].mxu0
    %v6884 = vadd.f32 0.0, %v6883
    %v6885 = vpop.f32.mrb[0].mxu0
    %6886 = vmatprep.mubr.f32.mxu0 0.0
    %6887 = vmatmul.mubr.f32.gmra.mrb[0].mxu0 %v6683
    %v6888 = vpop.f32.mrb[0].mxu0
    %v6889 = vadd.f32 0.0, %v6888
    %v6890 = vpop.f32.mrb[0].mxu0
    %6891 = vmatprep.mubr.f32.mxu0 0.0
    %6892 = vmatmul.mubr.f32.gmra.mrb[0].mxu0 %v6686
    %v6893 = vpop.f32.mrb[0].mxu0
    %v6894 = vadd.f32 0.0, %v6893
    %v6895 = vpop.f32.mrb[0].mxu0
    %6896 = vmatprep.mubr.f32.mxu0 0.0
    %6897 = vmatmul.mubr.f32.gmra.mrb[0].mxu0 %v6689
    %v6898 = vpop.f32.mrb[0].mxu0
    %v6899 = vadd.f32 0.0, %v6898
    %v6900 = vpop.f32.mrb[0].mxu0
    %6901 = vmatprep.mubr.f32.mxu0 0.0
    %6902 = vmatmul.mubr.f32.gmra.mrb[0].mxu0 %v6692
    %v6903 = vpop.f32.mrb[0].mxu0
    %v6904 = vadd.f32 0.0, %v6903
    %v6905 = vpop.f32.mrb[0].mxu0
    %6906 = vmatprep.mubr.f32.mxu0 0.0
    %6907 = vmatmul.mubr.f32.gmra.mrb[0].mxu0 %v6695
    %v6908 = vpop.f32.mrb[0].mxu0
    %v6909 = vadd.f32 0.0, %v6908
    %v6910 = vpop.f32.mrb[0].mxu0
    %6911 = vmatprep.mubr.f32.mxu0 0.0
    %6912 = vmatmul.mubr.f32.gmra.mrb[0].mxu0 %v6698
    %v6913 = vpop.f32.mrb[0].mxu0
    %v6914 = vadd.f32 0.0, %v6913
    %v6915 = vpop.f32.mrb[0].mxu0
    %6916 = vmatprep.mubr.f32.mxu0 0.0
    %6917 = vmatmul.mubr.f32.gmra.mrb[0].mxu0 %v6701
    %v6918 = vpop.f32.mrb[0].mxu0
    %v6919 = vadd.f32 0.0, %v6918
    %v6920 = vpop.f32.mrb[0].mxu0
    %6921 = vmatprep.mubr.f32.mxu0 0.0
    %6922 = vmatmul.mubr.f32.gmra.mrb[0].mxu0 %v6704
    %v6923 = vpop.f32.mrb[0].mxu0
    %v6924 = vadd.f32 0.0, %v6923
    %v6925 = vpop.f32.mrb[0].mxu0
    %6926 = vmatprep.mubr.f32.mxu0 0.0
    %6927 = vmatmul.mubr.f32.gmra.mrb[0].mxu0 %v6707
    %v6928 = vpop.f32.mrb[0].mxu0
    %v6929 = vadd.f32 0.0, %v6928
    %v6930 = vpop.f32.mrb[0].mxu0
    %6931 = vmatprep.mubr.f32.mxu0 0.0
    %6932 = vmatmul.mubr.f32.gmra.mrb[0].mxu0 %v6710
    %v6933 = vpop.f32.mrb[0].mxu0
    %v6934 = vadd.f32 0.0, %v6933
    %v6935 = vpop.f32.mrb[0].mxu0
    %6936 = vdwg.mxu0
    %v6938 = vsel %vm35, %v6568, 0
    %v6941 = vsel %vm35, %v6569, 0
    %v6944 = vsel %vm35, %v6570, 0
    %v6947 = vsel %vm35, %v6571, 0
    %v6950 = vsel %vm35, %v6572, 0
    %v6953 = vsel %vm35, %v6573, 0
    %v6956 = vsel %vm35, %v6574, 0
    %v6959 = vsel %vm35, %v6575, 0
    %v6962 = vsel %vm35, %v6576, 0
    %v6965 = vsel %vm35, %v6577, 0
    %v6968 = vsel %vm35, %v6578, 0
    %v6971 = vsel %vm35, %v6579, 0
    %v6974 = vsel %vm35, %v6580, 0
    %v6977 = vsel %vm35, %v6581, 0
    %v6980 = vsel %vm35, %v6582, 0
    %v6983 = vsel %vm35, %v6583, 0
    %v6986 = vsel %vm35, %v6584, 0
    %v6989 = vsel %vm35, %v6585, 0
    %v6992 = vsel %vm35, %v6586, 0
    %v6995 = vsel %vm35, %v6587, 0
    %v6998 = vsel %vm35, %v6588, 0
    %v7001 = vsel %vm35, %v6589, 0
    %v7004 = vsel %vm35, %v6590, 0
    %v7007 = vsel %vm35, %v6591, 0
    %v7010 = vsel %vm35, %v6592, 0
    %v7013 = vsel %vm35, %v6593, 0
    %v7016 = vsel %vm35, %v6594, 0
    %v7019 = vsel %vm35, %v6595, 0
    %v7022 = vsel %vm35, %v6596, 0
    %v7025 = vsel %vm35, %v6597, 0
    %v7028 = vsel %vm35, %v6598, 0
    %v7031 = vsel %vm35, %v6599, 0
    %7033 = vmatprep.subr.mxu0 0.0
    %7034 = vmatpush1.msra.mxu0 %v6600
    %7035 = vmatprep.subr.mxu0 0.0
    %7036 = vmatpush1.msra.mxu0 %v6601
    %7037 = vmatprep.subr.mxu0 0.0
    %7038 = vmatpush1.msra.mxu0 %v6602
    %7039 = vmatprep.subr.mxu0 0.0
    %7040 = vmatpush1.msra.mxu0 %v6603
    %7041 = vmatprep.subr.mxu0 0.0
    %7042 = vmatpush1.msra.mxu0 %v6604
    %7043 = vmatprep.subr.mxu0 0.0
    %7044 = vmatpush1.msra.mxu0 %v6605
    %7045 = vmatprep.subr.mxu0 0.0
    %7046 = vmatpush1.msra.mxu0 %v6606
    %7047 = vmatprep.subr.mxu0 0.0
    %7048 = vmatpush1.msra.mxu0 %v6607
    %7049 = vmatprep.subr.mxu0 0.0
    %7050 = vmatpush1.msra.mxu0 0.0
    %7051 = vmatprep.subr.mxu0 0.0
    %7052 = vmatpush1.msra.mxu0 0.0
    %7053 = vmatprep.subr.mxu0 0.0
    %7054 = vmatpush1.msra.mxu0 0.0
    %7055 = vmatprep.subr.mxu0 0.0
    %7056 = vmatpush1.msra.mxu0 0.0
    %7057 = vmatprep.subr.mxu0 0.0
    %7058 = vmatpush1.msra.mxu0 0.0
    %7059 = vmatprep.subr.mxu0 0.0
    %7060 = vmatpush1.msra.mxu0 0.0
    %7061 = vmatprep.subr.mxu0 0.0
    %7062 = vmatpush1.msra.mxu0 0.0
    %7063 = vmatprep.subr.mxu0 0.0
    %7064 = vmatpush1.msra.mxu0 0.0
    %7065 = vmatprep.subr.mxu0 0.0
    %7066 = vmatpush1.msra.mxu0 0.0
    %7067 = vmatprep.subr.mxu0 0.0
    %7068 = vmatpush1.msra.mxu0 0.0
    %7069 = vmatprep.subr.mxu0 0.0
    %7070 = vmatpush1.msra.mxu0 0.0
    %7071 = vmatprep.subr.mxu0 0.0
    %7072 = vmatpush1.msra.mxu0 0.0
    %7073 = vmatprep.subr.mxu0 0.0
    %7074 = vmatpush1.msra.mxu0 0.0
    %7075 = vmatprep.subr.mxu0 0.0
    %7076 = vmatpush1.msra.mxu0 0.0
    %7077 = vmatprep.subr.mxu0 0.0
    %7078 = vmatpush1.msra.mxu0 0.0
    %7079 = vmatprep.subr.mxu0 0.0
    %7080 = vmatpush1.msra.mxu0 0.0
    %7081 = vmatprep.subr.mxu0 0.0
    %7082 = vmatpush1.msra.mxu0 0.0
    %7083 = vmatprep.subr.mxu0 0.0
    %7084 = vmatpush1.msra.mxu0 0.0
    %7085 = vmatprep.subr.mxu0 0.0
    %7086 = vmatpush1.msra.mxu0 0.0
    %7087 = vmatprep.subr.mxu0 0.0
    %7088 = vmatpush1.msra.mxu0 0.0
    %7089 = vmatprep.subr.mxu0 0.0
    %7090 = vmatpush1.msra.mxu0 0.0
    %7091 = vmatprep.subr.mxu0 0.0
    %7092 = vmatpush1.msra.mxu0 0.0
    %7093 = vmatprep.subr.mxu0 0.0
    %7094 = vmatpush1.msra.mxu0 0.0
    %7095 = vmatprep.subr.mxu0 0.0
    %7096 = vmatpush1.msra.mxu0 0.0
    %7097 = vmatprep.mubr.f32.mxu0 0.0
    %7098 = vmatmul.mubr.f32.gmra.mrb[0].mxu0 %v6938
    %v7099 = vpop.f32.mrb[0].mxu0
    %v7100 = vadd.f32 %v6779, %v7099
    %v7101 = vpop.f32.mrb[0].mxu0
    %7102 = vmatprep.mubr.f32.mxu0 0.0
    %7103 = vmatmul.mubr.f32.gmra.mrb[0].mxu0 %v6941
    %v7104 = vpop.f32.mrb[0].mxu0
    %v7105 = vadd.f32 %v6784, %v7104
    %v7106 = vpop.f32.mrb[0].mxu0
    %7107 = vmatprep.mubr.f32.mxu0 0.0
    %7108 = vmatmul.mubr.f32.gmra.mrb[0].mxu0 %v6944
    %v7109 = vpop.f32.mrb[0].mxu0
    %v7110 = vadd.f32 %v6789, %v7109
    %v7111 = vpop.f32.mrb[0].mxu0
    %7112 = vmatprep.mubr.f32.mxu0 0.0
    %7113 = vmatmul.mubr.f32.gmra.mrb[0].mxu0 %v6947
    %v7114 = vpop.f32.mrb[0].mxu0
    %v7115 = vadd.f32 %v6794, %v7114
    %v7116 = vpop.f32.mrb[0].mxu0
    %7117 = vmatprep.mubr.f32.mxu0 0.0
    %7118 = vmatmul.mubr.f32.gmra.mrb[0].mxu0 %v6950
    %v7119 = vpop.f32.mrb[0].mxu0
    %v7120 = vadd.f32 %v6799, %v7119
    %v7121 = vpop.f32.mrb[0].mxu0
    %7122 = vmatprep.mubr.f32.mxu0 0.0
    %7123 = vmatmul.mubr.f32.gmra.mrb[0].mxu0 %v6953
    %v7124 = vpop.f32.mrb[0].mxu0
    %v7125 = vadd.f32 %v6804, %v7124
    %v7126 = vpop.f32.mrb[0].mxu0
    %7127 = vmatprep.mubr.f32.mxu0 0.0
    %7128 = vmatmul.mubr.f32.gmra.mrb[0].mxu0 %v6956
    %v7129 = vpop.f32.mrb[0].mxu0
    %v7130 = vadd.f32 %v6809, %v7129
    %v7131 = vpop.f32.mrb[0].mxu0
    %7132 = vmatprep.mubr.f32.mxu0 0.0
    %7133 = vmatmul.mubr.f32.gmra.mrb[0].mxu0 %v6959
    %v7134 = vpop.f32.mrb[0].mxu0
    %v7135 = vadd.f32 %v6814, %v7134
    %v7136 = vpop.f32.mrb[0].mxu0
    %7137 = vmatprep.mubr.f32.mxu0 0.0
    %7138 = vmatmul.mubr.f32.gmra.mrb[0].mxu0 %v6962
    %v7139 = vpop.f32.mrb[0].mxu0
    %v7140 = vadd.f32 %v6819, %v7139
    %v7141 = vpop.f32.mrb[0].mxu0
    %7142 = vmatprep.mubr.f32.mxu0 0.0
    %7143 = vmatmul.mubr.f32.gmra.mrb[0].mxu0 %v6965
    %v7144 = vpop.f32.mrb[0].mxu0
    %v7145 = vadd.f32 %v6824, %v7144
    %v7146 = vpop.f32.mrb[0].mxu0
    %7147 = vmatprep.mubr.f32.mxu0 0.0
    %7148 = vmatmul.mubr.f32.gmra.mrb[0].mxu0 %v6968
    %v7149 = vpop.f32.mrb[0].mxu0
    %v7150 = vadd.f32 %v6829, %v7149
    %v7151 = vpop.f32.mrb[0].mxu0
    %7152 = vmatprep.mubr.f32.mxu0 0.0
    %7153 = vmatmul.mubr.f32.gmra.mrb[0].mxu0 %v6971
    %v7154 = vpop.f32.mrb[0].mxu0
    %v7155 = vadd.f32 %v6834, %v7154
    %v7156 = vpop.f32.mrb[0].mxu0
    %7157 = vmatprep.mubr.f32.mxu0 0.0
    %7158 = vmatmul.mubr.f32.gmra.mrb[0].mxu0 %v6974
    %v7159 = vpop.f32.mrb[0].mxu0
    %v7160 = vadd.f32 %v6839, %v7159
    %v7161 = vpop.f32.mrb[0].mxu0
    %7162 = vmatprep.mubr.f32.mxu0 0.0
    %7163 = vmatmul.mubr.f32.gmra.mrb[0].mxu0 %v6977
    %v7164 = vpop.f32.mrb[0].mxu0
    %v7165 = vadd.f32 %v6844, %v7164
    %v7166 = vpop.f32.mrb[0].mxu0
    %7167 = vmatprep.mubr.f32.mxu0 0.0
    %7168 = vmatmul.mubr.f32.gmra.mrb[0].mxu0 %v6980
    %v7169 = vpop.f32.mrb[0].mxu0
    %v7170 = vadd.f32 %v6849, %v7169
    %v7171 = vpop.f32.mrb[0].mxu0
    %7172 = vmatprep.mubr.f32.mxu0 0.0
    %7173 = vmatmul.mubr.f32.gmra.mrb[0].mxu0 %v6983
    %v7174 = vpop.f32.mrb[0].mxu0
    %v7175 = vadd.f32 %v6854, %v7174
    %v7176 = vpop.f32.mrb[0].mxu0
    %7177 = vmatprep.mubr.f32.mxu0 0.0
    %7178 = vmatmul.mubr.f32.gmra.mrb[0].mxu0 %v6986
    %v7179 = vpop.f32.mrb[0].mxu0
    %v7180 = vadd.f32 %v6859, %v7179
    %v7181 = vpop.f32.mrb[0].mxu0
    %7182 = vmatprep.mubr.f32.mxu0 0.0
    %7183 = vmatmul.mubr.f32.gmra.mrb[0].mxu0 %v6989
    %v7184 = vpop.f32.mrb[0].mxu0
    %v7185 = vadd.f32 %v6864, %v7184
    %v7186 = vpop.f32.mrb[0].mxu0
    %7187 = vmatprep.mubr.f32.mxu0 0.0
    %7188 = vmatmul.mubr.f32.gmra.mrb[0].mxu0 %v6992
    %v7189 = vpop.f32.mrb[0].mxu0
    %v7190 = vadd.f32 %v6869, %v7189
    %v7191 = vpop.f32.mrb[0].mxu0
    %7192 = vmatprep.mubr.f32.mxu0 0.0
    %7193 = vmatmul.mubr.f32.gmra.mrb[0].mxu0 %v6995
    %v7194 = vpop.f32.mrb[0].mxu0
    %v7195 = vadd.f32 %v6874, %v7194
    %v7196 = vpop.f32.mrb[0].mxu0
    %7197 = vmatprep.mubr.f32.mxu0 0.0
    %7198 = vmatmul.mubr.f32.gmra.mrb[0].mxu0 %v6998
    %v7199 = vpop.f32.mrb[0].mxu0
    %v7200 = vadd.f32 %v6879, %v7199
    %v7201 = vpop.f32.mrb[0].mxu0
    %7202 = vmatprep.mubr.f32.mxu0 0.0
    %7203 = vmatmul.mubr.f32.gmra.mrb[0].mxu0 %v7001
    %v7204 = vpop.f32.mrb[0].mxu0
    %v7205 = vadd.f32 %v6884, %v7204
    %v7206 = vpop.f32.mrb[0].mxu0
    %7207 = vmatprep.mubr.f32.mxu0 0.0
    %7208 = vmatmul.mubr.f32.gmra.mrb[0].mxu0 %v7004
    %v7209 = vpop.f32.mrb[0].mxu0
    %v7210 = vadd.f32 %v6889, %v7209
    %v7211 = vpop.f32.mrb[0].mxu0
    %7212 = vmatprep.mubr.f32.mxu0 0.0
    %7213 = vmatmul.mubr.f32.gmra.mrb[0].mxu0 %v7007
    %v7214 = vpop.f32.mrb[0].mxu0
    %v7215 = vadd.f32 %v6894, %v7214
    %v7216 = vpop.f32.mrb[0].mxu0
    %7217 = vmatprep.mubr.f32.mxu0 0.0
    %7218 = vmatmul.mubr.f32.gmra.mrb[0].mxu0 %v7010
    %v7219 = vpop.f32.mrb[0].mxu0
    %v7220 = vadd.f32 %v6899, %v7219
    %v7221 = vpop.f32.mrb[0].mxu0
    %7222 = vmatprep.mubr.f32.mxu0 0.0
    %7223 = vmatmul.mubr.f32.gmra.mrb[0].mxu0 %v7013
    %v7224 = vpop.f32.mrb[0].mxu0
    %v7225 = vadd.f32 %v6904, %v7224
    %v7226 = vpop.f32.mrb[0].mxu0
    %7227 = vmatprep.mubr.f32.mxu0 0.0
    %7228 = vmatmul.mubr.f32.gmra.mrb[0].mxu0 %v7016
    %v7229 = vpop.f32.mrb[0].mxu0
    %v7230 = vadd.f32 %v6909, %v7229
    %v7231 = vpop.f32.mrb[0].mxu0
    %7232 = vmatprep.mubr.f32.mxu0 0.0
    %7233 = vmatmul.mubr.f32.gmra.mrb[0].mxu0 %v7019
    %v7234 = vpop.f32.mrb[0].mxu0
    %v7235 = vadd.f32 %v6914, %v7234
    %v7236 = vpop.f32.mrb[0].mxu0
    %7237 = vmatprep.mubr.f32.mxu0 0.0
    %7238 = vmatmul.mubr.f32.gmra.mrb[0].mxu0 %v7022
    %v7239 = vpop.f32.mrb[0].mxu0
    %v7240 = vadd.f32 %v6919, %v7239
    %v7241 = vpop.f32.mrb[0].mxu0
    %7242 = vmatprep.mubr.f32.mxu0 0.0
    %7243 = vmatmul.mubr.f32.gmra.mrb[0].mxu0 %v7025
    %v7244 = vpop.f32.mrb[0].mxu0
    %v7245 = vadd.f32 %v6924, %v7244
    %v7246 = vpop.f32.mrb[0].mxu0
    %7247 = vmatprep.mubr.f32.mxu0 0.0
    %7248 = vmatmul.mubr.f32.gmra.mrb[0].mxu0 %v7028
    %v7249 = vpop.f32.mrb[0].mxu0
    %v7250 = vadd.f32 %v6929, %v7249
    %v7251 = vpop.f32.mrb[0].mxu0
    %7252 = vmatprep.mubr.f32.mxu0 0.0
    %7253 = vmatmul.mubr.f32.gmra.mrb[0].mxu0 %v7031
    %v7254 = vpop.f32.mrb[0].mxu0
    %v7255 = vadd.f32 %v6934, %v7254
    %v7256 = vpop.f32.mrb[0].mxu0
    %7257 = vdwg.mxu0
    %v7258 = vld [vmem:[%s4] sm:$0x1]
    %v7260 = vlaneseq
    %v7261 = vshrl.u32 %v7260, 7
    %v7262 = vsub.s32 0, %v7261
    %v7263 = vrot.slane %v7258, %v7262
    %v7265 = vadd.f32 %v7100, %v7263
    %v7266 = vadd.f32 %v7105, %v7263
    %v7267 = vadd.f32 %v7110, %v7263
    %v7268 = vadd.f32 %v7115, %v7263
    %v7269 = vadd.f32 %v7120, %v7263
    %v7270 = vadd.f32 %v7125, %v7263
    %v7271 = vadd.f32 %v7130, %v7263
    %v7272 = vadd.f32 %v7135, %v7263
    %v7273 = vadd.f32 %v7140, %v7263
    %v7274 = vadd.f32 %v7145, %v7263
    %v7275 = vadd.f32 %v7150, %v7263
    %v7276 = vadd.f32 %v7155, %v7263
    %v7277 = vadd.f32 %v7160, %v7263
    %v7278 = vadd.f32 %v7165, %v7263
    %v7279 = vadd.f32 %v7170, %v7263
    %v7280 = vadd.f32 %v7175, %v7263
    %v7281 = vadd.f32 %v7180, %v7263
    %v7282 = vadd.f32 %v7185, %v7263
    %v7283 = vadd.f32 %v7190, %v7263
    %v7284 = vadd.f32 %v7195, %v7263
    %v7285 = vadd.f32 %v7200, %v7263
    %v7286 = vadd.f32 %v7205, %v7263
    %v7287 = vadd.f32 %v7210, %v7263
    %v7288 = vadd.f32 %v7215, %v7263
    %v7289 = vadd.f32 %v7220, %v7263
    %v7290 = vadd.f32 %v7225, %v7263
    %v7291 = vadd.f32 %v7230, %v7263
    %v7292 = vadd.f32 %v7235, %v7263
    %v7293 = vadd.f32 %v7240, %v7263
    %v7294 = vadd.f32 %v7245, %v7263
    %v7295 = vadd.f32 %v7250, %v7263
    %v7296 = vadd.f32 %v7255, %v7263
    %7297 = vst.msk [vmem:[#allocation6] sm:$0xff] %vm35, %v7265
    %7298 = vst.msk [vmem:[#allocation6 + $0x8] sm:$0xff] %vm35, %v7266
    %7299 = vst.msk [vmem:[#allocation6 + $0x10] sm:$0xff] %vm35, %v7267
    %7300 = vst.msk [vmem:[#allocation6 + $0x18] sm:$0xff] %vm35, %v7268
    %7301 = vst.msk [vmem:[#allocation6 + $0x20] sm:$0xff] %vm35, %v7269
    %7302 = vst.msk [vmem:[#allocation6 + $0x28] sm:$0xff] %vm35, %v7270
    %7303 = vst.msk [vmem:[#allocation6 + $0x30] sm:$0xff] %vm35, %v7271
    %7304 = vst.msk [vmem:[#allocation6 + $0x38] sm:$0xff] %vm35, %v7272
    %7305 = vst.msk [vmem:[#allocation6 + $0x40] sm:$0xff] %vm35, %v7273
    %7306 = vst.msk [vmem:[#allocation6 + $0x48] sm:$0xff] %vm35, %v7274
    %7307 = vst.msk [vmem:[#allocation6 + $0x50] sm:$0xff] %vm35, %v7275
    %7308 = vst.msk [vmem:[#allocation6 + $0x58] sm:$0xff] %vm35, %v7276
    %7309 = vst.msk [vmem:[#allocation6 + $0x60] sm:$0xff] %vm35, %v7277
    %7310 = vst.msk [vmem:[#allocation6 + $0x68] sm:$0xff] %vm35, %v7278
    %7311 = vst.msk [vmem:[#allocation6 + $0x70] sm:$0xff] %vm35, %v7279
    %7312 = vst.msk [vmem:[#allocation6 + $0x78] sm:$0xff] %vm35, %v7280
    %7313 = vst.msk [vmem:[#allocation6 + $0x80] sm:$0xff] %vm35, %v7281
    %7314 = vst.msk [vmem:[#allocation6 + $0x88] sm:$0xff] %vm35, %v7282
    %7315 = vst.msk [vmem:[#allocation6 + $0x90] sm:$0xff] %vm35, %v7283
    %7316 = vst.msk [vmem:[#allocation6 + $0x98] sm:$0xff] %vm35, %v7284
    %7317 = vst.msk [vmem:[#allocation6 + $0xa0] sm:$0xff] %vm35, %v7285
    %7318 = vst.msk [vmem:[#allocation6 + $0xa8] sm:$0xff] %vm35, %v7286
    %7319 = vst.msk [vmem:[#allocation6 + $0xb0] sm:$0xff] %vm35, %v7287
    %7320 = vst.msk [vmem:[#allocation6 + $0xb8] sm:$0xff] %vm35, %v7288
    %7321 = vst.msk [vmem:[#allocation6 + $0xc0] sm:$0xff] %vm35, %v7289
    %7322 = vst.msk [vmem:[#allocation6 + $0xc8] sm:$0xff] %vm35, %v7290
    %7323 = vst.msk [vmem:[#allocation6 + $0xd0] sm:$0xff] %vm35, %v7291
    %7324 = vst.msk [vmem:[#allocation6 + $0xd8] sm:$0xff] %vm35, %v7292
    %7325 = vst.msk [vmem:[#allocation6 + $0xe0] sm:$0xff] %vm35, %v7293
    %7326 = vst.msk [vmem:[#allocation6 + $0xe8] sm:$0xff] %vm35, %v7294
    %7327 = vst.msk [vmem:[#allocation6 + $0xf0] sm:$0xff] %vm35, %v7295
    %7328 = vst.msk [vmem:[#allocation6 + $0xf8] sm:$0xff] %vm35, %v7296
    // Predicated region
    $region26: #{tpu_custom_call.1} parent=1 // pred_check
      _
    $region27: #{tpu_custom_call.1} parent=1 // pred_check_branch
      %7330 = sbr.rel (0) target = $region29
    $region28: #{tpu_custom_call.1} parent=1 // pred_region
      %s7332 = ssub.s32 4096, 4096
      %7333 = vsyncadd [#allocation5], %s7332
      %s7334 = sshll.u32 [#allocation6], 4
      %s7335 = int_to_ptr.vmem [resolvable:$true] %s7334
      %7340 = dma.vmem_to_hbm [thread:$0]  %s7335, 4096, %s5, [#allocation5], 128, 128, 8
    $region29: #{tpu_custom_call.1} parent=1 // pred_fallthru
      _
    // Predicated region
    $region30: #{tpu_custom_call.1} parent=1 // pred_check
      _
    $region31: #{tpu_custom_call.1} parent=1 // pred_check_branch
      %7342 = sbr.rel (0) target = $region33
    $region32: #{tpu_custom_call.1} parent=1 // pred_region
      %7343 = dma.done [#allocation5], 4096
    $region33: #{tpu_custom_call.1} parent=1 // pred_fallthru
      _
    %7344 = vsyncpa [#allocation4], 1
    %7345 = vsyncpa [#allocation5], 1

</llo_original>
